<compile_context>
chip_gen: v6e
topology: v6e:2x2x1
jax: 0.10.0
libtpu: 0.0.40
codegen_flags: <defaults>
</compile_context>

<pallas_src>
import functools

import jax
import jax.numpy as jnp
from jax.experimental import pallas as pl
from jax.experimental.pallas import tpu as pltpu


# ----------------------------------------------------------------------------
# Fused kernel: enc1 + actlet + enc2..4 + per-sample mean-pool + fc
# One grid step processes B samples (B*MTVp rows) at once.
# ----------------------------------------------------------------------------
def _progress_fused_kernel(
    inv_mtv,
    x_ref, hm1_ref,
    w1_ref, b1_ref,
    aw_ref, ab_ref,
    w2_ref, b2_ref,
    w3_ref, b3_ref,
    w4_ref, b4_ref,
    pool_ref, fw_ref, fb_ref,
    o_ref,
):
    # ---- encoder1 stand-in: pointwise conv + ReLU on the MXU (K padded to 8) ----
    # TODO(synk): base_encoder is a dynamically imported GCN backbone; stand-in only.
    h1 = jnp.maximum(
        jnp.dot(x_ref[...], w1_ref[...], preferred_element_type=jnp.float32)
        + b1_ref[...],
        0.0,
    )                                                     # (B*MTVp, 64) f32

    # ---- Actlet stand-in: x * sigmoid(W @ (x - enc1(x_mean)) + b) ----
    # TODO(synk): Actlet is not defined in the reference source; sigmoid-gate stand-in.
    diff = (h1 - hm1_ref[...].astype(jnp.float32)).astype(aw_ref.dtype)
    gate = jax.nn.sigmoid(
        jnp.dot(diff, aw_ref[...], preferred_element_type=jnp.float32) + ab_ref[...]
    )
    h = h1 * gate                                         # (B*MTVp, 64) f32

    # ---- encoder2..4 stand-ins: pointwise conv + ReLU; bf16 MXU, f32 accumulate ----
    def pconv(z, w_ref, b_ref):
        acc = jnp.dot(z.astype(w_ref.dtype), w_ref[...],
                      preferred_element_type=jnp.float32) + b_ref[...]
        return jnp.maximum(acc, 0.0)

    h = pconv(h, w2_ref, b2_ref)                          # (B*MTVp, 128)
    h = pconv(h, w3_ref, b3_ref)                          # (B*MTVp, 256)
    h = pconv(h, w4_ref, b4_ref)                          # (B*MTVp, 256)

    # ---- per-sample mean over (M, T, V): resident 0/1 block-diag ones matmul ----
    pooled = jnp.dot(pool_ref[...], h.astype(pool_ref.dtype),
                     preferred_element_type=jnp.float32) * inv_mtv       # (B, 256)

    # ---- fc (lane-padded to a multiple of 128 outputs) ----
    out = jnp.dot(pooled.astype(fw_ref.dtype), fw_ref[...],
                  preferred_element_type=jnp.float32) + fb_ref[...]      # (B, ncp)
    o_ref[...] = out.astype(o_ref.dtype)


# ----------------------------------------------------------------------------
# Forward pass (glue = reshapes / BN fold / mean-path precompute in XLA,
#               compute = one fused Pallas kernel over a batch grid)
# ----------------------------------------------------------------------------
def progress_forward(x, params, *, eps=1e-5, max_batch_block=8):
    N, C, T, V, M = x.shape
    MTV = M * T * V
    MTVp = ((MTV + 7) // 8) * 8          # sublane-aligned row count
    C8 = 8                               # channel pad 3 -> 8 (dense lane groups)

    base = params["enc1_w"].shape[1]     # 64
    num_class = params["fc_w"].shape[1]
    ncp = ((num_class + 127) // 128) * 128

    # x.mean(dim=0, keepdim=True) -- cheap glue reduction over real N.
    x_mean = jnp.mean(x, axis=0, keepdims=True)

    def to_rows(y):
        # (n, C, T, V, M) -> rows ordered (m, t, v), channels last (lane axis)
        n = y.shape[0]
        return jnp.transpose(y, (0, 4, 2, 3, 1)).reshape(n, MTV, C)

    # data_bn (eval mode) folded into the rows here (fuses with the transpose).
    inv_std = 1.0 / jnp.sqrt(params["bn_var"] + eps)
    sc = (params["bn_gamma"] * inv_std).reshape(M, V, C)
    sh = (params["bn_beta"] - params["bn_mean"] * params["bn_gamma"] * inv_std).reshape(M, V, C)
    bn_scale = jnp.broadcast_to(sc[:, None], (M, T, V, C)).reshape(MTV, C).astype(jnp.float32)
    bn_shift = jnp.broadcast_to(sh[:, None], (M, T, V, C)).reshape(MTV, C).astype(jnp.float32)

    x_rows = to_rows(x).astype(jnp.float32) * bn_scale[None] + bn_shift[None]   # (N, MTV, C)
    xm_rows = to_rows(x_mean)[0].astype(jnp.float32) * bn_scale + bn_shift      # (MTV, C)

    # enc1 weights, channel-padded to K=8.
    w1 = jnp.pad(params["enc1_w"].astype(jnp.float32), ((0, C8 - C), (0, 0)))   # (8, 64)
    b1 = params["enc1_b"].reshape(1, -1).astype(jnp.float32)

    # Batch-invariant mean path: hm1 = enc1(data_bn(x_mean)), computed once in f32.
    xm8 = jnp.pad(xm_rows, ((0, 0), (0, C8 - C)))
    hm1 = jnp.maximum(xm8 @ w1 + b1, 0.0)                                       # (MTV, 64)

    # Per-step batch block; keep B <= 8 so peak activations fit v7x's 64 MiB VMEM.
    B = N if N <= max_batch_block else max_batch_block
    G = pl.cdiv(N, B)
    N_pad = G * B

    # Input rows: pad (batch, rows, channels), flatten to a dense (rows, 8) bf16 slab.
    x8 = jnp.pad(x_rows, ((0, N_pad - N), (0, MTVp - MTV), (0, C8 - C)))
    x8 = x8.reshape(N_pad * MTVp, C8).astype(jnp.bfloat16)                      # (N_pad*MTVp, 8)

    # Resident mean-path activations, tiled to the per-step row count.
    hm1p = jnp.pad(hm1, ((0, MTVp - MTV), (0, 0)))
    hm1t = jnp.tile(hm1p, (B, 1)).astype(jnp.bfloat16)                          # (B*MTVp, 64)

    # Block-diagonal 0/1 pooling matrix (only real rows contribute); 1/MTV applied in-kernel.
    row_mask = (jnp.arange(MTVp) < MTV).astype(jnp.float32)
    pool = jnp.kron(jnp.eye(B, dtype=jnp.float32), row_mask[None, :]).astype(jnp.bfloat16)

    # bf16 operand weights (f32 biases / accumulation inside the kernel).
    w1b = w1.astype(jnp.bfloat16)
    aw = params["act1_w"].astype(jnp.bfloat16)
    ab = params["act1_b"].reshape(1, -1).astype(jnp.float32)
    w2 = params["enc2_w"].astype(jnp.bfloat16)
    b2 = params["enc2_b"].reshape(1, -1).astype(jnp.float32)
    w3 = params["enc3_w"].astype(jnp.bfloat16)
    b3 = params["enc3_b"].reshape(1, -1).astype(jnp.float32)
    w4 = params["enc4_w"].astype(jnp.bfloat16)
    b4 = params["enc4_b"].reshape(1, -1).astype(jnp.float32)
    fw = (jnp.zeros((4 * base, ncp), jnp.float32)
          .at[:, :num_class].set(params["fc_w"])).astype(jnp.bfloat16)
    fb = jnp.zeros((1, ncp), jnp.float32).at[:, :num_class].set(params["fc_b"])

    operands = (x8, hm1t, w1b, b1, aw, ab, w2, b2, w3, b3, w4, b4, pool, fw, fb)

    def resident(a):
        nd = a.ndim
        return pl.BlockSpec(a.shape, lambda g, _nd=nd: (0,) * _nd)

    in_specs = [pl.BlockSpec((B * MTVp, C8), lambda g: (g, 0))]   # per-step row slab
    in_specs += [resident(a) for a in operands[1:]]

    out = pl.pallas_call(
        functools.partial(_progress_fused_kernel, 1.0 / MTV),
        out_shape=jax.ShapeDtypeStruct((N_pad, ncp), jnp.float32),
        grid=(G,),
        in_specs=in_specs,
        out_specs=pl.BlockSpec((B, ncp), lambda g: (g, 0)),
        compiler_params=pltpu.CompilerParams(
            dimension_semantics=("parallel",),
            vmem_limit_bytes=48 * 1024 * 1024,
        ),
    )(*operands)

    # Drop batch padding rows and class-lane padding.
    return out[:N, :num_class]


# ----------------------------------------------------------------------------
# Deterministic parameter init (synthetic; no checkpoints)
# ----------------------------------------------------------------------------
def init_params(key, *, num_person=2, in_channels=3, num_point=25, num_class=60):
    ks = jax.random.split(key, 8)
    feat = num_person * in_channels * num_point  # data_bn features
    base = 64

    def he(k, cin, cout):
        return (jax.random.normal(k, (cin, cout)) * (2.0 / cin) ** 0.5).astype(jnp.float32)

    params = {
        # data_bn: bn_init(scale=1) + default running stats, eval semantics.
        "bn_gamma": jnp.ones((feat,), jnp.float32),
        "bn_beta": jnp.zeros((feat,), jnp.float32),
        "bn_mean": jnp.zeros((feat,), jnp.float32),
        "bn_var": jnp.ones((feat,), jnp.float32),
        # encoder stand-ins (channel widths implied by the module).
        "enc1_w": he(ks[0], in_channels, base),       "enc1_b": jnp.zeros((base,), jnp.float32),
        "enc2_w": he(ks[1], base, 2 * base),          "enc2_b": jnp.zeros((2 * base,), jnp.float32),
        "enc3_w": he(ks[2], 2 * base, 4 * base),      "enc3_b": jnp.zeros((4 * base,), jnp.float32),
        "enc4_w": he(ks[3], 4 * base, 4 * base),      "enc4_b": jnp.zeros((4 * base,), jnp.float32),
        # Actlet stand-in (in=out=64).
        "act1_w": he(ks[4], base, base),              "act1_b": jnp.zeros((base,), jnp.float32),
        # fc: weight ~ N(0, sqrt(2/num_class)), bias ~ U(+-1/sqrt(fan_in)).
        "fc_w": (jax.random.normal(ks[5], (4 * base, num_class))
                 * (2.0 / num_class) ** 0.5).astype(jnp.float32),
        "fc_b": jax.random.uniform(ks[6], (num_class,), jnp.float32,
                                   minval=-1.0 / (4 * base) ** 0.5,
                                   maxval=1.0 / (4 * base) ** 0.5),
    }
    return params


if __name__ == "__main__":
    key = jax.random.PRNGKey(0)
    k_x, k_p = jax.random.split(key)

    N, C, T, V, M = 2, 3, 16, 25, 2
    num_class = 60

    x = jax.random.normal(k_x, (N, C, T, V, M), jnp.float32)
    params = init_params(k_p, num_person=M, in_channels=C, num_point=V, num_class=num_class)

    fwd = jax.jit(lambda inp: progress_forward(inp, params))
    out = jax.block_until_ready(fwd(x))

    assert out.shape == (N, num_class), out.shape
    assert out.dtype == jnp.float32
    assert bool(jnp.all(jnp.isfinite(out)))
    print("KERNEL_OK")
</pallas_src>

<mosaic_0001>
module attributes {stable_mosaic.version = 11 : i64} {
  func.func @_progress_fused_kernel(%arg0: i32, %arg1: memref<1600x8xbf16, #tpu.memory_space<vmem>>, %arg2: memref<1600x64xbf16, #tpu.memory_space<vmem>>, %arg3: memref<8x64xbf16, #tpu.memory_space<vmem>>, %arg4: memref<1x64xf32, #tpu.memory_space<vmem>>, %arg5: memref<64x64xbf16, #tpu.memory_space<vmem>>, %arg6: memref<1x64xf32, #tpu.memory_space<vmem>>, %arg7: memref<64x128xbf16, #tpu.memory_space<vmem>>, %arg8: memref<1x128xf32, #tpu.memory_space<vmem>>, %arg9: memref<128x256xbf16, #tpu.memory_space<vmem>>, %arg10: memref<1x256xf32, #tpu.memory_space<vmem>>, %arg11: memref<256x256xbf16, #tpu.memory_space<vmem>>, %arg12: memref<1x256xf32, #tpu.memory_space<vmem>>, %arg13: memref<2x1600xbf16, #tpu.memory_space<vmem>>, %arg14: memref<256x128xbf16, #tpu.memory_space<vmem>>, %arg15: memref<1x128xf32, #tpu.memory_space<vmem>>, %arg16: memref<2x128xf32, #tpu.memory_space<vmem>>) attributes {dimension_semantics = [#tpu.dimension_semantics<parallel>], iteration_bounds = array<i64: 1>, scalar_prefetch = 0 : i64, scratch_operands = 0 : i64, tpu.core_type = #tpu.core_type<tc>, window_params = [{transform_indices = @transform_0, window_bounds = array<i64: 1600, 8>}, {pipeline_mode = #tpu.pipeline_mode<synchronous>, transform_indices = @transform_1, window_bounds = array<i64: 1600, 64>}, {pipeline_mode = #tpu.pipeline_mode<synchronous>, transform_indices = @transform_2, window_bounds = array<i64: 8, 64>}, {pipeline_mode = #tpu.pipeline_mode<synchronous>, transform_indices = @transform_3, window_bounds = array<i64: 1, 64>}, {pipeline_mode = #tpu.pipeline_mode<synchronous>, transform_indices = @transform_4, window_bounds = array<i64: 64, 64>}, {pipeline_mode = #tpu.pipeline_mode<synchronous>, transform_indices = @transform_5, window_bounds = array<i64: 1, 64>}, {pipeline_mode = #tpu.pipeline_mode<synchronous>, transform_indices = @transform_6, window_bounds = array<i64: 64, 128>}, {pipeline_mode = #tpu.pipeline_mode<synchronous>, transform_indices = @transform_7, window_bounds = array<i64: 1, 128>}, {pipeline_mode = #tpu.pipeline_mode<synchronous>, transform_indices = @transform_8, window_bounds = array<i64: 128, 256>}, {pipeline_mode = #tpu.pipeline_mode<synchronous>, transform_indices = @transform_9, window_bounds = array<i64: 1, 256>}, {pipeline_mode = #tpu.pipeline_mode<synchronous>, transform_indices = @transform_10, window_bounds = array<i64: 256, 256>}, {pipeline_mode = #tpu.pipeline_mode<synchronous>, transform_indices = @transform_11, window_bounds = array<i64: 1, 256>}, {pipeline_mode = #tpu.pipeline_mode<synchronous>, transform_indices = @transform_12, window_bounds = array<i64: 2, 1600>}, {pipeline_mode = #tpu.pipeline_mode<synchronous>, transform_indices = @transform_13, window_bounds = array<i64: 256, 128>}, {pipeline_mode = #tpu.pipeline_mode<synchronous>, transform_indices = @transform_14, window_bounds = array<i64: 1, 128>}, {transform_indices = @transform_15, window_bounds = array<i64: 2, 128>}]} {
    %c0 = arith.constant 0 : index
    %c0_0 = arith.constant 0 : index
    %0 = vector.load %arg1[%c0, %c0_0] : memref<1600x8xbf16, #tpu.memory_space<vmem>>, vector<1600x8xbf16>
    %c0_1 = arith.constant 0 : index
    %c0_2 = arith.constant 0 : index
    %1 = vector.load %arg3[%c0_1, %c0_2] : memref<8x64xbf16, #tpu.memory_space<vmem>>, vector<8x64xbf16>
    %cst = arith.constant dense<0.000000e+00> : vector<1600x64xf32>
    %2 = tpu.matmul %0, %1, %cst {dimension_numbers = #tpu.dot_dimension_numbers<[1], [0], [0], [1], [0, 0, 1, 1], [], []>} : vector<1600x8xbf16>, vector<8x64xbf16>, vector<1600x64xf32> -> vector<1600x64xf32>
    %c0_3 = arith.constant 0 : index
    %c0_4 = arith.constant 0 : index
    %3 = vector.load %arg4[%c0_3, %c0_4] : memref<1x64xf32, #tpu.memory_space<vmem>>, vector<1x64xf32>
    %4 = vector.broadcast %3 : vector<1x64xf32> to vector<1600x64xf32>
    %5 = arith.addf %2, %4 : vector<1600x64xf32>
    %cst_5 = arith.constant 0.000000e+00 : f32
    %6 = vector.broadcast %cst_5 : f32 to vector<1600x64xf32>
    %7 = arith.maximumf %5, %6 : vector<1600x64xf32>
    %c0_6 = arith.constant 0 : index
    %c0_7 = arith.constant 0 : index
    %8 = vector.load %arg2[%c0_6, %c0_7] : memref<1600x64xbf16, #tpu.memory_space<vmem>>, vector<1600x64xbf16>
    %9 = arith.extf %8 : vector<1600x64xbf16> to vector<1600x64xf32>
    %10 = arith.subf %7, %9 : vector<1600x64xf32>
    %11 = arith.truncf %10 : vector<1600x64xf32> to vector<1600x64xbf16>
    %c0_8 = arith.constant 0 : index
    %c0_9 = arith.constant 0 : index
    %12 = vector.load %arg5[%c0_8, %c0_9] : memref<64x64xbf16, #tpu.memory_space<vmem>>, vector<64x64xbf16>
    %cst_10 = arith.constant dense<0.000000e+00> : vector<1600x64xf32>
    %13 = tpu.matmul %11, %12, %cst_10 {dimension_numbers = #tpu.dot_dimension_numbers<[1], [0], [0], [1], [0, 0, 1, 1], [], []>} : vector<1600x64xbf16>, vector<64x64xbf16>, vector<1600x64xf32> -> vector<1600x64xf32>
    %c0_11 = arith.constant 0 : index
    %c0_12 = arith.constant 0 : index
    %14 = vector.load %arg6[%c0_11, %c0_12] : memref<1x64xf32, #tpu.memory_space<vmem>>, vector<1x64xf32>
    %15 = vector.broadcast %14 : vector<1x64xf32> to vector<1600x64xf32>
    %16 = arith.addf %13, %15 : vector<1600x64xf32>
    %17 = arith.negf %16 : vector<1600x64xf32>
    %18 = math.exp %17 : vector<1600x64xf32>
    %cst_13 = arith.constant 1.000000e+00 : f32
    %19 = vector.broadcast %cst_13 : f32 to vector<1600x64xf32>
    %20 = arith.addf %19, %18 : vector<1600x64xf32>
    %21 = arith.divf %19, %20 : vector<1600x64xf32>
    %22 = arith.mulf %7, %21 : vector<1600x64xf32>
    %23 = arith.truncf %22 : vector<1600x64xf32> to vector<1600x64xbf16>
    %c0_14 = arith.constant 0 : index
    %c0_15 = arith.constant 0 : index
    %24 = vector.load %arg7[%c0_14, %c0_15] : memref<64x128xbf16, #tpu.memory_space<vmem>>, vector<64x128xbf16>
    %cst_16 = arith.constant dense<0.000000e+00> : vector<1600x128xf32>
    %25 = tpu.matmul %23, %24, %cst_16 {dimension_numbers = #tpu.dot_dimension_numbers<[1], [0], [0], [1], [0, 0, 1, 1], [], []>} : vector<1600x64xbf16>, vector<64x128xbf16>, vector<1600x128xf32> -> vector<1600x128xf32>
    %c0_17 = arith.constant 0 : index
    %c0_18 = arith.constant 0 : index
    %26 = vector.load %arg8[%c0_17, %c0_18] : memref<1x128xf32, #tpu.memory_space<vmem>>, vector<1x128xf32>
    %27 = vector.broadcast %26 : vector<1x128xf32> to vector<1600x128xf32>
    %28 = arith.addf %25, %27 : vector<1600x128xf32>
    %cst_19 = arith.constant 0.000000e+00 : f32
    %29 = vector.broadcast %cst_19 : f32 to vector<1600x128xf32>
    %30 = arith.maximumf %28, %29 : vector<1600x128xf32>
    %31 = arith.truncf %30 : vector<1600x128xf32> to vector<1600x128xbf16>
    %c0_20 = arith.constant 0 : index
    %c0_21 = arith.constant 0 : index
    %32 = vector.load %arg9[%c0_20, %c0_21] : memref<128x256xbf16, #tpu.memory_space<vmem>>, vector<128x256xbf16>
    %cst_22 = arith.constant dense<0.000000e+00> : vector<1600x256xf32>
    %33 = tpu.matmul %31, %32, %cst_22 {dimension_numbers = #tpu.dot_dimension_numbers<[1], [0], [0], [1], [0, 0, 1, 1], [], []>} : vector<1600x128xbf16>, vector<128x256xbf16>, vector<1600x256xf32> -> vector<1600x256xf32>
    %c0_23 = arith.constant 0 : index
    %c0_24 = arith.constant 0 : index
    %34 = vector.load %arg10[%c0_23, %c0_24] : memref<1x256xf32, #tpu.memory_space<vmem>>, vector<1x256xf32>
    %35 = vector.broadcast %34 : vector<1x256xf32> to vector<1600x256xf32>
    %36 = arith.addf %33, %35 : vector<1600x256xf32>
    %cst_25 = arith.constant 0.000000e+00 : f32
    %37 = vector.broadcast %cst_25 : f32 to vector<1600x256xf32>
    %38 = arith.maximumf %36, %37 : vector<1600x256xf32>
    %39 = arith.truncf %38 : vector<1600x256xf32> to vector<1600x256xbf16>
    %c0_26 = arith.constant 0 : index
    %c0_27 = arith.constant 0 : index
    %40 = vector.load %arg11[%c0_26, %c0_27] : memref<256x256xbf16, #tpu.memory_space<vmem>>, vector<256x256xbf16>
    %cst_28 = arith.constant dense<0.000000e+00> : vector<1600x256xf32>
    %41 = tpu.matmul %39, %40, %cst_28 {dimension_numbers = #tpu.dot_dimension_numbers<[1], [0], [0], [1], [0, 0, 1, 1], [], []>} : vector<1600x256xbf16>, vector<256x256xbf16>, vector<1600x256xf32> -> vector<1600x256xf32>
    %c0_29 = arith.constant 0 : index
    %c0_30 = arith.constant 0 : index
    %42 = vector.load %arg12[%c0_29, %c0_30] : memref<1x256xf32, #tpu.memory_space<vmem>>, vector<1x256xf32>
    %43 = vector.broadcast %42 : vector<1x256xf32> to vector<1600x256xf32>
    %44 = arith.addf %41, %43 : vector<1600x256xf32>
    %cst_31 = arith.constant 0.000000e+00 : f32
    %45 = vector.broadcast %cst_31 : f32 to vector<1600x256xf32>
    %46 = arith.maximumf %44, %45 : vector<1600x256xf32>
    %c0_32 = arith.constant 0 : index
    %c0_33 = arith.constant 0 : index
    %47 = vector.load %arg13[%c0_32, %c0_33] : memref<2x1600xbf16, #tpu.memory_space<vmem>>, vector<2x1600xbf16>
    %48 = arith.truncf %46 : vector<1600x256xf32> to vector<1600x256xbf16>
    %cst_34 = arith.constant dense<0.000000e+00> : vector<2x256xf32>
    %49 = tpu.matmul %47, %48, %cst_34 {dimension_numbers = #tpu.dot_dimension_numbers<[1], [0], [0], [1], [0, 0, 1, 1], [], []>} : vector<2x1600xbf16>, vector<1600x256xbf16>, vector<2x256xf32> -> vector<2x256xf32>
    %cst_35 = arith.constant 1.250000e-03 : f32
    %50 = vector.broadcast %cst_35 : f32 to vector<2x256xf32>
    %51 = arith.mulf %49, %50 : vector<2x256xf32>
    %52 = arith.truncf %51 : vector<2x256xf32> to vector<2x256xbf16>
    %c0_36 = arith.constant 0 : index
    %c0_37 = arith.constant 0 : index
    %53 = vector.load %arg14[%c0_36, %c0_37] : memref<256x128xbf16, #tpu.memory_space<vmem>>, vector<256x128xbf16>
    %cst_38 = arith.constant dense<0.000000e+00> : vector<2x128xf32>
    %54 = tpu.matmul %52, %53, %cst_38 {dimension_numbers = #tpu.dot_dimension_numbers<[1], [0], [0], [1], [0, 0, 1, 1], [], []>} : vector<2x256xbf16>, vector<256x128xbf16>, vector<2x128xf32> -> vector<2x128xf32>
    %c0_39 = arith.constant 0 : index
    %c0_40 = arith.constant 0 : index
    %55 = vector.load %arg15[%c0_39, %c0_40] : memref<1x128xf32, #tpu.memory_space<vmem>>, vector<1x128xf32>
    %56 = vector.broadcast %55 : vector<1x128xf32> to vector<2x128xf32>
    %57 = arith.addf %54, %56 : vector<2x128xf32>
    %c0_41 = arith.constant 0 : index
    %c0_42 = arith.constant 0 : index
    %58 = vector.load %arg16[%c0_41, %c0_42] : memref<2x128xf32, #tpu.memory_space<vmem>>, vector<2x128xf32>
    tpu.vector_store %arg16[%c0_41, %c0_42], %57 {strides = array<i32>} : memref<2x128xf32, #tpu.memory_space<vmem>>, vector<2x128xf32>,
    return
  }
  func.func @transform_0(%arg0: i32) -> (i32, i32) {
    %c0_i32 = arith.constant 0 : i32
    %c0_i32_0 = arith.constant 0 : i32
    return %arg0, %c0_i32 : i32, i32
  }
  func.func @transform_1(%arg0: i32) -> (i32, i32) {
    %c0_i32 = arith.constant 0 : i32
    %c0_i32_0 = arith.constant 0 : i32
    %c0_i32_1 = arith.constant 0 : i32
    return %c0_i32, %c0_i32_0 : i32, i32
  }
  func.func @transform_2(%arg0: i32) -> (i32, i32) {
    %c0_i32 = arith.constant 0 : i32
    %c0_i32_0 = arith.constant 0 : i32
    %c0_i32_1 = arith.constant 0 : i32
    return %c0_i32, %c0_i32_0 : i32, i32
  }
  func.func @transform_3(%arg0: i32) -> (i32, i32) {
    %c0_i32 = arith.constant 0 : i32
    %c0_i32_0 = arith.constant 0 : i32
    %c0_i32_1 = arith.constant 0 : i32
    return %c0_i32, %c0_i32_0 : i32, i32
  }
  func.func @transform_4(%arg0: i32) -> (i32, i32) {
    %c0_i32 = arith.constant 0 : i32
    %c0_i32_0 = arith.constant 0 : i32
    %c0_i32_1 = arith.constant 0 : i32
    return %c0_i32, %c0_i32_0 : i32, i32
  }
  func.func @transform_5(%arg0: i32) -> (i32, i32) {
    %c0_i32 = arith.constant 0 : i32
    %c0_i32_0 = arith.constant 0 : i32
    %c0_i32_1 = arith.constant 0 : i32
    return %c0_i32, %c0_i32_0 : i32, i32
  }
  func.func @transform_6(%arg0: i32) -> (i32, i32) {
    %c0_i32 = arith.constant 0 : i32
    %c0_i32_0 = arith.constant 0 : i32
    %c0_i32_1 = arith.constant 0 : i32
    return %c0_i32, %c0_i32_0 : i32, i32
  }
  func.func @transform_7(%arg0: i32) -> (i32, i32) {
    %c0_i32 = arith.constant 0 : i32
    %c0_i32_0 = arith.constant 0 : i32
    %c0_i32_1 = arith.constant 0 : i32
    return %c0_i32, %c0_i32_0 : i32, i32
  }
  func.func @transform_8(%arg0: i32) -> (i32, i32) {
    %c0_i32 = arith.constant 0 : i32
    %c0_i32_0 = arith.constant 0 : i32
    %c0_i32_1 = arith.constant 0 : i32
    return %c0_i32, %c0_i32_0 : i32, i32
  }
  func.func @transform_9(%arg0: i32) -> (i32, i32) {
    %c0_i32 = arith.constant 0 : i32
    %c0_i32_0 = arith.constant 0 : i32
    %c0_i32_1 = arith.constant 0 : i32
    return %c0_i32, %c0_i32_0 : i32, i32
  }
  func.func @transform_10(%arg0: i32) -> (i32, i32) {
    %c0_i32 = arith.constant 0 : i32
    %c0_i32_0 = arith.constant 0 : i32
    %c0_i32_1 = arith.constant 0 : i32
    return %c0_i32, %c0_i32_0 : i32, i32
  }
  func.func @transform_11(%arg0: i32) -> (i32, i32) {
    %c0_i32 = arith.constant 0 : i32
    %c0_i32_0 = arith.constant 0 : i32
    %c0_i32_1 = arith.constant 0 : i32
    return %c0_i32, %c0_i32_0 : i32, i32
  }
  func.func @transform_12(%arg0: i32) -> (i32, i32) {
    %c0_i32 = arith.constant 0 : i32
    %c0_i32_0 = arith.constant 0 : i32
    %c0_i32_1 = arith.constant 0 : i32
    return %c0_i32, %c0_i32_0 : i32, i32
  }
  func.func @transform_13(%arg0: i32) -> (i32, i32) {
    %c0_i32 = arith.constant 0 : i32
    %c0_i32_0 = arith.constant 0 : i32
    %c0_i32_1 = arith.constant 0 : i32
    return %c0_i32, %c0_i32_0 : i32, i32
  }
  func.func @transform_14(%arg0: i32) -> (i32, i32) {
    %c0_i32 = arith.constant 0 : i32
    %c0_i32_0 = arith.constant 0 : i32
    %c0_i32_1 = arith.constant 0 : i32
    return %c0_i32, %c0_i32_0 : i32, i32
  }
  func.func @transform_15(%arg0: i32) -> (i32, i32) {
    %c0_i32 = arith.constant 0 : i32
    %c0_i32_0 = arith.constant 0 : i32
    return %arg0, %c0_i32 : i32, i32
  }
}

</mosaic_0001>

<llo_original>
// kernel: _lambda_.1
$region0: #{_lambda_.1}
  #allocation0 [shape = 'u32[]', space=smem, size = 0x4, offset = 0x4, fixed_abs, tag = 'smem constant byte address 0x4 - core index']
  #allocation1 [shape = 'u32[144,128]{1,0:T(1,128)}', space=vmem, size = 0x12000, scoped, tag = 'internal scratch']
  %s0 = inlined_call_operand.vmem [shape: bf16[1600,8], index: 0, kind: input, shape index: {}]
  %s1 = inlined_call_operand.vmem [shape: bf16[1600,64], index: 1, kind: input, shape index: {}]
  %s2 = inlined_call_operand.vmem [shape: bf16[8,64], index: 2, kind: input, shape index: {}]
  %s3 = inlined_call_operand.vmem [shape: f32[1,64], index: 3, kind: input, shape index: {}, may-alias: {3,5}]
  %s4 = inlined_call_operand.vmem [shape: bf16[64,64], index: 4, kind: input, shape index: {}]
  %s5 = inlined_call_operand.vmem [shape: f32[1,64], index: 5, kind: input, shape index: {}, may-alias: {3,5}]
  %s6 = inlined_call_operand.vmem [shape: bf16[64,128], index: 6, kind: input, shape index: {}]
  %s7 = inlined_call_operand.vmem [shape: f32[1,128], index: 7, kind: input, shape index: {}]
  %s8 = inlined_call_operand.vmem [shape: bf16[128,256], index: 8, kind: input, shape index: {}]
  %s9 = inlined_call_operand.vmem [shape: f32[1,256], index: 9, kind: input, shape index: {}, may-alias: {9,11}]
  %s10 = inlined_call_operand.vmem [shape: bf16[256,256], index: 10, kind: input, shape index: {}]
  %s11 = inlined_call_operand.vmem [shape: f32[1,256], index: 11, kind: input, shape index: {}, may-alias: {9,11}]
  %s12 = inlined_call_operand.vmem [shape: bf16[2,1600], index: 12, kind: input, shape index: {}]
  %s13 = inlined_call_operand.vmem [shape: bf16[256,128], index: 13, kind: input, shape index: {}]
  %s14 = inlined_call_operand.vmem [shape: f32[1,128], index: 14, kind: input, shape index: {}]
  %s15 = inlined_call_operand.hbm [shape: f32[2,128], index: 15, kind: output, shape index: {}]
  %s16 = sld [smem:[#allocation0]]
  $region70: #{_lambda_.1} parent=0
    _
  %s18 = ssub.s32 1, %s16
  %s19 = scalar_select 0, %s18, %s16
  $region1: #{_lambda_.1} parent=0
    #allocation2 [shape = 'u8[1024]{0}', space=vmem, size = 0x400, scoped, tag = 'output window, operand 0, single buffered']
    #allocation3 [shape = 's32[1]{0}', space=sflag, size = 0x4, scoped, tag = 'scoped memory for _lambda_.1']
    %20 = vsyncpa [#allocation3], 0
    // Predicated region
    $region2: #{_lambda_.1} parent=1 // pred_check
      _
    $region3: #{_lambda_.1} parent=1 // pred_check_branch
      %22 = sbr.rel (0) target = $region5
    $region4: #{_lambda_.1} parent=1 // pred_region
      _
    $region5: #{_lambda_.1} parent=1 // pred_fallthru
      _
    // Predicated region
    $region6: #{_lambda_.1} parent=1 // pred_check
      _
    $region7: #{_lambda_.1} parent=1 // pred_check_branch
      %24 = sbr.rel (0) target = $region9
    $region8: #{_lambda_.1} parent=1 // pred_region
      _
    $region9: #{_lambda_.1} parent=1 // pred_fallthru
      _
    // Predicated region
    $region10: #{_lambda_.1} parent=1 // pred_check
      _
    $region11: #{_lambda_.1} parent=1 // pred_check_branch
      %26 = sbr.rel (0) target = $region13
    $region12: #{_lambda_.1} parent=1 // pred_region
      _
    $region13: #{_lambda_.1} parent=1 // pred_fallthru
      _
    // Predicated region
    $region14: #{_lambda_.1} parent=1 // pred_check
      _
    $region15: #{_lambda_.1} parent=1 // pred_check_branch
      %28 = sbr.rel (0) target = $region17
    $region16: #{_lambda_.1} parent=1 // pred_region
      _
    $region17: #{_lambda_.1} parent=1 // pred_fallthru
      _
    // Predicated region
    $region18: #{_lambda_.1} parent=1 // pred_check
      _
    $region19: #{_lambda_.1} parent=1 // pred_check_branch
      %30 = sbr.rel (0) target = $region21
    $region20: #{_lambda_.1} parent=1 // pred_region
      _
    $region21: #{_lambda_.1} parent=1 // pred_fallthru
      _
    // Predicated region
    $region22: #{_lambda_.1} parent=1 // pred_check
      _
    $region23: #{_lambda_.1} parent=1 // pred_check_branch
      %32 = sbr.rel (0) target = $region25
    $region24: #{_lambda_.1} parent=1 // pred_region
      _
    $region25: #{_lambda_.1} parent=1 // pred_fallthru
      _
    // Predicated region
    $region26: #{_lambda_.1} parent=1 // pred_check
      _
    $region27: #{_lambda_.1} parent=1 // pred_check_branch
      %34 = sbr.rel (0) target = $region29
    $region28: #{_lambda_.1} parent=1 // pred_region
      _
    $region29: #{_lambda_.1} parent=1 // pred_fallthru
      _
    // Predicated region
    $region30: #{_lambda_.1} parent=1 // pred_check
      _
    $region31: #{_lambda_.1} parent=1 // pred_check_branch
      %36 = sbr.rel (0) target = $region33
    $region32: #{_lambda_.1} parent=1 // pred_region
      _
    $region33: #{_lambda_.1} parent=1 // pred_fallthru
      _
    // Predicated region
    $region34: #{_lambda_.1} parent=1 // pred_check
      _
    $region35: #{_lambda_.1} parent=1 // pred_check_branch
      %38 = sbr.rel (0) target = $region37
    $region36: #{_lambda_.1} parent=1 // pred_region
      _
    $region37: #{_lambda_.1} parent=1 // pred_fallthru
      _
    // Predicated region
    $region38: #{_lambda_.1} parent=1 // pred_check
      _
    $region39: #{_lambda_.1} parent=1 // pred_check_branch
      %40 = sbr.rel (0) target = $region41
    $region40: #{_lambda_.1} parent=1 // pred_region
      _
    $region41: #{_lambda_.1} parent=1 // pred_fallthru
      _
    // Predicated region
    $region42: #{_lambda_.1} parent=1 // pred_check
      _
    $region43: #{_lambda_.1} parent=1 // pred_check_branch
      %42 = sbr.rel (0) target = $region45
    $region44: #{_lambda_.1} parent=1 // pred_region
      _
    $region45: #{_lambda_.1} parent=1 // pred_fallthru
      _
    // Predicated region
    $region46: #{_lambda_.1} parent=1 // pred_check
      _
    $region47: #{_lambda_.1} parent=1 // pred_check_branch
      %44 = sbr.rel (0) target = $region49
    $region48: #{_lambda_.1} parent=1 // pred_region
      _
    $region49: #{_lambda_.1} parent=1 // pred_fallthru
      _
    // Predicated region
    $region50: #{_lambda_.1} parent=1 // pred_check
      _
    $region51: #{_lambda_.1} parent=1 // pred_check_branch
      %46 = sbr.rel (0) target = $region53
    $region52: #{_lambda_.1} parent=1 // pred_region
      _
    $region53: #{_lambda_.1} parent=1 // pred_fallthru
      _
    // Predicated region
    $region54: #{_lambda_.1} parent=1 // pred_check
      _
    $region55: #{_lambda_.1} parent=1 // pred_check_branch
      %48 = sbr.rel (0) target = $region57
    $region56: #{_lambda_.1} parent=1 // pred_region
      _
    $region57: #{_lambda_.1} parent=1 // pred_fallthru
      _
    // Predicated region
    $region58: #{_lambda_.1} parent=1 // pred_check
      _
    $region59: #{_lambda_.1} parent=1 // pred_check_branch
      %50 = sbr.rel (0) target = $region61
    $region60: #{_lambda_.1} parent=1 // pred_region
      _
    $region61: #{_lambda_.1} parent=1 // pred_fallthru
      _
    %v52 = vld [vmem:[%s0] sm:$0xf]
    %v53 = vld [vmem:[%s0 + $0x4] sm:$0xf]
    %v54 = vld [vmem:[%s0 + $0x8] sm:$0xf]
    %v55 = vld [vmem:[%s0 + $0xc] sm:$0xf]
    %v56 = vld [vmem:[%s0 + $0x10] sm:$0xf]
    %v57 = vld [vmem:[%s0 + $0x14] sm:$0xf]
    %v58 = vld [vmem:[%s0 + $0x18] sm:$0xf]
    %v59 = vld [vmem:[%s0 + $0x1c] sm:$0xf]
    %v60 = vld [vmem:[%s0 + $0x20] sm:$0xf]
    %v61 = vld [vmem:[%s0 + $0x24] sm:$0xf]
    %v62 = vld [vmem:[%s0 + $0x28] sm:$0xf]
    %v63 = vld [vmem:[%s0 + $0x2c] sm:$0xf]
    %v64 = vld [vmem:[%s0 + $0x30] sm:$0xf]
    %v65 = vld [vmem:[%s0 + $0x34] sm:$0xf]
    %v66 = vld [vmem:[%s0 + $0x38] sm:$0xf]
    %v67 = vld [vmem:[%s0 + $0x3c] sm:$0xf]
    %v68 = vld [vmem:[%s0 + $0x40] sm:$0xf]
    %v69 = vld [vmem:[%s0 + $0x44] sm:$0xf]
    %v70 = vld [vmem:[%s0 + $0x48] sm:$0xf]
    %v71 = vld [vmem:[%s0 + $0x4c] sm:$0xf]
    %v72 = vld [vmem:[%s0 + $0x50] sm:$0xf]
    %v73 = vld [vmem:[%s0 + $0x54] sm:$0xf]
    %v74 = vld [vmem:[%s0 + $0x58] sm:$0xf]
    %v75 = vld [vmem:[%s0 + $0x5c] sm:$0xf]
    %v76 = vld [vmem:[%s0 + $0x60] sm:$0xf]
    %v77 = vld [vmem:[%s0 + $0x64] sm:$0xf]
    %v78 = vld [vmem:[%s0 + $0x68] sm:$0xf]
    %v79 = vld [vmem:[%s0 + $0x6c] sm:$0xf]
    %v80 = vld [vmem:[%s0 + $0x70] sm:$0xf]
    %v81 = vld [vmem:[%s0 + $0x74] sm:$0xf]
    %v82 = vld [vmem:[%s0 + $0x78] sm:$0xf]
    %v83 = vld [vmem:[%s0 + $0x7c] sm:$0xf]
    %v84 = vld [vmem:[%s0 + $0x80] sm:$0xf]
    %v85 = vld [vmem:[%s0 + $0x84] sm:$0xf]
    %v86 = vld [vmem:[%s0 + $0x88] sm:$0xf]
    %v87 = vld [vmem:[%s0 + $0x8c] sm:$0xf]
    %v88 = vld [vmem:[%s0 + $0x90] sm:$0xf]
    %v89 = vld [vmem:[%s0 + $0x94] sm:$0xf]
    %v90 = vld [vmem:[%s0 + $0x98] sm:$0xf]
    %v91 = vld [vmem:[%s0 + $0x9c] sm:$0xf]
    %v92 = vld [vmem:[%s0 + $0xa0] sm:$0xf]
    %v93 = vld [vmem:[%s0 + $0xa4] sm:$0xf]
    %v94 = vld [vmem:[%s0 + $0xa8] sm:$0xf]
    %v95 = vld [vmem:[%s0 + $0xac] sm:$0xf]
    %v96 = vld [vmem:[%s0 + $0xb0] sm:$0xf]
    %v97 = vld [vmem:[%s0 + $0xb4] sm:$0xf]
    %v98 = vld [vmem:[%s0 + $0xb8] sm:$0xf]
    %v99 = vld [vmem:[%s0 + $0xbc] sm:$0xf]
    %v100 = vld [vmem:[%s0 + $0xc0] sm:$0xf]
    %v101 = vld [vmem:[%s0 + $0xc4] sm:$0xf]
    %v102 = vld [vmem:[%s0 + $0xc8] sm:$0xf]
    %v103 = vld [vmem:[%s0 + $0xcc] sm:$0xf]
    %v104 = vld [vmem:[%s0 + $0xd0] sm:$0xf]
    %v105 = vld [vmem:[%s0 + $0xd4] sm:$0xf]
    %v106 = vld [vmem:[%s0 + $0xd8] sm:$0xf]
    %v107 = vld [vmem:[%s0 + $0xdc] sm:$0xf]
    %v108 = vld [vmem:[%s0 + $0xe0] sm:$0xf]
    %v109 = vld [vmem:[%s0 + $0xe4] sm:$0xf]
    %v110 = vld [vmem:[%s0 + $0xe8] sm:$0xf]
    %v111 = vld [vmem:[%s0 + $0xec] sm:$0xf]
    %v112 = vld [vmem:[%s0 + $0xf0] sm:$0xf]
    %v113 = vld [vmem:[%s0 + $0xf4] sm:$0xf]
    %v114 = vld [vmem:[%s0 + $0xf8] sm:$0xf]
    %v115 = vld [vmem:[%s0 + $0xfc] sm:$0xf]
    %v116 = vld [vmem:[%s0 + $0x100] sm:$0xf]
    %v117 = vld [vmem:[%s0 + $0x104] sm:$0xf]
    %v118 = vld [vmem:[%s0 + $0x108] sm:$0xf]
    %v119 = vld [vmem:[%s0 + $0x10c] sm:$0xf]
    %v120 = vld [vmem:[%s0 + $0x110] sm:$0xf]
    %v121 = vld [vmem:[%s0 + $0x114] sm:$0xf]
    %v122 = vld [vmem:[%s0 + $0x118] sm:$0xf]
    %v123 = vld [vmem:[%s0 + $0x11c] sm:$0xf]
    %v124 = vld [vmem:[%s0 + $0x120] sm:$0xf]
    %v125 = vld [vmem:[%s0 + $0x124] sm:$0xf]
    %v126 = vld [vmem:[%s0 + $0x128] sm:$0xf]
    %v127 = vld [vmem:[%s0 + $0x12c] sm:$0xf]
    %v128 = vld [vmem:[%s0 + $0x130] sm:$0xf]
    %v129 = vld [vmem:[%s0 + $0x134] sm:$0xf]
    %v130 = vld [vmem:[%s0 + $0x138] sm:$0xf]
    %v131 = vld [vmem:[%s0 + $0x13c] sm:$0xf]
    %v132 = vld [vmem:[%s0 + $0x140] sm:$0xf]
    %v133 = vld [vmem:[%s0 + $0x144] sm:$0xf]
    %v134 = vld [vmem:[%s0 + $0x148] sm:$0xf]
    %v135 = vld [vmem:[%s0 + $0x14c] sm:$0xf]
    %v136 = vld [vmem:[%s0 + $0x150] sm:$0xf]
    %v137 = vld [vmem:[%s0 + $0x154] sm:$0xf]
    %v138 = vld [vmem:[%s0 + $0x158] sm:$0xf]
    %v139 = vld [vmem:[%s0 + $0x15c] sm:$0xf]
    %v140 = vld [vmem:[%s0 + $0x160] sm:$0xf]
    %v141 = vld [vmem:[%s0 + $0x164] sm:$0xf]
    %v142 = vld [vmem:[%s0 + $0x168] sm:$0xf]
    %v143 = vld [vmem:[%s0 + $0x16c] sm:$0xf]
    %v144 = vld [vmem:[%s0 + $0x170] sm:$0xf]
    %v145 = vld [vmem:[%s0 + $0x174] sm:$0xf]
    %v146 = vld [vmem:[%s0 + $0x178] sm:$0xf]
    %v147 = vld [vmem:[%s0 + $0x17c] sm:$0xf]
    %v148 = vld [vmem:[%s0 + $0x180] sm:$0xf]
    %v149 = vld [vmem:[%s0 + $0x184] sm:$0xf]
    %v150 = vld [vmem:[%s0 + $0x188] sm:$0xf]
    %v151 = vld [vmem:[%s0 + $0x18c] sm:$0xf]
    %v152 = vld [vmem:[%s0 + $0x190] sm:$0xf]
    %v153 = vld [vmem:[%s0 + $0x194] sm:$0xf]
    %v154 = vld [vmem:[%s0 + $0x198] sm:$0xf]
    %v155 = vld [vmem:[%s0 + $0x19c] sm:$0xf]
    %v156 = vld [vmem:[%s0 + $0x1a0] sm:$0xf]
    %v157 = vld [vmem:[%s0 + $0x1a4] sm:$0xf]
    %v158 = vld [vmem:[%s0 + $0x1a8] sm:$0xf]
    %v159 = vld [vmem:[%s0 + $0x1ac] sm:$0xf]
    %v160 = vld [vmem:[%s0 + $0x1b0] sm:$0xf]
    %v161 = vld [vmem:[%s0 + $0x1b4] sm:$0xf]
    %v162 = vld [vmem:[%s0 + $0x1b8] sm:$0xf]
    %v163 = vld [vmem:[%s0 + $0x1bc] sm:$0xf]
    %v164 = vld [vmem:[%s0 + $0x1c0] sm:$0xf]
    %v165 = vld [vmem:[%s0 + $0x1c4] sm:$0xf]
    %v166 = vld [vmem:[%s0 + $0x1c8] sm:$0xf]
    %v167 = vld [vmem:[%s0 + $0x1cc] sm:$0xf]
    %v168 = vld [vmem:[%s0 + $0x1d0] sm:$0xf]
    %v169 = vld [vmem:[%s0 + $0x1d4] sm:$0xf]
    %v170 = vld [vmem:[%s0 + $0x1d8] sm:$0xf]
    %v171 = vld [vmem:[%s0 + $0x1dc] sm:$0xf]
    %v172 = vld [vmem:[%s0 + $0x1e0] sm:$0xf]
    %v173 = vld [vmem:[%s0 + $0x1e4] sm:$0xf]
    %v174 = vld [vmem:[%s0 + $0x1e8] sm:$0xf]
    %v175 = vld [vmem:[%s0 + $0x1ec] sm:$0xf]
    %v176 = vld [vmem:[%s0 + $0x1f0] sm:$0xf]
    %v177 = vld [vmem:[%s0 + $0x1f4] sm:$0xf]
    %v178 = vld [vmem:[%s0 + $0x1f8] sm:$0xf]
    %v179 = vld [vmem:[%s0 + $0x1fc] sm:$0xf]
    %v180 = vld [vmem:[%s0 + $0x200] sm:$0xf]
    %v181 = vld [vmem:[%s0 + $0x204] sm:$0xf]
    %v182 = vld [vmem:[%s0 + $0x208] sm:$0xf]
    %v183 = vld [vmem:[%s0 + $0x20c] sm:$0xf]
    %v184 = vld [vmem:[%s0 + $0x210] sm:$0xf]
    %v185 = vld [vmem:[%s0 + $0x214] sm:$0xf]
    %v186 = vld [vmem:[%s0 + $0x218] sm:$0xf]
    %v187 = vld [vmem:[%s0 + $0x21c] sm:$0xf]
    %v188 = vld [vmem:[%s0 + $0x220] sm:$0xf]
    %v189 = vld [vmem:[%s0 + $0x224] sm:$0xf]
    %v190 = vld [vmem:[%s0 + $0x228] sm:$0xf]
    %v191 = vld [vmem:[%s0 + $0x22c] sm:$0xf]
    %v192 = vld [vmem:[%s0 + $0x230] sm:$0xf]
    %v193 = vld [vmem:[%s0 + $0x234] sm:$0xf]
    %v194 = vld [vmem:[%s0 + $0x238] sm:$0xf]
    %v195 = vld [vmem:[%s0 + $0x23c] sm:$0xf]
    %v196 = vld [vmem:[%s0 + $0x240] sm:$0xf]
    %v197 = vld [vmem:[%s0 + $0x244] sm:$0xf]
    %v198 = vld [vmem:[%s0 + $0x248] sm:$0xf]
    %v199 = vld [vmem:[%s0 + $0x24c] sm:$0xf]
    %v200 = vld [vmem:[%s0 + $0x250] sm:$0xf]
    %v201 = vld [vmem:[%s0 + $0x254] sm:$0xf]
    %v202 = vld [vmem:[%s0 + $0x258] sm:$0xf]
    %v203 = vld [vmem:[%s0 + $0x25c] sm:$0xf]
    %v204 = vld [vmem:[%s0 + $0x260] sm:$0xf]
    %v205 = vld [vmem:[%s0 + $0x264] sm:$0xf]
    %v206 = vld [vmem:[%s0 + $0x268] sm:$0xf]
    %v207 = vld [vmem:[%s0 + $0x26c] sm:$0xf]
    %v208 = vld [vmem:[%s0 + $0x270] sm:$0xf]
    %v209 = vld [vmem:[%s0 + $0x274] sm:$0xf]
    %v210 = vld [vmem:[%s0 + $0x278] sm:$0xf]
    %v211 = vld [vmem:[%s0 + $0x27c] sm:$0xf]
    %v212 = vld [vmem:[%s0 + $0x280] sm:$0xf]
    %v213 = vld [vmem:[%s0 + $0x284] sm:$0xf]
    %v214 = vld [vmem:[%s0 + $0x288] sm:$0xf]
    %v215 = vld [vmem:[%s0 + $0x28c] sm:$0xf]
    %v216 = vld [vmem:[%s0 + $0x290] sm:$0xf]
    %v217 = vld [vmem:[%s0 + $0x294] sm:$0xf]
    %v218 = vld [vmem:[%s0 + $0x298] sm:$0xf]
    %v219 = vld [vmem:[%s0 + $0x29c] sm:$0xf]
    %v220 = vld [vmem:[%s0 + $0x2a0] sm:$0xf]
    %v221 = vld [vmem:[%s0 + $0x2a4] sm:$0xf]
    %v222 = vld [vmem:[%s0 + $0x2a8] sm:$0xf]
    %v223 = vld [vmem:[%s0 + $0x2ac] sm:$0xf]
    %v224 = vld [vmem:[%s0 + $0x2b0] sm:$0xf]
    %v225 = vld [vmem:[%s0 + $0x2b4] sm:$0xf]
    %v226 = vld [vmem:[%s0 + $0x2b8] sm:$0xf]
    %v227 = vld [vmem:[%s0 + $0x2bc] sm:$0xf]
    %v228 = vld [vmem:[%s0 + $0x2c0] sm:$0xf]
    %v229 = vld [vmem:[%s0 + $0x2c4] sm:$0xf]
    %v230 = vld [vmem:[%s0 + $0x2c8] sm:$0xf]
    %v231 = vld [vmem:[%s0 + $0x2cc] sm:$0xf]
    %v232 = vld [vmem:[%s0 + $0x2d0] sm:$0xf]
    %v233 = vld [vmem:[%s0 + $0x2d4] sm:$0xf]
    %v234 = vld [vmem:[%s0 + $0x2d8] sm:$0xf]
    %v235 = vld [vmem:[%s0 + $0x2dc] sm:$0xf]
    %v236 = vld [vmem:[%s0 + $0x2e0] sm:$0xf]
    %v237 = vld [vmem:[%s0 + $0x2e4] sm:$0xf]
    %v238 = vld [vmem:[%s0 + $0x2e8] sm:$0xf]
    %v239 = vld [vmem:[%s0 + $0x2ec] sm:$0xf]
    %v240 = vld [vmem:[%s0 + $0x2f0] sm:$0xf]
    %v241 = vld [vmem:[%s0 + $0x2f4] sm:$0xf]
    %v242 = vld [vmem:[%s0 + $0x2f8] sm:$0xf]
    %v243 = vld [vmem:[%s0 + $0x2fc] sm:$0xf]
    %v244 = vld [vmem:[%s0 + $0x300] sm:$0xf]
    %v245 = vld [vmem:[%s0 + $0x304] sm:$0xf]
    %v246 = vld [vmem:[%s0 + $0x308] sm:$0xf]
    %v247 = vld [vmem:[%s0 + $0x30c] sm:$0xf]
    %v248 = vld [vmem:[%s0 + $0x310] sm:$0xf]
    %v249 = vld [vmem:[%s0 + $0x314] sm:$0xf]
    %v250 = vld [vmem:[%s0 + $0x318] sm:$0xf]
    %v251 = vld [vmem:[%s0 + $0x31c] sm:$0xf]
    %v252 = vld [vmem:[%s2] sm:$0xf]
    %v253 = vld [vmem:[%s3] sm:$0x1]
    %v255 = vlaneseq
    %v256 = vshrl.u32 %v255, 7
    %v257 = vsub.s32 0, %v256
    %v258 = vrot.slane %v253, %v257
    %v460 = vunpack.c.l.b16 %v52
    %v461 = vunpack.c.l.b16 %v53
    %v462 = vunpack.c.l.b16 %v54
    %v463 = vunpack.c.l.b16 %v55
    %v464 = vunpack.c.l.b16 %v56
    %v465 = vunpack.c.l.b16 %v57
    %v466 = vunpack.c.l.b16 %v58
    %v467 = vunpack.c.l.b16 %v59
    %v468 = vunpack.c.l.b16 %v60
    %v469 = vunpack.c.l.b16 %v61
    %v470 = vunpack.c.l.b16 %v62
    %v471 = vunpack.c.l.b16 %v63
    %v472 = vunpack.c.l.b16 %v64
    %v473 = vunpack.c.l.b16 %v65
    %v474 = vunpack.c.l.b16 %v66
    %v475 = vunpack.c.l.b16 %v67
    %v476 = vunpack.c.l.b16 %v68
    %v477 = vunpack.c.l.b16 %v69
    %v478 = vunpack.c.l.b16 %v70
    %v479 = vunpack.c.l.b16 %v71
    %v480 = vunpack.c.l.b16 %v72
    %v481 = vunpack.c.l.b16 %v73
    %v482 = vunpack.c.l.b16 %v74
    %v483 = vunpack.c.l.b16 %v75
    %v484 = vunpack.c.l.b16 %v76
    %v485 = vunpack.c.l.b16 %v77
    %v486 = vunpack.c.l.b16 %v78
    %v487 = vunpack.c.l.b16 %v79
    %v488 = vunpack.c.l.b16 %v80
    %v489 = vunpack.c.l.b16 %v81
    %v490 = vunpack.c.l.b16 %v82
    %v491 = vunpack.c.l.b16 %v83
    %v492 = vunpack.c.l.b16 %v84
    %v493 = vunpack.c.l.b16 %v85
    %v494 = vunpack.c.l.b16 %v86
    %v495 = vunpack.c.l.b16 %v87
    %v496 = vunpack.c.l.b16 %v88
    %v497 = vunpack.c.l.b16 %v89
    %v498 = vunpack.c.l.b16 %v90
    %v499 = vunpack.c.l.b16 %v91
    %v500 = vunpack.c.l.b16 %v92
    %v501 = vunpack.c.l.b16 %v93
    %v502 = vunpack.c.l.b16 %v94
    %v503 = vunpack.c.l.b16 %v95
    %v504 = vunpack.c.l.b16 %v96
    %v505 = vunpack.c.l.b16 %v97
    %v506 = vunpack.c.l.b16 %v98
    %v507 = vunpack.c.l.b16 %v99
    %v508 = vunpack.c.l.b16 %v100
    %v509 = vunpack.c.l.b16 %v101
    %v510 = vunpack.c.l.b16 %v102
    %v511 = vunpack.c.l.b16 %v103
    %v512 = vunpack.c.l.b16 %v104
    %v513 = vunpack.c.l.b16 %v105
    %v514 = vunpack.c.l.b16 %v106
    %v515 = vunpack.c.l.b16 %v107
    %v516 = vunpack.c.l.b16 %v108
    %v517 = vunpack.c.l.b16 %v109
    %v518 = vunpack.c.l.b16 %v110
    %v519 = vunpack.c.l.b16 %v111
    %v520 = vunpack.c.l.b16 %v112
    %v521 = vunpack.c.l.b16 %v113
    %v522 = vunpack.c.l.b16 %v114
    %v523 = vunpack.c.l.b16 %v115
    %v524 = vunpack.c.l.b16 %v116
    %v525 = vunpack.c.l.b16 %v117
    %v526 = vunpack.c.l.b16 %v118
    %v527 = vunpack.c.l.b16 %v119
    %v528 = vunpack.c.l.b16 %v120
    %v529 = vunpack.c.l.b16 %v121
    %v530 = vunpack.c.l.b16 %v122
    %v531 = vunpack.c.l.b16 %v123
    %v532 = vunpack.c.l.b16 %v124
    %v533 = vunpack.c.l.b16 %v125
    %v534 = vunpack.c.l.b16 %v126
    %v535 = vunpack.c.l.b16 %v127
    %v536 = vunpack.c.l.b16 %v128
    %v537 = vunpack.c.l.b16 %v129
    %v538 = vunpack.c.l.b16 %v130
    %v539 = vunpack.c.l.b16 %v131
    %v540 = vunpack.c.l.b16 %v132
    %v541 = vunpack.c.l.b16 %v133
    %v542 = vunpack.c.l.b16 %v134
    %v543 = vunpack.c.l.b16 %v135
    %v544 = vunpack.c.l.b16 %v136
    %v545 = vunpack.c.l.b16 %v137
    %v546 = vunpack.c.l.b16 %v138
    %v547 = vunpack.c.l.b16 %v139
    %v548 = vunpack.c.l.b16 %v140
    %v549 = vunpack.c.l.b16 %v141
    %v550 = vunpack.c.l.b16 %v142
    %v551 = vunpack.c.l.b16 %v143
    %v552 = vunpack.c.l.b16 %v144
    %v553 = vunpack.c.l.b16 %v145
    %v554 = vunpack.c.l.b16 %v146
    %v555 = vunpack.c.l.b16 %v147
    %v556 = vunpack.c.l.b16 %v148
    %v557 = vunpack.c.l.b16 %v149
    %v558 = vunpack.c.l.b16 %v150
    %v559 = vunpack.c.l.b16 %v151
    %v560 = vunpack.c.l.b16 %v152
    %v561 = vunpack.c.l.b16 %v153
    %v562 = vunpack.c.l.b16 %v154
    %v563 = vunpack.c.l.b16 %v155
    %v564 = vunpack.c.l.b16 %v156
    %v565 = vunpack.c.l.b16 %v157
    %v566 = vunpack.c.l.b16 %v158
    %v567 = vunpack.c.l.b16 %v159
    %v568 = vunpack.c.l.b16 %v160
    %v569 = vunpack.c.l.b16 %v161
    %v570 = vunpack.c.l.b16 %v162
    %v571 = vunpack.c.l.b16 %v163
    %v572 = vunpack.c.l.b16 %v164
    %v573 = vunpack.c.l.b16 %v165
    %v574 = vunpack.c.l.b16 %v166
    %v575 = vunpack.c.l.b16 %v167
    %v576 = vunpack.c.l.b16 %v168
    %v577 = vunpack.c.l.b16 %v169
    %v578 = vunpack.c.l.b16 %v170
    %v579 = vunpack.c.l.b16 %v171
    %v580 = vunpack.c.l.b16 %v172
    %v581 = vunpack.c.l.b16 %v173
    %v582 = vunpack.c.l.b16 %v174
    %v583 = vunpack.c.l.b16 %v175
    %v584 = vunpack.c.l.b16 %v176
    %v585 = vunpack.c.l.b16 %v177
    %v586 = vunpack.c.l.b16 %v178
    %v587 = vunpack.c.l.b16 %v179
    %v588 = vunpack.c.l.b16 %v180
    %v589 = vunpack.c.l.b16 %v181
    %v590 = vunpack.c.l.b16 %v182
    %v591 = vunpack.c.l.b16 %v183
    %v592 = vunpack.c.l.b16 %v184
    %v593 = vunpack.c.l.b16 %v185
    %v594 = vunpack.c.l.b16 %v186
    %v595 = vunpack.c.l.b16 %v187
    %v596 = vunpack.c.l.b16 %v188
    %v597 = vunpack.c.l.b16 %v189
    %v598 = vunpack.c.l.b16 %v190
    %v599 = vunpack.c.l.b16 %v191
    %v600 = vunpack.c.l.b16 %v192
    %v601 = vunpack.c.l.b16 %v193
    %v602 = vunpack.c.l.b16 %v194
    %v603 = vunpack.c.l.b16 %v195
    %v604 = vunpack.c.l.b16 %v196
    %v605 = vunpack.c.l.b16 %v197
    %v606 = vunpack.c.l.b16 %v198
    %v607 = vunpack.c.l.b16 %v199
    %v608 = vunpack.c.l.b16 %v200
    %v609 = vunpack.c.l.b16 %v201
    %v610 = vunpack.c.l.b16 %v202
    %v611 = vunpack.c.l.b16 %v203
    %v612 = vunpack.c.l.b16 %v204
    %v613 = vunpack.c.l.b16 %v205
    %v614 = vunpack.c.l.b16 %v206
    %v615 = vunpack.c.l.b16 %v207
    %v616 = vunpack.c.l.b16 %v208
    %v617 = vunpack.c.l.b16 %v209
    %v618 = vunpack.c.l.b16 %v210
    %v619 = vunpack.c.l.b16 %v211
    %v620 = vunpack.c.l.b16 %v212
    %v621 = vunpack.c.l.b16 %v213
    %v622 = vunpack.c.l.b16 %v214
    %v623 = vunpack.c.l.b16 %v215
    %v624 = vunpack.c.l.b16 %v216
    %v625 = vunpack.c.l.b16 %v217
    %v626 = vunpack.c.l.b16 %v218
    %v627 = vunpack.c.l.b16 %v219
    %v628 = vunpack.c.l.b16 %v220
    %v629 = vunpack.c.l.b16 %v221
    %v630 = vunpack.c.l.b16 %v222
    %v631 = vunpack.c.l.b16 %v223
    %v632 = vunpack.c.l.b16 %v224
    %v633 = vunpack.c.l.b16 %v225
    %v634 = vunpack.c.l.b16 %v226
    %v635 = vunpack.c.l.b16 %v227
    %v636 = vunpack.c.l.b16 %v228
    %v637 = vunpack.c.l.b16 %v229
    %v638 = vunpack.c.l.b16 %v230
    %v639 = vunpack.c.l.b16 %v231
    %v640 = vunpack.c.l.b16 %v232
    %v641 = vunpack.c.l.b16 %v233
    %v642 = vunpack.c.l.b16 %v234
    %v643 = vunpack.c.l.b16 %v235
    %v644 = vunpack.c.l.b16 %v236
    %v645 = vunpack.c.l.b16 %v237
    %v646 = vunpack.c.l.b16 %v238
    %v647 = vunpack.c.l.b16 %v239
    %v648 = vunpack.c.l.b16 %v240
    %v649 = vunpack.c.l.b16 %v241
    %v650 = vunpack.c.l.b16 %v242
    %v651 = vunpack.c.l.b16 %v243
    %v652 = vunpack.c.l.b16 %v244
    %v653 = vunpack.c.l.b16 %v245
    %v654 = vunpack.c.l.b16 %v246
    %v655 = vunpack.c.l.b16 %v247
    %v656 = vunpack.c.l.b16 %v248
    %v657 = vunpack.c.l.b16 %v249
    %v658 = vunpack.c.l.b16 %v250
    %v659 = vunpack.c.l.b16 %v251
    %v660 = vpack.c.b16 %v461, %v460
    %v661 = vpack.c.b16 %v463, %v462
    %v662 = vpack.c.b16 %v465, %v464
    %v663 = vpack.c.b16 %v467, %v466
    %v664 = vpack.c.b16 %v469, %v468
    %v665 = vpack.c.b16 %v471, %v470
    %v666 = vpack.c.b16 %v473, %v472
    %v667 = vpack.c.b16 %v475, %v474
    %v668 = vpack.c.b16 %v477, %v476
    %v669 = vpack.c.b16 %v479, %v478
    %v670 = vpack.c.b16 %v481, %v480
    %v671 = vpack.c.b16 %v483, %v482
    %v672 = vpack.c.b16 %v485, %v484
    %v673 = vpack.c.b16 %v487, %v486
    %v674 = vpack.c.b16 %v489, %v488
    %v675 = vpack.c.b16 %v491, %v490
    %v676 = vpack.c.b16 %v493, %v492
    %v677 = vpack.c.b16 %v495, %v494
    %v678 = vpack.c.b16 %v497, %v496
    %v679 = vpack.c.b16 %v499, %v498
    %v680 = vpack.c.b16 %v501, %v500
    %v681 = vpack.c.b16 %v503, %v502
    %v682 = vpack.c.b16 %v505, %v504
    %v683 = vpack.c.b16 %v507, %v506
    %v684 = vpack.c.b16 %v509, %v508
    %v685 = vpack.c.b16 %v511, %v510
    %v686 = vpack.c.b16 %v513, %v512
    %v687 = vpack.c.b16 %v515, %v514
    %v688 = vpack.c.b16 %v517, %v516
    %v689 = vpack.c.b16 %v519, %v518
    %v690 = vpack.c.b16 %v521, %v520
    %v691 = vpack.c.b16 %v523, %v522
    %v692 = vpack.c.b16 %v525, %v524
    %v693 = vpack.c.b16 %v527, %v526
    %v694 = vpack.c.b16 %v529, %v528
    %v695 = vpack.c.b16 %v531, %v530
    %v696 = vpack.c.b16 %v533, %v532
    %v697 = vpack.c.b16 %v535, %v534
    %v698 = vpack.c.b16 %v537, %v536
    %v699 = vpack.c.b16 %v539, %v538
    %v700 = vpack.c.b16 %v541, %v540
    %v701 = vpack.c.b16 %v543, %v542
    %v702 = vpack.c.b16 %v545, %v544
    %v703 = vpack.c.b16 %v547, %v546
    %v704 = vpack.c.b16 %v549, %v548
    %v705 = vpack.c.b16 %v551, %v550
    %v706 = vpack.c.b16 %v553, %v552
    %v707 = vpack.c.b16 %v555, %v554
    %v708 = vpack.c.b16 %v557, %v556
    %v709 = vpack.c.b16 %v559, %v558
    %v710 = vpack.c.b16 %v561, %v560
    %v711 = vpack.c.b16 %v563, %v562
    %v712 = vpack.c.b16 %v565, %v564
    %v713 = vpack.c.b16 %v567, %v566
    %v714 = vpack.c.b16 %v569, %v568
    %v715 = vpack.c.b16 %v571, %v570
    %v716 = vpack.c.b16 %v573, %v572
    %v717 = vpack.c.b16 %v575, %v574
    %v718 = vpack.c.b16 %v577, %v576
    %v719 = vpack.c.b16 %v579, %v578
    %v720 = vpack.c.b16 %v581, %v580
    %v721 = vpack.c.b16 %v583, %v582
    %v722 = vpack.c.b16 %v585, %v584
    %v723 = vpack.c.b16 %v587, %v586
    %v724 = vpack.c.b16 %v589, %v588
    %v725 = vpack.c.b16 %v591, %v590
    %v726 = vpack.c.b16 %v593, %v592
    %v727 = vpack.c.b16 %v595, %v594
    %v728 = vpack.c.b16 %v597, %v596
    %v729 = vpack.c.b16 %v599, %v598
    %v730 = vpack.c.b16 %v601, %v600
    %v731 = vpack.c.b16 %v603, %v602
    %v732 = vpack.c.b16 %v605, %v604
    %v733 = vpack.c.b16 %v607, %v606
    %v734 = vpack.c.b16 %v609, %v608
    %v735 = vpack.c.b16 %v611, %v610
    %v736 = vpack.c.b16 %v613, %v612
    %v737 = vpack.c.b16 %v615, %v614
    %v738 = vpack.c.b16 %v617, %v616
    %v739 = vpack.c.b16 %v619, %v618
    %v740 = vpack.c.b16 %v621, %v620
    %v741 = vpack.c.b16 %v623, %v622
    %v742 = vpack.c.b16 %v625, %v624
    %v743 = vpack.c.b16 %v627, %v626
    %v744 = vpack.c.b16 %v629, %v628
    %v745 = vpack.c.b16 %v631, %v630
    %v746 = vpack.c.b16 %v633, %v632
    %v747 = vpack.c.b16 %v635, %v634
    %v748 = vpack.c.b16 %v637, %v636
    %v749 = vpack.c.b16 %v639, %v638
    %v750 = vpack.c.b16 %v641, %v640
    %v751 = vpack.c.b16 %v643, %v642
    %v752 = vpack.c.b16 %v645, %v644
    %v753 = vpack.c.b16 %v647, %v646
    %v754 = vpack.c.b16 %v649, %v648
    %v755 = vpack.c.b16 %v651, %v650
    %v756 = vpack.c.b16 %v653, %v652
    %v757 = vpack.c.b16 %v655, %v654
    %v758 = vpack.c.b16 %v657, %v656
    %v759 = vpack.c.b16 %v659, %v658
    %vm760 = vcmask 64512
    %v762 = vsel %vm760, %v660, 0
    %v765 = vsel %vm760, %v661, 0
    %v768 = vsel %vm760, %v662, 0
    %v771 = vsel %vm760, %v663, 0
    %v774 = vsel %vm760, %v664, 0
    %v777 = vsel %vm760, %v665, 0
    %v780 = vsel %vm760, %v666, 0
    %v783 = vsel %vm760, %v667, 0
    %v786 = vsel %vm760, %v668, 0
    %v789 = vsel %vm760, %v669, 0
    %v792 = vsel %vm760, %v670, 0
    %v795 = vsel %vm760, %v671, 0
    %v798 = vsel %vm760, %v672, 0
    %v801 = vsel %vm760, %v673, 0
    %v804 = vsel %vm760, %v674, 0
    %v807 = vsel %vm760, %v675, 0
    %v810 = vsel %vm760, %v676, 0
    %v813 = vsel %vm760, %v677, 0
    %v816 = vsel %vm760, %v678, 0
    %v819 = vsel %vm760, %v679, 0
    %v822 = vsel %vm760, %v680, 0
    %v825 = vsel %vm760, %v681, 0
    %v828 = vsel %vm760, %v682, 0
    %v831 = vsel %vm760, %v683, 0
    %v834 = vsel %vm760, %v684, 0
    %v837 = vsel %vm760, %v685, 0
    %v840 = vsel %vm760, %v686, 0
    %v843 = vsel %vm760, %v687, 0
    %v846 = vsel %vm760, %v688, 0
    %v849 = vsel %vm760, %v689, 0
    %v852 = vsel %vm760, %v690, 0
    %v855 = vsel %vm760, %v691, 0
    %v858 = vsel %vm760, %v692, 0
    %v861 = vsel %vm760, %v693, 0
    %v864 = vsel %vm760, %v694, 0
    %v867 = vsel %vm760, %v695, 0
    %v870 = vsel %vm760, %v696, 0
    %v873 = vsel %vm760, %v697, 0
    %v876 = vsel %vm760, %v698, 0
    %v879 = vsel %vm760, %v699, 0
    %v882 = vsel %vm760, %v700, 0
    %v885 = vsel %vm760, %v701, 0
    %v888 = vsel %vm760, %v702, 0
    %v891 = vsel %vm760, %v703, 0
    %v894 = vsel %vm760, %v704, 0
    %v897 = vsel %vm760, %v705, 0
    %v900 = vsel %vm760, %v706, 0
    %v903 = vsel %vm760, %v707, 0
    %v906 = vsel %vm760, %v708, 0
    %v909 = vsel %vm760, %v709, 0
    %v912 = vsel %vm760, %v710, 0
    %v915 = vsel %vm760, %v711, 0
    %v918 = vsel %vm760, %v712, 0
    %v921 = vsel %vm760, %v713, 0
    %v924 = vsel %vm760, %v714, 0
    %v927 = vsel %vm760, %v715, 0
    %v930 = vsel %vm760, %v716, 0
    %v933 = vsel %vm760, %v717, 0
    %v936 = vsel %vm760, %v718, 0
    %v939 = vsel %vm760, %v719, 0
    %v942 = vsel %vm760, %v720, 0
    %v945 = vsel %vm760, %v721, 0
    %v948 = vsel %vm760, %v722, 0
    %v951 = vsel %vm760, %v723, 0
    %v954 = vsel %vm760, %v724, 0
    %v957 = vsel %vm760, %v725, 0
    %v960 = vsel %vm760, %v726, 0
    %v963 = vsel %vm760, %v727, 0
    %v966 = vsel %vm760, %v728, 0
    %v969 = vsel %vm760, %v729, 0
    %v972 = vsel %vm760, %v730, 0
    %v975 = vsel %vm760, %v731, 0
    %v978 = vsel %vm760, %v732, 0
    %v981 = vsel %vm760, %v733, 0
    %v984 = vsel %vm760, %v734, 0
    %v987 = vsel %vm760, %v735, 0
    %v990 = vsel %vm760, %v736, 0
    %v993 = vsel %vm760, %v737, 0
    %v996 = vsel %vm760, %v738, 0
    %v999 = vsel %vm760, %v739, 0
    %v1002 = vsel %vm760, %v740, 0
    %v1005 = vsel %vm760, %v741, 0
    %v1008 = vsel %vm760, %v742, 0
    %v1011 = vsel %vm760, %v743, 0
    %v1014 = vsel %vm760, %v744, 0
    %v1017 = vsel %vm760, %v745, 0
    %v1020 = vsel %vm760, %v746, 0
    %v1023 = vsel %vm760, %v747, 0
    %v1026 = vsel %vm760, %v748, 0
    %v1029 = vsel %vm760, %v749, 0
    %v1032 = vsel %vm760, %v750, 0
    %v1035 = vsel %vm760, %v751, 0
    %v1038 = vsel %vm760, %v752, 0
    %v1041 = vsel %vm760, %v753, 0
    %v1044 = vsel %vm760, %v754, 0
    %v1047 = vsel %vm760, %v755, 0
    %v1050 = vsel %vm760, %v756, 0
    %v1053 = vsel %vm760, %v757, 0
    %v1056 = vsel %vm760, %v758, 0
    %v1059 = vsel %vm760, %v759, 0
    %vm1061 = vcmask 1043456
    %v1063 = vsel %vm1061, %v252, 0
    %1065 = vmatprep.subr.bf16.mxu0 0
    %1066 = vmatpush1.bf16.msra.mxu0 0
    %1067 = vmatprep.subr.bf16.mxu0 0
    %1068 = vmatpush1.bf16.msra.mxu0 0
    %1069 = vmatprep.subr.bf16.mxu0 0
    %1070 = vmatpush1.bf16.msra.mxu0 0
    %1071 = vmatprep.subr.bf16.mxu0 0
    %1072 = vmatpush1.bf16.msra.mxu0 0
    %1073 = vmatprep.subr.bf16.mxu0 0
    %1074 = vmatpush1.bf16.msra.mxu0 0
    %1075 = vmatprep.subr.bf16.mxu0 0
    %1076 = vmatpush1.bf16.msra.mxu0 0
    %1077 = vmatprep.subr.bf16.mxu0 0
    %1078 = vmatpush1.bf16.msra.mxu0 0
    %1079 = vmatprep.subr.bf16.mxu0 0
    %1080 = vmatpush1.bf16.msra.mxu0 %v1063
    %1081 = vmatprep.subr.bf16.mxu0 0
    %1082 = vmatpush2.bf16.msra.mxu0 0
    %1083 = vmatprep.subr.bf16.mxu0 0
    %1084 = vmatpush2.bf16.msra.mxu0 0
    %1085 = vmatprep.subr.bf16.mxu0 0
    %1086 = vmatpush2.bf16.msra.mxu0 0
    %1087 = vmatprep.subr.bf16.mxu0 0
    %1088 = vmatpush2.bf16.msra.mxu0 0
    %1089 = vmatprep.subr.bf16.mxu0 0
    %1090 = vmatpush2.bf16.msra.mxu0 0
    %1091 = vmatprep.subr.bf16.mxu0 0
    %1092 = vmatpush2.bf16.msra.mxu0 0
    %1093 = vmatprep.subr.bf16.mxu0 0
    %1094 = vmatpush2.bf16.msra.mxu0 0
    %1095 = vmatprep.subr.bf16.mxu0 0
    %1096 = vmatpush2.bf16.msra.mxu0 0
    %1097 = vmatprep.mubr.bf16.mxu0 0
    %1098 = vmatmul.mubr.bf16.gmra.mxu0 %v762
    %v1099 = vpop.f32.mrf.mxu0
    %v1100 = vadd.f32 %v258, %v1099
    %v1101 = vpop.f32.mrf.mxu0
    %v1102 = vpop.f32.mrf.mxu0
    %v1103 = vadd.f32 %v258, %v1102
    %v1104 = vpop.f32.mrf.mxu0
    %1105 = vmatprep.mubr.bf16.mxu0 0
    %1106 = vmatmul.mubr.bf16.gmra.mxu0 %v765
    %v1107 = vpop.f32.mrf.mxu0
    %v1108 = vadd.f32 %v258, %v1107
    %v1109 = vpop.f32.mrf.mxu0
    %v1110 = vpop.f32.mrf.mxu0
    %v1111 = vadd.f32 %v258, %v1110
    %v1112 = vpop.f32.mrf.mxu0
    %1113 = vmatprep.mubr.bf16.mxu0 0
    %1114 = vmatmul.mubr.bf16.gmra.mxu0 %v768
    %v1115 = vpop.f32.mrf.mxu0
    %v1116 = vadd.f32 %v258, %v1115
    %v1117 = vpop.f32.mrf.mxu0
    %v1118 = vpop.f32.mrf.mxu0
    %v1119 = vadd.f32 %v258, %v1118
    %v1120 = vpop.f32.mrf.mxu0
    %1121 = vmatprep.mubr.bf16.mxu0 0
    %1122 = vmatmul.mubr.bf16.gmra.mxu0 %v771
    %v1123 = vpop.f32.mrf.mxu0
    %v1124 = vadd.f32 %v258, %v1123
    %v1125 = vpop.f32.mrf.mxu0
    %v1126 = vpop.f32.mrf.mxu0
    %v1127 = vadd.f32 %v258, %v1126
    %v1128 = vpop.f32.mrf.mxu0
    %1129 = vmatprep.mubr.bf16.mxu0 0
    %1130 = vmatmul.mubr.bf16.gmra.mxu0 %v774
    %v1131 = vpop.f32.mrf.mxu0
    %v1132 = vadd.f32 %v258, %v1131
    %v1133 = vpop.f32.mrf.mxu0
    %v1134 = vpop.f32.mrf.mxu0
    %v1135 = vadd.f32 %v258, %v1134
    %v1136 = vpop.f32.mrf.mxu0
    %1137 = vmatprep.mubr.bf16.mxu0 0
    %1138 = vmatmul.mubr.bf16.gmra.mxu0 %v777
    %v1139 = vpop.f32.mrf.mxu0
    %v1140 = vadd.f32 %v258, %v1139
    %v1141 = vpop.f32.mrf.mxu0
    %v1142 = vpop.f32.mrf.mxu0
    %v1143 = vadd.f32 %v258, %v1142
    %v1144 = vpop.f32.mrf.mxu0
    %1145 = vmatprep.mubr.bf16.mxu0 0
    %1146 = vmatmul.mubr.bf16.gmra.mxu0 %v780
    %v1147 = vpop.f32.mrf.mxu0
    %v1148 = vadd.f32 %v258, %v1147
    %v1149 = vpop.f32.mrf.mxu0
    %v1150 = vpop.f32.mrf.mxu0
    %v1151 = vadd.f32 %v258, %v1150
    %v1152 = vpop.f32.mrf.mxu0
    %1153 = vmatprep.mubr.bf16.mxu0 0
    %1154 = vmatmul.mubr.bf16.gmra.mxu0 %v783
    %v1155 = vpop.f32.mrf.mxu0
    %v1156 = vadd.f32 %v258, %v1155
    %v1157 = vpop.f32.mrf.mxu0
    %v1158 = vpop.f32.mrf.mxu0
    %v1159 = vadd.f32 %v258, %v1158
    %v1160 = vpop.f32.mrf.mxu0
    %1161 = vmatprep.mubr.bf16.mxu0 0
    %1162 = vmatmul.mubr.bf16.gmra.mxu0 %v786
    %v1163 = vpop.f32.mrf.mxu0
    %v1164 = vadd.f32 %v258, %v1163
    %v1165 = vpop.f32.mrf.mxu0
    %v1166 = vpop.f32.mrf.mxu0
    %v1167 = vadd.f32 %v258, %v1166
    %v1168 = vpop.f32.mrf.mxu0
    %1169 = vmatprep.mubr.bf16.mxu0 0
    %1170 = vmatmul.mubr.bf16.gmra.mxu0 %v789
    %v1171 = vpop.f32.mrf.mxu0
    %v1172 = vadd.f32 %v258, %v1171
    %v1173 = vpop.f32.mrf.mxu0
    %v1174 = vpop.f32.mrf.mxu0
    %v1175 = vadd.f32 %v258, %v1174
    %v1176 = vpop.f32.mrf.mxu0
    %1177 = vmatprep.mubr.bf16.mxu0 0
    %1178 = vmatmul.mubr.bf16.gmra.mxu0 %v792
    %v1179 = vpop.f32.mrf.mxu0
    %v1180 = vadd.f32 %v258, %v1179
    %v1181 = vpop.f32.mrf.mxu0
    %v1182 = vpop.f32.mrf.mxu0
    %v1183 = vadd.f32 %v258, %v1182
    %v1184 = vpop.f32.mrf.mxu0
    %1185 = vmatprep.mubr.bf16.mxu0 0
    %1186 = vmatmul.mubr.bf16.gmra.mxu0 %v795
    %v1187 = vpop.f32.mrf.mxu0
    %v1188 = vadd.f32 %v258, %v1187
    %v1189 = vpop.f32.mrf.mxu0
    %v1190 = vpop.f32.mrf.mxu0
    %v1191 = vadd.f32 %v258, %v1190
    %v1192 = vpop.f32.mrf.mxu0
    %1193 = vmatprep.mubr.bf16.mxu0 0
    %1194 = vmatmul.mubr.bf16.gmra.mxu0 %v798
    %v1195 = vpop.f32.mrf.mxu0
    %v1196 = vadd.f32 %v258, %v1195
    %v1197 = vpop.f32.mrf.mxu0
    %v1198 = vpop.f32.mrf.mxu0
    %v1199 = vadd.f32 %v258, %v1198
    %v1200 = vpop.f32.mrf.mxu0
    %1201 = vmatprep.mubr.bf16.mxu0 0
    %1202 = vmatmul.mubr.bf16.gmra.mxu0 %v801
    %v1203 = vpop.f32.mrf.mxu0
    %v1204 = vadd.f32 %v258, %v1203
    %v1205 = vpop.f32.mrf.mxu0
    %v1206 = vpop.f32.mrf.mxu0
    %v1207 = vadd.f32 %v258, %v1206
    %v1208 = vpop.f32.mrf.mxu0
    %1209 = vmatprep.mubr.bf16.mxu0 0
    %1210 = vmatmul.mubr.bf16.gmra.mxu0 %v804
    %v1211 = vpop.f32.mrf.mxu0
    %v1212 = vadd.f32 %v258, %v1211
    %v1213 = vpop.f32.mrf.mxu0
    %v1214 = vpop.f32.mrf.mxu0
    %v1215 = vadd.f32 %v258, %v1214
    %v1216 = vpop.f32.mrf.mxu0
    %1217 = vmatprep.mubr.bf16.mxu0 0
    %1218 = vmatmul.mubr.bf16.gmra.mxu0 %v807
    %v1219 = vpop.f32.mrf.mxu0
    %v1220 = vadd.f32 %v258, %v1219
    %v1221 = vpop.f32.mrf.mxu0
    %v1222 = vpop.f32.mrf.mxu0
    %v1223 = vadd.f32 %v258, %v1222
    %v1224 = vpop.f32.mrf.mxu0
    %1225 = vmatprep.mubr.bf16.mxu0 0
    %1226 = vmatmul.mubr.bf16.gmra.mxu0 %v810
    %v1227 = vpop.f32.mrf.mxu0
    %v1228 = vadd.f32 %v258, %v1227
    %v1229 = vpop.f32.mrf.mxu0
    %v1230 = vpop.f32.mrf.mxu0
    %v1231 = vadd.f32 %v258, %v1230
    %v1232 = vpop.f32.mrf.mxu0
    %1233 = vmatprep.mubr.bf16.mxu0 0
    %1234 = vmatmul.mubr.bf16.gmra.mxu0 %v813
    %v1235 = vpop.f32.mrf.mxu0
    %v1236 = vadd.f32 %v258, %v1235
    %v1237 = vpop.f32.mrf.mxu0
    %v1238 = vpop.f32.mrf.mxu0
    %v1239 = vadd.f32 %v258, %v1238
    %v1240 = vpop.f32.mrf.mxu0
    %1241 = vmatprep.mubr.bf16.mxu0 0
    %1242 = vmatmul.mubr.bf16.gmra.mxu0 %v816
    %v1243 = vpop.f32.mrf.mxu0
    %v1244 = vadd.f32 %v258, %v1243
    %v1245 = vpop.f32.mrf.mxu0
    %v1246 = vpop.f32.mrf.mxu0
    %v1247 = vadd.f32 %v258, %v1246
    %v1248 = vpop.f32.mrf.mxu0
    %1249 = vmatprep.mubr.bf16.mxu0 0
    %1250 = vmatmul.mubr.bf16.gmra.mxu0 %v819
    %v1251 = vpop.f32.mrf.mxu0
    %v1252 = vadd.f32 %v258, %v1251
    %v1253 = vpop.f32.mrf.mxu0
    %v1254 = vpop.f32.mrf.mxu0
    %v1255 = vadd.f32 %v258, %v1254
    %v1256 = vpop.f32.mrf.mxu0
    %1257 = vmatprep.mubr.bf16.mxu0 0
    %1258 = vmatmul.mubr.bf16.gmra.mxu0 %v822
    %v1259 = vpop.f32.mrf.mxu0
    %v1260 = vadd.f32 %v258, %v1259
    %v1261 = vpop.f32.mrf.mxu0
    %v1262 = vpop.f32.mrf.mxu0
    %v1263 = vadd.f32 %v258, %v1262
    %v1264 = vpop.f32.mrf.mxu0
    %1265 = vmatprep.mubr.bf16.mxu0 0
    %1266 = vmatmul.mubr.bf16.gmra.mxu0 %v825
    %v1267 = vpop.f32.mrf.mxu0
    %v1268 = vadd.f32 %v258, %v1267
    %v1269 = vpop.f32.mrf.mxu0
    %v1270 = vpop.f32.mrf.mxu0
    %v1271 = vadd.f32 %v258, %v1270
    %v1272 = vpop.f32.mrf.mxu0
    %1273 = vmatprep.mubr.bf16.mxu0 0
    %1274 = vmatmul.mubr.bf16.gmra.mxu0 %v828
    %v1275 = vpop.f32.mrf.mxu0
    %v1276 = vadd.f32 %v258, %v1275
    %v1277 = vpop.f32.mrf.mxu0
    %v1278 = vpop.f32.mrf.mxu0
    %v1279 = vadd.f32 %v258, %v1278
    %v1280 = vpop.f32.mrf.mxu0
    %1281 = vmatprep.mubr.bf16.mxu0 0
    %1282 = vmatmul.mubr.bf16.gmra.mxu0 %v831
    %v1283 = vpop.f32.mrf.mxu0
    %v1284 = vadd.f32 %v258, %v1283
    %v1285 = vpop.f32.mrf.mxu0
    %v1286 = vpop.f32.mrf.mxu0
    %v1287 = vadd.f32 %v258, %v1286
    %v1288 = vpop.f32.mrf.mxu0
    %1289 = vmatprep.mubr.bf16.mxu0 0
    %1290 = vmatmul.mubr.bf16.gmra.mxu0 %v834
    %v1291 = vpop.f32.mrf.mxu0
    %v1292 = vadd.f32 %v258, %v1291
    %v1293 = vpop.f32.mrf.mxu0
    %v1294 = vpop.f32.mrf.mxu0
    %v1295 = vadd.f32 %v258, %v1294
    %v1296 = vpop.f32.mrf.mxu0
    %1297 = vmatprep.mubr.bf16.mxu0 0
    %1298 = vmatmul.mubr.bf16.gmra.mxu0 %v837
    %v1299 = vpop.f32.mrf.mxu0
    %v1300 = vadd.f32 %v258, %v1299
    %v1301 = vpop.f32.mrf.mxu0
    %v1302 = vpop.f32.mrf.mxu0
    %v1303 = vadd.f32 %v258, %v1302
    %v1304 = vpop.f32.mrf.mxu0
    %1305 = vmatprep.mubr.bf16.mxu0 0
    %1306 = vmatmul.mubr.bf16.gmra.mxu0 %v840
    %v1307 = vpop.f32.mrf.mxu0
    %v1308 = vadd.f32 %v258, %v1307
    %v1309 = vpop.f32.mrf.mxu0
    %v1310 = vpop.f32.mrf.mxu0
    %v1311 = vadd.f32 %v258, %v1310
    %v1312 = vpop.f32.mrf.mxu0
    %1313 = vmatprep.mubr.bf16.mxu0 0
    %1314 = vmatmul.mubr.bf16.gmra.mxu0 %v843
    %v1315 = vpop.f32.mrf.mxu0
    %v1316 = vadd.f32 %v258, %v1315
    %v1317 = vpop.f32.mrf.mxu0
    %v1318 = vpop.f32.mrf.mxu0
    %v1319 = vadd.f32 %v258, %v1318
    %v1320 = vpop.f32.mrf.mxu0
    %1321 = vmatprep.mubr.bf16.mxu0 0
    %1322 = vmatmul.mubr.bf16.gmra.mxu0 %v846
    %v1323 = vpop.f32.mrf.mxu0
    %v1324 = vadd.f32 %v258, %v1323
    %v1325 = vpop.f32.mrf.mxu0
    %v1326 = vpop.f32.mrf.mxu0
    %v1327 = vadd.f32 %v258, %v1326
    %v1328 = vpop.f32.mrf.mxu0
    %1329 = vmatprep.mubr.bf16.mxu0 0
    %1330 = vmatmul.mubr.bf16.gmra.mxu0 %v849
    %v1331 = vpop.f32.mrf.mxu0
    %v1332 = vadd.f32 %v258, %v1331
    %v1333 = vpop.f32.mrf.mxu0
    %v1334 = vpop.f32.mrf.mxu0
    %v1335 = vadd.f32 %v258, %v1334
    %v1336 = vpop.f32.mrf.mxu0
    %1337 = vmatprep.mubr.bf16.mxu0 0
    %1338 = vmatmul.mubr.bf16.gmra.mxu0 %v852
    %v1339 = vpop.f32.mrf.mxu0
    %v1340 = vadd.f32 %v258, %v1339
    %v1341 = vpop.f32.mrf.mxu0
    %v1342 = vpop.f32.mrf.mxu0
    %v1343 = vadd.f32 %v258, %v1342
    %v1344 = vpop.f32.mrf.mxu0
    %1345 = vmatprep.mubr.bf16.mxu0 0
    %1346 = vmatmul.mubr.bf16.gmra.mxu0 %v855
    %v1347 = vpop.f32.mrf.mxu0
    %v1348 = vadd.f32 %v258, %v1347
    %v1349 = vpop.f32.mrf.mxu0
    %v1350 = vpop.f32.mrf.mxu0
    %v1351 = vadd.f32 %v258, %v1350
    %v1352 = vpop.f32.mrf.mxu0
    %1353 = vmatprep.mubr.bf16.mxu0 0
    %1354 = vmatmul.mubr.bf16.gmra.mxu0 %v858
    %v1355 = vpop.f32.mrf.mxu0
    %v1356 = vadd.f32 %v258, %v1355
    %v1357 = vpop.f32.mrf.mxu0
    %v1358 = vpop.f32.mrf.mxu0
    %v1359 = vadd.f32 %v258, %v1358
    %v1360 = vpop.f32.mrf.mxu0
    %1361 = vmatprep.mubr.bf16.mxu0 0
    %1362 = vmatmul.mubr.bf16.gmra.mxu0 %v861
    %v1363 = vpop.f32.mrf.mxu0
    %v1364 = vadd.f32 %v258, %v1363
    %v1365 = vpop.f32.mrf.mxu0
    %v1366 = vpop.f32.mrf.mxu0
    %v1367 = vadd.f32 %v258, %v1366
    %v1368 = vpop.f32.mrf.mxu0
    %1369 = vmatprep.mubr.bf16.mxu0 0
    %1370 = vmatmul.mubr.bf16.gmra.mxu0 %v864
    %v1371 = vpop.f32.mrf.mxu0
    %v1372 = vadd.f32 %v258, %v1371
    %v1373 = vpop.f32.mrf.mxu0
    %v1374 = vpop.f32.mrf.mxu0
    %v1375 = vadd.f32 %v258, %v1374
    %v1376 = vpop.f32.mrf.mxu0
    %1377 = vmatprep.mubr.bf16.mxu0 0
    %1378 = vmatmul.mubr.bf16.gmra.mxu0 %v867
    %v1379 = vpop.f32.mrf.mxu0
    %v1380 = vadd.f32 %v258, %v1379
    %v1381 = vpop.f32.mrf.mxu0
    %v1382 = vpop.f32.mrf.mxu0
    %v1383 = vadd.f32 %v258, %v1382
    %v1384 = vpop.f32.mrf.mxu0
    %1385 = vmatprep.mubr.bf16.mxu0 0
    %1386 = vmatmul.mubr.bf16.gmra.mxu0 %v870
    %v1387 = vpop.f32.mrf.mxu0
    %v1388 = vadd.f32 %v258, %v1387
    %v1389 = vpop.f32.mrf.mxu0
    %v1390 = vpop.f32.mrf.mxu0
    %v1391 = vadd.f32 %v258, %v1390
    %v1392 = vpop.f32.mrf.mxu0
    %1393 = vmatprep.mubr.bf16.mxu0 0
    %1394 = vmatmul.mubr.bf16.gmra.mxu0 %v873
    %v1395 = vpop.f32.mrf.mxu0
    %v1396 = vadd.f32 %v258, %v1395
    %v1397 = vpop.f32.mrf.mxu0
    %v1398 = vpop.f32.mrf.mxu0
    %v1399 = vadd.f32 %v258, %v1398
    %v1400 = vpop.f32.mrf.mxu0
    %1401 = vmatprep.mubr.bf16.mxu0 0
    %1402 = vmatmul.mubr.bf16.gmra.mxu0 %v876
    %v1403 = vpop.f32.mrf.mxu0
    %v1404 = vadd.f32 %v258, %v1403
    %v1405 = vpop.f32.mrf.mxu0
    %v1406 = vpop.f32.mrf.mxu0
    %v1407 = vadd.f32 %v258, %v1406
    %v1408 = vpop.f32.mrf.mxu0
    %1409 = vmatprep.mubr.bf16.mxu0 0
    %1410 = vmatmul.mubr.bf16.gmra.mxu0 %v879
    %v1411 = vpop.f32.mrf.mxu0
    %v1412 = vadd.f32 %v258, %v1411
    %v1413 = vpop.f32.mrf.mxu0
    %v1414 = vpop.f32.mrf.mxu0
    %v1415 = vadd.f32 %v258, %v1414
    %v1416 = vpop.f32.mrf.mxu0
    %1417 = vmatprep.mubr.bf16.mxu0 0
    %1418 = vmatmul.mubr.bf16.gmra.mxu0 %v882
    %v1419 = vpop.f32.mrf.mxu0
    %v1420 = vadd.f32 %v258, %v1419
    %v1421 = vpop.f32.mrf.mxu0
    %v1422 = vpop.f32.mrf.mxu0
    %v1423 = vadd.f32 %v258, %v1422
    %v1424 = vpop.f32.mrf.mxu0
    %1425 = vmatprep.mubr.bf16.mxu0 0
    %1426 = vmatmul.mubr.bf16.gmra.mxu0 %v885
    %v1427 = vpop.f32.mrf.mxu0
    %v1428 = vadd.f32 %v258, %v1427
    %v1429 = vpop.f32.mrf.mxu0
    %v1430 = vpop.f32.mrf.mxu0
    %v1431 = vadd.f32 %v258, %v1430
    %v1432 = vpop.f32.mrf.mxu0
    %1433 = vmatprep.mubr.bf16.mxu0 0
    %1434 = vmatmul.mubr.bf16.gmra.mxu0 %v888
    %v1435 = vpop.f32.mrf.mxu0
    %v1436 = vadd.f32 %v258, %v1435
    %v1437 = vpop.f32.mrf.mxu0
    %v1438 = vpop.f32.mrf.mxu0
    %v1439 = vadd.f32 %v258, %v1438
    %v1440 = vpop.f32.mrf.mxu0
    %1441 = vmatprep.mubr.bf16.mxu0 0
    %1442 = vmatmul.mubr.bf16.gmra.mxu0 %v891
    %v1443 = vpop.f32.mrf.mxu0
    %v1444 = vadd.f32 %v258, %v1443
    %v1445 = vpop.f32.mrf.mxu0
    %v1446 = vpop.f32.mrf.mxu0
    %v1447 = vadd.f32 %v258, %v1446
    %v1448 = vpop.f32.mrf.mxu0
    %1449 = vmatprep.mubr.bf16.mxu0 0
    %1450 = vmatmul.mubr.bf16.gmra.mxu0 %v894
    %v1451 = vpop.f32.mrf.mxu0
    %v1452 = vadd.f32 %v258, %v1451
    %v1453 = vpop.f32.mrf.mxu0
    %v1454 = vpop.f32.mrf.mxu0
    %v1455 = vadd.f32 %v258, %v1454
    %v1456 = vpop.f32.mrf.mxu0
    %1457 = vmatprep.mubr.bf16.mxu0 0
    %1458 = vmatmul.mubr.bf16.gmra.mxu0 %v897
    %v1459 = vpop.f32.mrf.mxu0
    %v1460 = vadd.f32 %v258, %v1459
    %v1461 = vpop.f32.mrf.mxu0
    %v1462 = vpop.f32.mrf.mxu0
    %v1463 = vadd.f32 %v258, %v1462
    %v1464 = vpop.f32.mrf.mxu0
    %1465 = vmatprep.mubr.bf16.mxu0 0
    %1466 = vmatmul.mubr.bf16.gmra.mxu0 %v900
    %v1467 = vpop.f32.mrf.mxu0
    %v1468 = vadd.f32 %v258, %v1467
    %v1469 = vpop.f32.mrf.mxu0
    %v1470 = vpop.f32.mrf.mxu0
    %v1471 = vadd.f32 %v258, %v1470
    %v1472 = vpop.f32.mrf.mxu0
    %1473 = vmatprep.mubr.bf16.mxu0 0
    %1474 = vmatmul.mubr.bf16.gmra.mxu0 %v903
    %v1475 = vpop.f32.mrf.mxu0
    %v1476 = vadd.f32 %v258, %v1475
    %v1477 = vpop.f32.mrf.mxu0
    %v1478 = vpop.f32.mrf.mxu0
    %v1479 = vadd.f32 %v258, %v1478
    %v1480 = vpop.f32.mrf.mxu0
    %1481 = vmatprep.mubr.bf16.mxu0 0
    %1482 = vmatmul.mubr.bf16.gmra.mxu0 %v906
    %v1483 = vpop.f32.mrf.mxu0
    %v1484 = vadd.f32 %v258, %v1483
    %v1485 = vpop.f32.mrf.mxu0
    %v1486 = vpop.f32.mrf.mxu0
    %v1487 = vadd.f32 %v258, %v1486
    %v1488 = vpop.f32.mrf.mxu0
    %1489 = vmatprep.mubr.bf16.mxu0 0
    %1490 = vmatmul.mubr.bf16.gmra.mxu0 %v909
    %v1491 = vpop.f32.mrf.mxu0
    %v1492 = vadd.f32 %v258, %v1491
    %v1493 = vpop.f32.mrf.mxu0
    %v1494 = vpop.f32.mrf.mxu0
    %v1495 = vadd.f32 %v258, %v1494
    %v1496 = vpop.f32.mrf.mxu0
    %1497 = vmatprep.mubr.bf16.mxu0 0
    %1498 = vmatmul.mubr.bf16.gmra.mxu0 %v912
    %v1499 = vpop.f32.mrf.mxu0
    %v1500 = vadd.f32 %v258, %v1499
    %v1501 = vpop.f32.mrf.mxu0
    %v1502 = vpop.f32.mrf.mxu0
    %v1503 = vadd.f32 %v258, %v1502
    %v1504 = vpop.f32.mrf.mxu0
    %1505 = vmatprep.mubr.bf16.mxu0 0
    %1506 = vmatmul.mubr.bf16.gmra.mxu0 %v915
    %v1507 = vpop.f32.mrf.mxu0
    %v1508 = vadd.f32 %v258, %v1507
    %v1509 = vpop.f32.mrf.mxu0
    %v1510 = vpop.f32.mrf.mxu0
    %v1511 = vadd.f32 %v258, %v1510
    %v1512 = vpop.f32.mrf.mxu0
    %1513 = vmatprep.mubr.bf16.mxu0 0
    %1514 = vmatmul.mubr.bf16.gmra.mxu0 %v918
    %v1515 = vpop.f32.mrf.mxu0
    %v1516 = vadd.f32 %v258, %v1515
    %v1517 = vpop.f32.mrf.mxu0
    %v1518 = vpop.f32.mrf.mxu0
    %v1519 = vadd.f32 %v258, %v1518
    %v1520 = vpop.f32.mrf.mxu0
    %1521 = vmatprep.mubr.bf16.mxu0 0
    %1522 = vmatmul.mubr.bf16.gmra.mxu0 %v921
    %v1523 = vpop.f32.mrf.mxu0
    %v1524 = vadd.f32 %v258, %v1523
    %v1525 = vpop.f32.mrf.mxu0
    %v1526 = vpop.f32.mrf.mxu0
    %v1527 = vadd.f32 %v258, %v1526
    %v1528 = vpop.f32.mrf.mxu0
    %1529 = vmatprep.mubr.bf16.mxu0 0
    %1530 = vmatmul.mubr.bf16.gmra.mxu0 %v924
    %v1531 = vpop.f32.mrf.mxu0
    %v1532 = vadd.f32 %v258, %v1531
    %v1533 = vpop.f32.mrf.mxu0
    %v1534 = vpop.f32.mrf.mxu0
    %v1535 = vadd.f32 %v258, %v1534
    %v1536 = vpop.f32.mrf.mxu0
    %1537 = vmatprep.mubr.bf16.mxu0 0
    %1538 = vmatmul.mubr.bf16.gmra.mxu0 %v927
    %v1539 = vpop.f32.mrf.mxu0
    %v1540 = vadd.f32 %v258, %v1539
    %v1541 = vpop.f32.mrf.mxu0
    %v1542 = vpop.f32.mrf.mxu0
    %v1543 = vadd.f32 %v258, %v1542
    %v1544 = vpop.f32.mrf.mxu0
    %1545 = vmatprep.mubr.bf16.mxu0 0
    %1546 = vmatmul.mubr.bf16.gmra.mxu0 %v930
    %v1547 = vpop.f32.mrf.mxu0
    %v1548 = vadd.f32 %v258, %v1547
    %v1549 = vpop.f32.mrf.mxu0
    %v1550 = vpop.f32.mrf.mxu0
    %v1551 = vadd.f32 %v258, %v1550
    %v1552 = vpop.f32.mrf.mxu0
    %1553 = vmatprep.mubr.bf16.mxu0 0
    %1554 = vmatmul.mubr.bf16.gmra.mxu0 %v933
    %v1555 = vpop.f32.mrf.mxu0
    %v1556 = vadd.f32 %v258, %v1555
    %v1557 = vpop.f32.mrf.mxu0
    %v1558 = vpop.f32.mrf.mxu0
    %v1559 = vadd.f32 %v258, %v1558
    %v1560 = vpop.f32.mrf.mxu0
    %1561 = vmatprep.mubr.bf16.mxu0 0
    %1562 = vmatmul.mubr.bf16.gmra.mxu0 %v936
    %v1563 = vpop.f32.mrf.mxu0
    %v1564 = vadd.f32 %v258, %v1563
    %v1565 = vpop.f32.mrf.mxu0
    %v1566 = vpop.f32.mrf.mxu0
    %v1567 = vadd.f32 %v258, %v1566
    %v1568 = vpop.f32.mrf.mxu0
    %1569 = vmatprep.mubr.bf16.mxu0 0
    %1570 = vmatmul.mubr.bf16.gmra.mxu0 %v939
    %v1571 = vpop.f32.mrf.mxu0
    %v1572 = vadd.f32 %v258, %v1571
    %v1573 = vpop.f32.mrf.mxu0
    %v1574 = vpop.f32.mrf.mxu0
    %v1575 = vadd.f32 %v258, %v1574
    %v1576 = vpop.f32.mrf.mxu0
    %1577 = vmatprep.mubr.bf16.mxu0 0
    %1578 = vmatmul.mubr.bf16.gmra.mxu0 %v942
    %v1579 = vpop.f32.mrf.mxu0
    %v1580 = vadd.f32 %v258, %v1579
    %v1581 = vpop.f32.mrf.mxu0
    %v1582 = vpop.f32.mrf.mxu0
    %v1583 = vadd.f32 %v258, %v1582
    %v1584 = vpop.f32.mrf.mxu0
    %1585 = vmatprep.mubr.bf16.mxu0 0
    %1586 = vmatmul.mubr.bf16.gmra.mxu0 %v945
    %v1587 = vpop.f32.mrf.mxu0
    %v1588 = vadd.f32 %v258, %v1587
    %v1589 = vpop.f32.mrf.mxu0
    %v1590 = vpop.f32.mrf.mxu0
    %v1591 = vadd.f32 %v258, %v1590
    %v1592 = vpop.f32.mrf.mxu0
    %1593 = vmatprep.mubr.bf16.mxu0 0
    %1594 = vmatmul.mubr.bf16.gmra.mxu0 %v948
    %v1595 = vpop.f32.mrf.mxu0
    %v1596 = vadd.f32 %v258, %v1595
    %v1597 = vpop.f32.mrf.mxu0
    %v1598 = vpop.f32.mrf.mxu0
    %v1599 = vadd.f32 %v258, %v1598
    %v1600 = vpop.f32.mrf.mxu0
    %1601 = vmatprep.mubr.bf16.mxu0 0
    %1602 = vmatmul.mubr.bf16.gmra.mxu0 %v951
    %v1603 = vpop.f32.mrf.mxu0
    %v1604 = vadd.f32 %v258, %v1603
    %v1605 = vpop.f32.mrf.mxu0
    %v1606 = vpop.f32.mrf.mxu0
    %v1607 = vadd.f32 %v258, %v1606
    %v1608 = vpop.f32.mrf.mxu0
    %1609 = vmatprep.mubr.bf16.mxu0 0
    %1610 = vmatmul.mubr.bf16.gmra.mxu0 %v954
    %v1611 = vpop.f32.mrf.mxu0
    %v1612 = vadd.f32 %v258, %v1611
    %v1613 = vpop.f32.mrf.mxu0
    %v1614 = vpop.f32.mrf.mxu0
    %v1615 = vadd.f32 %v258, %v1614
    %v1616 = vpop.f32.mrf.mxu0
    %1617 = vmatprep.mubr.bf16.mxu0 0
    %1618 = vmatmul.mubr.bf16.gmra.mxu0 %v957
    %v1619 = vpop.f32.mrf.mxu0
    %v1620 = vadd.f32 %v258, %v1619
    %v1621 = vpop.f32.mrf.mxu0
    %v1622 = vpop.f32.mrf.mxu0
    %v1623 = vadd.f32 %v258, %v1622
    %v1624 = vpop.f32.mrf.mxu0
    %1625 = vmatprep.mubr.bf16.mxu0 0
    %1626 = vmatmul.mubr.bf16.gmra.mxu0 %v960
    %v1627 = vpop.f32.mrf.mxu0
    %v1628 = vadd.f32 %v258, %v1627
    %v1629 = vpop.f32.mrf.mxu0
    %v1630 = vpop.f32.mrf.mxu0
    %v1631 = vadd.f32 %v258, %v1630
    %v1632 = vpop.f32.mrf.mxu0
    %1633 = vmatprep.mubr.bf16.mxu0 0
    %1634 = vmatmul.mubr.bf16.gmra.mxu0 %v963
    %v1635 = vpop.f32.mrf.mxu0
    %v1636 = vadd.f32 %v258, %v1635
    %v1637 = vpop.f32.mrf.mxu0
    %v1638 = vpop.f32.mrf.mxu0
    %v1639 = vadd.f32 %v258, %v1638
    %v1640 = vpop.f32.mrf.mxu0
    %1641 = vmatprep.mubr.bf16.mxu0 0
    %1642 = vmatmul.mubr.bf16.gmra.mxu0 %v966
    %v1643 = vpop.f32.mrf.mxu0
    %v1644 = vadd.f32 %v258, %v1643
    %v1645 = vpop.f32.mrf.mxu0
    %v1646 = vpop.f32.mrf.mxu0
    %v1647 = vadd.f32 %v258, %v1646
    %v1648 = vpop.f32.mrf.mxu0
    %1649 = vmatprep.mubr.bf16.mxu0 0
    %1650 = vmatmul.mubr.bf16.gmra.mxu0 %v969
    %v1651 = vpop.f32.mrf.mxu0
    %v1652 = vadd.f32 %v258, %v1651
    %v1653 = vpop.f32.mrf.mxu0
    %v1654 = vpop.f32.mrf.mxu0
    %v1655 = vadd.f32 %v258, %v1654
    %v1656 = vpop.f32.mrf.mxu0
    %1657 = vmatprep.mubr.bf16.mxu0 0
    %1658 = vmatmul.mubr.bf16.gmra.mxu0 %v972
    %v1659 = vpop.f32.mrf.mxu0
    %v1660 = vadd.f32 %v258, %v1659
    %v1661 = vpop.f32.mrf.mxu0
    %v1662 = vpop.f32.mrf.mxu0
    %v1663 = vadd.f32 %v258, %v1662
    %v1664 = vpop.f32.mrf.mxu0
    %1665 = vmatprep.mubr.bf16.mxu0 0
    %1666 = vmatmul.mubr.bf16.gmra.mxu0 %v975
    %v1667 = vpop.f32.mrf.mxu0
    %v1668 = vadd.f32 %v258, %v1667
    %v1669 = vpop.f32.mrf.mxu0
    %v1670 = vpop.f32.mrf.mxu0
    %v1671 = vadd.f32 %v258, %v1670
    %v1672 = vpop.f32.mrf.mxu0
    %1673 = vmatprep.mubr.bf16.mxu0 0
    %1674 = vmatmul.mubr.bf16.gmra.mxu0 %v978
    %v1675 = vpop.f32.mrf.mxu0
    %v1676 = vadd.f32 %v258, %v1675
    %v1677 = vpop.f32.mrf.mxu0
    %v1678 = vpop.f32.mrf.mxu0
    %v1679 = vadd.f32 %v258, %v1678
    %v1680 = vpop.f32.mrf.mxu0
    %1681 = vmatprep.mubr.bf16.mxu0 0
    %1682 = vmatmul.mubr.bf16.gmra.mxu0 %v981
    %v1683 = vpop.f32.mrf.mxu0
    %v1684 = vadd.f32 %v258, %v1683
    %v1685 = vpop.f32.mrf.mxu0
    %v1686 = vpop.f32.mrf.mxu0
    %v1687 = vadd.f32 %v258, %v1686
    %v1688 = vpop.f32.mrf.mxu0
    %1689 = vmatprep.mubr.bf16.mxu0 0
    %1690 = vmatmul.mubr.bf16.gmra.mxu0 %v984
    %v1691 = vpop.f32.mrf.mxu0
    %v1692 = vadd.f32 %v258, %v1691
    %v1693 = vpop.f32.mrf.mxu0
    %v1694 = vpop.f32.mrf.mxu0
    %v1695 = vadd.f32 %v258, %v1694
    %v1696 = vpop.f32.mrf.mxu0
    %1697 = vmatprep.mubr.bf16.mxu0 0
    %1698 = vmatmul.mubr.bf16.gmra.mxu0 %v987
    %v1699 = vpop.f32.mrf.mxu0
    %v1700 = vadd.f32 %v258, %v1699
    %v1701 = vpop.f32.mrf.mxu0
    %v1702 = vpop.f32.mrf.mxu0
    %v1703 = vadd.f32 %v258, %v1702
    %v1704 = vpop.f32.mrf.mxu0
    %1705 = vmatprep.mubr.bf16.mxu0 0
    %1706 = vmatmul.mubr.bf16.gmra.mxu0 %v990
    %v1707 = vpop.f32.mrf.mxu0
    %v1708 = vadd.f32 %v258, %v1707
    %v1709 = vpop.f32.mrf.mxu0
    %v1710 = vpop.f32.mrf.mxu0
    %v1711 = vadd.f32 %v258, %v1710
    %v1712 = vpop.f32.mrf.mxu0
    %1713 = vmatprep.mubr.bf16.mxu0 0
    %1714 = vmatmul.mubr.bf16.gmra.mxu0 %v993
    %v1715 = vpop.f32.mrf.mxu0
    %v1716 = vadd.f32 %v258, %v1715
    %v1717 = vpop.f32.mrf.mxu0
    %v1718 = vpop.f32.mrf.mxu0
    %v1719 = vadd.f32 %v258, %v1718
    %v1720 = vpop.f32.mrf.mxu0
    %1721 = vmatprep.mubr.bf16.mxu0 0
    %1722 = vmatmul.mubr.bf16.gmra.mxu0 %v996
    %v1723 = vpop.f32.mrf.mxu0
    %v1724 = vadd.f32 %v258, %v1723
    %v1725 = vpop.f32.mrf.mxu0
    %v1726 = vpop.f32.mrf.mxu0
    %v1727 = vadd.f32 %v258, %v1726
    %v1728 = vpop.f32.mrf.mxu0
    %1729 = vmatprep.mubr.bf16.mxu0 0
    %1730 = vmatmul.mubr.bf16.gmra.mxu0 %v999
    %v1731 = vpop.f32.mrf.mxu0
    %v1732 = vadd.f32 %v258, %v1731
    %v1733 = vpop.f32.mrf.mxu0
    %v1734 = vpop.f32.mrf.mxu0
    %v1735 = vadd.f32 %v258, %v1734
    %v1736 = vpop.f32.mrf.mxu0
    %1737 = vmatprep.mubr.bf16.mxu0 0
    %1738 = vmatmul.mubr.bf16.gmra.mxu0 %v1002
    %v1739 = vpop.f32.mrf.mxu0
    %v1740 = vadd.f32 %v258, %v1739
    %v1741 = vpop.f32.mrf.mxu0
    %v1742 = vpop.f32.mrf.mxu0
    %v1743 = vadd.f32 %v258, %v1742
    %v1744 = vpop.f32.mrf.mxu0
    %1745 = vmatprep.mubr.bf16.mxu0 0
    %1746 = vmatmul.mubr.bf16.gmra.mxu0 %v1005
    %v1747 = vpop.f32.mrf.mxu0
    %v1748 = vadd.f32 %v258, %v1747
    %v1749 = vpop.f32.mrf.mxu0
    %v1750 = vpop.f32.mrf.mxu0
    %v1751 = vadd.f32 %v258, %v1750
    %v1752 = vpop.f32.mrf.mxu0
    %1753 = vmatprep.mubr.bf16.mxu0 0
    %1754 = vmatmul.mubr.bf16.gmra.mxu0 %v1008
    %v1755 = vpop.f32.mrf.mxu0
    %v1756 = vadd.f32 %v258, %v1755
    %v1757 = vpop.f32.mrf.mxu0
    %v1758 = vpop.f32.mrf.mxu0
    %v1759 = vadd.f32 %v258, %v1758
    %v1760 = vpop.f32.mrf.mxu0
    %1761 = vmatprep.mubr.bf16.mxu0 0
    %1762 = vmatmul.mubr.bf16.gmra.mxu0 %v1011
    %v1763 = vpop.f32.mrf.mxu0
    %v1764 = vadd.f32 %v258, %v1763
    %v1765 = vpop.f32.mrf.mxu0
    %v1766 = vpop.f32.mrf.mxu0
    %v1767 = vadd.f32 %v258, %v1766
    %v1768 = vpop.f32.mrf.mxu0
    %1769 = vmatprep.mubr.bf16.mxu0 0
    %1770 = vmatmul.mubr.bf16.gmra.mxu0 %v1014
    %v1771 = vpop.f32.mrf.mxu0
    %v1772 = vadd.f32 %v258, %v1771
    %v1773 = vpop.f32.mrf.mxu0
    %v1774 = vpop.f32.mrf.mxu0
    %v1775 = vadd.f32 %v258, %v1774
    %v1776 = vpop.f32.mrf.mxu0
    %1777 = vmatprep.mubr.bf16.mxu0 0
    %1778 = vmatmul.mubr.bf16.gmra.mxu0 %v1017
    %v1779 = vpop.f32.mrf.mxu0
    %v1780 = vadd.f32 %v258, %v1779
    %v1781 = vpop.f32.mrf.mxu0
    %v1782 = vpop.f32.mrf.mxu0
    %v1783 = vadd.f32 %v258, %v1782
    %v1784 = vpop.f32.mrf.mxu0
    %1785 = vmatprep.mubr.bf16.mxu0 0
    %1786 = vmatmul.mubr.bf16.gmra.mxu0 %v1020
    %v1787 = vpop.f32.mrf.mxu0
    %v1788 = vadd.f32 %v258, %v1787
    %v1789 = vpop.f32.mrf.mxu0
    %v1790 = vpop.f32.mrf.mxu0
    %v1791 = vadd.f32 %v258, %v1790
    %v1792 = vpop.f32.mrf.mxu0
    %1793 = vmatprep.mubr.bf16.mxu0 0
    %1794 = vmatmul.mubr.bf16.gmra.mxu0 %v1023
    %v1795 = vpop.f32.mrf.mxu0
    %v1796 = vadd.f32 %v258, %v1795
    %v1797 = vpop.f32.mrf.mxu0
    %v1798 = vpop.f32.mrf.mxu0
    %v1799 = vadd.f32 %v258, %v1798
    %v1800 = vpop.f32.mrf.mxu0
    %1801 = vmatprep.mubr.bf16.mxu0 0
    %1802 = vmatmul.mubr.bf16.gmra.mxu0 %v1026
    %v1803 = vpop.f32.mrf.mxu0
    %v1804 = vadd.f32 %v258, %v1803
    %v1805 = vpop.f32.mrf.mxu0
    %v1806 = vpop.f32.mrf.mxu0
    %v1807 = vadd.f32 %v258, %v1806
    %v1808 = vpop.f32.mrf.mxu0
    %1809 = vmatprep.mubr.bf16.mxu0 0
    %1810 = vmatmul.mubr.bf16.gmra.mxu0 %v1029
    %v1811 = vpop.f32.mrf.mxu0
    %v1812 = vadd.f32 %v258, %v1811
    %v1813 = vpop.f32.mrf.mxu0
    %v1814 = vpop.f32.mrf.mxu0
    %v1815 = vadd.f32 %v258, %v1814
    %v1816 = vpop.f32.mrf.mxu0
    %1817 = vmatprep.mubr.bf16.mxu0 0
    %1818 = vmatmul.mubr.bf16.gmra.mxu0 %v1032
    %v1819 = vpop.f32.mrf.mxu0
    %v1820 = vadd.f32 %v258, %v1819
    %v1821 = vpop.f32.mrf.mxu0
    %v1822 = vpop.f32.mrf.mxu0
    %v1823 = vadd.f32 %v258, %v1822
    %v1824 = vpop.f32.mrf.mxu0
    %1825 = vmatprep.mubr.bf16.mxu0 0
    %1826 = vmatmul.mubr.bf16.gmra.mxu0 %v1035
    %v1827 = vpop.f32.mrf.mxu0
    %v1828 = vadd.f32 %v258, %v1827
    %v1829 = vpop.f32.mrf.mxu0
    %v1830 = vpop.f32.mrf.mxu0
    %v1831 = vadd.f32 %v258, %v1830
    %v1832 = vpop.f32.mrf.mxu0
    %1833 = vmatprep.mubr.bf16.mxu0 0
    %1834 = vmatmul.mubr.bf16.gmra.mxu0 %v1038
    %v1835 = vpop.f32.mrf.mxu0
    %v1836 = vadd.f32 %v258, %v1835
    %v1837 = vpop.f32.mrf.mxu0
    %v1838 = vpop.f32.mrf.mxu0
    %v1839 = vadd.f32 %v258, %v1838
    %v1840 = vpop.f32.mrf.mxu0
    %1841 = vmatprep.mubr.bf16.mxu0 0
    %1842 = vmatmul.mubr.bf16.gmra.mxu0 %v1041
    %v1843 = vpop.f32.mrf.mxu0
    %v1844 = vadd.f32 %v258, %v1843
    %v1845 = vpop.f32.mrf.mxu0
    %v1846 = vpop.f32.mrf.mxu0
    %v1847 = vadd.f32 %v258, %v1846
    %v1848 = vpop.f32.mrf.mxu0
    %1849 = vmatprep.mubr.bf16.mxu0 0
    %1850 = vmatmul.mubr.bf16.gmra.mxu0 %v1044
    %v1851 = vpop.f32.mrf.mxu0
    %v1852 = vadd.f32 %v258, %v1851
    %v1853 = vpop.f32.mrf.mxu0
    %v1854 = vpop.f32.mrf.mxu0
    %v1855 = vadd.f32 %v258, %v1854
    %v1856 = vpop.f32.mrf.mxu0
    %1857 = vmatprep.mubr.bf16.mxu0 0
    %1858 = vmatmul.mubr.bf16.gmra.mxu0 %v1047
    %v1859 = vpop.f32.mrf.mxu0
    %v1860 = vadd.f32 %v258, %v1859
    %v1861 = vpop.f32.mrf.mxu0
    %v1862 = vpop.f32.mrf.mxu0
    %v1863 = vadd.f32 %v258, %v1862
    %v1864 = vpop.f32.mrf.mxu0
    %1865 = vmatprep.mubr.bf16.mxu0 0
    %1866 = vmatmul.mubr.bf16.gmra.mxu0 %v1050
    %v1867 = vpop.f32.mrf.mxu0
    %v1868 = vadd.f32 %v258, %v1867
    %v1869 = vpop.f32.mrf.mxu0
    %v1870 = vpop.f32.mrf.mxu0
    %v1871 = vadd.f32 %v258, %v1870
    %v1872 = vpop.f32.mrf.mxu0
    %1873 = vmatprep.mubr.bf16.mxu0 0
    %1874 = vmatmul.mubr.bf16.gmra.mxu0 %v1053
    %v1875 = vpop.f32.mrf.mxu0
    %v1876 = vadd.f32 %v258, %v1875
    %v1877 = vpop.f32.mrf.mxu0
    %v1878 = vpop.f32.mrf.mxu0
    %v1879 = vadd.f32 %v258, %v1878
    %v1880 = vpop.f32.mrf.mxu0
    %1881 = vmatprep.mubr.bf16.mxu0 0
    %1882 = vmatmul.mubr.bf16.gmra.mxu0 %v1056
    %v1883 = vpop.f32.mrf.mxu0
    %v1884 = vadd.f32 %v258, %v1883
    %v1885 = vpop.f32.mrf.mxu0
    %v1886 = vpop.f32.mrf.mxu0
    %v1887 = vadd.f32 %v258, %v1886
    %v1888 = vpop.f32.mrf.mxu0
    %1889 = vmatprep.mubr.bf16.mxu0 0
    %1890 = vmatmul.mubr.bf16.gmra.mxu0 %v1059
    %v1891 = vpop.f32.mrf.mxu0
    %v1892 = vadd.f32 %v258, %v1891
    %v1893 = vpop.f32.mrf.mxu0
    %v1894 = vpop.f32.mrf.mxu0
    %v1895 = vadd.f32 %v258, %v1894
    %v1896 = vpop.f32.mrf.mxu0
    %1897 = vdwg.mxu0
    %v1898 = vmax.f32 %v1100, 0.0
    %v1899 = vmax.f32 %v1103, 0.0
    %v1900 = vmax.f32 %v1108, 0.0
    %v1901 = vmax.f32 %v1111, 0.0
    %v1902 = vmax.f32 %v1116, 0.0
    %v1903 = vmax.f32 %v1119, 0.0
    %v1904 = vmax.f32 %v1124, 0.0
    %v1905 = vmax.f32 %v1127, 0.0
    %v1906 = vmax.f32 %v1132, 0.0
    %v1907 = vmax.f32 %v1135, 0.0
    %v1908 = vmax.f32 %v1140, 0.0
    %v1909 = vmax.f32 %v1143, 0.0
    %v1910 = vmax.f32 %v1148, 0.0
    %v1911 = vmax.f32 %v1151, 0.0
    %v1912 = vmax.f32 %v1156, 0.0
    %v1913 = vmax.f32 %v1159, 0.0
    %v1914 = vmax.f32 %v1164, 0.0
    %v1915 = vmax.f32 %v1167, 0.0
    %v1916 = vmax.f32 %v1172, 0.0
    %v1917 = vmax.f32 %v1175, 0.0
    %v1918 = vmax.f32 %v1180, 0.0
    %v1919 = vmax.f32 %v1183, 0.0
    %v1920 = vmax.f32 %v1188, 0.0
    %v1921 = vmax.f32 %v1191, 0.0
    %v1922 = vmax.f32 %v1196, 0.0
    %v1923 = vmax.f32 %v1199, 0.0
    %v1924 = vmax.f32 %v1204, 0.0
    %v1925 = vmax.f32 %v1207, 0.0
    %v1926 = vmax.f32 %v1212, 0.0
    %v1927 = vmax.f32 %v1215, 0.0
    %v1928 = vmax.f32 %v1220, 0.0
    %v1929 = vmax.f32 %v1223, 0.0
    %v1930 = vmax.f32 %v1228, 0.0
    %v1931 = vmax.f32 %v1231, 0.0
    %v1932 = vmax.f32 %v1236, 0.0
    %v1933 = vmax.f32 %v1239, 0.0
    %v1934 = vmax.f32 %v1244, 0.0
    %v1935 = vmax.f32 %v1247, 0.0
    %v1936 = vmax.f32 %v1252, 0.0
    %v1937 = vmax.f32 %v1255, 0.0
    %v1938 = vmax.f32 %v1260, 0.0
    %v1939 = vmax.f32 %v1263, 0.0
    %v1940 = vmax.f32 %v1268, 0.0
    %v1941 = vmax.f32 %v1271, 0.0
    %v1942 = vmax.f32 %v1276, 0.0
    %v1943 = vmax.f32 %v1279, 0.0
    %v1944 = vmax.f32 %v1284, 0.0
    %v1945 = vmax.f32 %v1287, 0.0
    %v1946 = vmax.f32 %v1292, 0.0
    %v1947 = vmax.f32 %v1295, 0.0
    %v1948 = vmax.f32 %v1300, 0.0
    %v1949 = vmax.f32 %v1303, 0.0
    %v1950 = vmax.f32 %v1308, 0.0
    %v1951 = vmax.f32 %v1311, 0.0
    %v1952 = vmax.f32 %v1316, 0.0
    %v1953 = vmax.f32 %v1319, 0.0
    %v1954 = vmax.f32 %v1324, 0.0
    %v1955 = vmax.f32 %v1327, 0.0
    %v1956 = vmax.f32 %v1332, 0.0
    %v1957 = vmax.f32 %v1335, 0.0
    %v1958 = vmax.f32 %v1340, 0.0
    %v1959 = vmax.f32 %v1343, 0.0
    %v1960 = vmax.f32 %v1348, 0.0
    %v1961 = vmax.f32 %v1351, 0.0
    %v1962 = vmax.f32 %v1356, 0.0
    %v1963 = vmax.f32 %v1359, 0.0
    %v1964 = vmax.f32 %v1364, 0.0
    %v1965 = vmax.f32 %v1367, 0.0
    %v1966 = vmax.f32 %v1372, 0.0
    %v1967 = vmax.f32 %v1375, 0.0
    %v1968 = vmax.f32 %v1380, 0.0
    %v1969 = vmax.f32 %v1383, 0.0
    %v1970 = vmax.f32 %v1388, 0.0
    %v1971 = vmax.f32 %v1391, 0.0
    %v1972 = vmax.f32 %v1396, 0.0
    %v1973 = vmax.f32 %v1399, 0.0
    %v1974 = vmax.f32 %v1404, 0.0
    %v1975 = vmax.f32 %v1407, 0.0
    %v1976 = vmax.f32 %v1412, 0.0
    %v1977 = vmax.f32 %v1415, 0.0
    %v1978 = vmax.f32 %v1420, 0.0
    %v1979 = vmax.f32 %v1423, 0.0
    %v1980 = vmax.f32 %v1428, 0.0
    %v1981 = vmax.f32 %v1431, 0.0
    %v1982 = vmax.f32 %v1436, 0.0
    %v1983 = vmax.f32 %v1439, 0.0
    %v1984 = vmax.f32 %v1444, 0.0
    %v1985 = vmax.f32 %v1447, 0.0
    %v1986 = vmax.f32 %v1452, 0.0
    %v1987 = vmax.f32 %v1455, 0.0
    %v1988 = vmax.f32 %v1460, 0.0
    %v1989 = vmax.f32 %v1463, 0.0
    %v1990 = vmax.f32 %v1468, 0.0
    %v1991 = vmax.f32 %v1471, 0.0
    %v1992 = vmax.f32 %v1476, 0.0
    %v1993 = vmax.f32 %v1479, 0.0
    %v1994 = vmax.f32 %v1484, 0.0
    %v1995 = vmax.f32 %v1487, 0.0
    %v1996 = vmax.f32 %v1492, 0.0
    %v1997 = vmax.f32 %v1495, 0.0
    %v1998 = vmax.f32 %v1500, 0.0
    %v1999 = vmax.f32 %v1503, 0.0
    %v2000 = vmax.f32 %v1508, 0.0
    %v2001 = vmax.f32 %v1511, 0.0
    %v2002 = vmax.f32 %v1516, 0.0
    %v2003 = vmax.f32 %v1519, 0.0
    %v2004 = vmax.f32 %v1524, 0.0
    %v2005 = vmax.f32 %v1527, 0.0
    %v2006 = vmax.f32 %v1532, 0.0
    %v2007 = vmax.f32 %v1535, 0.0
    %v2008 = vmax.f32 %v1540, 0.0
    %v2009 = vmax.f32 %v1543, 0.0
    %v2010 = vmax.f32 %v1548, 0.0
    %v2011 = vmax.f32 %v1551, 0.0
    %v2012 = vmax.f32 %v1556, 0.0
    %v2013 = vmax.f32 %v1559, 0.0
    %v2014 = vmax.f32 %v1564, 0.0
    %v2015 = vmax.f32 %v1567, 0.0
    %v2016 = vmax.f32 %v1572, 0.0
    %v2017 = vmax.f32 %v1575, 0.0
    %v2018 = vmax.f32 %v1580, 0.0
    %v2019 = vmax.f32 %v1583, 0.0
    %v2020 = vmax.f32 %v1588, 0.0
    %v2021 = vmax.f32 %v1591, 0.0
    %v2022 = vmax.f32 %v1596, 0.0
    %v2023 = vmax.f32 %v1599, 0.0
    %v2024 = vmax.f32 %v1604, 0.0
    %v2025 = vmax.f32 %v1607, 0.0
    %v2026 = vmax.f32 %v1612, 0.0
    %v2027 = vmax.f32 %v1615, 0.0
    %v2028 = vmax.f32 %v1620, 0.0
    %v2029 = vmax.f32 %v1623, 0.0
    %v2030 = vmax.f32 %v1628, 0.0
    %v2031 = vmax.f32 %v1631, 0.0
    %v2032 = vmax.f32 %v1636, 0.0
    %v2033 = vmax.f32 %v1639, 0.0
    %v2034 = vmax.f32 %v1644, 0.0
    %v2035 = vmax.f32 %v1647, 0.0
    %v2036 = vmax.f32 %v1652, 0.0
    %v2037 = vmax.f32 %v1655, 0.0
    %v2038 = vmax.f32 %v1660, 0.0
    %v2039 = vmax.f32 %v1663, 0.0
    %v2040 = vmax.f32 %v1668, 0.0
    %v2041 = vmax.f32 %v1671, 0.0
    %v2042 = vmax.f32 %v1676, 0.0
    %v2043 = vmax.f32 %v1679, 0.0
    %v2044 = vmax.f32 %v1684, 0.0
    %v2045 = vmax.f32 %v1687, 0.0
    %v2046 = vmax.f32 %v1692, 0.0
    %v2047 = vmax.f32 %v1695, 0.0
    %v2048 = vmax.f32 %v1700, 0.0
    %v2049 = vmax.f32 %v1703, 0.0
    %v2050 = vmax.f32 %v1708, 0.0
    %v2051 = vmax.f32 %v1711, 0.0
    %v2052 = vmax.f32 %v1716, 0.0
    %v2053 = vmax.f32 %v1719, 0.0
    %v2054 = vmax.f32 %v1724, 0.0
    %v2055 = vmax.f32 %v1727, 0.0
    %v2056 = vmax.f32 %v1732, 0.0
    %v2057 = vmax.f32 %v1735, 0.0
    %v2058 = vmax.f32 %v1740, 0.0
    %v2059 = vmax.f32 %v1743, 0.0
    %v2060 = vmax.f32 %v1748, 0.0
    %v2061 = vmax.f32 %v1751, 0.0
    %v2062 = vmax.f32 %v1756, 0.0
    %v2063 = vmax.f32 %v1759, 0.0
    %v2064 = vmax.f32 %v1764, 0.0
    %v2065 = vmax.f32 %v1767, 0.0
    %v2066 = vmax.f32 %v1772, 0.0
    %v2067 = vmax.f32 %v1775, 0.0
    %v2068 = vmax.f32 %v1780, 0.0
    %v2069 = vmax.f32 %v1783, 0.0
    %v2070 = vmax.f32 %v1788, 0.0
    %v2071 = vmax.f32 %v1791, 0.0
    %v2072 = vmax.f32 %v1796, 0.0
    %v2073 = vmax.f32 %v1799, 0.0
    %v2074 = vmax.f32 %v1804, 0.0
    %v2075 = vmax.f32 %v1807, 0.0
    %v2076 = vmax.f32 %v1812, 0.0
    %v2077 = vmax.f32 %v1815, 0.0
    %v2078 = vmax.f32 %v1820, 0.0
    %v2079 = vmax.f32 %v1823, 0.0
    %v2080 = vmax.f32 %v1828, 0.0
    %v2081 = vmax.f32 %v1831, 0.0
    %v2082 = vmax.f32 %v1836, 0.0
    %v2083 = vmax.f32 %v1839, 0.0
    %v2084 = vmax.f32 %v1844, 0.0
    %v2085 = vmax.f32 %v1847, 0.0
    %v2086 = vmax.f32 %v1852, 0.0
    %v2087 = vmax.f32 %v1855, 0.0
    %v2088 = vmax.f32 %v1860, 0.0
    %v2089 = vmax.f32 %v1863, 0.0
    %v2090 = vmax.f32 %v1868, 0.0
    %v2091 = vmax.f32 %v1871, 0.0
    %v2092 = vmax.f32 %v1876, 0.0
    %v2093 = vmax.f32 %v1879, 0.0
    %v2094 = vmax.f32 %v1884, 0.0
    %v2095 = vmax.f32 %v1887, 0.0
    %v2096 = vmax.f32 %v1892, 0.0
    %v2097 = vmax.f32 %v1895, 0.0
    %v2098 = vld [vmem:[%s1] sm:$0xf]
    %v2099 = vld [vmem:[%s1 + $0x4] sm:$0xf]
    %v2100 = vld [vmem:[%s1 + $0x8] sm:$0xf]
    %v2101 = vld [vmem:[%s1 + $0xc] sm:$0xf]
    %v2102 = vld [vmem:[%s1 + $0x10] sm:$0xf]
    %v2103 = vld [vmem:[%s1 + $0x14] sm:$0xf]
    %v2104 = vld [vmem:[%s1 + $0x18] sm:$0xf]
    %v2105 = vld [vmem:[%s1 + $0x1c] sm:$0xf]
    %v2106 = vld [vmem:[%s1 + $0x20] sm:$0xf]
    %v2107 = vld [vmem:[%s1 + $0x24] sm:$0xf]
    %v2108 = vld [vmem:[%s1 + $0x28] sm:$0xf]
    %v2109 = vld [vmem:[%s1 + $0x2c] sm:$0xf]
    %v2110 = vld [vmem:[%s1 + $0x30] sm:$0xf]
    %v2111 = vld [vmem:[%s1 + $0x34] sm:$0xf]
    %v2112 = vld [vmem:[%s1 + $0x38] sm:$0xf]
    %v2113 = vld [vmem:[%s1 + $0x3c] sm:$0xf]
    %v2114 = vld [vmem:[%s1 + $0x40] sm:$0xf]
    %v2115 = vld [vmem:[%s1 + $0x44] sm:$0xf]
    %v2116 = vld [vmem:[%s1 + $0x48] sm:$0xf]
    %v2117 = vld [vmem:[%s1 + $0x4c] sm:$0xf]
    %v2118 = vld [vmem:[%s1 + $0x50] sm:$0xf]
    %v2119 = vld [vmem:[%s1 + $0x54] sm:$0xf]
    %v2120 = vld [vmem:[%s1 + $0x58] sm:$0xf]
    %v2121 = vld [vmem:[%s1 + $0x5c] sm:$0xf]
    %v2122 = vld [vmem:[%s1 + $0x60] sm:$0xf]
    %v2123 = vld [vmem:[%s1 + $0x64] sm:$0xf]
    %v2124 = vld [vmem:[%s1 + $0x68] sm:$0xf]
    %v2125 = vld [vmem:[%s1 + $0x6c] sm:$0xf]
    %v2126 = vld [vmem:[%s1 + $0x70] sm:$0xf]
    %v2127 = vld [vmem:[%s1 + $0x74] sm:$0xf]
    %v2128 = vld [vmem:[%s1 + $0x78] sm:$0xf]
    %v2129 = vld [vmem:[%s1 + $0x7c] sm:$0xf]
    %v2130 = vld [vmem:[%s1 + $0x80] sm:$0xf]
    %v2131 = vld [vmem:[%s1 + $0x84] sm:$0xf]
    %v2132 = vld [vmem:[%s1 + $0x88] sm:$0xf]
    %v2133 = vld [vmem:[%s1 + $0x8c] sm:$0xf]
    %v2134 = vld [vmem:[%s1 + $0x90] sm:$0xf]
    %v2135 = vld [vmem:[%s1 + $0x94] sm:$0xf]
    %v2136 = vld [vmem:[%s1 + $0x98] sm:$0xf]
    %v2137 = vld [vmem:[%s1 + $0x9c] sm:$0xf]
    %v2138 = vld [vmem:[%s1 + $0xa0] sm:$0xf]
    %v2139 = vld [vmem:[%s1 + $0xa4] sm:$0xf]
    %v2140 = vld [vmem:[%s1 + $0xa8] sm:$0xf]
    %v2141 = vld [vmem:[%s1 + $0xac] sm:$0xf]
    %v2142 = vld [vmem:[%s1 + $0xb0] sm:$0xf]
    %v2143 = vld [vmem:[%s1 + $0xb4] sm:$0xf]
    %v2144 = vld [vmem:[%s1 + $0xb8] sm:$0xf]
    %v2145 = vld [vmem:[%s1 + $0xbc] sm:$0xf]
    %v2146 = vld [vmem:[%s1 + $0xc0] sm:$0xf]
    %v2147 = vld [vmem:[%s1 + $0xc4] sm:$0xf]
    %v2148 = vld [vmem:[%s1 + $0xc8] sm:$0xf]
    %v2149 = vld [vmem:[%s1 + $0xcc] sm:$0xf]
    %v2150 = vld [vmem:[%s1 + $0xd0] sm:$0xf]
    %v2151 = vld [vmem:[%s1 + $0xd4] sm:$0xf]
    %v2152 = vld [vmem:[%s1 + $0xd8] sm:$0xf]
    %v2153 = vld [vmem:[%s1 + $0xdc] sm:$0xf]
    %v2154 = vld [vmem:[%s1 + $0xe0] sm:$0xf]
    %v2155 = vld [vmem:[%s1 + $0xe4] sm:$0xf]
    %v2156 = vld [vmem:[%s1 + $0xe8] sm:$0xf]
    %v2157 = vld [vmem:[%s1 + $0xec] sm:$0xf]
    %v2158 = vld [vmem:[%s1 + $0xf0] sm:$0xf]
    %v2159 = vld [vmem:[%s1 + $0xf4] sm:$0xf]
    %v2160 = vld [vmem:[%s1 + $0xf8] sm:$0xf]
    %v2161 = vld [vmem:[%s1 + $0xfc] sm:$0xf]
    %v2162 = vld [vmem:[%s1 + $0x100] sm:$0xf]
    %v2163 = vld [vmem:[%s1 + $0x104] sm:$0xf]
    %v2164 = vld [vmem:[%s1 + $0x108] sm:$0xf]
    %v2165 = vld [vmem:[%s1 + $0x10c] sm:$0xf]
    %v2166 = vld [vmem:[%s1 + $0x110] sm:$0xf]
    %v2167 = vld [vmem:[%s1 + $0x114] sm:$0xf]
    %v2168 = vld [vmem:[%s1 + $0x118] sm:$0xf]
    %v2169 = vld [vmem:[%s1 + $0x11c] sm:$0xf]
    %v2170 = vld [vmem:[%s1 + $0x120] sm:$0xf]
    %v2171 = vld [vmem:[%s1 + $0x124] sm:$0xf]
    %v2172 = vld [vmem:[%s1 + $0x128] sm:$0xf]
    %v2173 = vld [vmem:[%s1 + $0x12c] sm:$0xf]
    %v2174 = vld [vmem:[%s1 + $0x130] sm:$0xf]
    %v2175 = vld [vmem:[%s1 + $0x134] sm:$0xf]
    %v2176 = vld [vmem:[%s1 + $0x138] sm:$0xf]
    %v2177 = vld [vmem:[%s1 + $0x13c] sm:$0xf]
    %v2178 = vld [vmem:[%s1 + $0x140] sm:$0xf]
    %v2179 = vld [vmem:[%s1 + $0x144] sm:$0xf]
    %v2180 = vld [vmem:[%s1 + $0x148] sm:$0xf]
    %v2181 = vld [vmem:[%s1 + $0x14c] sm:$0xf]
    %v2182 = vld [vmem:[%s1 + $0x150] sm:$0xf]
    %v2183 = vld [vmem:[%s1 + $0x154] sm:$0xf]
    %v2184 = vld [vmem:[%s1 + $0x158] sm:$0xf]
    %v2185 = vld [vmem:[%s1 + $0x15c] sm:$0xf]
    %v2186 = vld [vmem:[%s1 + $0x160] sm:$0xf]
    %v2187 = vld [vmem:[%s1 + $0x164] sm:$0xf]
    %v2188 = vld [vmem:[%s1 + $0x168] sm:$0xf]
    %v2189 = vld [vmem:[%s1 + $0x16c] sm:$0xf]
    %v2190 = vld [vmem:[%s1 + $0x170] sm:$0xf]
    %v2191 = vld [vmem:[%s1 + $0x174] sm:$0xf]
    %v2192 = vld [vmem:[%s1 + $0x178] sm:$0xf]
    %v2193 = vld [vmem:[%s1 + $0x17c] sm:$0xf]
    %v2194 = vld [vmem:[%s1 + $0x180] sm:$0xf]
    %v2195 = vld [vmem:[%s1 + $0x184] sm:$0xf]
    %v2196 = vld [vmem:[%s1 + $0x188] sm:$0xf]
    %v2197 = vld [vmem:[%s1 + $0x18c] sm:$0xf]
    %v2198 = vld [vmem:[%s1 + $0x190] sm:$0xf]
    %v2199 = vld [vmem:[%s1 + $0x194] sm:$0xf]
    %v2200 = vld [vmem:[%s1 + $0x198] sm:$0xf]
    %v2201 = vld [vmem:[%s1 + $0x19c] sm:$0xf]
    %v2202 = vld [vmem:[%s1 + $0x1a0] sm:$0xf]
    %v2203 = vld [vmem:[%s1 + $0x1a4] sm:$0xf]
    %v2204 = vld [vmem:[%s1 + $0x1a8] sm:$0xf]
    %v2205 = vld [vmem:[%s1 + $0x1ac] sm:$0xf]
    %v2206 = vld [vmem:[%s1 + $0x1b0] sm:$0xf]
    %v2207 = vld [vmem:[%s1 + $0x1b4] sm:$0xf]
    %v2208 = vld [vmem:[%s1 + $0x1b8] sm:$0xf]
    %v2209 = vld [vmem:[%s1 + $0x1bc] sm:$0xf]
    %v2210 = vld [vmem:[%s1 + $0x1c0] sm:$0xf]
    %v2211 = vld [vmem:[%s1 + $0x1c4] sm:$0xf]
    %v2212 = vld [vmem:[%s1 + $0x1c8] sm:$0xf]
    %v2213 = vld [vmem:[%s1 + $0x1cc] sm:$0xf]
    %v2214 = vld [vmem:[%s1 + $0x1d0] sm:$0xf]
    %v2215 = vld [vmem:[%s1 + $0x1d4] sm:$0xf]
    %v2216 = vld [vmem:[%s1 + $0x1d8] sm:$0xf]
    %v2217 = vld [vmem:[%s1 + $0x1dc] sm:$0xf]
    %v2218 = vld [vmem:[%s1 + $0x1e0] sm:$0xf]
    %v2219 = vld [vmem:[%s1 + $0x1e4] sm:$0xf]
    %v2220 = vld [vmem:[%s1 + $0x1e8] sm:$0xf]
    %v2221 = vld [vmem:[%s1 + $0x1ec] sm:$0xf]
    %v2222 = vld [vmem:[%s1 + $0x1f0] sm:$0xf]
    %v2223 = vld [vmem:[%s1 + $0x1f4] sm:$0xf]
    %v2224 = vld [vmem:[%s1 + $0x1f8] sm:$0xf]
    %v2225 = vld [vmem:[%s1 + $0x1fc] sm:$0xf]
    %v2226 = vld [vmem:[%s1 + $0x200] sm:$0xf]
    %v2227 = vld [vmem:[%s1 + $0x204] sm:$0xf]
    %v2228 = vld [vmem:[%s1 + $0x208] sm:$0xf]
    %v2229 = vld [vmem:[%s1 + $0x20c] sm:$0xf]
    %v2230 = vld [vmem:[%s1 + $0x210] sm:$0xf]
    %v2231 = vld [vmem:[%s1 + $0x214] sm:$0xf]
    %v2232 = vld [vmem:[%s1 + $0x218] sm:$0xf]
    %v2233 = vld [vmem:[%s1 + $0x21c] sm:$0xf]
    %v2234 = vld [vmem:[%s1 + $0x220] sm:$0xf]
    %v2235 = vld [vmem:[%s1 + $0x224] sm:$0xf]
    %v2236 = vld [vmem:[%s1 + $0x228] sm:$0xf]
    %v2237 = vld [vmem:[%s1 + $0x22c] sm:$0xf]
    %v2238 = vld [vmem:[%s1 + $0x230] sm:$0xf]
    %v2239 = vld [vmem:[%s1 + $0x234] sm:$0xf]
    %v2240 = vld [vmem:[%s1 + $0x238] sm:$0xf]
    %v2241 = vld [vmem:[%s1 + $0x23c] sm:$0xf]
    %v2242 = vld [vmem:[%s1 + $0x240] sm:$0xf]
    %v2243 = vld [vmem:[%s1 + $0x244] sm:$0xf]
    %v2244 = vld [vmem:[%s1 + $0x248] sm:$0xf]
    %v2245 = vld [vmem:[%s1 + $0x24c] sm:$0xf]
    %v2246 = vld [vmem:[%s1 + $0x250] sm:$0xf]
    %v2247 = vld [vmem:[%s1 + $0x254] sm:$0xf]
    %v2248 = vld [vmem:[%s1 + $0x258] sm:$0xf]
    %v2249 = vld [vmem:[%s1 + $0x25c] sm:$0xf]
    %v2250 = vld [vmem:[%s1 + $0x260] sm:$0xf]
    %v2251 = vld [vmem:[%s1 + $0x264] sm:$0xf]
    %v2252 = vld [vmem:[%s1 + $0x268] sm:$0xf]
    %v2253 = vld [vmem:[%s1 + $0x26c] sm:$0xf]
    %v2254 = vld [vmem:[%s1 + $0x270] sm:$0xf]
    %v2255 = vld [vmem:[%s1 + $0x274] sm:$0xf]
    %v2256 = vld [vmem:[%s1 + $0x278] sm:$0xf]
    %v2257 = vld [vmem:[%s1 + $0x27c] sm:$0xf]
    %v2258 = vld [vmem:[%s1 + $0x280] sm:$0xf]
    %v2259 = vld [vmem:[%s1 + $0x284] sm:$0xf]
    %v2260 = vld [vmem:[%s1 + $0x288] sm:$0xf]
    %v2261 = vld [vmem:[%s1 + $0x28c] sm:$0xf]
    %v2262 = vld [vmem:[%s1 + $0x290] sm:$0xf]
    %v2263 = vld [vmem:[%s1 + $0x294] sm:$0xf]
    %v2264 = vld [vmem:[%s1 + $0x298] sm:$0xf]
    %v2265 = vld [vmem:[%s1 + $0x29c] sm:$0xf]
    %v2266 = vld [vmem:[%s1 + $0x2a0] sm:$0xf]
    %v2267 = vld [vmem:[%s1 + $0x2a4] sm:$0xf]
    %v2268 = vld [vmem:[%s1 + $0x2a8] sm:$0xf]
    %v2269 = vld [vmem:[%s1 + $0x2ac] sm:$0xf]
    %v2270 = vld [vmem:[%s1 + $0x2b0] sm:$0xf]
    %v2271 = vld [vmem:[%s1 + $0x2b4] sm:$0xf]
    %v2272 = vld [vmem:[%s1 + $0x2b8] sm:$0xf]
    %v2273 = vld [vmem:[%s1 + $0x2bc] sm:$0xf]
    %v2274 = vld [vmem:[%s1 + $0x2c0] sm:$0xf]
    %v2275 = vld [vmem:[%s1 + $0x2c4] sm:$0xf]
    %v2276 = vld [vmem:[%s1 + $0x2c8] sm:$0xf]
    %v2277 = vld [vmem:[%s1 + $0x2cc] sm:$0xf]
    %v2278 = vld [vmem:[%s1 + $0x2d0] sm:$0xf]
    %v2279 = vld [vmem:[%s1 + $0x2d4] sm:$0xf]
    %v2280 = vld [vmem:[%s1 + $0x2d8] sm:$0xf]
    %v2281 = vld [vmem:[%s1 + $0x2dc] sm:$0xf]
    %v2282 = vld [vmem:[%s1 + $0x2e0] sm:$0xf]
    %v2283 = vld [vmem:[%s1 + $0x2e4] sm:$0xf]
    %v2284 = vld [vmem:[%s1 + $0x2e8] sm:$0xf]
    %v2285 = vld [vmem:[%s1 + $0x2ec] sm:$0xf]
    %v2286 = vld [vmem:[%s1 + $0x2f0] sm:$0xf]
    %v2287 = vld [vmem:[%s1 + $0x2f4] sm:$0xf]
    %v2288 = vld [vmem:[%s1 + $0x2f8] sm:$0xf]
    %v2289 = vld [vmem:[%s1 + $0x2fc] sm:$0xf]
    %v2290 = vld [vmem:[%s1 + $0x300] sm:$0xf]
    %v2291 = vld [vmem:[%s1 + $0x304] sm:$0xf]
    %v2292 = vld [vmem:[%s1 + $0x308] sm:$0xf]
    %v2293 = vld [vmem:[%s1 + $0x30c] sm:$0xf]
    %v2294 = vld [vmem:[%s1 + $0x310] sm:$0xf]
    %v2295 = vld [vmem:[%s1 + $0x314] sm:$0xf]
    %v2296 = vld [vmem:[%s1 + $0x318] sm:$0xf]
    %v2297 = vld [vmem:[%s1 + $0x31c] sm:$0xf]
    %v2298 = vunpack.c.l.bf16 %v2098
    %v2299 = vunpack.c.l.bf16 %v2099
    %v2300 = vunpack.c.l.bf16 %v2100
    %v2301 = vunpack.c.l.bf16 %v2101
    %v2302 = vunpack.c.l.bf16 %v2102
    %v2303 = vunpack.c.l.bf16 %v2103
    %v2304 = vunpack.c.l.bf16 %v2104
    %v2305 = vunpack.c.l.bf16 %v2105
    %v2306 = vunpack.c.l.bf16 %v2106
    %v2307 = vunpack.c.l.bf16 %v2107
    %v2308 = vunpack.c.l.bf16 %v2108
    %v2309 = vunpack.c.l.bf16 %v2109
    %v2310 = vunpack.c.l.bf16 %v2110
    %v2311 = vunpack.c.l.bf16 %v2111
    %v2312 = vunpack.c.l.bf16 %v2112
    %v2313 = vunpack.c.l.bf16 %v2113
    %v2314 = vunpack.c.l.bf16 %v2114
    %v2315 = vunpack.c.l.bf16 %v2115
    %v2316 = vunpack.c.l.bf16 %v2116
    %v2317 = vunpack.c.l.bf16 %v2117
    %v2318 = vunpack.c.l.bf16 %v2118
    %v2319 = vunpack.c.l.bf16 %v2119
    %v2320 = vunpack.c.l.bf16 %v2120
    %v2321 = vunpack.c.l.bf16 %v2121
    %v2322 = vunpack.c.l.bf16 %v2122
    %v2323 = vunpack.c.l.bf16 %v2123
    %v2324 = vunpack.c.l.bf16 %v2124
    %v2325 = vunpack.c.l.bf16 %v2125
    %v2326 = vunpack.c.l.bf16 %v2126
    %v2327 = vunpack.c.l.bf16 %v2127
    %v2328 = vunpack.c.l.bf16 %v2128
    %v2329 = vunpack.c.l.bf16 %v2129
    %v2330 = vunpack.c.l.bf16 %v2130
    %v2331 = vunpack.c.l.bf16 %v2131
    %v2332 = vunpack.c.l.bf16 %v2132
    %v2333 = vunpack.c.l.bf16 %v2133
    %v2334 = vunpack.c.l.bf16 %v2134
    %v2335 = vunpack.c.l.bf16 %v2135
    %v2336 = vunpack.c.l.bf16 %v2136
    %v2337 = vunpack.c.l.bf16 %v2137
    %v2338 = vunpack.c.l.bf16 %v2138
    %v2339 = vunpack.c.l.bf16 %v2139
    %v2340 = vunpack.c.l.bf16 %v2140
    %v2341 = vunpack.c.l.bf16 %v2141
    %v2342 = vunpack.c.l.bf16 %v2142
    %v2343 = vunpack.c.l.bf16 %v2143
    %v2344 = vunpack.c.l.bf16 %v2144
    %v2345 = vunpack.c.l.bf16 %v2145
    %v2346 = vunpack.c.l.bf16 %v2146
    %v2347 = vunpack.c.l.bf16 %v2147
    %v2348 = vunpack.c.l.bf16 %v2148
    %v2349 = vunpack.c.l.bf16 %v2149
    %v2350 = vunpack.c.l.bf16 %v2150
    %v2351 = vunpack.c.l.bf16 %v2151
    %v2352 = vunpack.c.l.bf16 %v2152
    %v2353 = vunpack.c.l.bf16 %v2153
    %v2354 = vunpack.c.l.bf16 %v2154
    %v2355 = vunpack.c.l.bf16 %v2155
    %v2356 = vunpack.c.l.bf16 %v2156
    %v2357 = vunpack.c.l.bf16 %v2157
    %v2358 = vunpack.c.l.bf16 %v2158
    %v2359 = vunpack.c.l.bf16 %v2159
    %v2360 = vunpack.c.l.bf16 %v2160
    %v2361 = vunpack.c.l.bf16 %v2161
    %v2362 = vunpack.c.l.bf16 %v2162
    %v2363 = vunpack.c.l.bf16 %v2163
    %v2364 = vunpack.c.l.bf16 %v2164
    %v2365 = vunpack.c.l.bf16 %v2165
    %v2366 = vunpack.c.l.bf16 %v2166
    %v2367 = vunpack.c.l.bf16 %v2167
    %v2368 = vunpack.c.l.bf16 %v2168
    %v2369 = vunpack.c.l.bf16 %v2169
    %v2370 = vunpack.c.l.bf16 %v2170
    %v2371 = vunpack.c.l.bf16 %v2171
    %v2372 = vunpack.c.l.bf16 %v2172
    %v2373 = vunpack.c.l.bf16 %v2173
    %v2374 = vunpack.c.l.bf16 %v2174
    %v2375 = vunpack.c.l.bf16 %v2175
    %v2376 = vunpack.c.l.bf16 %v2176
    %v2377 = vunpack.c.l.bf16 %v2177
    %v2378 = vunpack.c.l.bf16 %v2178
    %v2379 = vunpack.c.l.bf16 %v2179
    %v2380 = vunpack.c.l.bf16 %v2180
    %v2381 = vunpack.c.l.bf16 %v2181
    %v2382 = vunpack.c.l.bf16 %v2182
    %v2383 = vunpack.c.l.bf16 %v2183
    %v2384 = vunpack.c.l.bf16 %v2184
    %v2385 = vunpack.c.l.bf16 %v2185
    %v2386 = vunpack.c.l.bf16 %v2186
    %v2387 = vunpack.c.l.bf16 %v2187
    %v2388 = vunpack.c.l.bf16 %v2188
    %v2389 = vunpack.c.l.bf16 %v2189
    %v2390 = vunpack.c.l.bf16 %v2190
    %v2391 = vunpack.c.l.bf16 %v2191
    %v2392 = vunpack.c.l.bf16 %v2192
    %v2393 = vunpack.c.l.bf16 %v2193
    %v2394 = vunpack.c.l.bf16 %v2194
    %v2395 = vunpack.c.l.bf16 %v2195
    %v2396 = vunpack.c.l.bf16 %v2196
    %v2397 = vunpack.c.l.bf16 %v2197
    %v2398 = vunpack.c.l.bf16 %v2198
    %v2399 = vunpack.c.l.bf16 %v2199
    %v2400 = vunpack.c.l.bf16 %v2200
    %v2401 = vunpack.c.l.bf16 %v2201
    %v2402 = vunpack.c.l.bf16 %v2202
    %v2403 = vunpack.c.l.bf16 %v2203
    %v2404 = vunpack.c.l.bf16 %v2204
    %v2405 = vunpack.c.l.bf16 %v2205
    %v2406 = vunpack.c.l.bf16 %v2206
    %v2407 = vunpack.c.l.bf16 %v2207
    %v2408 = vunpack.c.l.bf16 %v2208
    %v2409 = vunpack.c.l.bf16 %v2209
    %v2410 = vunpack.c.l.bf16 %v2210
    %v2411 = vunpack.c.l.bf16 %v2211
    %v2412 = vunpack.c.l.bf16 %v2212
    %v2413 = vunpack.c.l.bf16 %v2213
    %v2414 = vunpack.c.l.bf16 %v2214
    %v2415 = vunpack.c.l.bf16 %v2215
    %v2416 = vunpack.c.l.bf16 %v2216
    %v2417 = vunpack.c.l.bf16 %v2217
    %v2418 = vunpack.c.l.bf16 %v2218
    %v2419 = vunpack.c.l.bf16 %v2219
    %v2420 = vunpack.c.l.bf16 %v2220
    %v2421 = vunpack.c.l.bf16 %v2221
    %v2422 = vunpack.c.l.bf16 %v2222
    %v2423 = vunpack.c.l.bf16 %v2223
    %v2424 = vunpack.c.l.bf16 %v2224
    %v2425 = vunpack.c.l.bf16 %v2225
    %v2426 = vunpack.c.l.bf16 %v2226
    %v2427 = vunpack.c.l.bf16 %v2227
    %v2428 = vunpack.c.l.bf16 %v2228
    %v2429 = vunpack.c.l.bf16 %v2229
    %v2430 = vunpack.c.l.bf16 %v2230
    %v2431 = vunpack.c.l.bf16 %v2231
    %v2432 = vunpack.c.l.bf16 %v2232
    %v2433 = vunpack.c.l.bf16 %v2233
    %v2434 = vunpack.c.l.bf16 %v2234
    %v2435 = vunpack.c.l.bf16 %v2235
    %v2436 = vunpack.c.l.bf16 %v2236
    %v2437 = vunpack.c.l.bf16 %v2237
    %v2438 = vunpack.c.l.bf16 %v2238
    %v2439 = vunpack.c.l.bf16 %v2239
    %v2440 = vunpack.c.l.bf16 %v2240
    %v2441 = vunpack.c.l.bf16 %v2241
    %v2442 = vunpack.c.l.bf16 %v2242
    %v2443 = vunpack.c.l.bf16 %v2243
    %v2444 = vunpack.c.l.bf16 %v2244
    %v2445 = vunpack.c.l.bf16 %v2245
    %v2446 = vunpack.c.l.bf16 %v2246
    %v2447 = vunpack.c.l.bf16 %v2247
    %v2448 = vunpack.c.l.bf16 %v2248
    %v2449 = vunpack.c.l.bf16 %v2249
    %v2450 = vunpack.c.l.bf16 %v2250
    %v2451 = vunpack.c.l.bf16 %v2251
    %v2452 = vunpack.c.l.bf16 %v2252
    %v2453 = vunpack.c.l.bf16 %v2253
    %v2454 = vunpack.c.l.bf16 %v2254
    %v2455 = vunpack.c.l.bf16 %v2255
    %v2456 = vunpack.c.l.bf16 %v2256
    %v2457 = vunpack.c.l.bf16 %v2257
    %v2458 = vunpack.c.l.bf16 %v2258
    %v2459 = vunpack.c.l.bf16 %v2259
    %v2460 = vunpack.c.l.bf16 %v2260
    %v2461 = vunpack.c.l.bf16 %v2261
    %v2462 = vunpack.c.l.bf16 %v2262
    %v2463 = vunpack.c.l.bf16 %v2263
    %v2464 = vunpack.c.l.bf16 %v2264
    %v2465 = vunpack.c.l.bf16 %v2265
    %v2466 = vunpack.c.l.bf16 %v2266
    %v2467 = vunpack.c.l.bf16 %v2267
    %v2468 = vunpack.c.l.bf16 %v2268
    %v2469 = vunpack.c.l.bf16 %v2269
    %v2470 = vunpack.c.l.bf16 %v2270
    %v2471 = vunpack.c.l.bf16 %v2271
    %v2472 = vunpack.c.l.bf16 %v2272
    %v2473 = vunpack.c.l.bf16 %v2273
    %v2474 = vunpack.c.l.bf16 %v2274
    %v2475 = vunpack.c.l.bf16 %v2275
    %v2476 = vunpack.c.l.bf16 %v2276
    %v2477 = vunpack.c.l.bf16 %v2277
    %v2478 = vunpack.c.l.bf16 %v2278
    %v2479 = vunpack.c.l.bf16 %v2279
    %v2480 = vunpack.c.l.bf16 %v2280
    %v2481 = vunpack.c.l.bf16 %v2281
    %v2482 = vunpack.c.l.bf16 %v2282
    %v2483 = vunpack.c.l.bf16 %v2283
    %v2484 = vunpack.c.l.bf16 %v2284
    %v2485 = vunpack.c.l.bf16 %v2285
    %v2486 = vunpack.c.l.bf16 %v2286
    %v2487 = vunpack.c.l.bf16 %v2287
    %v2488 = vunpack.c.l.bf16 %v2288
    %v2489 = vunpack.c.l.bf16 %v2289
    %v2490 = vunpack.c.l.bf16 %v2290
    %v2491 = vunpack.c.l.bf16 %v2291
    %v2492 = vunpack.c.l.bf16 %v2292
    %v2493 = vunpack.c.l.bf16 %v2293
    %v2494 = vunpack.c.l.bf16 %v2294
    %v2495 = vunpack.c.l.bf16 %v2295
    %v2496 = vunpack.c.l.bf16 %v2296
    %v2497 = vunpack.c.l.bf16 %v2297
    %v2498 = vsub.f32 %v1898, %v2298
    %v2499 = vsub.f32 %v1899, %v2299
    %v2500 = vsub.f32 %v1900, %v2300
    %v2501 = vsub.f32 %v1901, %v2301
    %v2502 = vsub.f32 %v1902, %v2302
    %v2503 = vsub.f32 %v1903, %v2303
    %v2504 = vsub.f32 %v1904, %v2304
    %v2505 = vsub.f32 %v1905, %v2305
    %v2506 = vsub.f32 %v1906, %v2306
    %v2507 = vsub.f32 %v1907, %v2307
    %v2508 = vsub.f32 %v1908, %v2308
    %v2509 = vsub.f32 %v1909, %v2309
    %v2510 = vsub.f32 %v1910, %v2310
    %v2511 = vsub.f32 %v1911, %v2311
    %v2512 = vsub.f32 %v1912, %v2312
    %v2513 = vsub.f32 %v1913, %v2313
    %v2514 = vsub.f32 %v1914, %v2314
    %v2515 = vsub.f32 %v1915, %v2315
    %v2516 = vsub.f32 %v1916, %v2316
    %v2517 = vsub.f32 %v1917, %v2317
    %v2518 = vsub.f32 %v1918, %v2318
    %v2519 = vsub.f32 %v1919, %v2319
    %v2520 = vsub.f32 %v1920, %v2320
    %v2521 = vsub.f32 %v1921, %v2321
    %v2522 = vsub.f32 %v1922, %v2322
    %v2523 = vsub.f32 %v1923, %v2323
    %v2524 = vsub.f32 %v1924, %v2324
    %v2525 = vsub.f32 %v1925, %v2325
    %v2526 = vsub.f32 %v1926, %v2326
    %v2527 = vsub.f32 %v1927, %v2327
    %v2528 = vsub.f32 %v1928, %v2328
    %v2529 = vsub.f32 %v1929, %v2329
    %v2530 = vsub.f32 %v1930, %v2330
    %v2531 = vsub.f32 %v1931, %v2331
    %v2532 = vsub.f32 %v1932, %v2332
    %v2533 = vsub.f32 %v1933, %v2333
    %v2534 = vsub.f32 %v1934, %v2334
    %v2535 = vsub.f32 %v1935, %v2335
    %v2536 = vsub.f32 %v1936, %v2336
    %v2537 = vsub.f32 %v1937, %v2337
    %v2538 = vsub.f32 %v1938, %v2338
    %v2539 = vsub.f32 %v1939, %v2339
    %v2540 = vsub.f32 %v1940, %v2340
    %v2541 = vsub.f32 %v1941, %v2341
    %v2542 = vsub.f32 %v1942, %v2342
    %v2543 = vsub.f32 %v1943, %v2343
    %v2544 = vsub.f32 %v1944, %v2344
    %v2545 = vsub.f32 %v1945, %v2345
    %v2546 = vsub.f32 %v1946, %v2346
    %v2547 = vsub.f32 %v1947, %v2347
    %v2548 = vsub.f32 %v1948, %v2348
    %v2549 = vsub.f32 %v1949, %v2349
    %v2550 = vsub.f32 %v1950, %v2350
    %v2551 = vsub.f32 %v1951, %v2351
    %v2552 = vsub.f32 %v1952, %v2352
    %v2553 = vsub.f32 %v1953, %v2353
    %v2554 = vsub.f32 %v1954, %v2354
    %v2555 = vsub.f32 %v1955, %v2355
    %v2556 = vsub.f32 %v1956, %v2356
    %v2557 = vsub.f32 %v1957, %v2357
    %v2558 = vsub.f32 %v1958, %v2358
    %v2559 = vsub.f32 %v1959, %v2359
    %v2560 = vsub.f32 %v1960, %v2360
    %v2561 = vsub.f32 %v1961, %v2361
    %v2562 = vsub.f32 %v1962, %v2362
    %v2563 = vsub.f32 %v1963, %v2363
    %v2564 = vsub.f32 %v1964, %v2364
    %v2565 = vsub.f32 %v1965, %v2365
    %v2566 = vsub.f32 %v1966, %v2366
    %v2567 = vsub.f32 %v1967, %v2367
    %v2568 = vsub.f32 %v1968, %v2368
    %v2569 = vsub.f32 %v1969, %v2369
    %v2570 = vsub.f32 %v1970, %v2370
    %v2571 = vsub.f32 %v1971, %v2371
    %v2572 = vsub.f32 %v1972, %v2372
    %v2573 = vsub.f32 %v1973, %v2373
    %v2574 = vsub.f32 %v1974, %v2374
    %v2575 = vsub.f32 %v1975, %v2375
    %v2576 = vsub.f32 %v1976, %v2376
    %v2577 = vsub.f32 %v1977, %v2377
    %v2578 = vsub.f32 %v1978, %v2378
    %v2579 = vsub.f32 %v1979, %v2379
    %v2580 = vsub.f32 %v1980, %v2380
    %v2581 = vsub.f32 %v1981, %v2381
    %v2582 = vsub.f32 %v1982, %v2382
    %v2583 = vsub.f32 %v1983, %v2383
    %v2584 = vsub.f32 %v1984, %v2384
    %v2585 = vsub.f32 %v1985, %v2385
    %v2586 = vsub.f32 %v1986, %v2386
    %v2587 = vsub.f32 %v1987, %v2387
    %v2588 = vsub.f32 %v1988, %v2388
    %v2589 = vsub.f32 %v1989, %v2389
    %v2590 = vsub.f32 %v1990, %v2390
    %v2591 = vsub.f32 %v1991, %v2391
    %v2592 = vsub.f32 %v1992, %v2392
    %v2593 = vsub.f32 %v1993, %v2393
    %v2594 = vsub.f32 %v1994, %v2394
    %v2595 = vsub.f32 %v1995, %v2395
    %v2596 = vsub.f32 %v1996, %v2396
    %v2597 = vsub.f32 %v1997, %v2397
    %v2598 = vsub.f32 %v1998, %v2398
    %v2599 = vsub.f32 %v1999, %v2399
    %v2600 = vsub.f32 %v2000, %v2400
    %v2601 = vsub.f32 %v2001, %v2401
    %v2602 = vsub.f32 %v2002, %v2402
    %v2603 = vsub.f32 %v2003, %v2403
    %v2604 = vsub.f32 %v2004, %v2404
    %v2605 = vsub.f32 %v2005, %v2405
    %v2606 = vsub.f32 %v2006, %v2406
    %v2607 = vsub.f32 %v2007, %v2407
    %v2608 = vsub.f32 %v2008, %v2408
    %v2609 = vsub.f32 %v2009, %v2409
    %v2610 = vsub.f32 %v2010, %v2410
    %v2611 = vsub.f32 %v2011, %v2411
    %v2612 = vsub.f32 %v2012, %v2412
    %v2613 = vsub.f32 %v2013, %v2413
    %v2614 = vsub.f32 %v2014, %v2414
    %v2615 = vsub.f32 %v2015, %v2415
    %v2616 = vsub.f32 %v2016, %v2416
    %v2617 = vsub.f32 %v2017, %v2417
    %v2618 = vsub.f32 %v2018, %v2418
    %v2619 = vsub.f32 %v2019, %v2419
    %v2620 = vsub.f32 %v2020, %v2420
    %v2621 = vsub.f32 %v2021, %v2421
    %v2622 = vsub.f32 %v2022, %v2422
    %v2623 = vsub.f32 %v2023, %v2423
    %v2624 = vsub.f32 %v2024, %v2424
    %v2625 = vsub.f32 %v2025, %v2425
    %v2626 = vsub.f32 %v2026, %v2426
    %v2627 = vsub.f32 %v2027, %v2427
    %v2628 = vsub.f32 %v2028, %v2428
    %v2629 = vsub.f32 %v2029, %v2429
    %v2630 = vsub.f32 %v2030, %v2430
    %v2631 = vsub.f32 %v2031, %v2431
    %v2632 = vsub.f32 %v2032, %v2432
    %v2633 = vsub.f32 %v2033, %v2433
    %v2634 = vsub.f32 %v2034, %v2434
    %v2635 = vsub.f32 %v2035, %v2435
    %v2636 = vsub.f32 %v2036, %v2436
    %v2637 = vsub.f32 %v2037, %v2437
    %v2638 = vsub.f32 %v2038, %v2438
    %v2639 = vsub.f32 %v2039, %v2439
    %v2640 = vsub.f32 %v2040, %v2440
    %v2641 = vsub.f32 %v2041, %v2441
    %v2642 = vsub.f32 %v2042, %v2442
    %v2643 = vsub.f32 %v2043, %v2443
    %v2644 = vsub.f32 %v2044, %v2444
    %v2645 = vsub.f32 %v2045, %v2445
    %v2646 = vsub.f32 %v2046, %v2446
    %v2647 = vsub.f32 %v2047, %v2447
    %v2648 = vsub.f32 %v2048, %v2448
    %v2649 = vsub.f32 %v2049, %v2449
    %v2650 = vsub.f32 %v2050, %v2450
    %v2651 = vsub.f32 %v2051, %v2451
    %v2652 = vsub.f32 %v2052, %v2452
    %v2653 = vsub.f32 %v2053, %v2453
    %v2654 = vsub.f32 %v2054, %v2454
    %v2655 = vsub.f32 %v2055, %v2455
    %v2656 = vsub.f32 %v2056, %v2456
    %v2657 = vsub.f32 %v2057, %v2457
    %v2658 = vsub.f32 %v2058, %v2458
    %v2659 = vsub.f32 %v2059, %v2459
    %v2660 = vsub.f32 %v2060, %v2460
    %v2661 = vsub.f32 %v2061, %v2461
    %v2662 = vsub.f32 %v2062, %v2462
    %v2663 = vsub.f32 %v2063, %v2463
    %v2664 = vsub.f32 %v2064, %v2464
    %v2665 = vsub.f32 %v2065, %v2465
    %v2666 = vsub.f32 %v2066, %v2466
    %v2667 = vsub.f32 %v2067, %v2467
    %v2668 = vsub.f32 %v2068, %v2468
    %v2669 = vsub.f32 %v2069, %v2469
    %v2670 = vsub.f32 %v2070, %v2470
    %v2671 = vsub.f32 %v2071, %v2471
    %v2672 = vsub.f32 %v2072, %v2472
    %v2673 = vsub.f32 %v2073, %v2473
    %v2674 = vsub.f32 %v2074, %v2474
    %v2675 = vsub.f32 %v2075, %v2475
    %v2676 = vsub.f32 %v2076, %v2476
    %v2677 = vsub.f32 %v2077, %v2477
    %v2678 = vsub.f32 %v2078, %v2478
    %v2679 = vsub.f32 %v2079, %v2479
    %v2680 = vsub.f32 %v2080, %v2480
    %v2681 = vsub.f32 %v2081, %v2481
    %v2682 = vsub.f32 %v2082, %v2482
    %v2683 = vsub.f32 %v2083, %v2483
    %v2684 = vsub.f32 %v2084, %v2484
    %v2685 = vsub.f32 %v2085, %v2485
    %v2686 = vsub.f32 %v2086, %v2486
    %v2687 = vsub.f32 %v2087, %v2487
    %v2688 = vsub.f32 %v2088, %v2488
    %v2689 = vsub.f32 %v2089, %v2489
    %v2690 = vsub.f32 %v2090, %v2490
    %v2691 = vsub.f32 %v2091, %v2491
    %v2692 = vsub.f32 %v2092, %v2492
    %v2693 = vsub.f32 %v2093, %v2493
    %v2694 = vsub.f32 %v2094, %v2494
    %v2695 = vsub.f32 %v2095, %v2495
    %v2696 = vsub.f32 %v2096, %v2496
    %v2697 = vsub.f32 %v2097, %v2497
    %v2698 = vpack.c.bf16 %v2499, %v2498
    %v2699 = vpack.c.bf16 %v2501, %v2500
    %v2700 = vpack.c.bf16 %v2503, %v2502
    %v2701 = vpack.c.bf16 %v2505, %v2504
    %v2702 = vpack.c.bf16 %v2507, %v2506
    %v2703 = vpack.c.bf16 %v2509, %v2508
    %v2704 = vpack.c.bf16 %v2511, %v2510
    %v2705 = vpack.c.bf16 %v2513, %v2512
    %v2706 = vpack.c.bf16 %v2515, %v2514
    %v2707 = vpack.c.bf16 %v2517, %v2516
    %v2708 = vpack.c.bf16 %v2519, %v2518
    %v2709 = vpack.c.bf16 %v2521, %v2520
    %v2710 = vpack.c.bf16 %v2523, %v2522
    %v2711 = vpack.c.bf16 %v2525, %v2524
    %v2712 = vpack.c.bf16 %v2527, %v2526
    %v2713 = vpack.c.bf16 %v2529, %v2528
    %v2714 = vpack.c.bf16 %v2531, %v2530
    %v2715 = vpack.c.bf16 %v2533, %v2532
    %v2716 = vpack.c.bf16 %v2535, %v2534
    %v2717 = vpack.c.bf16 %v2537, %v2536
    %v2718 = vpack.c.bf16 %v2539, %v2538
    %v2719 = vpack.c.bf16 %v2541, %v2540
    %v2720 = vpack.c.bf16 %v2543, %v2542
    %v2721 = vpack.c.bf16 %v2545, %v2544
    %v2722 = vpack.c.bf16 %v2547, %v2546
    %v2723 = vpack.c.bf16 %v2549, %v2548
    %v2724 = vpack.c.bf16 %v2551, %v2550
    %v2725 = vpack.c.bf16 %v2553, %v2552
    %v2726 = vpack.c.bf16 %v2555, %v2554
    %v2727 = vpack.c.bf16 %v2557, %v2556
    %v2728 = vpack.c.bf16 %v2559, %v2558
    %v2729 = vpack.c.bf16 %v2561, %v2560
    %v2730 = vpack.c.bf16 %v2563, %v2562
    %v2731 = vpack.c.bf16 %v2565, %v2564
    %v2732 = vpack.c.bf16 %v2567, %v2566
    %v2733 = vpack.c.bf16 %v2569, %v2568
    %v2734 = vpack.c.bf16 %v2571, %v2570
    %v2735 = vpack.c.bf16 %v2573, %v2572
    %v2736 = vpack.c.bf16 %v2575, %v2574
    %v2737 = vpack.c.bf16 %v2577, %v2576
    %v2738 = vpack.c.bf16 %v2579, %v2578
    %v2739 = vpack.c.bf16 %v2581, %v2580
    %v2740 = vpack.c.bf16 %v2583, %v2582
    %v2741 = vpack.c.bf16 %v2585, %v2584
    %v2742 = vpack.c.bf16 %v2587, %v2586
    %v2743 = vpack.c.bf16 %v2589, %v2588
    %v2744 = vpack.c.bf16 %v2591, %v2590
    %v2745 = vpack.c.bf16 %v2593, %v2592
    %v2746 = vpack.c.bf16 %v2595, %v2594
    %v2747 = vpack.c.bf16 %v2597, %v2596
    %v2748 = vpack.c.bf16 %v2599, %v2598
    %v2749 = vpack.c.bf16 %v2601, %v2600
    %v2750 = vpack.c.bf16 %v2603, %v2602
    %v2751 = vpack.c.bf16 %v2605, %v2604
    %v2752 = vpack.c.bf16 %v2607, %v2606
    %v2753 = vpack.c.bf16 %v2609, %v2608
    %v2754 = vpack.c.bf16 %v2611, %v2610
    %v2755 = vpack.c.bf16 %v2613, %v2612
    %v2756 = vpack.c.bf16 %v2615, %v2614
    %v2757 = vpack.c.bf16 %v2617, %v2616
    %v2758 = vpack.c.bf16 %v2619, %v2618
    %v2759 = vpack.c.bf16 %v2621, %v2620
    %v2760 = vpack.c.bf16 %v2623, %v2622
    %v2761 = vpack.c.bf16 %v2625, %v2624
    %v2762 = vpack.c.bf16 %v2627, %v2626
    %v2763 = vpack.c.bf16 %v2629, %v2628
    %v2764 = vpack.c.bf16 %v2631, %v2630
    %v2765 = vpack.c.bf16 %v2633, %v2632
    %v2766 = vpack.c.bf16 %v2635, %v2634
    %v2767 = vpack.c.bf16 %v2637, %v2636
    %v2768 = vpack.c.bf16 %v2639, %v2638
    %v2769 = vpack.c.bf16 %v2641, %v2640
    %v2770 = vpack.c.bf16 %v2643, %v2642
    %v2771 = vpack.c.bf16 %v2645, %v2644
    %v2772 = vpack.c.bf16 %v2647, %v2646
    %v2773 = vpack.c.bf16 %v2649, %v2648
    %v2774 = vpack.c.bf16 %v2651, %v2650
    %v2775 = vpack.c.bf16 %v2653, %v2652
    %v2776 = vpack.c.bf16 %v2655, %v2654
    %v2777 = vpack.c.bf16 %v2657, %v2656
    %v2778 = vpack.c.bf16 %v2659, %v2658
    %v2779 = vpack.c.bf16 %v2661, %v2660
    %v2780 = vpack.c.bf16 %v2663, %v2662
    %v2781 = vpack.c.bf16 %v2665, %v2664
    %v2782 = vpack.c.bf16 %v2667, %v2666
    %v2783 = vpack.c.bf16 %v2669, %v2668
    %v2784 = vpack.c.bf16 %v2671, %v2670
    %v2785 = vpack.c.bf16 %v2673, %v2672
    %v2786 = vpack.c.bf16 %v2675, %v2674
    %v2787 = vpack.c.bf16 %v2677, %v2676
    %v2788 = vpack.c.bf16 %v2679, %v2678
    %v2789 = vpack.c.bf16 %v2681, %v2680
    %v2790 = vpack.c.bf16 %v2683, %v2682
    %v2791 = vpack.c.bf16 %v2685, %v2684
    %v2792 = vpack.c.bf16 %v2687, %v2686
    %v2793 = vpack.c.bf16 %v2689, %v2688
    %v2794 = vpack.c.bf16 %v2691, %v2690
    %v2795 = vpack.c.bf16 %v2693, %v2692
    %v2796 = vpack.c.bf16 %v2695, %v2694
    %v2797 = vpack.c.bf16 %v2697, %v2696
    %v2798 = vld [vmem:[%s4] sm:$0xf]
    %v2799 = vld [vmem:[%s4 + $0x4] sm:$0xf]
    %v2800 = vld [vmem:[%s4 + $0x8] sm:$0xf]
    %v2801 = vld [vmem:[%s4 + $0xc] sm:$0xf]
    %v2802 = vld [vmem:[%s4 + $0x10] sm:$0xf]
    %v2803 = vld [vmem:[%s4 + $0x14] sm:$0xf]
    %v2804 = vld [vmem:[%s4 + $0x18] sm:$0xf]
    %v2805 = vld [vmem:[%s4 + $0x1c] sm:$0xf]
    %v2806 = vld [vmem:[%s5] sm:$0x1]
    %v2808 = vlaneseq
    %v2809 = vshrl.u32 %v2808, 7
    %v2810 = vsub.s32 0, %v2809
    %v2811 = vrot.slane %v2806, %v2810
    %v2821 = vunpack.c.l.b16 %v2798
    %v2822 = vunpack.c.l.b16 %v2799
    %v2823 = vunpack.c.l.b16 %v2800
    %v2824 = vunpack.c.l.b16 %v2801
    %v2825 = vunpack.c.l.b16 %v2802
    %v2826 = vunpack.c.l.b16 %v2803
    %v2827 = vunpack.c.l.b16 %v2804
    %v2828 = vunpack.c.l.b16 %v2805
    %v2829 = vpack.c.b16 %v2822, %v2821
    %v2830 = vpack.c.b16 %v2824, %v2823
    %v2831 = vpack.c.b16 %v2826, %v2825
    %v2832 = vpack.c.b16 %v2828, %v2827
    %vm2837 = vcmask 523264
    %v2839 = vsel %vm2837, %v2698, 0
    %v2842 = vsel %vm2837, %v2699, 0
    %v2845 = vsel %vm2837, %v2700, 0
    %v2848 = vsel %vm2837, %v2701, 0
    %v2851 = vsel %vm2837, %v2702, 0
    %v2854 = vsel %vm2837, %v2703, 0
    %v2857 = vsel %vm2837, %v2704, 0
    %v2860 = vsel %vm2837, %v2705, 0
    %v2863 = vsel %vm2837, %v2706, 0
    %v2866 = vsel %vm2837, %v2707, 0
    %v2869 = vsel %vm2837, %v2708, 0
    %v2872 = vsel %vm2837, %v2709, 0
    %v2875 = vsel %vm2837, %v2710, 0
    %v2878 = vsel %vm2837, %v2711, 0
    %v2881 = vsel %vm2837, %v2712, 0
    %v2884 = vsel %vm2837, %v2713, 0
    %v2887 = vsel %vm2837, %v2714, 0
    %v2890 = vsel %vm2837, %v2715, 0
    %v2893 = vsel %vm2837, %v2716, 0
    %v2896 = vsel %vm2837, %v2717, 0
    %v2899 = vsel %vm2837, %v2718, 0
    %v2902 = vsel %vm2837, %v2719, 0
    %v2905 = vsel %vm2837, %v2720, 0
    %v2908 = vsel %vm2837, %v2721, 0
    %v2911 = vsel %vm2837, %v2722, 0
    %v2914 = vsel %vm2837, %v2723, 0
    %v2917 = vsel %vm2837, %v2724, 0
    %v2920 = vsel %vm2837, %v2725, 0
    %v2923 = vsel %vm2837, %v2726, 0
    %v2926 = vsel %vm2837, %v2727, 0
    %v2929 = vsel %vm2837, %v2728, 0
    %v2932 = vsel %vm2837, %v2729, 0
    %v2935 = vsel %vm2837, %v2730, 0
    %v2938 = vsel %vm2837, %v2731, 0
    %v2941 = vsel %vm2837, %v2732, 0
    %v2944 = vsel %vm2837, %v2733, 0
    %v2947 = vsel %vm2837, %v2734, 0
    %v2950 = vsel %vm2837, %v2735, 0
    %v2953 = vsel %vm2837, %v2736, 0
    %v2956 = vsel %vm2837, %v2737, 0
    %v2959 = vsel %vm2837, %v2738, 0
    %v2962 = vsel %vm2837, %v2739, 0
    %v2965 = vsel %vm2837, %v2740, 0
    %v2968 = vsel %vm2837, %v2741, 0
    %v2971 = vsel %vm2837, %v2742, 0
    %v2974 = vsel %vm2837, %v2743, 0
    %v2977 = vsel %vm2837, %v2744, 0
    %v2980 = vsel %vm2837, %v2745, 0
    %v2983 = vsel %vm2837, %v2746, 0
    %v2986 = vsel %vm2837, %v2747, 0
    %v2989 = vsel %vm2837, %v2748, 0
    %v2992 = vsel %vm2837, %v2749, 0
    %v2995 = vsel %vm2837, %v2750, 0
    %v2998 = vsel %vm2837, %v2751, 0
    %v3001 = vsel %vm2837, %v2752, 0
    %v3004 = vsel %vm2837, %v2753, 0
    %v3007 = vsel %vm2837, %v2754, 0
    %v3010 = vsel %vm2837, %v2755, 0
    %v3013 = vsel %vm2837, %v2756, 0
    %v3016 = vsel %vm2837, %v2757, 0
    %v3019 = vsel %vm2837, %v2758, 0
    %v3022 = vsel %vm2837, %v2759, 0
    %v3025 = vsel %vm2837, %v2760, 0
    %v3028 = vsel %vm2837, %v2761, 0
    %v3031 = vsel %vm2837, %v2762, 0
    %v3034 = vsel %vm2837, %v2763, 0
    %v3037 = vsel %vm2837, %v2764, 0
    %v3040 = vsel %vm2837, %v2765, 0
    %v3043 = vsel %vm2837, %v2766, 0
    %v3046 = vsel %vm2837, %v2767, 0
    %v3049 = vsel %vm2837, %v2768, 0
    %v3052 = vsel %vm2837, %v2769, 0
    %v3055 = vsel %vm2837, %v2770, 0
    %v3058 = vsel %vm2837, %v2771, 0
    %v3061 = vsel %vm2837, %v2772, 0
    %v3064 = vsel %vm2837, %v2773, 0
    %v3067 = vsel %vm2837, %v2774, 0
    %v3070 = vsel %vm2837, %v2775, 0
    %v3073 = vsel %vm2837, %v2776, 0
    %v3076 = vsel %vm2837, %v2777, 0
    %v3079 = vsel %vm2837, %v2778, 0
    %v3082 = vsel %vm2837, %v2779, 0
    %v3085 = vsel %vm2837, %v2780, 0
    %v3088 = vsel %vm2837, %v2781, 0
    %v3091 = vsel %vm2837, %v2782, 0
    %v3094 = vsel %vm2837, %v2783, 0
    %v3097 = vsel %vm2837, %v2784, 0
    %v3100 = vsel %vm2837, %v2785, 0
    %v3103 = vsel %vm2837, %v2786, 0
    %v3106 = vsel %vm2837, %v2787, 0
    %v3109 = vsel %vm2837, %v2788, 0
    %v3112 = vsel %vm2837, %v2789, 0
    %v3115 = vsel %vm2837, %v2790, 0
    %v3118 = vsel %vm2837, %v2791, 0
    %v3121 = vsel %vm2837, %v2792, 0
    %v3124 = vsel %vm2837, %v2793, 0
    %v3127 = vsel %vm2837, %v2794, 0
    %v3130 = vsel %vm2837, %v2795, 0
    %v3133 = vsel %vm2837, %v2796, 0
    %v3136 = vsel %vm2837, %v2797, 0
    %3138 = vmatprep.subr.bf16.mxu0 0
    %3139 = vmatpush1.bf16.msra.mxu0 0
    %3140 = vmatprep.subr.bf16.mxu0 0
    %3141 = vmatpush1.bf16.msra.mxu0 0
    %3142 = vmatprep.subr.bf16.mxu0 0
    %3143 = vmatpush1.bf16.msra.mxu0 0
    %3144 = vmatprep.subr.bf16.mxu0 0
    %3145 = vmatpush1.bf16.msra.mxu0 0
    %3146 = vmatprep.subr.bf16.mxu0 0
    %3147 = vmatpush1.bf16.msra.mxu0 %v2832
    %3148 = vmatprep.subr.bf16.mxu0 0
    %3149 = vmatpush1.bf16.msra.mxu0 %v2831
    %3150 = vmatprep.subr.bf16.mxu0 0
    %3151 = vmatpush1.bf16.msra.mxu0 %v2830
    %3152 = vmatprep.subr.bf16.mxu0 0
    %3153 = vmatpush1.bf16.msra.mxu0 %v2829
    %3154 = vmatprep.subr.bf16.mxu0 0
    %3155 = vmatpush2.bf16.msra.mxu0 0
    %3156 = vmatprep.subr.bf16.mxu0 0
    %3157 = vmatpush2.bf16.msra.mxu0 0
    %3158 = vmatprep.subr.bf16.mxu0 0
    %3159 = vmatpush2.bf16.msra.mxu0 0
    %3160 = vmatprep.subr.bf16.mxu0 0
    %3161 = vmatpush2.bf16.msra.mxu0 0
    %3162 = vmatprep.subr.bf16.mxu0 0
    %3163 = vmatpush2.bf16.msra.mxu0 0
    %3164 = vmatprep.subr.bf16.mxu0 0
    %3165 = vmatpush2.bf16.msra.mxu0 0
    %3166 = vmatprep.subr.bf16.mxu0 0
    %3167 = vmatpush2.bf16.msra.mxu0 0
    %3168 = vmatprep.subr.bf16.mxu0 0
    %3169 = vmatpush2.bf16.msra.mxu0 0
    %3170 = vmatprep.mubr.bf16.mxu0 0
    %3171 = vmatmul.mubr.bf16.gmra.mxu0 %v2839
    %v3172 = vpop.f32.mrf.mxu0
    %v3173 = vadd.f32 %v2811, %v3172
    %v3174 = vpop.f32.mrf.mxu0
    %v3175 = vpop.f32.mrf.mxu0
    %v3176 = vadd.f32 %v2811, %v3175
    %v3177 = vpop.f32.mrf.mxu0
    %3178 = vmatprep.mubr.bf16.mxu0 0
    %3179 = vmatmul.mubr.bf16.gmra.mxu0 %v2842
    %v3180 = vpop.f32.mrf.mxu0
    %v3181 = vadd.f32 %v2811, %v3180
    %v3182 = vpop.f32.mrf.mxu0
    %v3183 = vpop.f32.mrf.mxu0
    %v3184 = vadd.f32 %v2811, %v3183
    %v3185 = vpop.f32.mrf.mxu0
    %3186 = vmatprep.mubr.bf16.mxu0 0
    %3187 = vmatmul.mubr.bf16.gmra.mxu0 %v2845
    %v3188 = vpop.f32.mrf.mxu0
    %v3189 = vadd.f32 %v2811, %v3188
    %v3190 = vpop.f32.mrf.mxu0
    %v3191 = vpop.f32.mrf.mxu0
    %v3192 = vadd.f32 %v2811, %v3191
    %v3193 = vpop.f32.mrf.mxu0
    %3194 = vmatprep.mubr.bf16.mxu0 0
    %3195 = vmatmul.mubr.bf16.gmra.mxu0 %v2848
    %v3196 = vpop.f32.mrf.mxu0
    %v3197 = vadd.f32 %v2811, %v3196
    %v3198 = vpop.f32.mrf.mxu0
    %v3199 = vpop.f32.mrf.mxu0
    %v3200 = vadd.f32 %v2811, %v3199
    %v3201 = vpop.f32.mrf.mxu0
    %3202 = vmatprep.mubr.bf16.mxu0 0
    %3203 = vmatmul.mubr.bf16.gmra.mxu0 %v2851
    %v3204 = vpop.f32.mrf.mxu0
    %v3205 = vadd.f32 %v2811, %v3204
    %v3206 = vpop.f32.mrf.mxu0
    %v3207 = vpop.f32.mrf.mxu0
    %v3208 = vadd.f32 %v2811, %v3207
    %v3209 = vpop.f32.mrf.mxu0
    %3210 = vmatprep.mubr.bf16.mxu0 0
    %3211 = vmatmul.mubr.bf16.gmra.mxu0 %v2854
    %v3212 = vpop.f32.mrf.mxu0
    %v3213 = vadd.f32 %v2811, %v3212
    %v3214 = vpop.f32.mrf.mxu0
    %v3215 = vpop.f32.mrf.mxu0
    %v3216 = vadd.f32 %v2811, %v3215
    %v3217 = vpop.f32.mrf.mxu0
    %3218 = vmatprep.mubr.bf16.mxu0 0
    %3219 = vmatmul.mubr.bf16.gmra.mxu0 %v2857
    %v3220 = vpop.f32.mrf.mxu0
    %v3221 = vadd.f32 %v2811, %v3220
    %v3222 = vpop.f32.mrf.mxu0
    %v3223 = vpop.f32.mrf.mxu0
    %v3224 = vadd.f32 %v2811, %v3223
    %v3225 = vpop.f32.mrf.mxu0
    %3226 = vmatprep.mubr.bf16.mxu0 0
    %3227 = vmatmul.mubr.bf16.gmra.mxu0 %v2860
    %v3228 = vpop.f32.mrf.mxu0
    %v3229 = vadd.f32 %v2811, %v3228
    %v3230 = vpop.f32.mrf.mxu0
    %v3231 = vpop.f32.mrf.mxu0
    %v3232 = vadd.f32 %v2811, %v3231
    %v3233 = vpop.f32.mrf.mxu0
    %3234 = vmatprep.mubr.bf16.mxu0 0
    %3235 = vmatmul.mubr.bf16.gmra.mxu0 %v2863
    %v3236 = vpop.f32.mrf.mxu0
    %v3237 = vadd.f32 %v2811, %v3236
    %v3238 = vpop.f32.mrf.mxu0
    %v3239 = vpop.f32.mrf.mxu0
    %v3240 = vadd.f32 %v2811, %v3239
    %v3241 = vpop.f32.mrf.mxu0
    %3242 = vmatprep.mubr.bf16.mxu0 0
    %3243 = vmatmul.mubr.bf16.gmra.mxu0 %v2866
    %v3244 = vpop.f32.mrf.mxu0
    %v3245 = vadd.f32 %v2811, %v3244
    %v3246 = vpop.f32.mrf.mxu0
    %v3247 = vpop.f32.mrf.mxu0
    %v3248 = vadd.f32 %v2811, %v3247
    %v3249 = vpop.f32.mrf.mxu0
    %3250 = vmatprep.mubr.bf16.mxu0 0
    %3251 = vmatmul.mubr.bf16.gmra.mxu0 %v2869
    %v3252 = vpop.f32.mrf.mxu0
    %v3253 = vadd.f32 %v2811, %v3252
    %v3254 = vpop.f32.mrf.mxu0
    %v3255 = vpop.f32.mrf.mxu0
    %v3256 = vadd.f32 %v2811, %v3255
    %v3257 = vpop.f32.mrf.mxu0
    %3258 = vmatprep.mubr.bf16.mxu0 0
    %3259 = vmatmul.mubr.bf16.gmra.mxu0 %v2872
    %v3260 = vpop.f32.mrf.mxu0
    %v3261 = vadd.f32 %v2811, %v3260
    %v3262 = vpop.f32.mrf.mxu0
    %v3263 = vpop.f32.mrf.mxu0
    %v3264 = vadd.f32 %v2811, %v3263
    %v3265 = vpop.f32.mrf.mxu0
    %3266 = vmatprep.mubr.bf16.mxu0 0
    %3267 = vmatmul.mubr.bf16.gmra.mxu0 %v2875
    %v3268 = vpop.f32.mrf.mxu0
    %v3269 = vadd.f32 %v2811, %v3268
    %v3270 = vpop.f32.mrf.mxu0
    %v3271 = vpop.f32.mrf.mxu0
    %v3272 = vadd.f32 %v2811, %v3271
    %v3273 = vpop.f32.mrf.mxu0
    %3274 = vmatprep.mubr.bf16.mxu0 0
    %3275 = vmatmul.mubr.bf16.gmra.mxu0 %v2878
    %v3276 = vpop.f32.mrf.mxu0
    %v3277 = vadd.f32 %v2811, %v3276
    %v3278 = vpop.f32.mrf.mxu0
    %v3279 = vpop.f32.mrf.mxu0
    %v3280 = vadd.f32 %v2811, %v3279
    %v3281 = vpop.f32.mrf.mxu0
    %3282 = vmatprep.mubr.bf16.mxu0 0
    %3283 = vmatmul.mubr.bf16.gmra.mxu0 %v2881
    %v3284 = vpop.f32.mrf.mxu0
    %v3285 = vadd.f32 %v2811, %v3284
    %v3286 = vpop.f32.mrf.mxu0
    %v3287 = vpop.f32.mrf.mxu0
    %v3288 = vadd.f32 %v2811, %v3287
    %v3289 = vpop.f32.mrf.mxu0
    %3290 = vmatprep.mubr.bf16.mxu0 0
    %3291 = vmatmul.mubr.bf16.gmra.mxu0 %v2884
    %v3292 = vpop.f32.mrf.mxu0
    %v3293 = vadd.f32 %v2811, %v3292
    %v3294 = vpop.f32.mrf.mxu0
    %v3295 = vpop.f32.mrf.mxu0
    %v3296 = vadd.f32 %v2811, %v3295
    %v3297 = vpop.f32.mrf.mxu0
    %3298 = vmatprep.mubr.bf16.mxu0 0
    %3299 = vmatmul.mubr.bf16.gmra.mxu0 %v2887
    %v3300 = vpop.f32.mrf.mxu0
    %v3301 = vadd.f32 %v2811, %v3300
    %v3302 = vpop.f32.mrf.mxu0
    %v3303 = vpop.f32.mrf.mxu0
    %v3304 = vadd.f32 %v2811, %v3303
    %v3305 = vpop.f32.mrf.mxu0
    %3306 = vmatprep.mubr.bf16.mxu0 0
    %3307 = vmatmul.mubr.bf16.gmra.mxu0 %v2890
    %v3308 = vpop.f32.mrf.mxu0
    %v3309 = vadd.f32 %v2811, %v3308
    %v3310 = vpop.f32.mrf.mxu0
    %v3311 = vpop.f32.mrf.mxu0
    %v3312 = vadd.f32 %v2811, %v3311
    %v3313 = vpop.f32.mrf.mxu0
    %3314 = vmatprep.mubr.bf16.mxu0 0
    %3315 = vmatmul.mubr.bf16.gmra.mxu0 %v2893
    %v3316 = vpop.f32.mrf.mxu0
    %v3317 = vadd.f32 %v2811, %v3316
    %v3318 = vpop.f32.mrf.mxu0
    %v3319 = vpop.f32.mrf.mxu0
    %v3320 = vadd.f32 %v2811, %v3319
    %v3321 = vpop.f32.mrf.mxu0
    %3322 = vmatprep.mubr.bf16.mxu0 0
    %3323 = vmatmul.mubr.bf16.gmra.mxu0 %v2896
    %v3324 = vpop.f32.mrf.mxu0
    %v3325 = vadd.f32 %v2811, %v3324
    %v3326 = vpop.f32.mrf.mxu0
    %v3327 = vpop.f32.mrf.mxu0
    %v3328 = vadd.f32 %v2811, %v3327
    %v3329 = vpop.f32.mrf.mxu0
    %3330 = vmatprep.mubr.bf16.mxu0 0
    %3331 = vmatmul.mubr.bf16.gmra.mxu0 %v2899
    %v3332 = vpop.f32.mrf.mxu0
    %v3333 = vadd.f32 %v2811, %v3332
    %v3334 = vpop.f32.mrf.mxu0
    %v3335 = vpop.f32.mrf.mxu0
    %v3336 = vadd.f32 %v2811, %v3335
    %v3337 = vpop.f32.mrf.mxu0
    %3338 = vmatprep.mubr.bf16.mxu0 0
    %3339 = vmatmul.mubr.bf16.gmra.mxu0 %v2902
    %v3340 = vpop.f32.mrf.mxu0
    %v3341 = vadd.f32 %v2811, %v3340
    %v3342 = vpop.f32.mrf.mxu0
    %v3343 = vpop.f32.mrf.mxu0
    %v3344 = vadd.f32 %v2811, %v3343
    %v3345 = vpop.f32.mrf.mxu0
    %3346 = vmatprep.mubr.bf16.mxu0 0
    %3347 = vmatmul.mubr.bf16.gmra.mxu0 %v2905
    %v3348 = vpop.f32.mrf.mxu0
    %v3349 = vadd.f32 %v2811, %v3348
    %v3350 = vpop.f32.mrf.mxu0
    %v3351 = vpop.f32.mrf.mxu0
    %v3352 = vadd.f32 %v2811, %v3351
    %v3353 = vpop.f32.mrf.mxu0
    %3354 = vmatprep.mubr.bf16.mxu0 0
    %3355 = vmatmul.mubr.bf16.gmra.mxu0 %v2908
    %v3356 = vpop.f32.mrf.mxu0
    %v3357 = vadd.f32 %v2811, %v3356
    %v3358 = vpop.f32.mrf.mxu0
    %v3359 = vpop.f32.mrf.mxu0
    %v3360 = vadd.f32 %v2811, %v3359
    %v3361 = vpop.f32.mrf.mxu0
    %3362 = vmatprep.mubr.bf16.mxu0 0
    %3363 = vmatmul.mubr.bf16.gmra.mxu0 %v2911
    %v3364 = vpop.f32.mrf.mxu0
    %v3365 = vadd.f32 %v2811, %v3364
    %v3366 = vpop.f32.mrf.mxu0
    %v3367 = vpop.f32.mrf.mxu0
    %v3368 = vadd.f32 %v2811, %v3367
    %v3369 = vpop.f32.mrf.mxu0
    %3370 = vmatprep.mubr.bf16.mxu0 0
    %3371 = vmatmul.mubr.bf16.gmra.mxu0 %v2914
    %v3372 = vpop.f32.mrf.mxu0
    %v3373 = vadd.f32 %v2811, %v3372
    %v3374 = vpop.f32.mrf.mxu0
    %v3375 = vpop.f32.mrf.mxu0
    %v3376 = vadd.f32 %v2811, %v3375
    %v3377 = vpop.f32.mrf.mxu0
    %3378 = vmatprep.mubr.bf16.mxu0 0
    %3379 = vmatmul.mubr.bf16.gmra.mxu0 %v2917
    %v3380 = vpop.f32.mrf.mxu0
    %v3381 = vadd.f32 %v2811, %v3380
    %v3382 = vpop.f32.mrf.mxu0
    %v3383 = vpop.f32.mrf.mxu0
    %v3384 = vadd.f32 %v2811, %v3383
    %v3385 = vpop.f32.mrf.mxu0
    %3386 = vmatprep.mubr.bf16.mxu0 0
    %3387 = vmatmul.mubr.bf16.gmra.mxu0 %v2920
    %v3388 = vpop.f32.mrf.mxu0
    %v3389 = vadd.f32 %v2811, %v3388
    %v3390 = vpop.f32.mrf.mxu0
    %v3391 = vpop.f32.mrf.mxu0
    %v3392 = vadd.f32 %v2811, %v3391
    %v3393 = vpop.f32.mrf.mxu0
    %3394 = vmatprep.mubr.bf16.mxu0 0
    %3395 = vmatmul.mubr.bf16.gmra.mxu0 %v2923
    %v3396 = vpop.f32.mrf.mxu0
    %v3397 = vadd.f32 %v2811, %v3396
    %v3398 = vpop.f32.mrf.mxu0
    %v3399 = vpop.f32.mrf.mxu0
    %v3400 = vadd.f32 %v2811, %v3399
    %v3401 = vpop.f32.mrf.mxu0
    %3402 = vmatprep.mubr.bf16.mxu0 0
    %3403 = vmatmul.mubr.bf16.gmra.mxu0 %v2926
    %v3404 = vpop.f32.mrf.mxu0
    %v3405 = vadd.f32 %v2811, %v3404
    %v3406 = vpop.f32.mrf.mxu0
    %v3407 = vpop.f32.mrf.mxu0
    %v3408 = vadd.f32 %v2811, %v3407
    %v3409 = vpop.f32.mrf.mxu0
    %3410 = vmatprep.mubr.bf16.mxu0 0
    %3411 = vmatmul.mubr.bf16.gmra.mxu0 %v2929
    %v3412 = vpop.f32.mrf.mxu0
    %v3413 = vadd.f32 %v2811, %v3412
    %v3414 = vpop.f32.mrf.mxu0
    %v3415 = vpop.f32.mrf.mxu0
    %v3416 = vadd.f32 %v2811, %v3415
    %v3417 = vpop.f32.mrf.mxu0
    %3418 = vmatprep.mubr.bf16.mxu0 0
    %3419 = vmatmul.mubr.bf16.gmra.mxu0 %v2932
    %v3420 = vpop.f32.mrf.mxu0
    %v3421 = vadd.f32 %v2811, %v3420
    %v3422 = vpop.f32.mrf.mxu0
    %v3423 = vpop.f32.mrf.mxu0
    %v3424 = vadd.f32 %v2811, %v3423
    %v3425 = vpop.f32.mrf.mxu0
    %3426 = vmatprep.mubr.bf16.mxu0 0
    %3427 = vmatmul.mubr.bf16.gmra.mxu0 %v2935
    %v3428 = vpop.f32.mrf.mxu0
    %v3429 = vadd.f32 %v2811, %v3428
    %v3430 = vpop.f32.mrf.mxu0
    %v3431 = vpop.f32.mrf.mxu0
    %v3432 = vadd.f32 %v2811, %v3431
    %v3433 = vpop.f32.mrf.mxu0
    %3434 = vmatprep.mubr.bf16.mxu0 0
    %3435 = vmatmul.mubr.bf16.gmra.mxu0 %v2938
    %v3436 = vpop.f32.mrf.mxu0
    %v3437 = vadd.f32 %v2811, %v3436
    %v3438 = vpop.f32.mrf.mxu0
    %v3439 = vpop.f32.mrf.mxu0
    %v3440 = vadd.f32 %v2811, %v3439
    %v3441 = vpop.f32.mrf.mxu0
    %3442 = vmatprep.mubr.bf16.mxu0 0
    %3443 = vmatmul.mubr.bf16.gmra.mxu0 %v2941
    %v3444 = vpop.f32.mrf.mxu0
    %v3445 = vadd.f32 %v2811, %v3444
    %v3446 = vpop.f32.mrf.mxu0
    %v3447 = vpop.f32.mrf.mxu0
    %v3448 = vadd.f32 %v2811, %v3447
    %v3449 = vpop.f32.mrf.mxu0
    %3450 = vmatprep.mubr.bf16.mxu0 0
    %3451 = vmatmul.mubr.bf16.gmra.mxu0 %v2944
    %v3452 = vpop.f32.mrf.mxu0
    %v3453 = vadd.f32 %v2811, %v3452
    %v3454 = vpop.f32.mrf.mxu0
    %v3455 = vpop.f32.mrf.mxu0
    %v3456 = vadd.f32 %v2811, %v3455
    %v3457 = vpop.f32.mrf.mxu0
    %3458 = vmatprep.mubr.bf16.mxu0 0
    %3459 = vmatmul.mubr.bf16.gmra.mxu0 %v2947
    %v3460 = vpop.f32.mrf.mxu0
    %v3461 = vadd.f32 %v2811, %v3460
    %v3462 = vpop.f32.mrf.mxu0
    %v3463 = vpop.f32.mrf.mxu0
    %v3464 = vadd.f32 %v2811, %v3463
    %v3465 = vpop.f32.mrf.mxu0
    %3466 = vmatprep.mubr.bf16.mxu0 0
    %3467 = vmatmul.mubr.bf16.gmra.mxu0 %v2950
    %v3468 = vpop.f32.mrf.mxu0
    %v3469 = vadd.f32 %v2811, %v3468
    %v3470 = vpop.f32.mrf.mxu0
    %v3471 = vpop.f32.mrf.mxu0
    %v3472 = vadd.f32 %v2811, %v3471
    %v3473 = vpop.f32.mrf.mxu0
    %3474 = vmatprep.mubr.bf16.mxu0 0
    %3475 = vmatmul.mubr.bf16.gmra.mxu0 %v2953
    %v3476 = vpop.f32.mrf.mxu0
    %v3477 = vadd.f32 %v2811, %v3476
    %v3478 = vpop.f32.mrf.mxu0
    %v3479 = vpop.f32.mrf.mxu0
    %v3480 = vadd.f32 %v2811, %v3479
    %v3481 = vpop.f32.mrf.mxu0
    %3482 = vmatprep.mubr.bf16.mxu0 0
    %3483 = vmatmul.mubr.bf16.gmra.mxu0 %v2956
    %v3484 = vpop.f32.mrf.mxu0
    %v3485 = vadd.f32 %v2811, %v3484
    %v3486 = vpop.f32.mrf.mxu0
    %v3487 = vpop.f32.mrf.mxu0
    %v3488 = vadd.f32 %v2811, %v3487
    %v3489 = vpop.f32.mrf.mxu0
    %3490 = vmatprep.mubr.bf16.mxu0 0
    %3491 = vmatmul.mubr.bf16.gmra.mxu0 %v2959
    %v3492 = vpop.f32.mrf.mxu0
    %v3493 = vadd.f32 %v2811, %v3492
    %v3494 = vpop.f32.mrf.mxu0
    %v3495 = vpop.f32.mrf.mxu0
    %v3496 = vadd.f32 %v2811, %v3495
    %v3497 = vpop.f32.mrf.mxu0
    %3498 = vmatprep.mubr.bf16.mxu0 0
    %3499 = vmatmul.mubr.bf16.gmra.mxu0 %v2962
    %v3500 = vpop.f32.mrf.mxu0
    %v3501 = vadd.f32 %v2811, %v3500
    %v3502 = vpop.f32.mrf.mxu0
    %v3503 = vpop.f32.mrf.mxu0
    %v3504 = vadd.f32 %v2811, %v3503
    %v3505 = vpop.f32.mrf.mxu0
    %3506 = vmatprep.mubr.bf16.mxu0 0
    %3507 = vmatmul.mubr.bf16.gmra.mxu0 %v2965
    %v3508 = vpop.f32.mrf.mxu0
    %v3509 = vadd.f32 %v2811, %v3508
    %v3510 = vpop.f32.mrf.mxu0
    %v3511 = vpop.f32.mrf.mxu0
    %v3512 = vadd.f32 %v2811, %v3511
    %v3513 = vpop.f32.mrf.mxu0
    %3514 = vmatprep.mubr.bf16.mxu0 0
    %3515 = vmatmul.mubr.bf16.gmra.mxu0 %v2968
    %v3516 = vpop.f32.mrf.mxu0
    %v3517 = vadd.f32 %v2811, %v3516
    %v3518 = vpop.f32.mrf.mxu0
    %v3519 = vpop.f32.mrf.mxu0
    %v3520 = vadd.f32 %v2811, %v3519
    %v3521 = vpop.f32.mrf.mxu0
    %3522 = vmatprep.mubr.bf16.mxu0 0
    %3523 = vmatmul.mubr.bf16.gmra.mxu0 %v2971
    %v3524 = vpop.f32.mrf.mxu0
    %v3525 = vadd.f32 %v2811, %v3524
    %v3526 = vpop.f32.mrf.mxu0
    %v3527 = vpop.f32.mrf.mxu0
    %v3528 = vadd.f32 %v2811, %v3527
    %v3529 = vpop.f32.mrf.mxu0
    %3530 = vmatprep.mubr.bf16.mxu0 0
    %3531 = vmatmul.mubr.bf16.gmra.mxu0 %v2974
    %v3532 = vpop.f32.mrf.mxu0
    %v3533 = vadd.f32 %v2811, %v3532
    %v3534 = vpop.f32.mrf.mxu0
    %v3535 = vpop.f32.mrf.mxu0
    %v3536 = vadd.f32 %v2811, %v3535
    %v3537 = vpop.f32.mrf.mxu0
    %3538 = vmatprep.mubr.bf16.mxu0 0
    %3539 = vmatmul.mubr.bf16.gmra.mxu0 %v2977
    %v3540 = vpop.f32.mrf.mxu0
    %v3541 = vadd.f32 %v2811, %v3540
    %v3542 = vpop.f32.mrf.mxu0
    %v3543 = vpop.f32.mrf.mxu0
    %v3544 = vadd.f32 %v2811, %v3543
    %v3545 = vpop.f32.mrf.mxu0
    %3546 = vmatprep.mubr.bf16.mxu0 0
    %3547 = vmatmul.mubr.bf16.gmra.mxu0 %v2980
    %v3548 = vpop.f32.mrf.mxu0
    %v3549 = vadd.f32 %v2811, %v3548
    %v3550 = vpop.f32.mrf.mxu0
    %v3551 = vpop.f32.mrf.mxu0
    %v3552 = vadd.f32 %v2811, %v3551
    %v3553 = vpop.f32.mrf.mxu0
    %3554 = vmatprep.mubr.bf16.mxu0 0
    %3555 = vmatmul.mubr.bf16.gmra.mxu0 %v2983
    %v3556 = vpop.f32.mrf.mxu0
    %v3557 = vadd.f32 %v2811, %v3556
    %v3558 = vpop.f32.mrf.mxu0
    %v3559 = vpop.f32.mrf.mxu0
    %v3560 = vadd.f32 %v2811, %v3559
    %v3561 = vpop.f32.mrf.mxu0
    %3562 = vmatprep.mubr.bf16.mxu0 0
    %3563 = vmatmul.mubr.bf16.gmra.mxu0 %v2986
    %v3564 = vpop.f32.mrf.mxu0
    %v3565 = vadd.f32 %v2811, %v3564
    %v3566 = vpop.f32.mrf.mxu0
    %v3567 = vpop.f32.mrf.mxu0
    %v3568 = vadd.f32 %v2811, %v3567
    %v3569 = vpop.f32.mrf.mxu0
    %3570 = vmatprep.mubr.bf16.mxu0 0
    %3571 = vmatmul.mubr.bf16.gmra.mxu0 %v2989
    %v3572 = vpop.f32.mrf.mxu0
    %v3573 = vadd.f32 %v2811, %v3572
    %v3574 = vpop.f32.mrf.mxu0
    %v3575 = vpop.f32.mrf.mxu0
    %v3576 = vadd.f32 %v2811, %v3575
    %v3577 = vpop.f32.mrf.mxu0
    %3578 = vmatprep.mubr.bf16.mxu0 0
    %3579 = vmatmul.mubr.bf16.gmra.mxu0 %v2992
    %v3580 = vpop.f32.mrf.mxu0
    %v3581 = vadd.f32 %v2811, %v3580
    %v3582 = vpop.f32.mrf.mxu0
    %v3583 = vpop.f32.mrf.mxu0
    %v3584 = vadd.f32 %v2811, %v3583
    %v3585 = vpop.f32.mrf.mxu0
    %3586 = vmatprep.mubr.bf16.mxu0 0
    %3587 = vmatmul.mubr.bf16.gmra.mxu0 %v2995
    %v3588 = vpop.f32.mrf.mxu0
    %v3589 = vadd.f32 %v2811, %v3588
    %v3590 = vpop.f32.mrf.mxu0
    %v3591 = vpop.f32.mrf.mxu0
    %v3592 = vadd.f32 %v2811, %v3591
    %v3593 = vpop.f32.mrf.mxu0
    %3594 = vmatprep.mubr.bf16.mxu0 0
    %3595 = vmatmul.mubr.bf16.gmra.mxu0 %v2998
    %v3596 = vpop.f32.mrf.mxu0
    %v3597 = vadd.f32 %v2811, %v3596
    %v3598 = vpop.f32.mrf.mxu0
    %v3599 = vpop.f32.mrf.mxu0
    %v3600 = vadd.f32 %v2811, %v3599
    %v3601 = vpop.f32.mrf.mxu0
    %3602 = vmatprep.mubr.bf16.mxu0 0
    %3603 = vmatmul.mubr.bf16.gmra.mxu0 %v3001
    %v3604 = vpop.f32.mrf.mxu0
    %v3605 = vadd.f32 %v2811, %v3604
    %v3606 = vpop.f32.mrf.mxu0
    %v3607 = vpop.f32.mrf.mxu0
    %v3608 = vadd.f32 %v2811, %v3607
    %v3609 = vpop.f32.mrf.mxu0
    %3610 = vmatprep.mubr.bf16.mxu0 0
    %3611 = vmatmul.mubr.bf16.gmra.mxu0 %v3004
    %v3612 = vpop.f32.mrf.mxu0
    %v3613 = vadd.f32 %v2811, %v3612
    %v3614 = vpop.f32.mrf.mxu0
    %v3615 = vpop.f32.mrf.mxu0
    %v3616 = vadd.f32 %v2811, %v3615
    %v3617 = vpop.f32.mrf.mxu0
    %3618 = vmatprep.mubr.bf16.mxu0 0
    %3619 = vmatmul.mubr.bf16.gmra.mxu0 %v3007
    %v3620 = vpop.f32.mrf.mxu0
    %v3621 = vadd.f32 %v2811, %v3620
    %v3622 = vpop.f32.mrf.mxu0
    %v3623 = vpop.f32.mrf.mxu0
    %v3624 = vadd.f32 %v2811, %v3623
    %v3625 = vpop.f32.mrf.mxu0
    %3626 = vmatprep.mubr.bf16.mxu0 0
    %3627 = vmatmul.mubr.bf16.gmra.mxu0 %v3010
    %v3628 = vpop.f32.mrf.mxu0
    %v3629 = vadd.f32 %v2811, %v3628
    %v3630 = vpop.f32.mrf.mxu0
    %v3631 = vpop.f32.mrf.mxu0
    %v3632 = vadd.f32 %v2811, %v3631
    %v3633 = vpop.f32.mrf.mxu0
    %3634 = vmatprep.mubr.bf16.mxu0 0
    %3635 = vmatmul.mubr.bf16.gmra.mxu0 %v3013
    %v3636 = vpop.f32.mrf.mxu0
    %v3637 = vadd.f32 %v2811, %v3636
    %v3638 = vpop.f32.mrf.mxu0
    %v3639 = vpop.f32.mrf.mxu0
    %v3640 = vadd.f32 %v2811, %v3639
    %v3641 = vpop.f32.mrf.mxu0
    %3642 = vmatprep.mubr.bf16.mxu0 0
    %3643 = vmatmul.mubr.bf16.gmra.mxu0 %v3016
    %v3644 = vpop.f32.mrf.mxu0
    %v3645 = vadd.f32 %v2811, %v3644
    %v3646 = vpop.f32.mrf.mxu0
    %v3647 = vpop.f32.mrf.mxu0
    %v3648 = vadd.f32 %v2811, %v3647
    %v3649 = vpop.f32.mrf.mxu0
    %3650 = vmatprep.mubr.bf16.mxu0 0
    %3651 = vmatmul.mubr.bf16.gmra.mxu0 %v3019
    %v3652 = vpop.f32.mrf.mxu0
    %v3653 = vadd.f32 %v2811, %v3652
    %v3654 = vpop.f32.mrf.mxu0
    %v3655 = vpop.f32.mrf.mxu0
    %v3656 = vadd.f32 %v2811, %v3655
    %v3657 = vpop.f32.mrf.mxu0
    %3658 = vmatprep.mubr.bf16.mxu0 0
    %3659 = vmatmul.mubr.bf16.gmra.mxu0 %v3022
    %v3660 = vpop.f32.mrf.mxu0
    %v3661 = vadd.f32 %v2811, %v3660
    %v3662 = vpop.f32.mrf.mxu0
    %v3663 = vpop.f32.mrf.mxu0
    %v3664 = vadd.f32 %v2811, %v3663
    %v3665 = vpop.f32.mrf.mxu0
    %3666 = vmatprep.mubr.bf16.mxu0 0
    %3667 = vmatmul.mubr.bf16.gmra.mxu0 %v3025
    %v3668 = vpop.f32.mrf.mxu0
    %v3669 = vadd.f32 %v2811, %v3668
    %v3670 = vpop.f32.mrf.mxu0
    %v3671 = vpop.f32.mrf.mxu0
    %v3672 = vadd.f32 %v2811, %v3671
    %v3673 = vpop.f32.mrf.mxu0
    %3674 = vmatprep.mubr.bf16.mxu0 0
    %3675 = vmatmul.mubr.bf16.gmra.mxu0 %v3028
    %v3676 = vpop.f32.mrf.mxu0
    %v3677 = vadd.f32 %v2811, %v3676
    %v3678 = vpop.f32.mrf.mxu0
    %v3679 = vpop.f32.mrf.mxu0
    %v3680 = vadd.f32 %v2811, %v3679
    %v3681 = vpop.f32.mrf.mxu0
    %3682 = vmatprep.mubr.bf16.mxu0 0
    %3683 = vmatmul.mubr.bf16.gmra.mxu0 %v3031
    %v3684 = vpop.f32.mrf.mxu0
    %v3685 = vadd.f32 %v2811, %v3684
    %v3686 = vpop.f32.mrf.mxu0
    %v3687 = vpop.f32.mrf.mxu0
    %v3688 = vadd.f32 %v2811, %v3687
    %v3689 = vpop.f32.mrf.mxu0
    %3690 = vmatprep.mubr.bf16.mxu0 0
    %3691 = vmatmul.mubr.bf16.gmra.mxu0 %v3034
    %v3692 = vpop.f32.mrf.mxu0
    %v3693 = vadd.f32 %v2811, %v3692
    %v3694 = vpop.f32.mrf.mxu0
    %v3695 = vpop.f32.mrf.mxu0
    %v3696 = vadd.f32 %v2811, %v3695
    %v3697 = vpop.f32.mrf.mxu0
    %3698 = vmatprep.mubr.bf16.mxu0 0
    %3699 = vmatmul.mubr.bf16.gmra.mxu0 %v3037
    %v3700 = vpop.f32.mrf.mxu0
    %v3701 = vadd.f32 %v2811, %v3700
    %v3702 = vpop.f32.mrf.mxu0
    %v3703 = vpop.f32.mrf.mxu0
    %v3704 = vadd.f32 %v2811, %v3703
    %v3705 = vpop.f32.mrf.mxu0
    %3706 = vmatprep.mubr.bf16.mxu0 0
    %3707 = vmatmul.mubr.bf16.gmra.mxu0 %v3040
    %v3708 = vpop.f32.mrf.mxu0
    %v3709 = vadd.f32 %v2811, %v3708
    %v3710 = vpop.f32.mrf.mxu0
    %v3711 = vpop.f32.mrf.mxu0
    %v3712 = vadd.f32 %v2811, %v3711
    %v3713 = vpop.f32.mrf.mxu0
    %3714 = vmatprep.mubr.bf16.mxu0 0
    %3715 = vmatmul.mubr.bf16.gmra.mxu0 %v3043
    %v3716 = vpop.f32.mrf.mxu0
    %v3717 = vadd.f32 %v2811, %v3716
    %v3718 = vpop.f32.mrf.mxu0
    %v3719 = vpop.f32.mrf.mxu0
    %v3720 = vadd.f32 %v2811, %v3719
    %v3721 = vpop.f32.mrf.mxu0
    %3722 = vmatprep.mubr.bf16.mxu0 0
    %3723 = vmatmul.mubr.bf16.gmra.mxu0 %v3046
    %v3724 = vpop.f32.mrf.mxu0
    %v3725 = vadd.f32 %v2811, %v3724
    %v3726 = vpop.f32.mrf.mxu0
    %v3727 = vpop.f32.mrf.mxu0
    %v3728 = vadd.f32 %v2811, %v3727
    %v3729 = vpop.f32.mrf.mxu0
    %3730 = vmatprep.mubr.bf16.mxu0 0
    %3731 = vmatmul.mubr.bf16.gmra.mxu0 %v3049
    %v3732 = vpop.f32.mrf.mxu0
    %v3733 = vadd.f32 %v2811, %v3732
    %v3734 = vpop.f32.mrf.mxu0
    %v3735 = vpop.f32.mrf.mxu0
    %v3736 = vadd.f32 %v2811, %v3735
    %v3737 = vpop.f32.mrf.mxu0
    %3738 = vmatprep.mubr.bf16.mxu0 0
    %3739 = vmatmul.mubr.bf16.gmra.mxu0 %v3052
    %v3740 = vpop.f32.mrf.mxu0
    %v3741 = vadd.f32 %v2811, %v3740
    %v3742 = vpop.f32.mrf.mxu0
    %v3743 = vpop.f32.mrf.mxu0
    %v3744 = vadd.f32 %v2811, %v3743
    %v3745 = vpop.f32.mrf.mxu0
    %3746 = vmatprep.mubr.bf16.mxu0 0
    %3747 = vmatmul.mubr.bf16.gmra.mxu0 %v3055
    %v3748 = vpop.f32.mrf.mxu0
    %v3749 = vadd.f32 %v2811, %v3748
    %v3750 = vpop.f32.mrf.mxu0
    %v3751 = vpop.f32.mrf.mxu0
    %v3752 = vadd.f32 %v2811, %v3751
    %v3753 = vpop.f32.mrf.mxu0
    %3754 = vmatprep.mubr.bf16.mxu0 0
    %3755 = vmatmul.mubr.bf16.gmra.mxu0 %v3058
    %v3756 = vpop.f32.mrf.mxu0
    %v3757 = vadd.f32 %v2811, %v3756
    %v3758 = vpop.f32.mrf.mxu0
    %v3759 = vpop.f32.mrf.mxu0
    %v3760 = vadd.f32 %v2811, %v3759
    %v3761 = vpop.f32.mrf.mxu0
    %3762 = vmatprep.mubr.bf16.mxu0 0
    %3763 = vmatmul.mubr.bf16.gmra.mxu0 %v3061
    %v3764 = vpop.f32.mrf.mxu0
    %v3765 = vadd.f32 %v2811, %v3764
    %v3766 = vpop.f32.mrf.mxu0
    %v3767 = vpop.f32.mrf.mxu0
    %v3768 = vadd.f32 %v2811, %v3767
    %v3769 = vpop.f32.mrf.mxu0
    %3770 = vmatprep.mubr.bf16.mxu0 0
    %3771 = vmatmul.mubr.bf16.gmra.mxu0 %v3064
    %v3772 = vpop.f32.mrf.mxu0
    %v3773 = vadd.f32 %v2811, %v3772
    %v3774 = vpop.f32.mrf.mxu0
    %v3775 = vpop.f32.mrf.mxu0
    %v3776 = vadd.f32 %v2811, %v3775
    %v3777 = vpop.f32.mrf.mxu0
    %3778 = vmatprep.mubr.bf16.mxu0 0
    %3779 = vmatmul.mubr.bf16.gmra.mxu0 %v3067
    %v3780 = vpop.f32.mrf.mxu0
    %v3781 = vadd.f32 %v2811, %v3780
    %v3782 = vpop.f32.mrf.mxu0
    %v3783 = vpop.f32.mrf.mxu0
    %v3784 = vadd.f32 %v2811, %v3783
    %v3785 = vpop.f32.mrf.mxu0
    %3786 = vmatprep.mubr.bf16.mxu0 0
    %3787 = vmatmul.mubr.bf16.gmra.mxu0 %v3070
    %v3788 = vpop.f32.mrf.mxu0
    %v3789 = vadd.f32 %v2811, %v3788
    %v3790 = vpop.f32.mrf.mxu0
    %v3791 = vpop.f32.mrf.mxu0
    %v3792 = vadd.f32 %v2811, %v3791
    %v3793 = vpop.f32.mrf.mxu0
    %3794 = vmatprep.mubr.bf16.mxu0 0
    %3795 = vmatmul.mubr.bf16.gmra.mxu0 %v3073
    %v3796 = vpop.f32.mrf.mxu0
    %v3797 = vadd.f32 %v2811, %v3796
    %v3798 = vpop.f32.mrf.mxu0
    %v3799 = vpop.f32.mrf.mxu0
    %v3800 = vadd.f32 %v2811, %v3799
    %v3801 = vpop.f32.mrf.mxu0
    %3802 = vmatprep.mubr.bf16.mxu0 0
    %3803 = vmatmul.mubr.bf16.gmra.mxu0 %v3076
    %v3804 = vpop.f32.mrf.mxu0
    %v3805 = vadd.f32 %v2811, %v3804
    %v3806 = vpop.f32.mrf.mxu0
    %v3807 = vpop.f32.mrf.mxu0
    %v3808 = vadd.f32 %v2811, %v3807
    %v3809 = vpop.f32.mrf.mxu0
    %3810 = vmatprep.mubr.bf16.mxu0 0
    %3811 = vmatmul.mubr.bf16.gmra.mxu0 %v3079
    %v3812 = vpop.f32.mrf.mxu0
    %v3813 = vadd.f32 %v2811, %v3812
    %v3814 = vpop.f32.mrf.mxu0
    %v3815 = vpop.f32.mrf.mxu0
    %v3816 = vadd.f32 %v2811, %v3815
    %v3817 = vpop.f32.mrf.mxu0
    %3818 = vmatprep.mubr.bf16.mxu0 0
    %3819 = vmatmul.mubr.bf16.gmra.mxu0 %v3082
    %v3820 = vpop.f32.mrf.mxu0
    %v3821 = vadd.f32 %v2811, %v3820
    %v3822 = vpop.f32.mrf.mxu0
    %v3823 = vpop.f32.mrf.mxu0
    %v3824 = vadd.f32 %v2811, %v3823
    %v3825 = vpop.f32.mrf.mxu0
    %3826 = vmatprep.mubr.bf16.mxu0 0
    %3827 = vmatmul.mubr.bf16.gmra.mxu0 %v3085
    %v3828 = vpop.f32.mrf.mxu0
    %v3829 = vadd.f32 %v2811, %v3828
    %v3830 = vpop.f32.mrf.mxu0
    %v3831 = vpop.f32.mrf.mxu0
    %v3832 = vadd.f32 %v2811, %v3831
    %v3833 = vpop.f32.mrf.mxu0
    %3834 = vmatprep.mubr.bf16.mxu0 0
    %3835 = vmatmul.mubr.bf16.gmra.mxu0 %v3088
    %v3836 = vpop.f32.mrf.mxu0
    %v3837 = vadd.f32 %v2811, %v3836
    %v3838 = vpop.f32.mrf.mxu0
    %v3839 = vpop.f32.mrf.mxu0
    %v3840 = vadd.f32 %v2811, %v3839
    %v3841 = vpop.f32.mrf.mxu0
    %3842 = vmatprep.mubr.bf16.mxu0 0
    %3843 = vmatmul.mubr.bf16.gmra.mxu0 %v3091
    %v3844 = vpop.f32.mrf.mxu0
    %v3845 = vadd.f32 %v2811, %v3844
    %v3846 = vpop.f32.mrf.mxu0
    %v3847 = vpop.f32.mrf.mxu0
    %v3848 = vadd.f32 %v2811, %v3847
    %v3849 = vpop.f32.mrf.mxu0
    %3850 = vmatprep.mubr.bf16.mxu0 0
    %3851 = vmatmul.mubr.bf16.gmra.mxu0 %v3094
    %v3852 = vpop.f32.mrf.mxu0
    %v3853 = vadd.f32 %v2811, %v3852
    %v3854 = vpop.f32.mrf.mxu0
    %v3855 = vpop.f32.mrf.mxu0
    %v3856 = vadd.f32 %v2811, %v3855
    %v3857 = vpop.f32.mrf.mxu0
    %3858 = vmatprep.mubr.bf16.mxu0 0
    %3859 = vmatmul.mubr.bf16.gmra.mxu0 %v3097
    %v3860 = vpop.f32.mrf.mxu0
    %v3861 = vadd.f32 %v2811, %v3860
    %v3862 = vpop.f32.mrf.mxu0
    %v3863 = vpop.f32.mrf.mxu0
    %v3864 = vadd.f32 %v2811, %v3863
    %v3865 = vpop.f32.mrf.mxu0
    %3866 = vmatprep.mubr.bf16.mxu0 0
    %3867 = vmatmul.mubr.bf16.gmra.mxu0 %v3100
    %v3868 = vpop.f32.mrf.mxu0
    %v3869 = vadd.f32 %v2811, %v3868
    %v3870 = vpop.f32.mrf.mxu0
    %v3871 = vpop.f32.mrf.mxu0
    %v3872 = vadd.f32 %v2811, %v3871
    %v3873 = vpop.f32.mrf.mxu0
    %3874 = vmatprep.mubr.bf16.mxu0 0
    %3875 = vmatmul.mubr.bf16.gmra.mxu0 %v3103
    %v3876 = vpop.f32.mrf.mxu0
    %v3877 = vadd.f32 %v2811, %v3876
    %v3878 = vpop.f32.mrf.mxu0
    %v3879 = vpop.f32.mrf.mxu0
    %v3880 = vadd.f32 %v2811, %v3879
    %v3881 = vpop.f32.mrf.mxu0
    %3882 = vmatprep.mubr.bf16.mxu0 0
    %3883 = vmatmul.mubr.bf16.gmra.mxu0 %v3106
    %v3884 = vpop.f32.mrf.mxu0
    %v3885 = vadd.f32 %v2811, %v3884
    %v3886 = vpop.f32.mrf.mxu0
    %v3887 = vpop.f32.mrf.mxu0
    %v3888 = vadd.f32 %v2811, %v3887
    %v3889 = vpop.f32.mrf.mxu0
    %3890 = vmatprep.mubr.bf16.mxu0 0
    %3891 = vmatmul.mubr.bf16.gmra.mxu0 %v3109
    %v3892 = vpop.f32.mrf.mxu0
    %v3893 = vadd.f32 %v2811, %v3892
    %v3894 = vpop.f32.mrf.mxu0
    %v3895 = vpop.f32.mrf.mxu0
    %v3896 = vadd.f32 %v2811, %v3895
    %v3897 = vpop.f32.mrf.mxu0
    %3898 = vmatprep.mubr.bf16.mxu0 0
    %3899 = vmatmul.mubr.bf16.gmra.mxu0 %v3112
    %v3900 = vpop.f32.mrf.mxu0
    %v3901 = vadd.f32 %v2811, %v3900
    %v3902 = vpop.f32.mrf.mxu0
    %v3903 = vpop.f32.mrf.mxu0
    %v3904 = vadd.f32 %v2811, %v3903
    %v3905 = vpop.f32.mrf.mxu0
    %3906 = vmatprep.mubr.bf16.mxu0 0
    %3907 = vmatmul.mubr.bf16.gmra.mxu0 %v3115
    %v3908 = vpop.f32.mrf.mxu0
    %v3909 = vadd.f32 %v2811, %v3908
    %v3910 = vpop.f32.mrf.mxu0
    %v3911 = vpop.f32.mrf.mxu0
    %v3912 = vadd.f32 %v2811, %v3911
    %v3913 = vpop.f32.mrf.mxu0
    %3914 = vmatprep.mubr.bf16.mxu0 0
    %3915 = vmatmul.mubr.bf16.gmra.mxu0 %v3118
    %v3916 = vpop.f32.mrf.mxu0
    %v3917 = vadd.f32 %v2811, %v3916
    %v3918 = vpop.f32.mrf.mxu0
    %v3919 = vpop.f32.mrf.mxu0
    %v3920 = vadd.f32 %v2811, %v3919
    %v3921 = vpop.f32.mrf.mxu0
    %3922 = vmatprep.mubr.bf16.mxu0 0
    %3923 = vmatmul.mubr.bf16.gmra.mxu0 %v3121
    %v3924 = vpop.f32.mrf.mxu0
    %v3925 = vadd.f32 %v2811, %v3924
    %v3926 = vpop.f32.mrf.mxu0
    %v3927 = vpop.f32.mrf.mxu0
    %v3928 = vadd.f32 %v2811, %v3927
    %v3929 = vpop.f32.mrf.mxu0
    %3930 = vmatprep.mubr.bf16.mxu0 0
    %3931 = vmatmul.mubr.bf16.gmra.mxu0 %v3124
    %v3932 = vpop.f32.mrf.mxu0
    %v3933 = vadd.f32 %v2811, %v3932
    %v3934 = vpop.f32.mrf.mxu0
    %v3935 = vpop.f32.mrf.mxu0
    %v3936 = vadd.f32 %v2811, %v3935
    %v3937 = vpop.f32.mrf.mxu0
    %3938 = vmatprep.mubr.bf16.mxu0 0
    %3939 = vmatmul.mubr.bf16.gmra.mxu0 %v3127
    %v3940 = vpop.f32.mrf.mxu0
    %v3941 = vadd.f32 %v2811, %v3940
    %v3942 = vpop.f32.mrf.mxu0
    %v3943 = vpop.f32.mrf.mxu0
    %v3944 = vadd.f32 %v2811, %v3943
    %v3945 = vpop.f32.mrf.mxu0
    %3946 = vmatprep.mubr.bf16.mxu0 0
    %3947 = vmatmul.mubr.bf16.gmra.mxu0 %v3130
    %v3948 = vpop.f32.mrf.mxu0
    %v3949 = vadd.f32 %v2811, %v3948
    %v3950 = vpop.f32.mrf.mxu0
    %v3951 = vpop.f32.mrf.mxu0
    %v3952 = vadd.f32 %v2811, %v3951
    %v3953 = vpop.f32.mrf.mxu0
    %3954 = vmatprep.mubr.bf16.mxu0 0
    %3955 = vmatmul.mubr.bf16.gmra.mxu0 %v3133
    %v3956 = vpop.f32.mrf.mxu0
    %v3957 = vadd.f32 %v2811, %v3956
    %v3958 = vpop.f32.mrf.mxu0
    %v3959 = vpop.f32.mrf.mxu0
    %v3960 = vadd.f32 %v2811, %v3959
    %v3961 = vpop.f32.mrf.mxu0
    %3962 = vmatprep.mubr.bf16.mxu0 0
    %3963 = vmatmul.mubr.bf16.gmra.mxu0 %v3136
    %v3964 = vpop.f32.mrf.mxu0
    %v3965 = vadd.f32 %v2811, %v3964
    %v3966 = vpop.f32.mrf.mxu0
    %v3967 = vpop.f32.mrf.mxu0
    %v3968 = vadd.f32 %v2811, %v3967
    %v3969 = vpop.f32.mrf.mxu0
    %3970 = vdwg.mxu0
    %v3971 = vxor.u32 %v3173, 2147483648
    %v3972 = vxor.u32 %v3176, 2147483648
    %v3973 = vxor.u32 %v3181, 2147483648
    %v3974 = vxor.u32 %v3184, 2147483648
    %v3975 = vxor.u32 %v3189, 2147483648
    %v3976 = vxor.u32 %v3192, 2147483648
    %v3977 = vxor.u32 %v3197, 2147483648
    %v3978 = vxor.u32 %v3200, 2147483648
    %v3979 = vxor.u32 %v3205, 2147483648
    %v3980 = vxor.u32 %v3208, 2147483648
    %v3981 = vxor.u32 %v3213, 2147483648
    %v3982 = vxor.u32 %v3216, 2147483648
    %v3983 = vxor.u32 %v3221, 2147483648
    %v3984 = vxor.u32 %v3224, 2147483648
    %v3985 = vxor.u32 %v3229, 2147483648
    %v3986 = vxor.u32 %v3232, 2147483648
    %v3987 = vxor.u32 %v3237, 2147483648
    %v3988 = vxor.u32 %v3240, 2147483648
    %v3989 = vxor.u32 %v3245, 2147483648
    %v3990 = vxor.u32 %v3248, 2147483648
    %v3991 = vxor.u32 %v3253, 2147483648
    %v3992 = vxor.u32 %v3256, 2147483648
    %v3993 = vxor.u32 %v3261, 2147483648
    %v3994 = vxor.u32 %v3264, 2147483648
    %v3995 = vxor.u32 %v3269, 2147483648
    %v3996 = vxor.u32 %v3272, 2147483648
    %v3997 = vxor.u32 %v3277, 2147483648
    %v3998 = vxor.u32 %v3280, 2147483648
    %v3999 = vxor.u32 %v3285, 2147483648
    %v4000 = vxor.u32 %v3288, 2147483648
    %v4001 = vxor.u32 %v3293, 2147483648
    %v4002 = vxor.u32 %v3296, 2147483648
    %v4003 = vxor.u32 %v3301, 2147483648
    %v4004 = vxor.u32 %v3304, 2147483648
    %v4005 = vxor.u32 %v3309, 2147483648
    %v4006 = vxor.u32 %v3312, 2147483648
    %v4007 = vxor.u32 %v3317, 2147483648
    %v4008 = vxor.u32 %v3320, 2147483648
    %v4009 = vxor.u32 %v3325, 2147483648
    %v4010 = vxor.u32 %v3328, 2147483648
    %v4011 = vxor.u32 %v3333, 2147483648
    %v4012 = vxor.u32 %v3336, 2147483648
    %v4013 = vxor.u32 %v3341, 2147483648
    %v4014 = vxor.u32 %v3344, 2147483648
    %v4015 = vxor.u32 %v3349, 2147483648
    %v4016 = vxor.u32 %v3352, 2147483648
    %v4017 = vxor.u32 %v3357, 2147483648
    %v4018 = vxor.u32 %v3360, 2147483648
    %v4019 = vxor.u32 %v3365, 2147483648
    %v4020 = vxor.u32 %v3368, 2147483648
    %v4021 = vxor.u32 %v3373, 2147483648
    %v4022 = vxor.u32 %v3376, 2147483648
    %v4023 = vxor.u32 %v3381, 2147483648
    %v4024 = vxor.u32 %v3384, 2147483648
    %v4025 = vxor.u32 %v3389, 2147483648
    %v4026 = vxor.u32 %v3392, 2147483648
    %v4027 = vxor.u32 %v3397, 2147483648
    %v4028 = vxor.u32 %v3400, 2147483648
    %v4029 = vxor.u32 %v3405, 2147483648
    %v4030 = vxor.u32 %v3408, 2147483648
    %v4031 = vxor.u32 %v3413, 2147483648
    %v4032 = vxor.u32 %v3416, 2147483648
    %v4033 = vxor.u32 %v3421, 2147483648
    %v4034 = vxor.u32 %v3424, 2147483648
    %v4035 = vxor.u32 %v3429, 2147483648
    %v4036 = vxor.u32 %v3432, 2147483648
    %v4037 = vxor.u32 %v3437, 2147483648
    %v4038 = vxor.u32 %v3440, 2147483648
    %v4039 = vxor.u32 %v3445, 2147483648
    %v4040 = vxor.u32 %v3448, 2147483648
    %v4041 = vxor.u32 %v3453, 2147483648
    %v4042 = vxor.u32 %v3456, 2147483648
    %v4043 = vxor.u32 %v3461, 2147483648
    %v4044 = vxor.u32 %v3464, 2147483648
    %v4045 = vxor.u32 %v3469, 2147483648
    %v4046 = vxor.u32 %v3472, 2147483648
    %v4047 = vxor.u32 %v3477, 2147483648
    %v4048 = vxor.u32 %v3480, 2147483648
    %v4049 = vxor.u32 %v3485, 2147483648
    %v4050 = vxor.u32 %v3488, 2147483648
    %v4051 = vxor.u32 %v3493, 2147483648
    %v4052 = vxor.u32 %v3496, 2147483648
    %v4053 = vxor.u32 %v3501, 2147483648
    %v4054 = vxor.u32 %v3504, 2147483648
    %v4055 = vxor.u32 %v3509, 2147483648
    %v4056 = vxor.u32 %v3512, 2147483648
    %v4057 = vxor.u32 %v3517, 2147483648
    %v4058 = vxor.u32 %v3520, 2147483648
    %v4059 = vxor.u32 %v3525, 2147483648
    %v4060 = vxor.u32 %v3528, 2147483648
    %v4061 = vxor.u32 %v3533, 2147483648
    %v4062 = vxor.u32 %v3536, 2147483648
    %v4063 = vxor.u32 %v3541, 2147483648
    %v4064 = vxor.u32 %v3544, 2147483648
    %v4065 = vxor.u32 %v3549, 2147483648
    %v4066 = vxor.u32 %v3552, 2147483648
    %v4067 = vxor.u32 %v3557, 2147483648
    %v4068 = vxor.u32 %v3560, 2147483648
    %v4069 = vxor.u32 %v3565, 2147483648
    %v4070 = vxor.u32 %v3568, 2147483648
    %v4071 = vxor.u32 %v3573, 2147483648
    %v4072 = vxor.u32 %v3576, 2147483648
    %v4073 = vxor.u32 %v3581, 2147483648
    %v4074 = vxor.u32 %v3584, 2147483648
    %v4075 = vxor.u32 %v3589, 2147483648
    %v4076 = vxor.u32 %v3592, 2147483648
    %v4077 = vxor.u32 %v3597, 2147483648
    %v4078 = vxor.u32 %v3600, 2147483648
    %v4079 = vxor.u32 %v3605, 2147483648
    %v4080 = vxor.u32 %v3608, 2147483648
    %v4081 = vxor.u32 %v3613, 2147483648
    %v4082 = vxor.u32 %v3616, 2147483648
    %v4083 = vxor.u32 %v3621, 2147483648
    %v4084 = vxor.u32 %v3624, 2147483648
    %v4085 = vxor.u32 %v3629, 2147483648
    %v4086 = vxor.u32 %v3632, 2147483648
    %v4087 = vxor.u32 %v3637, 2147483648
    %v4088 = vxor.u32 %v3640, 2147483648
    %v4089 = vxor.u32 %v3645, 2147483648
    %v4090 = vxor.u32 %v3648, 2147483648
    %v4091 = vxor.u32 %v3653, 2147483648
    %v4092 = vxor.u32 %v3656, 2147483648
    %v4093 = vxor.u32 %v3661, 2147483648
    %v4094 = vxor.u32 %v3664, 2147483648
    %v4095 = vxor.u32 %v3669, 2147483648
    %v4096 = vxor.u32 %v3672, 2147483648
    %v4097 = vxor.u32 %v3677, 2147483648
    %v4098 = vxor.u32 %v3680, 2147483648
    %v4099 = vxor.u32 %v3685, 2147483648
    %v4100 = vxor.u32 %v3688, 2147483648
    %v4101 = vxor.u32 %v3693, 2147483648
    %v4102 = vxor.u32 %v3696, 2147483648
    %v4103 = vxor.u32 %v3701, 2147483648
    %v4104 = vxor.u32 %v3704, 2147483648
    %v4105 = vxor.u32 %v3709, 2147483648
    %v4106 = vxor.u32 %v3712, 2147483648
    %v4107 = vxor.u32 %v3717, 2147483648
    %v4108 = vxor.u32 %v3720, 2147483648
    %v4109 = vxor.u32 %v3725, 2147483648
    %v4110 = vxor.u32 %v3728, 2147483648
    %v4111 = vxor.u32 %v3733, 2147483648
    %v4112 = vxor.u32 %v3736, 2147483648
    %v4113 = vxor.u32 %v3741, 2147483648
    %v4114 = vxor.u32 %v3744, 2147483648
    %v4115 = vxor.u32 %v3749, 2147483648
    %v4116 = vxor.u32 %v3752, 2147483648
    %v4117 = vxor.u32 %v3757, 2147483648
    %v4118 = vxor.u32 %v3760, 2147483648
    %v4119 = vxor.u32 %v3765, 2147483648
    %v4120 = vxor.u32 %v3768, 2147483648
    %v4121 = vxor.u32 %v3773, 2147483648
    %v4122 = vxor.u32 %v3776, 2147483648
    %v4123 = vxor.u32 %v3781, 2147483648
    %v4124 = vxor.u32 %v3784, 2147483648
    %v4125 = vxor.u32 %v3789, 2147483648
    %v4126 = vxor.u32 %v3792, 2147483648
    %v4127 = vxor.u32 %v3797, 2147483648
    %v4128 = vxor.u32 %v3800, 2147483648
    %v4129 = vxor.u32 %v3805, 2147483648
    %v4130 = vxor.u32 %v3808, 2147483648
    %v4131 = vxor.u32 %v3813, 2147483648
    %v4132 = vxor.u32 %v3816, 2147483648
    %v4133 = vxor.u32 %v3821, 2147483648
    %v4134 = vxor.u32 %v3824, 2147483648
    %v4135 = vxor.u32 %v3829, 2147483648
    %v4136 = vxor.u32 %v3832, 2147483648
    %v4137 = vxor.u32 %v3837, 2147483648
    %v4138 = vxor.u32 %v3840, 2147483648
    %v4139 = vxor.u32 %v3845, 2147483648
    %v4140 = vxor.u32 %v3848, 2147483648
    %v4141 = vxor.u32 %v3853, 2147483648
    %v4142 = vxor.u32 %v3856, 2147483648
    %v4143 = vxor.u32 %v3861, 2147483648
    %v4144 = vxor.u32 %v3864, 2147483648
    %v4145 = vxor.u32 %v3869, 2147483648
    %v4146 = vxor.u32 %v3872, 2147483648
    %v4147 = vxor.u32 %v3877, 2147483648
    %v4148 = vxor.u32 %v3880, 2147483648
    %v4149 = vxor.u32 %v3885, 2147483648
    %v4150 = vxor.u32 %v3888, 2147483648
    %v4151 = vxor.u32 %v3893, 2147483648
    %v4152 = vxor.u32 %v3896, 2147483648
    %v4153 = vxor.u32 %v3901, 2147483648
    %v4154 = vxor.u32 %v3904, 2147483648
    %v4155 = vxor.u32 %v3909, 2147483648
    %v4156 = vxor.u32 %v3912, 2147483648
    %v4157 = vxor.u32 %v3917, 2147483648
    %v4158 = vxor.u32 %v3920, 2147483648
    %v4159 = vxor.u32 %v3925, 2147483648
    %v4160 = vxor.u32 %v3928, 2147483648
    %v4161 = vxor.u32 %v3933, 2147483648
    %v4162 = vxor.u32 %v3936, 2147483648
    %v4163 = vxor.u32 %v3941, 2147483648
    %v4164 = vxor.u32 %v3944, 2147483648
    %v4165 = vxor.u32 %v3949, 2147483648
    %v4166 = vxor.u32 %v3952, 2147483648
    %v4167 = vxor.u32 %v3957, 2147483648
    %v4168 = vxor.u32 %v3960, 2147483648
    %v4169 = vxor.u32 %v3965, 2147483648
    %v4170 = vxor.u32 %v3968, 2147483648
    %v4171 = vmul.f32 %v3971, 1.442695
    %v4172 = vpow.pop %v4171
    %v4173 = vmul.f32 %v3972, 1.442695
    %v4174 = vpow.pop %v4173
    %v4175 = vmul.f32 %v3973, 1.442695
    %v4176 = vpow.pop %v4175
    %v4177 = vmul.f32 %v3974, 1.442695
    %v4178 = vpow.pop %v4177
    %v4179 = vmul.f32 %v3975, 1.442695
    %v4180 = vpow.pop %v4179
    %v4181 = vmul.f32 %v3976, 1.442695
    %v4182 = vpow.pop %v4181
    %v4183 = vmul.f32 %v3977, 1.442695
    %v4184 = vpow.pop %v4183
    %v4185 = vmul.f32 %v3978, 1.442695
    %v4186 = vpow.pop %v4185
    %v4187 = vmul.f32 %v3979, 1.442695
    %v4188 = vpow.pop %v4187
    %v4189 = vmul.f32 %v3980, 1.442695
    %v4190 = vpow.pop %v4189
    %v4191 = vmul.f32 %v3981, 1.442695
    %v4192 = vpow.pop %v4191
    %v4193 = vmul.f32 %v3982, 1.442695
    %v4194 = vpow.pop %v4193
    %v4195 = vmul.f32 %v3983, 1.442695
    %v4196 = vpow.pop %v4195
    %v4197 = vmul.f32 %v3984, 1.442695
    %v4198 = vpow.pop %v4197
    %v4199 = vmul.f32 %v3985, 1.442695
    %v4200 = vpow.pop %v4199
    %v4201 = vmul.f32 %v3986, 1.442695
    %v4202 = vpow.pop %v4201
    %v4203 = vmul.f32 %v3987, 1.442695
    %v4204 = vpow.pop %v4203
    %v4205 = vmul.f32 %v3988, 1.442695
    %v4206 = vpow.pop %v4205
    %v4207 = vmul.f32 %v3989, 1.442695
    %v4208 = vpow.pop %v4207
    %v4209 = vmul.f32 %v3990, 1.442695
    %v4210 = vpow.pop %v4209
    %v4211 = vmul.f32 %v3991, 1.442695
    %v4212 = vpow.pop %v4211
    %v4213 = vmul.f32 %v3992, 1.442695
    %v4214 = vpow.pop %v4213
    %v4215 = vmul.f32 %v3993, 1.442695
    %v4216 = vpow.pop %v4215
    %v4217 = vmul.f32 %v3994, 1.442695
    %v4218 = vpow.pop %v4217
    %v4219 = vmul.f32 %v3995, 1.442695
    %v4220 = vpow.pop %v4219
    %v4221 = vmul.f32 %v3996, 1.442695
    %v4222 = vpow.pop %v4221
    %v4223 = vmul.f32 %v3997, 1.442695
    %v4224 = vpow.pop %v4223
    %v4225 = vmul.f32 %v3998, 1.442695
    %v4226 = vpow.pop %v4225
    %v4227 = vmul.f32 %v3999, 1.442695
    %v4228 = vpow.pop %v4227
    %v4229 = vmul.f32 %v4000, 1.442695
    %v4230 = vpow.pop %v4229
    %v4231 = vmul.f32 %v4001, 1.442695
    %v4232 = vpow.pop %v4231
    %v4233 = vmul.f32 %v4002, 1.442695
    %v4234 = vpow.pop %v4233
    %v4235 = vmul.f32 %v4003, 1.442695
    %v4236 = vpow.pop %v4235
    %v4237 = vmul.f32 %v4004, 1.442695
    %v4238 = vpow.pop %v4237
    %v4239 = vmul.f32 %v4005, 1.442695
    %v4240 = vpow.pop %v4239
    %v4241 = vmul.f32 %v4006, 1.442695
    %v4242 = vpow.pop %v4241
    %v4243 = vmul.f32 %v4007, 1.442695
    %v4244 = vpow.pop %v4243
    %v4245 = vmul.f32 %v4008, 1.442695
    %v4246 = vpow.pop %v4245
    %v4247 = vmul.f32 %v4009, 1.442695
    %v4248 = vpow.pop %v4247
    %v4249 = vmul.f32 %v4010, 1.442695
    %v4250 = vpow.pop %v4249
    %v4251 = vmul.f32 %v4011, 1.442695
    %v4252 = vpow.pop %v4251
    %v4253 = vmul.f32 %v4012, 1.442695
    %v4254 = vpow.pop %v4253
    %v4255 = vmul.f32 %v4013, 1.442695
    %v4256 = vpow.pop %v4255
    %v4257 = vmul.f32 %v4014, 1.442695
    %v4258 = vpow.pop %v4257
    %v4259 = vmul.f32 %v4015, 1.442695
    %v4260 = vpow.pop %v4259
    %v4261 = vmul.f32 %v4016, 1.442695
    %v4262 = vpow.pop %v4261
    %v4263 = vmul.f32 %v4017, 1.442695
    %v4264 = vpow.pop %v4263
    %v4265 = vmul.f32 %v4018, 1.442695
    %v4266 = vpow.pop %v4265
    %v4267 = vmul.f32 %v4019, 1.442695
    %v4268 = vpow.pop %v4267
    %v4269 = vmul.f32 %v4020, 1.442695
    %v4270 = vpow.pop %v4269
    %v4271 = vmul.f32 %v4021, 1.442695
    %v4272 = vpow.pop %v4271
    %v4273 = vmul.f32 %v4022, 1.442695
    %v4274 = vpow.pop %v4273
    %v4275 = vmul.f32 %v4023, 1.442695
    %v4276 = vpow.pop %v4275
    %v4277 = vmul.f32 %v4024, 1.442695
    %v4278 = vpow.pop %v4277
    %v4279 = vmul.f32 %v4025, 1.442695
    %v4280 = vpow.pop %v4279
    %v4281 = vmul.f32 %v4026, 1.442695
    %v4282 = vpow.pop %v4281
    %v4283 = vmul.f32 %v4027, 1.442695
    %v4284 = vpow.pop %v4283
    %v4285 = vmul.f32 %v4028, 1.442695
    %v4286 = vpow.pop %v4285
    %v4287 = vmul.f32 %v4029, 1.442695
    %v4288 = vpow.pop %v4287
    %v4289 = vmul.f32 %v4030, 1.442695
    %v4290 = vpow.pop %v4289
    %v4291 = vmul.f32 %v4031, 1.442695
    %v4292 = vpow.pop %v4291
    %v4293 = vmul.f32 %v4032, 1.442695
    %v4294 = vpow.pop %v4293
    %v4295 = vmul.f32 %v4033, 1.442695
    %v4296 = vpow.pop %v4295
    %v4297 = vmul.f32 %v4034, 1.442695
    %v4298 = vpow.pop %v4297
    %v4299 = vmul.f32 %v4035, 1.442695
    %v4300 = vpow.pop %v4299
    %v4301 = vmul.f32 %v4036, 1.442695
    %v4302 = vpow.pop %v4301
    %v4303 = vmul.f32 %v4037, 1.442695
    %v4304 = vpow.pop %v4303
    %v4305 = vmul.f32 %v4038, 1.442695
    %v4306 = vpow.pop %v4305
    %v4307 = vmul.f32 %v4039, 1.442695
    %v4308 = vpow.pop %v4307
    %v4309 = vmul.f32 %v4040, 1.442695
    %v4310 = vpow.pop %v4309
    %v4311 = vmul.f32 %v4041, 1.442695
    %v4312 = vpow.pop %v4311
    %v4313 = vmul.f32 %v4042, 1.442695
    %v4314 = vpow.pop %v4313
    %v4315 = vmul.f32 %v4043, 1.442695
    %v4316 = vpow.pop %v4315
    %v4317 = vmul.f32 %v4044, 1.442695
    %v4318 = vpow.pop %v4317
    %v4319 = vmul.f32 %v4045, 1.442695
    %v4320 = vpow.pop %v4319
    %v4321 = vmul.f32 %v4046, 1.442695
    %v4322 = vpow.pop %v4321
    %v4323 = vmul.f32 %v4047, 1.442695
    %v4324 = vpow.pop %v4323
    %v4325 = vmul.f32 %v4048, 1.442695
    %v4326 = vpow.pop %v4325
    %v4327 = vmul.f32 %v4049, 1.442695
    %v4328 = vpow.pop %v4327
    %v4329 = vmul.f32 %v4050, 1.442695
    %v4330 = vpow.pop %v4329
    %v4331 = vmul.f32 %v4051, 1.442695
    %v4332 = vpow.pop %v4331
    %v4333 = vmul.f32 %v4052, 1.442695
    %v4334 = vpow.pop %v4333
    %v4335 = vmul.f32 %v4053, 1.442695
    %v4336 = vpow.pop %v4335
    %v4337 = vmul.f32 %v4054, 1.442695
    %v4338 = vpow.pop %v4337
    %v4339 = vmul.f32 %v4055, 1.442695
    %v4340 = vpow.pop %v4339
    %v4341 = vmul.f32 %v4056, 1.442695
    %v4342 = vpow.pop %v4341
    %v4343 = vmul.f32 %v4057, 1.442695
    %v4344 = vpow.pop %v4343
    %v4345 = vmul.f32 %v4058, 1.442695
    %v4346 = vpow.pop %v4345
    %v4347 = vmul.f32 %v4059, 1.442695
    %v4348 = vpow.pop %v4347
    %v4349 = vmul.f32 %v4060, 1.442695
    %v4350 = vpow.pop %v4349
    %v4351 = vmul.f32 %v4061, 1.442695
    %v4352 = vpow.pop %v4351
    %v4353 = vmul.f32 %v4062, 1.442695
    %v4354 = vpow.pop %v4353
    %v4355 = vmul.f32 %v4063, 1.442695
    %v4356 = vpow.pop %v4355
    %v4357 = vmul.f32 %v4064, 1.442695
    %v4358 = vpow.pop %v4357
    %v4359 = vmul.f32 %v4065, 1.442695
    %v4360 = vpow.pop %v4359
    %v4361 = vmul.f32 %v4066, 1.442695
    %v4362 = vpow.pop %v4361
    %v4363 = vmul.f32 %v4067, 1.442695
    %v4364 = vpow.pop %v4363
    %v4365 = vmul.f32 %v4068, 1.442695
    %v4366 = vpow.pop %v4365
    %v4367 = vmul.f32 %v4069, 1.442695
    %v4368 = vpow.pop %v4367
    %v4369 = vmul.f32 %v4070, 1.442695
    %v4370 = vpow.pop %v4369
    %v4371 = vmul.f32 %v4071, 1.442695
    %v4372 = vpow.pop %v4371
    %v4373 = vmul.f32 %v4072, 1.442695
    %v4374 = vpow.pop %v4373
    %v4375 = vmul.f32 %v4073, 1.442695
    %v4376 = vpow.pop %v4375
    %v4377 = vmul.f32 %v4074, 1.442695
    %v4378 = vpow.pop %v4377
    %v4379 = vmul.f32 %v4075, 1.442695
    %v4380 = vpow.pop %v4379
    %v4381 = vmul.f32 %v4076, 1.442695
    %v4382 = vpow.pop %v4381
    %v4383 = vmul.f32 %v4077, 1.442695
    %v4384 = vpow.pop %v4383
    %v4385 = vmul.f32 %v4078, 1.442695
    %v4386 = vpow.pop %v4385
    %v4387 = vmul.f32 %v4079, 1.442695
    %v4388 = vpow.pop %v4387
    %v4389 = vmul.f32 %v4080, 1.442695
    %v4390 = vpow.pop %v4389
    %v4391 = vmul.f32 %v4081, 1.442695
    %v4392 = vpow.pop %v4391
    %v4393 = vmul.f32 %v4082, 1.442695
    %v4394 = vpow.pop %v4393
    %v4395 = vmul.f32 %v4083, 1.442695
    %v4396 = vpow.pop %v4395
    %v4397 = vmul.f32 %v4084, 1.442695
    %v4398 = vpow.pop %v4397
    %v4399 = vmul.f32 %v4085, 1.442695
    %v4400 = vpow.pop %v4399
    %v4401 = vmul.f32 %v4086, 1.442695
    %v4402 = vpow.pop %v4401
    %v4403 = vmul.f32 %v4087, 1.442695
    %v4404 = vpow.pop %v4403
    %v4405 = vmul.f32 %v4088, 1.442695
    %v4406 = vpow.pop %v4405
    %v4407 = vmul.f32 %v4089, 1.442695
    %v4408 = vpow.pop %v4407
    %v4409 = vmul.f32 %v4090, 1.442695
    %v4410 = vpow.pop %v4409
    %v4411 = vmul.f32 %v4091, 1.442695
    %v4412 = vpow.pop %v4411
    %v4413 = vmul.f32 %v4092, 1.442695
    %v4414 = vpow.pop %v4413
    %v4415 = vmul.f32 %v4093, 1.442695
    %v4416 = vpow.pop %v4415
    %v4417 = vmul.f32 %v4094, 1.442695
    %v4418 = vpow.pop %v4417
    %v4419 = vmul.f32 %v4095, 1.442695
    %v4420 = vpow.pop %v4419
    %v4421 = vmul.f32 %v4096, 1.442695
    %v4422 = vpow.pop %v4421
    %v4423 = vmul.f32 %v4097, 1.442695
    %v4424 = vpow.pop %v4423
    %v4425 = vmul.f32 %v4098, 1.442695
    %v4426 = vpow.pop %v4425
    %v4427 = vmul.f32 %v4099, 1.442695
    %v4428 = vpow.pop %v4427
    %v4429 = vmul.f32 %v4100, 1.442695
    %v4430 = vpow.pop %v4429
    %v4431 = vmul.f32 %v4101, 1.442695
    %v4432 = vpow.pop %v4431
    %v4433 = vmul.f32 %v4102, 1.442695
    %v4434 = vpow.pop %v4433
    %v4435 = vmul.f32 %v4103, 1.442695
    %v4436 = vpow.pop %v4435
    %v4437 = vmul.f32 %v4104, 1.442695
    %v4438 = vpow.pop %v4437
    %v4439 = vmul.f32 %v4105, 1.442695
    %v4440 = vpow.pop %v4439
    %v4441 = vmul.f32 %v4106, 1.442695
    %v4442 = vpow.pop %v4441
    %v4443 = vmul.f32 %v4107, 1.442695
    %v4444 = vpow.pop %v4443
    %v4445 = vmul.f32 %v4108, 1.442695
    %v4446 = vpow.pop %v4445
    %v4447 = vmul.f32 %v4109, 1.442695
    %v4448 = vpow.pop %v4447
    %v4449 = vmul.f32 %v4110, 1.442695
    %v4450 = vpow.pop %v4449
    %v4451 = vmul.f32 %v4111, 1.442695
    %v4452 = vpow.pop %v4451
    %v4453 = vmul.f32 %v4112, 1.442695
    %v4454 = vpow.pop %v4453
    %v4455 = vmul.f32 %v4113, 1.442695
    %v4456 = vpow.pop %v4455
    %v4457 = vmul.f32 %v4114, 1.442695
    %v4458 = vpow.pop %v4457
    %v4459 = vmul.f32 %v4115, 1.442695
    %v4460 = vpow.pop %v4459
    %v4461 = vmul.f32 %v4116, 1.442695
    %v4462 = vpow.pop %v4461
    %v4463 = vmul.f32 %v4117, 1.442695
    %v4464 = vpow.pop %v4463
    %v4465 = vmul.f32 %v4118, 1.442695
    %v4466 = vpow.pop %v4465
    %v4467 = vmul.f32 %v4119, 1.442695
    %v4468 = vpow.pop %v4467
    %v4469 = vmul.f32 %v4120, 1.442695
    %v4470 = vpow.pop %v4469
    %v4471 = vmul.f32 %v4121, 1.442695
    %v4472 = vpow.pop %v4471
    %v4473 = vmul.f32 %v4122, 1.442695
    %v4474 = vpow.pop %v4473
    %v4475 = vmul.f32 %v4123, 1.442695
    %v4476 = vpow.pop %v4475
    %v4477 = vmul.f32 %v4124, 1.442695
    %v4478 = vpow.pop %v4477
    %v4479 = vmul.f32 %v4125, 1.442695
    %v4480 = vpow.pop %v4479
    %v4481 = vmul.f32 %v4126, 1.442695
    %v4482 = vpow.pop %v4481
    %v4483 = vmul.f32 %v4127, 1.442695
    %v4484 = vpow.pop %v4483
    %v4485 = vmul.f32 %v4128, 1.442695
    %v4486 = vpow.pop %v4485
    %v4487 = vmul.f32 %v4129, 1.442695
    %v4488 = vpow.pop %v4487
    %v4489 = vmul.f32 %v4130, 1.442695
    %v4490 = vpow.pop %v4489
    %v4491 = vmul.f32 %v4131, 1.442695
    %v4492 = vpow.pop %v4491
    %v4493 = vmul.f32 %v4132, 1.442695
    %v4494 = vpow.pop %v4493
    %v4495 = vmul.f32 %v4133, 1.442695
    %v4496 = vpow.pop %v4495
    %v4497 = vmul.f32 %v4134, 1.442695
    %v4498 = vpow.pop %v4497
    %v4499 = vmul.f32 %v4135, 1.442695
    %v4500 = vpow.pop %v4499
    %v4501 = vmul.f32 %v4136, 1.442695
    %v4502 = vpow.pop %v4501
    %v4503 = vmul.f32 %v4137, 1.442695
    %v4504 = vpow.pop %v4503
    %v4505 = vmul.f32 %v4138, 1.442695
    %v4506 = vpow.pop %v4505
    %v4507 = vmul.f32 %v4139, 1.442695
    %v4508 = vpow.pop %v4507
    %v4509 = vmul.f32 %v4140, 1.442695
    %v4510 = vpow.pop %v4509
    %v4511 = vmul.f32 %v4141, 1.442695
    %v4512 = vpow.pop %v4511
    %v4513 = vmul.f32 %v4142, 1.442695
    %v4514 = vpow.pop %v4513
    %v4515 = vmul.f32 %v4143, 1.442695
    %v4516 = vpow.pop %v4515
    %v4517 = vmul.f32 %v4144, 1.442695
    %v4518 = vpow.pop %v4517
    %v4519 = vmul.f32 %v4145, 1.442695
    %v4520 = vpow.pop %v4519
    %v4521 = vmul.f32 %v4146, 1.442695
    %v4522 = vpow.pop %v4521
    %v4523 = vmul.f32 %v4147, 1.442695
    %v4524 = vpow.pop %v4523
    %v4525 = vmul.f32 %v4148, 1.442695
    %v4526 = vpow.pop %v4525
    %v4527 = vmul.f32 %v4149, 1.442695
    %v4528 = vpow.pop %v4527
    %v4529 = vmul.f32 %v4150, 1.442695
    %v4530 = vpow.pop %v4529
    %v4531 = vmul.f32 %v4151, 1.442695
    %v4532 = vpow.pop %v4531
    %v4533 = vmul.f32 %v4152, 1.442695
    %v4534 = vpow.pop %v4533
    %v4535 = vmul.f32 %v4153, 1.442695
    %v4536 = vpow.pop %v4535
    %v4537 = vmul.f32 %v4154, 1.442695
    %v4538 = vpow.pop %v4537
    %v4539 = vmul.f32 %v4155, 1.442695
    %v4540 = vpow.pop %v4539
    %v4541 = vmul.f32 %v4156, 1.442695
    %v4542 = vpow.pop %v4541
    %v4543 = vmul.f32 %v4157, 1.442695
    %v4544 = vpow.pop %v4543
    %v4545 = vmul.f32 %v4158, 1.442695
    %v4546 = vpow.pop %v4545
    %v4547 = vmul.f32 %v4159, 1.442695
    %v4548 = vpow.pop %v4547
    %v4549 = vmul.f32 %v4160, 1.442695
    %v4550 = vpow.pop %v4549
    %v4551 = vmul.f32 %v4161, 1.442695
    %v4552 = vpow.pop %v4551
    %v4553 = vmul.f32 %v4162, 1.442695
    %v4554 = vpow.pop %v4553
    %v4555 = vmul.f32 %v4163, 1.442695
    %v4556 = vpow.pop %v4555
    %v4557 = vmul.f32 %v4164, 1.442695
    %v4558 = vpow.pop %v4557
    %v4559 = vmul.f32 %v4165, 1.442695
    %v4560 = vpow.pop %v4559
    %v4561 = vmul.f32 %v4166, 1.442695
    %v4562 = vpow.pop %v4561
    %v4563 = vmul.f32 %v4167, 1.442695
    %v4564 = vpow.pop %v4563
    %v4565 = vmul.f32 %v4168, 1.442695
    %v4566 = vpow.pop %v4565
    %v4567 = vmul.f32 %v4169, 1.442695
    %v4568 = vpow.pop %v4567
    %v4569 = vmul.f32 %v4170, 1.442695
    %v4570 = vpow.pop %v4569
    %v4571 = vadd.f32 %v4172, 1.0
    %v4572 = vadd.f32 %v4174, 1.0
    %v4573 = vadd.f32 %v4176, 1.0
    %v4574 = vadd.f32 %v4178, 1.0
    %v4575 = vadd.f32 %v4180, 1.0
    %v4576 = vadd.f32 %v4182, 1.0
    %v4577 = vadd.f32 %v4184, 1.0
    %v4578 = vadd.f32 %v4186, 1.0
    %v4579 = vadd.f32 %v4188, 1.0
    %v4580 = vadd.f32 %v4190, 1.0
    %v4581 = vadd.f32 %v4192, 1.0
    %v4582 = vadd.f32 %v4194, 1.0
    %v4583 = vadd.f32 %v4196, 1.0
    %v4584 = vadd.f32 %v4198, 1.0
    %v4585 = vadd.f32 %v4200, 1.0
    %v4586 = vadd.f32 %v4202, 1.0
    %v4587 = vadd.f32 %v4204, 1.0
    %v4588 = vadd.f32 %v4206, 1.0
    %v4589 = vadd.f32 %v4208, 1.0
    %v4590 = vadd.f32 %v4210, 1.0
    %v4591 = vadd.f32 %v4212, 1.0
    %v4592 = vadd.f32 %v4214, 1.0
    %v4593 = vadd.f32 %v4216, 1.0
    %v4594 = vadd.f32 %v4218, 1.0
    %v4595 = vadd.f32 %v4220, 1.0
    %v4596 = vadd.f32 %v4222, 1.0
    %v4597 = vadd.f32 %v4224, 1.0
    %v4598 = vadd.f32 %v4226, 1.0
    %v4599 = vadd.f32 %v4228, 1.0
    %v4600 = vadd.f32 %v4230, 1.0
    %v4601 = vadd.f32 %v4232, 1.0
    %v4602 = vadd.f32 %v4234, 1.0
    %v4603 = vadd.f32 %v4236, 1.0
    %v4604 = vadd.f32 %v4238, 1.0
    %v4605 = vadd.f32 %v4240, 1.0
    %v4606 = vadd.f32 %v4242, 1.0
    %v4607 = vadd.f32 %v4244, 1.0
    %v4608 = vadd.f32 %v4246, 1.0
    %v4609 = vadd.f32 %v4248, 1.0
    %v4610 = vadd.f32 %v4250, 1.0
    %v4611 = vadd.f32 %v4252, 1.0
    %v4612 = vadd.f32 %v4254, 1.0
    %v4613 = vadd.f32 %v4256, 1.0
    %v4614 = vadd.f32 %v4258, 1.0
    %v4615 = vadd.f32 %v4260, 1.0
    %v4616 = vadd.f32 %v4262, 1.0
    %v4617 = vadd.f32 %v4264, 1.0
    %v4618 = vadd.f32 %v4266, 1.0
    %v4619 = vadd.f32 %v4268, 1.0
    %v4620 = vadd.f32 %v4270, 1.0
    %v4621 = vadd.f32 %v4272, 1.0
    %v4622 = vadd.f32 %v4274, 1.0
    %v4623 = vadd.f32 %v4276, 1.0
    %v4624 = vadd.f32 %v4278, 1.0
    %v4625 = vadd.f32 %v4280, 1.0
    %v4626 = vadd.f32 %v4282, 1.0
    %v4627 = vadd.f32 %v4284, 1.0
    %v4628 = vadd.f32 %v4286, 1.0
    %v4629 = vadd.f32 %v4288, 1.0
    %v4630 = vadd.f32 %v4290, 1.0
    %v4631 = vadd.f32 %v4292, 1.0
    %v4632 = vadd.f32 %v4294, 1.0
    %v4633 = vadd.f32 %v4296, 1.0
    %v4634 = vadd.f32 %v4298, 1.0
    %v4635 = vadd.f32 %v4300, 1.0
    %v4636 = vadd.f32 %v4302, 1.0
    %v4637 = vadd.f32 %v4304, 1.0
    %v4638 = vadd.f32 %v4306, 1.0
    %v4639 = vadd.f32 %v4308, 1.0
    %v4640 = vadd.f32 %v4310, 1.0
    %v4641 = vadd.f32 %v4312, 1.0
    %v4642 = vadd.f32 %v4314, 1.0
    %v4643 = vadd.f32 %v4316, 1.0
    %v4644 = vadd.f32 %v4318, 1.0
    %v4645 = vadd.f32 %v4320, 1.0
    %v4646 = vadd.f32 %v4322, 1.0
    %v4647 = vadd.f32 %v4324, 1.0
    %v4648 = vadd.f32 %v4326, 1.0
    %v4649 = vadd.f32 %v4328, 1.0
    %v4650 = vadd.f32 %v4330, 1.0
    %v4651 = vadd.f32 %v4332, 1.0
    %v4652 = vadd.f32 %v4334, 1.0
    %v4653 = vadd.f32 %v4336, 1.0
    %v4654 = vadd.f32 %v4338, 1.0
    %v4655 = vadd.f32 %v4340, 1.0
    %v4656 = vadd.f32 %v4342, 1.0
    %v4657 = vadd.f32 %v4344, 1.0
    %v4658 = vadd.f32 %v4346, 1.0
    %v4659 = vadd.f32 %v4348, 1.0
    %v4660 = vadd.f32 %v4350, 1.0
    %v4661 = vadd.f32 %v4352, 1.0
    %v4662 = vadd.f32 %v4354, 1.0
    %v4663 = vadd.f32 %v4356, 1.0
    %v4664 = vadd.f32 %v4358, 1.0
    %v4665 = vadd.f32 %v4360, 1.0
    %v4666 = vadd.f32 %v4362, 1.0
    %v4667 = vadd.f32 %v4364, 1.0
    %v4668 = vadd.f32 %v4366, 1.0
    %v4669 = vadd.f32 %v4368, 1.0
    %v4670 = vadd.f32 %v4370, 1.0
    %v4671 = vadd.f32 %v4372, 1.0
    %v4672 = vadd.f32 %v4374, 1.0
    %v4673 = vadd.f32 %v4376, 1.0
    %v4674 = vadd.f32 %v4378, 1.0
    %v4675 = vadd.f32 %v4380, 1.0
    %v4676 = vadd.f32 %v4382, 1.0
    %v4677 = vadd.f32 %v4384, 1.0
    %v4678 = vadd.f32 %v4386, 1.0
    %v4679 = vadd.f32 %v4388, 1.0
    %v4680 = vadd.f32 %v4390, 1.0
    %v4681 = vadd.f32 %v4392, 1.0
    %v4682 = vadd.f32 %v4394, 1.0
    %v4683 = vadd.f32 %v4396, 1.0
    %v4684 = vadd.f32 %v4398, 1.0
    %v4685 = vadd.f32 %v4400, 1.0
    %v4686 = vadd.f32 %v4402, 1.0
    %v4687 = vadd.f32 %v4404, 1.0
    %v4688 = vadd.f32 %v4406, 1.0
    %v4689 = vadd.f32 %v4408, 1.0
    %v4690 = vadd.f32 %v4410, 1.0
    %v4691 = vadd.f32 %v4412, 1.0
    %v4692 = vadd.f32 %v4414, 1.0
    %v4693 = vadd.f32 %v4416, 1.0
    %v4694 = vadd.f32 %v4418, 1.0
    %v4695 = vadd.f32 %v4420, 1.0
    %v4696 = vadd.f32 %v4422, 1.0
    %v4697 = vadd.f32 %v4424, 1.0
    %v4698 = vadd.f32 %v4426, 1.0
    %v4699 = vadd.f32 %v4428, 1.0
    %v4700 = vadd.f32 %v4430, 1.0
    %v4701 = vadd.f32 %v4432, 1.0
    %v4702 = vadd.f32 %v4434, 1.0
    %v4703 = vadd.f32 %v4436, 1.0
    %v4704 = vadd.f32 %v4438, 1.0
    %v4705 = vadd.f32 %v4440, 1.0
    %v4706 = vadd.f32 %v4442, 1.0
    %v4707 = vadd.f32 %v4444, 1.0
    %v4708 = vadd.f32 %v4446, 1.0
    %v4709 = vadd.f32 %v4448, 1.0
    %v4710 = vadd.f32 %v4450, 1.0
    %v4711 = vadd.f32 %v4452, 1.0
    %v4712 = vadd.f32 %v4454, 1.0
    %v4713 = vadd.f32 %v4456, 1.0
    %v4714 = vadd.f32 %v4458, 1.0
    %v4715 = vadd.f32 %v4460, 1.0
    %v4716 = vadd.f32 %v4462, 1.0
    %v4717 = vadd.f32 %v4464, 1.0
    %v4718 = vadd.f32 %v4466, 1.0
    %v4719 = vadd.f32 %v4468, 1.0
    %v4720 = vadd.f32 %v4470, 1.0
    %v4721 = vadd.f32 %v4472, 1.0
    %v4722 = vadd.f32 %v4474, 1.0
    %v4723 = vadd.f32 %v4476, 1.0
    %v4724 = vadd.f32 %v4478, 1.0
    %v4725 = vadd.f32 %v4480, 1.0
    %v4726 = vadd.f32 %v4482, 1.0
    %v4727 = vadd.f32 %v4484, 1.0
    %v4728 = vadd.f32 %v4486, 1.0
    %v4729 = vadd.f32 %v4488, 1.0
    %v4730 = vadd.f32 %v4490, 1.0
    %v4731 = vadd.f32 %v4492, 1.0
    %v4732 = vadd.f32 %v4494, 1.0
    %v4733 = vadd.f32 %v4496, 1.0
    %v4734 = vadd.f32 %v4498, 1.0
    %v4735 = vadd.f32 %v4500, 1.0
    %v4736 = vadd.f32 %v4502, 1.0
    %v4737 = vadd.f32 %v4504, 1.0
    %v4738 = vadd.f32 %v4506, 1.0
    %v4739 = vadd.f32 %v4508, 1.0
    %v4740 = vadd.f32 %v4510, 1.0
    %v4741 = vadd.f32 %v4512, 1.0
    %v4742 = vadd.f32 %v4514, 1.0
    %v4743 = vadd.f32 %v4516, 1.0
    %v4744 = vadd.f32 %v4518, 1.0
    %v4745 = vadd.f32 %v4520, 1.0
    %v4746 = vadd.f32 %v4522, 1.0
    %v4747 = vadd.f32 %v4524, 1.0
    %v4748 = vadd.f32 %v4526, 1.0
    %v4749 = vadd.f32 %v4528, 1.0
    %v4750 = vadd.f32 %v4530, 1.0
    %v4751 = vadd.f32 %v4532, 1.0
    %v4752 = vadd.f32 %v4534, 1.0
    %v4753 = vadd.f32 %v4536, 1.0
    %v4754 = vadd.f32 %v4538, 1.0
    %v4755 = vadd.f32 %v4540, 1.0
    %v4756 = vadd.f32 %v4542, 1.0
    %v4757 = vadd.f32 %v4544, 1.0
    %v4758 = vadd.f32 %v4546, 1.0
    %v4759 = vadd.f32 %v4548, 1.0
    %v4760 = vadd.f32 %v4550, 1.0
    %v4761 = vadd.f32 %v4552, 1.0
    %v4762 = vadd.f32 %v4554, 1.0
    %v4763 = vadd.f32 %v4556, 1.0
    %v4764 = vadd.f32 %v4558, 1.0
    %v4765 = vadd.f32 %v4560, 1.0
    %v4766 = vadd.f32 %v4562, 1.0
    %v4767 = vadd.f32 %v4564, 1.0
    %v4768 = vadd.f32 %v4566, 1.0
    %v4769 = vadd.f32 %v4568, 1.0
    %v4770 = vadd.f32 %v4570, 1.0
    %v4771 = vrcp.pop %v4571
    %v4772 = vmul.f32 1.0, %v4771
    %v4773 = vrcp.pop %v4572
    %v4774 = vmul.f32 1.0, %v4773
    %v4775 = vrcp.pop %v4573
    %v4776 = vmul.f32 1.0, %v4775
    %v4777 = vrcp.pop %v4574
    %v4778 = vmul.f32 1.0, %v4777
    %v4779 = vrcp.pop %v4575
    %v4780 = vmul.f32 1.0, %v4779
    %v4781 = vrcp.pop %v4576
    %v4782 = vmul.f32 1.0, %v4781
    %v4783 = vrcp.pop %v4577
    %v4784 = vmul.f32 1.0, %v4783
    %v4785 = vrcp.pop %v4578
    %v4786 = vmul.f32 1.0, %v4785
    %v4787 = vrcp.pop %v4579
    %v4788 = vmul.f32 1.0, %v4787
    %v4789 = vrcp.pop %v4580
    %v4790 = vmul.f32 1.0, %v4789
    %v4791 = vrcp.pop %v4581
    %v4792 = vmul.f32 1.0, %v4791
    %v4793 = vrcp.pop %v4582
    %v4794 = vmul.f32 1.0, %v4793
    %v4795 = vrcp.pop %v4583
    %v4796 = vmul.f32 1.0, %v4795
    %v4797 = vrcp.pop %v4584
    %v4798 = vmul.f32 1.0, %v4797
    %v4799 = vrcp.pop %v4585
    %v4800 = vmul.f32 1.0, %v4799
    %v4801 = vrcp.pop %v4586
    %v4802 = vmul.f32 1.0, %v4801
    %v4803 = vrcp.pop %v4587
    %v4804 = vmul.f32 1.0, %v4803
    %v4805 = vrcp.pop %v4588
    %v4806 = vmul.f32 1.0, %v4805
    %v4807 = vrcp.pop %v4589
    %v4808 = vmul.f32 1.0, %v4807
    %v4809 = vrcp.pop %v4590
    %v4810 = vmul.f32 1.0, %v4809
    %v4811 = vrcp.pop %v4591
    %v4812 = vmul.f32 1.0, %v4811
    %v4813 = vrcp.pop %v4592
    %v4814 = vmul.f32 1.0, %v4813
    %v4815 = vrcp.pop %v4593
    %v4816 = vmul.f32 1.0, %v4815
    %v4817 = vrcp.pop %v4594
    %v4818 = vmul.f32 1.0, %v4817
    %v4819 = vrcp.pop %v4595
    %v4820 = vmul.f32 1.0, %v4819
    %v4821 = vrcp.pop %v4596
    %v4822 = vmul.f32 1.0, %v4821
    %v4823 = vrcp.pop %v4597
    %v4824 = vmul.f32 1.0, %v4823
    %v4825 = vrcp.pop %v4598
    %v4826 = vmul.f32 1.0, %v4825
    %v4827 = vrcp.pop %v4599
    %v4828 = vmul.f32 1.0, %v4827
    %v4829 = vrcp.pop %v4600
    %v4830 = vmul.f32 1.0, %v4829
    %v4831 = vrcp.pop %v4601
    %v4832 = vmul.f32 1.0, %v4831
    %v4833 = vrcp.pop %v4602
    %v4834 = vmul.f32 1.0, %v4833
    %v4835 = vrcp.pop %v4603
    %v4836 = vmul.f32 1.0, %v4835
    %v4837 = vrcp.pop %v4604
    %v4838 = vmul.f32 1.0, %v4837
    %v4839 = vrcp.pop %v4605
    %v4840 = vmul.f32 1.0, %v4839
    %v4841 = vrcp.pop %v4606
    %v4842 = vmul.f32 1.0, %v4841
    %v4843 = vrcp.pop %v4607
    %v4844 = vmul.f32 1.0, %v4843
    %v4845 = vrcp.pop %v4608
    %v4846 = vmul.f32 1.0, %v4845
    %v4847 = vrcp.pop %v4609
    %v4848 = vmul.f32 1.0, %v4847
    %v4849 = vrcp.pop %v4610
    %v4850 = vmul.f32 1.0, %v4849
    %v4851 = vrcp.pop %v4611
    %v4852 = vmul.f32 1.0, %v4851
    %v4853 = vrcp.pop %v4612
    %v4854 = vmul.f32 1.0, %v4853
    %v4855 = vrcp.pop %v4613
    %v4856 = vmul.f32 1.0, %v4855
    %v4857 = vrcp.pop %v4614
    %v4858 = vmul.f32 1.0, %v4857
    %v4859 = vrcp.pop %v4615
    %v4860 = vmul.f32 1.0, %v4859
    %v4861 = vrcp.pop %v4616
    %v4862 = vmul.f32 1.0, %v4861
    %v4863 = vrcp.pop %v4617
    %v4864 = vmul.f32 1.0, %v4863
    %v4865 = vrcp.pop %v4618
    %v4866 = vmul.f32 1.0, %v4865
    %v4867 = vrcp.pop %v4619
    %v4868 = vmul.f32 1.0, %v4867
    %v4869 = vrcp.pop %v4620
    %v4870 = vmul.f32 1.0, %v4869
    %v4871 = vrcp.pop %v4621
    %v4872 = vmul.f32 1.0, %v4871
    %v4873 = vrcp.pop %v4622
    %v4874 = vmul.f32 1.0, %v4873
    %v4875 = vrcp.pop %v4623
    %v4876 = vmul.f32 1.0, %v4875
    %v4877 = vrcp.pop %v4624
    %v4878 = vmul.f32 1.0, %v4877
    %v4879 = vrcp.pop %v4625
    %v4880 = vmul.f32 1.0, %v4879
    %v4881 = vrcp.pop %v4626
    %v4882 = vmul.f32 1.0, %v4881
    %v4883 = vrcp.pop %v4627
    %v4884 = vmul.f32 1.0, %v4883
    %v4885 = vrcp.pop %v4628
    %v4886 = vmul.f32 1.0, %v4885
    %v4887 = vrcp.pop %v4629
    %v4888 = vmul.f32 1.0, %v4887
    %v4889 = vrcp.pop %v4630
    %v4890 = vmul.f32 1.0, %v4889
    %v4891 = vrcp.pop %v4631
    %v4892 = vmul.f32 1.0, %v4891
    %v4893 = vrcp.pop %v4632
    %v4894 = vmul.f32 1.0, %v4893
    %v4895 = vrcp.pop %v4633
    %v4896 = vmul.f32 1.0, %v4895
    %v4897 = vrcp.pop %v4634
    %v4898 = vmul.f32 1.0, %v4897
    %v4899 = vrcp.pop %v4635
    %v4900 = vmul.f32 1.0, %v4899
    %v4901 = vrcp.pop %v4636
    %v4902 = vmul.f32 1.0, %v4901
    %v4903 = vrcp.pop %v4637
    %v4904 = vmul.f32 1.0, %v4903
    %v4905 = vrcp.pop %v4638
    %v4906 = vmul.f32 1.0, %v4905
    %v4907 = vrcp.pop %v4639
    %v4908 = vmul.f32 1.0, %v4907
    %v4909 = vrcp.pop %v4640
    %v4910 = vmul.f32 1.0, %v4909
    %v4911 = vrcp.pop %v4641
    %v4912 = vmul.f32 1.0, %v4911
    %v4913 = vrcp.pop %v4642
    %v4914 = vmul.f32 1.0, %v4913
    %v4915 = vrcp.pop %v4643
    %v4916 = vmul.f32 1.0, %v4915
    %v4917 = vrcp.pop %v4644
    %v4918 = vmul.f32 1.0, %v4917
    %v4919 = vrcp.pop %v4645
    %v4920 = vmul.f32 1.0, %v4919
    %v4921 = vrcp.pop %v4646
    %v4922 = vmul.f32 1.0, %v4921
    %v4923 = vrcp.pop %v4647
    %v4924 = vmul.f32 1.0, %v4923
    %v4925 = vrcp.pop %v4648
    %v4926 = vmul.f32 1.0, %v4925
    %v4927 = vrcp.pop %v4649
    %v4928 = vmul.f32 1.0, %v4927
    %v4929 = vrcp.pop %v4650
    %v4930 = vmul.f32 1.0, %v4929
    %v4931 = vrcp.pop %v4651
    %v4932 = vmul.f32 1.0, %v4931
    %v4933 = vrcp.pop %v4652
    %v4934 = vmul.f32 1.0, %v4933
    %v4935 = vrcp.pop %v4653
    %v4936 = vmul.f32 1.0, %v4935
    %v4937 = vrcp.pop %v4654
    %v4938 = vmul.f32 1.0, %v4937
    %v4939 = vrcp.pop %v4655
    %v4940 = vmul.f32 1.0, %v4939
    %v4941 = vrcp.pop %v4656
    %v4942 = vmul.f32 1.0, %v4941
    %v4943 = vrcp.pop %v4657
    %v4944 = vmul.f32 1.0, %v4943
    %v4945 = vrcp.pop %v4658
    %v4946 = vmul.f32 1.0, %v4945
    %v4947 = vrcp.pop %v4659
    %v4948 = vmul.f32 1.0, %v4947
    %v4949 = vrcp.pop %v4660
    %v4950 = vmul.f32 1.0, %v4949
    %v4951 = vrcp.pop %v4661
    %v4952 = vmul.f32 1.0, %v4951
    %v4953 = vrcp.pop %v4662
    %v4954 = vmul.f32 1.0, %v4953
    %v4955 = vrcp.pop %v4663
    %v4956 = vmul.f32 1.0, %v4955
    %v4957 = vrcp.pop %v4664
    %v4958 = vmul.f32 1.0, %v4957
    %v4959 = vrcp.pop %v4665
    %v4960 = vmul.f32 1.0, %v4959
    %v4961 = vrcp.pop %v4666
    %v4962 = vmul.f32 1.0, %v4961
    %v4963 = vrcp.pop %v4667
    %v4964 = vmul.f32 1.0, %v4963
    %v4965 = vrcp.pop %v4668
    %v4966 = vmul.f32 1.0, %v4965
    %v4967 = vrcp.pop %v4669
    %v4968 = vmul.f32 1.0, %v4967
    %v4969 = vrcp.pop %v4670
    %v4970 = vmul.f32 1.0, %v4969
    %v4971 = vrcp.pop %v4671
    %v4972 = vmul.f32 1.0, %v4971
    %v4973 = vrcp.pop %v4672
    %v4974 = vmul.f32 1.0, %v4973
    %v4975 = vrcp.pop %v4673
    %v4976 = vmul.f32 1.0, %v4975
    %v4977 = vrcp.pop %v4674
    %v4978 = vmul.f32 1.0, %v4977
    %v4979 = vrcp.pop %v4675
    %v4980 = vmul.f32 1.0, %v4979
    %v4981 = vrcp.pop %v4676
    %v4982 = vmul.f32 1.0, %v4981
    %v4983 = vrcp.pop %v4677
    %v4984 = vmul.f32 1.0, %v4983
    %v4985 = vrcp.pop %v4678
    %v4986 = vmul.f32 1.0, %v4985
    %v4987 = vrcp.pop %v4679
    %v4988 = vmul.f32 1.0, %v4987
    %v4989 = vrcp.pop %v4680
    %v4990 = vmul.f32 1.0, %v4989
    %v4991 = vrcp.pop %v4681
    %v4992 = vmul.f32 1.0, %v4991
    %v4993 = vrcp.pop %v4682
    %v4994 = vmul.f32 1.0, %v4993
    %v4995 = vrcp.pop %v4683
    %v4996 = vmul.f32 1.0, %v4995
    %v4997 = vrcp.pop %v4684
    %v4998 = vmul.f32 1.0, %v4997
    %v4999 = vrcp.pop %v4685
    %v5000 = vmul.f32 1.0, %v4999
    %v5001 = vrcp.pop %v4686
    %v5002 = vmul.f32 1.0, %v5001
    %v5003 = vrcp.pop %v4687
    %v5004 = vmul.f32 1.0, %v5003
    %v5005 = vrcp.pop %v4688
    %v5006 = vmul.f32 1.0, %v5005
    %v5007 = vrcp.pop %v4689
    %v5008 = vmul.f32 1.0, %v5007
    %v5009 = vrcp.pop %v4690
    %v5010 = vmul.f32 1.0, %v5009
    %v5011 = vrcp.pop %v4691
    %v5012 = vmul.f32 1.0, %v5011
    %v5013 = vrcp.pop %v4692
    %v5014 = vmul.f32 1.0, %v5013
    %v5015 = vrcp.pop %v4693
    %v5016 = vmul.f32 1.0, %v5015
    %v5017 = vrcp.pop %v4694
    %v5018 = vmul.f32 1.0, %v5017
    %v5019 = vrcp.pop %v4695
    %v5020 = vmul.f32 1.0, %v5019
    %v5021 = vrcp.pop %v4696
    %v5022 = vmul.f32 1.0, %v5021
    %v5023 = vrcp.pop %v4697
    %v5024 = vmul.f32 1.0, %v5023
    %v5025 = vrcp.pop %v4698
    %v5026 = vmul.f32 1.0, %v5025
    %v5027 = vrcp.pop %v4699
    %v5028 = vmul.f32 1.0, %v5027
    %v5029 = vrcp.pop %v4700
    %v5030 = vmul.f32 1.0, %v5029
    %v5031 = vrcp.pop %v4701
    %v5032 = vmul.f32 1.0, %v5031
    %v5033 = vrcp.pop %v4702
    %v5034 = vmul.f32 1.0, %v5033
    %v5035 = vrcp.pop %v4703
    %v5036 = vmul.f32 1.0, %v5035
    %v5037 = vrcp.pop %v4704
    %v5038 = vmul.f32 1.0, %v5037
    %v5039 = vrcp.pop %v4705
    %v5040 = vmul.f32 1.0, %v5039
    %v5041 = vrcp.pop %v4706
    %v5042 = vmul.f32 1.0, %v5041
    %v5043 = vrcp.pop %v4707
    %v5044 = vmul.f32 1.0, %v5043
    %v5045 = vrcp.pop %v4708
    %v5046 = vmul.f32 1.0, %v5045
    %v5047 = vrcp.pop %v4709
    %v5048 = vmul.f32 1.0, %v5047
    %v5049 = vrcp.pop %v4710
    %v5050 = vmul.f32 1.0, %v5049
    %v5051 = vrcp.pop %v4711
    %v5052 = vmul.f32 1.0, %v5051
    %v5053 = vrcp.pop %v4712
    %v5054 = vmul.f32 1.0, %v5053
    %v5055 = vrcp.pop %v4713
    %v5056 = vmul.f32 1.0, %v5055
    %v5057 = vrcp.pop %v4714
    %v5058 = vmul.f32 1.0, %v5057
    %v5059 = vrcp.pop %v4715
    %v5060 = vmul.f32 1.0, %v5059
    %v5061 = vrcp.pop %v4716
    %v5062 = vmul.f32 1.0, %v5061
    %v5063 = vrcp.pop %v4717
    %v5064 = vmul.f32 1.0, %v5063
    %v5065 = vrcp.pop %v4718
    %v5066 = vmul.f32 1.0, %v5065
    %v5067 = vrcp.pop %v4719
    %v5068 = vmul.f32 1.0, %v5067
    %v5069 = vrcp.pop %v4720
    %v5070 = vmul.f32 1.0, %v5069
    %v5071 = vrcp.pop %v4721
    %v5072 = vmul.f32 1.0, %v5071
    %v5073 = vrcp.pop %v4722
    %v5074 = vmul.f32 1.0, %v5073
    %v5075 = vrcp.pop %v4723
    %v5076 = vmul.f32 1.0, %v5075
    %v5077 = vrcp.pop %v4724
    %v5078 = vmul.f32 1.0, %v5077
    %v5079 = vrcp.pop %v4725
    %v5080 = vmul.f32 1.0, %v5079
    %v5081 = vrcp.pop %v4726
    %v5082 = vmul.f32 1.0, %v5081
    %v5083 = vrcp.pop %v4727
    %v5084 = vmul.f32 1.0, %v5083
    %v5085 = vrcp.pop %v4728
    %v5086 = vmul.f32 1.0, %v5085
    %v5087 = vrcp.pop %v4729
    %v5088 = vmul.f32 1.0, %v5087
    %v5089 = vrcp.pop %v4730
    %v5090 = vmul.f32 1.0, %v5089
    %v5091 = vrcp.pop %v4731
    %v5092 = vmul.f32 1.0, %v5091
    %v5093 = vrcp.pop %v4732
    %v5094 = vmul.f32 1.0, %v5093
    %v5095 = vrcp.pop %v4733
    %v5096 = vmul.f32 1.0, %v5095
    %v5097 = vrcp.pop %v4734
    %v5098 = vmul.f32 1.0, %v5097
    %v5099 = vrcp.pop %v4735
    %v5100 = vmul.f32 1.0, %v5099
    %v5101 = vrcp.pop %v4736
    %v5102 = vmul.f32 1.0, %v5101
    %v5103 = vrcp.pop %v4737
    %v5104 = vmul.f32 1.0, %v5103
    %v5105 = vrcp.pop %v4738
    %v5106 = vmul.f32 1.0, %v5105
    %v5107 = vrcp.pop %v4739
    %v5108 = vmul.f32 1.0, %v5107
    %v5109 = vrcp.pop %v4740
    %v5110 = vmul.f32 1.0, %v5109
    %v5111 = vrcp.pop %v4741
    %v5112 = vmul.f32 1.0, %v5111
    %v5113 = vrcp.pop %v4742
    %v5114 = vmul.f32 1.0, %v5113
    %v5115 = vrcp.pop %v4743
    %v5116 = vmul.f32 1.0, %v5115
    %v5117 = vrcp.pop %v4744
    %v5118 = vmul.f32 1.0, %v5117
    %v5119 = vrcp.pop %v4745
    %v5120 = vmul.f32 1.0, %v5119
    %v5121 = vrcp.pop %v4746
    %v5122 = vmul.f32 1.0, %v5121
    %v5123 = vrcp.pop %v4747
    %v5124 = vmul.f32 1.0, %v5123
    %v5125 = vrcp.pop %v4748
    %v5126 = vmul.f32 1.0, %v5125
    %v5127 = vrcp.pop %v4749
    %v5128 = vmul.f32 1.0, %v5127
    %v5129 = vrcp.pop %v4750
    %v5130 = vmul.f32 1.0, %v5129
    %v5131 = vrcp.pop %v4751
    %v5132 = vmul.f32 1.0, %v5131
    %v5133 = vrcp.pop %v4752
    %v5134 = vmul.f32 1.0, %v5133
    %v5135 = vrcp.pop %v4753
    %v5136 = vmul.f32 1.0, %v5135
    %v5137 = vrcp.pop %v4754
    %v5138 = vmul.f32 1.0, %v5137
    %v5139 = vrcp.pop %v4755
    %v5140 = vmul.f32 1.0, %v5139
    %v5141 = vrcp.pop %v4756
    %v5142 = vmul.f32 1.0, %v5141
    %v5143 = vrcp.pop %v4757
    %v5144 = vmul.f32 1.0, %v5143
    %v5145 = vrcp.pop %v4758
    %v5146 = vmul.f32 1.0, %v5145
    %v5147 = vrcp.pop %v4759
    %v5148 = vmul.f32 1.0, %v5147
    %v5149 = vrcp.pop %v4760
    %v5150 = vmul.f32 1.0, %v5149
    %v5151 = vrcp.pop %v4761
    %v5152 = vmul.f32 1.0, %v5151
    %v5153 = vrcp.pop %v4762
    %v5154 = vmul.f32 1.0, %v5153
    %v5155 = vrcp.pop %v4763
    %v5156 = vmul.f32 1.0, %v5155
    %v5157 = vrcp.pop %v4764
    %v5158 = vmul.f32 1.0, %v5157
    %v5159 = vrcp.pop %v4765
    %v5160 = vmul.f32 1.0, %v5159
    %v5161 = vrcp.pop %v4766
    %v5162 = vmul.f32 1.0, %v5161
    %v5163 = vrcp.pop %v4767
    %v5164 = vmul.f32 1.0, %v5163
    %v5165 = vrcp.pop %v4768
    %v5166 = vmul.f32 1.0, %v5165
    %v5167 = vrcp.pop %v4769
    %v5168 = vmul.f32 1.0, %v5167
    %v5169 = vrcp.pop %v4770
    %v5170 = vmul.f32 1.0, %v5169
    %v5171 = vmul.f32 %v1898, %v4772
    %v5172 = vmul.f32 %v1899, %v4774
    %v5173 = vmul.f32 %v1900, %v4776
    %v5174 = vmul.f32 %v1901, %v4778
    %v5175 = vmul.f32 %v1902, %v4780
    %v5176 = vmul.f32 %v1903, %v4782
    %v5177 = vmul.f32 %v1904, %v4784
    %v5178 = vmul.f32 %v1905, %v4786
    %v5179 = vmul.f32 %v1906, %v4788
    %v5180 = vmul.f32 %v1907, %v4790
    %v5181 = vmul.f32 %v1908, %v4792
    %v5182 = vmul.f32 %v1909, %v4794
    %v5183 = vmul.f32 %v1910, %v4796
    %v5184 = vmul.f32 %v1911, %v4798
    %v5185 = vmul.f32 %v1912, %v4800
    %v5186 = vmul.f32 %v1913, %v4802
    %v5187 = vmul.f32 %v1914, %v4804
    %v5188 = vmul.f32 %v1915, %v4806
    %v5189 = vmul.f32 %v1916, %v4808
    %v5190 = vmul.f32 %v1917, %v4810
    %v5191 = vmul.f32 %v1918, %v4812
    %v5192 = vmul.f32 %v1919, %v4814
    %v5193 = vmul.f32 %v1920, %v4816
    %v5194 = vmul.f32 %v1921, %v4818
    %v5195 = vmul.f32 %v1922, %v4820
    %v5196 = vmul.f32 %v1923, %v4822
    %v5197 = vmul.f32 %v1924, %v4824
    %v5198 = vmul.f32 %v1925, %v4826
    %v5199 = vmul.f32 %v1926, %v4828
    %v5200 = vmul.f32 %v1927, %v4830
    %v5201 = vmul.f32 %v1928, %v4832
    %v5202 = vmul.f32 %v1929, %v4834
    %v5203 = vmul.f32 %v1930, %v4836
    %v5204 = vmul.f32 %v1931, %v4838
    %v5205 = vmul.f32 %v1932, %v4840
    %v5206 = vmul.f32 %v1933, %v4842
    %v5207 = vmul.f32 %v1934, %v4844
    %v5208 = vmul.f32 %v1935, %v4846
    %v5209 = vmul.f32 %v1936, %v4848
    %v5210 = vmul.f32 %v1937, %v4850
    %v5211 = vmul.f32 %v1938, %v4852
    %v5212 = vmul.f32 %v1939, %v4854
    %v5213 = vmul.f32 %v1940, %v4856
    %v5214 = vmul.f32 %v1941, %v4858
    %v5215 = vmul.f32 %v1942, %v4860
    %v5216 = vmul.f32 %v1943, %v4862
    %v5217 = vmul.f32 %v1944, %v4864
    %v5218 = vmul.f32 %v1945, %v4866
    %v5219 = vmul.f32 %v1946, %v4868
    %v5220 = vmul.f32 %v1947, %v4870
    %v5221 = vmul.f32 %v1948, %v4872
    %v5222 = vmul.f32 %v1949, %v4874
    %v5223 = vmul.f32 %v1950, %v4876
    %v5224 = vmul.f32 %v1951, %v4878
    %v5225 = vmul.f32 %v1952, %v4880
    %v5226 = vmul.f32 %v1953, %v4882
    %v5227 = vmul.f32 %v1954, %v4884
    %v5228 = vmul.f32 %v1955, %v4886
    %v5229 = vmul.f32 %v1956, %v4888
    %v5230 = vmul.f32 %v1957, %v4890
    %v5231 = vmul.f32 %v1958, %v4892
    %v5232 = vmul.f32 %v1959, %v4894
    %v5233 = vmul.f32 %v1960, %v4896
    %v5234 = vmul.f32 %v1961, %v4898
    %v5235 = vmul.f32 %v1962, %v4900
    %v5236 = vmul.f32 %v1963, %v4902
    %v5237 = vmul.f32 %v1964, %v4904
    %v5238 = vmul.f32 %v1965, %v4906
    %v5239 = vmul.f32 %v1966, %v4908
    %v5240 = vmul.f32 %v1967, %v4910
    %v5241 = vmul.f32 %v1968, %v4912
    %v5242 = vmul.f32 %v1969, %v4914
    %v5243 = vmul.f32 %v1970, %v4916
    %v5244 = vmul.f32 %v1971, %v4918
    %v5245 = vmul.f32 %v1972, %v4920
    %v5246 = vmul.f32 %v1973, %v4922
    %v5247 = vmul.f32 %v1974, %v4924
    %v5248 = vmul.f32 %v1975, %v4926
    %v5249 = vmul.f32 %v1976, %v4928
    %v5250 = vmul.f32 %v1977, %v4930
    %v5251 = vmul.f32 %v1978, %v4932
    %v5252 = vmul.f32 %v1979, %v4934
    %v5253 = vmul.f32 %v1980, %v4936
    %v5254 = vmul.f32 %v1981, %v4938
    %v5255 = vmul.f32 %v1982, %v4940
    %v5256 = vmul.f32 %v1983, %v4942
    %v5257 = vmul.f32 %v1984, %v4944
    %v5258 = vmul.f32 %v1985, %v4946
    %v5259 = vmul.f32 %v1986, %v4948
    %v5260 = vmul.f32 %v1987, %v4950
    %v5261 = vmul.f32 %v1988, %v4952
    %v5262 = vmul.f32 %v1989, %v4954
    %v5263 = vmul.f32 %v1990, %v4956
    %v5264 = vmul.f32 %v1991, %v4958
    %v5265 = vmul.f32 %v1992, %v4960
    %v5266 = vmul.f32 %v1993, %v4962
    %v5267 = vmul.f32 %v1994, %v4964
    %v5268 = vmul.f32 %v1995, %v4966
    %v5269 = vmul.f32 %v1996, %v4968
    %v5270 = vmul.f32 %v1997, %v4970
    %v5271 = vmul.f32 %v1998, %v4972
    %v5272 = vmul.f32 %v1999, %v4974
    %v5273 = vmul.f32 %v2000, %v4976
    %v5274 = vmul.f32 %v2001, %v4978
    %v5275 = vmul.f32 %v2002, %v4980
    %v5276 = vmul.f32 %v2003, %v4982
    %v5277 = vmul.f32 %v2004, %v4984
    %v5278 = vmul.f32 %v2005, %v4986
    %v5279 = vmul.f32 %v2006, %v4988
    %v5280 = vmul.f32 %v2007, %v4990
    %v5281 = vmul.f32 %v2008, %v4992
    %v5282 = vmul.f32 %v2009, %v4994
    %v5283 = vmul.f32 %v2010, %v4996
    %v5284 = vmul.f32 %v2011, %v4998
    %v5285 = vmul.f32 %v2012, %v5000
    %v5286 = vmul.f32 %v2013, %v5002
    %v5287 = vmul.f32 %v2014, %v5004
    %v5288 = vmul.f32 %v2015, %v5006
    %v5289 = vmul.f32 %v2016, %v5008
    %v5290 = vmul.f32 %v2017, %v5010
    %v5291 = vmul.f32 %v2018, %v5012
    %v5292 = vmul.f32 %v2019, %v5014
    %v5293 = vmul.f32 %v2020, %v5016
    %v5294 = vmul.f32 %v2021, %v5018
    %v5295 = vmul.f32 %v2022, %v5020
    %v5296 = vmul.f32 %v2023, %v5022
    %v5297 = vmul.f32 %v2024, %v5024
    %v5298 = vmul.f32 %v2025, %v5026
    %v5299 = vmul.f32 %v2026, %v5028
    %v5300 = vmul.f32 %v2027, %v5030
    %v5301 = vmul.f32 %v2028, %v5032
    %v5302 = vmul.f32 %v2029, %v5034
    %v5303 = vmul.f32 %v2030, %v5036
    %v5304 = vmul.f32 %v2031, %v5038
    %v5305 = vmul.f32 %v2032, %v5040
    %v5306 = vmul.f32 %v2033, %v5042
    %v5307 = vmul.f32 %v2034, %v5044
    %v5308 = vmul.f32 %v2035, %v5046
    %v5309 = vmul.f32 %v2036, %v5048
    %v5310 = vmul.f32 %v2037, %v5050
    %v5311 = vmul.f32 %v2038, %v5052
    %v5312 = vmul.f32 %v2039, %v5054
    %v5313 = vmul.f32 %v2040, %v5056
    %v5314 = vmul.f32 %v2041, %v5058
    %v5315 = vmul.f32 %v2042, %v5060
    %v5316 = vmul.f32 %v2043, %v5062
    %v5317 = vmul.f32 %v2044, %v5064
    %v5318 = vmul.f32 %v2045, %v5066
    %v5319 = vmul.f32 %v2046, %v5068
    %v5320 = vmul.f32 %v2047, %v5070
    %v5321 = vmul.f32 %v2048, %v5072
    %v5322 = vmul.f32 %v2049, %v5074
    %v5323 = vmul.f32 %v2050, %v5076
    %v5324 = vmul.f32 %v2051, %v5078
    %v5325 = vmul.f32 %v2052, %v5080
    %v5326 = vmul.f32 %v2053, %v5082
    %v5327 = vmul.f32 %v2054, %v5084
    %v5328 = vmul.f32 %v2055, %v5086
    %v5329 = vmul.f32 %v2056, %v5088
    %v5330 = vmul.f32 %v2057, %v5090
    %v5331 = vmul.f32 %v2058, %v5092
    %v5332 = vmul.f32 %v2059, %v5094
    %v5333 = vmul.f32 %v2060, %v5096
    %v5334 = vmul.f32 %v2061, %v5098
    %v5335 = vmul.f32 %v2062, %v5100
    %v5336 = vmul.f32 %v2063, %v5102
    %v5337 = vmul.f32 %v2064, %v5104
    %v5338 = vmul.f32 %v2065, %v5106
    %v5339 = vmul.f32 %v2066, %v5108
    %v5340 = vmul.f32 %v2067, %v5110
    %v5341 = vmul.f32 %v2068, %v5112
    %v5342 = vmul.f32 %v2069, %v5114
    %v5343 = vmul.f32 %v2070, %v5116
    %v5344 = vmul.f32 %v2071, %v5118
    %v5345 = vmul.f32 %v2072, %v5120
    %v5346 = vmul.f32 %v2073, %v5122
    %v5347 = vmul.f32 %v2074, %v5124
    %v5348 = vmul.f32 %v2075, %v5126
    %v5349 = vmul.f32 %v2076, %v5128
    %v5350 = vmul.f32 %v2077, %v5130
    %v5351 = vmul.f32 %v2078, %v5132
    %v5352 = vmul.f32 %v2079, %v5134
    %v5353 = vmul.f32 %v2080, %v5136
    %v5354 = vmul.f32 %v2081, %v5138
    %v5355 = vmul.f32 %v2082, %v5140
    %v5356 = vmul.f32 %v2083, %v5142
    %v5357 = vmul.f32 %v2084, %v5144
    %v5358 = vmul.f32 %v2085, %v5146
    %v5359 = vmul.f32 %v2086, %v5148
    %v5360 = vmul.f32 %v2087, %v5150
    %v5361 = vmul.f32 %v2088, %v5152
    %v5362 = vmul.f32 %v2089, %v5154
    %v5363 = vmul.f32 %v2090, %v5156
    %v5364 = vmul.f32 %v2091, %v5158
    %v5365 = vmul.f32 %v2092, %v5160
    %v5366 = vmul.f32 %v2093, %v5162
    %v5367 = vmul.f32 %v2094, %v5164
    %v5368 = vmul.f32 %v2095, %v5166
    %v5369 = vmul.f32 %v2096, %v5168
    %v5370 = vmul.f32 %v2097, %v5170
    %v5371 = vpack.c.bf16 %v5172, %v5171
    %v5372 = vpack.c.bf16 %v5174, %v5173
    %v5373 = vpack.c.bf16 %v5176, %v5175
    %v5374 = vpack.c.bf16 %v5178, %v5177
    %v5375 = vpack.c.bf16 %v5180, %v5179
    %v5376 = vpack.c.bf16 %v5182, %v5181
    %v5377 = vpack.c.bf16 %v5184, %v5183
    %v5378 = vpack.c.bf16 %v5186, %v5185
    %v5379 = vpack.c.bf16 %v5188, %v5187
    %v5380 = vpack.c.bf16 %v5190, %v5189
    %v5381 = vpack.c.bf16 %v5192, %v5191
    %v5382 = vpack.c.bf16 %v5194, %v5193
    %v5383 = vpack.c.bf16 %v5196, %v5195
    %v5384 = vpack.c.bf16 %v5198, %v5197
    %v5385 = vpack.c.bf16 %v5200, %v5199
    %v5386 = vpack.c.bf16 %v5202, %v5201
    %v5387 = vpack.c.bf16 %v5204, %v5203
    %v5388 = vpack.c.bf16 %v5206, %v5205
    %v5389 = vpack.c.bf16 %v5208, %v5207
    %v5390 = vpack.c.bf16 %v5210, %v5209
    %v5391 = vpack.c.bf16 %v5212, %v5211
    %v5392 = vpack.c.bf16 %v5214, %v5213
    %v5393 = vpack.c.bf16 %v5216, %v5215
    %v5394 = vpack.c.bf16 %v5218, %v5217
    %v5395 = vpack.c.bf16 %v5220, %v5219
    %v5396 = vpack.c.bf16 %v5222, %v5221
    %v5397 = vpack.c.bf16 %v5224, %v5223
    %v5398 = vpack.c.bf16 %v5226, %v5225
    %v5399 = vpack.c.bf16 %v5228, %v5227
    %v5400 = vpack.c.bf16 %v5230, %v5229
    %v5401 = vpack.c.bf16 %v5232, %v5231
    %v5402 = vpack.c.bf16 %v5234, %v5233
    %v5403 = vpack.c.bf16 %v5236, %v5235
    %v5404 = vpack.c.bf16 %v5238, %v5237
    %v5405 = vpack.c.bf16 %v5240, %v5239
    %v5406 = vpack.c.bf16 %v5242, %v5241
    %v5407 = vpack.c.bf16 %v5244, %v5243
    %v5408 = vpack.c.bf16 %v5246, %v5245
    %v5409 = vpack.c.bf16 %v5248, %v5247
    %v5410 = vpack.c.bf16 %v5250, %v5249
    %v5411 = vpack.c.bf16 %v5252, %v5251
    %v5412 = vpack.c.bf16 %v5254, %v5253
    %v5413 = vpack.c.bf16 %v5256, %v5255
    %v5414 = vpack.c.bf16 %v5258, %v5257
    %v5415 = vpack.c.bf16 %v5260, %v5259
    %v5416 = vpack.c.bf16 %v5262, %v5261
    %v5417 = vpack.c.bf16 %v5264, %v5263
    %v5418 = vpack.c.bf16 %v5266, %v5265
    %v5419 = vpack.c.bf16 %v5268, %v5267
    %v5420 = vpack.c.bf16 %v5270, %v5269
    %v5421 = vpack.c.bf16 %v5272, %v5271
    %v5422 = vpack.c.bf16 %v5274, %v5273
    %v5423 = vpack.c.bf16 %v5276, %v5275
    %v5424 = vpack.c.bf16 %v5278, %v5277
    %v5425 = vpack.c.bf16 %v5280, %v5279
    %v5426 = vpack.c.bf16 %v5282, %v5281
    %v5427 = vpack.c.bf16 %v5284, %v5283
    %v5428 = vpack.c.bf16 %v5286, %v5285
    %v5429 = vpack.c.bf16 %v5288, %v5287
    %v5430 = vpack.c.bf16 %v5290, %v5289
    %v5431 = vpack.c.bf16 %v5292, %v5291
    %v5432 = vpack.c.bf16 %v5294, %v5293
    %v5433 = vpack.c.bf16 %v5296, %v5295
    %v5434 = vpack.c.bf16 %v5298, %v5297
    %v5435 = vpack.c.bf16 %v5300, %v5299
    %v5436 = vpack.c.bf16 %v5302, %v5301
    %v5437 = vpack.c.bf16 %v5304, %v5303
    %v5438 = vpack.c.bf16 %v5306, %v5305
    %v5439 = vpack.c.bf16 %v5308, %v5307
    %v5440 = vpack.c.bf16 %v5310, %v5309
    %v5441 = vpack.c.bf16 %v5312, %v5311
    %v5442 = vpack.c.bf16 %v5314, %v5313
    %v5443 = vpack.c.bf16 %v5316, %v5315
    %v5444 = vpack.c.bf16 %v5318, %v5317
    %v5445 = vpack.c.bf16 %v5320, %v5319
    %v5446 = vpack.c.bf16 %v5322, %v5321
    %v5447 = vpack.c.bf16 %v5324, %v5323
    %v5448 = vpack.c.bf16 %v5326, %v5325
    %v5449 = vpack.c.bf16 %v5328, %v5327
    %v5450 = vpack.c.bf16 %v5330, %v5329
    %v5451 = vpack.c.bf16 %v5332, %v5331
    %v5452 = vpack.c.bf16 %v5334, %v5333
    %v5453 = vpack.c.bf16 %v5336, %v5335
    %v5454 = vpack.c.bf16 %v5338, %v5337
    %v5455 = vpack.c.bf16 %v5340, %v5339
    %v5456 = vpack.c.bf16 %v5342, %v5341
    %v5457 = vpack.c.bf16 %v5344, %v5343
    %v5458 = vpack.c.bf16 %v5346, %v5345
    %v5459 = vpack.c.bf16 %v5348, %v5347
    %v5460 = vpack.c.bf16 %v5350, %v5349
    %v5461 = vpack.c.bf16 %v5352, %v5351
    %v5462 = vpack.c.bf16 %v5354, %v5353
    %v5463 = vpack.c.bf16 %v5356, %v5355
    %v5464 = vpack.c.bf16 %v5358, %v5357
    %v5465 = vpack.c.bf16 %v5360, %v5359
    %v5466 = vpack.c.bf16 %v5362, %v5361
    %v5467 = vpack.c.bf16 %v5364, %v5363
    %v5468 = vpack.c.bf16 %v5366, %v5365
    %v5469 = vpack.c.bf16 %v5368, %v5367
    %v5470 = vpack.c.bf16 %v5370, %v5369
    %v5471 = vld [vmem:[%s6] sm:$0xf]
    %v5472 = vld [vmem:[%s6 + $0x4] sm:$0xf]
    %v5473 = vld [vmem:[%s6 + $0x8] sm:$0xf]
    %v5474 = vld [vmem:[%s6 + $0xc] sm:$0xf]
    %v5475 = vld [vmem:[%s6 + $0x10] sm:$0xf]
    %v5476 = vld [vmem:[%s6 + $0x14] sm:$0xf]
    %v5477 = vld [vmem:[%s6 + $0x18] sm:$0xf]
    %v5478 = vld [vmem:[%s6 + $0x1c] sm:$0xf]
    %v5479 = vld [vmem:[%s7] sm:$0x1]
    %v5481 = vlaneseq
    %v5482 = vshrl.u32 %v5481, 7
    %v5483 = vsub.s32 0, %v5482
    %v5484 = vrot.slane %v5479, %v5483
    %v5494 = vunpack.c.l.b16 %v5471
    %v5495 = vunpack.c.l.b16 %v5472
    %v5496 = vunpack.c.l.b16 %v5473
    %v5497 = vunpack.c.l.b16 %v5474
    %v5498 = vunpack.c.l.b16 %v5475
    %v5499 = vunpack.c.l.b16 %v5476
    %v5500 = vunpack.c.l.b16 %v5477
    %v5501 = vunpack.c.l.b16 %v5478
    %v5502 = vpack.c.b16 %v5495, %v5494
    %v5503 = vpack.c.b16 %v5497, %v5496
    %v5504 = vpack.c.b16 %v5499, %v5498
    %v5505 = vpack.c.b16 %v5501, %v5500
    %v5511 = vsel %vm2837, %v5371, 0
    %v5514 = vsel %vm2837, %v5372, 0
    %v5517 = vsel %vm2837, %v5373, 0
    %v5520 = vsel %vm2837, %v5374, 0
    %v5523 = vsel %vm2837, %v5375, 0
    %v5526 = vsel %vm2837, %v5376, 0
    %v5529 = vsel %vm2837, %v5377, 0
    %v5532 = vsel %vm2837, %v5378, 0
    %v5535 = vsel %vm2837, %v5379, 0
    %v5538 = vsel %vm2837, %v5380, 0
    %v5541 = vsel %vm2837, %v5381, 0
    %v5544 = vsel %vm2837, %v5382, 0
    %v5547 = vsel %vm2837, %v5383, 0
    %v5550 = vsel %vm2837, %v5384, 0
    %v5553 = vsel %vm2837, %v5385, 0
    %v5556 = vsel %vm2837, %v5386, 0
    %v5559 = vsel %vm2837, %v5387, 0
    %v5562 = vsel %vm2837, %v5388, 0
    %v5565 = vsel %vm2837, %v5389, 0
    %v5568 = vsel %vm2837, %v5390, 0
    %v5571 = vsel %vm2837, %v5391, 0
    %v5574 = vsel %vm2837, %v5392, 0
    %v5577 = vsel %vm2837, %v5393, 0
    %v5580 = vsel %vm2837, %v5394, 0
    %v5583 = vsel %vm2837, %v5395, 0
    %v5586 = vsel %vm2837, %v5396, 0
    %v5589 = vsel %vm2837, %v5397, 0
    %v5592 = vsel %vm2837, %v5398, 0
    %v5595 = vsel %vm2837, %v5399, 0
    %v5598 = vsel %vm2837, %v5400, 0
    %v5601 = vsel %vm2837, %v5401, 0
    %v5604 = vsel %vm2837, %v5402, 0
    %v5607 = vsel %vm2837, %v5403, 0
    %v5610 = vsel %vm2837, %v5404, 0
    %v5613 = vsel %vm2837, %v5405, 0
    %v5616 = vsel %vm2837, %v5406, 0
    %v5619 = vsel %vm2837, %v5407, 0
    %v5622 = vsel %vm2837, %v5408, 0
    %v5625 = vsel %vm2837, %v5409, 0
    %v5628 = vsel %vm2837, %v5410, 0
    %v5631 = vsel %vm2837, %v5411, 0
    %v5634 = vsel %vm2837, %v5412, 0
    %v5637 = vsel %vm2837, %v5413, 0
    %v5640 = vsel %vm2837, %v5414, 0
    %v5643 = vsel %vm2837, %v5415, 0
    %v5646 = vsel %vm2837, %v5416, 0
    %v5649 = vsel %vm2837, %v5417, 0
    %v5652 = vsel %vm2837, %v5418, 0
    %v5655 = vsel %vm2837, %v5419, 0
    %v5658 = vsel %vm2837, %v5420, 0
    %v5661 = vsel %vm2837, %v5421, 0
    %v5664 = vsel %vm2837, %v5422, 0
    %v5667 = vsel %vm2837, %v5423, 0
    %v5670 = vsel %vm2837, %v5424, 0
    %v5673 = vsel %vm2837, %v5425, 0
    %v5676 = vsel %vm2837, %v5426, 0
    %v5679 = vsel %vm2837, %v5427, 0
    %v5682 = vsel %vm2837, %v5428, 0
    %v5685 = vsel %vm2837, %v5429, 0
    %v5688 = vsel %vm2837, %v5430, 0
    %v5691 = vsel %vm2837, %v5431, 0
    %v5694 = vsel %vm2837, %v5432, 0
    %v5697 = vsel %vm2837, %v5433, 0
    %v5700 = vsel %vm2837, %v5434, 0
    %v5703 = vsel %vm2837, %v5435, 0
    %v5706 = vsel %vm2837, %v5436, 0
    %v5709 = vsel %vm2837, %v5437, 0
    %v5712 = vsel %vm2837, %v5438, 0
    %v5715 = vsel %vm2837, %v5439, 0
    %v5718 = vsel %vm2837, %v5440, 0
    %v5721 = vsel %vm2837, %v5441, 0
    %v5724 = vsel %vm2837, %v5442, 0
    %v5727 = vsel %vm2837, %v5443, 0
    %v5730 = vsel %vm2837, %v5444, 0
    %v5733 = vsel %vm2837, %v5445, 0
    %v5736 = vsel %vm2837, %v5446, 0
    %v5739 = vsel %vm2837, %v5447, 0
    %v5742 = vsel %vm2837, %v5448, 0
    %v5745 = vsel %vm2837, %v5449, 0
    %v5748 = vsel %vm2837, %v5450, 0
    %v5751 = vsel %vm2837, %v5451, 0
    %v5754 = vsel %vm2837, %v5452, 0
    %v5757 = vsel %vm2837, %v5453, 0
    %v5760 = vsel %vm2837, %v5454, 0
    %v5763 = vsel %vm2837, %v5455, 0
    %v5766 = vsel %vm2837, %v5456, 0
    %v5769 = vsel %vm2837, %v5457, 0
    %v5772 = vsel %vm2837, %v5458, 0
    %v5775 = vsel %vm2837, %v5459, 0
    %v5778 = vsel %vm2837, %v5460, 0
    %v5781 = vsel %vm2837, %v5461, 0
    %v5784 = vsel %vm2837, %v5462, 0
    %v5787 = vsel %vm2837, %v5463, 0
    %v5790 = vsel %vm2837, %v5464, 0
    %v5793 = vsel %vm2837, %v5465, 0
    %v5796 = vsel %vm2837, %v5466, 0
    %v5799 = vsel %vm2837, %v5467, 0
    %v5802 = vsel %vm2837, %v5468, 0
    %v5805 = vsel %vm2837, %v5469, 0
    %v5808 = vsel %vm2837, %v5470, 0
    %5810 = vmatprep.subr.bf16.mxu0 0
    %5811 = vmatpush1.bf16.msra.mxu0 0
    %5812 = vmatprep.subr.bf16.mxu0 0
    %5813 = vmatpush1.bf16.msra.mxu0 0
    %5814 = vmatprep.subr.bf16.mxu0 0
    %5815 = vmatpush1.bf16.msra.mxu0 0
    %5816 = vmatprep.subr.bf16.mxu0 0
    %5817 = vmatpush1.bf16.msra.mxu0 0
    %5818 = vmatprep.subr.bf16.mxu0 0
    %5819 = vmatpush1.bf16.msra.mxu0 %v5505
    %5820 = vmatprep.subr.bf16.mxu0 0
    %5821 = vmatpush1.bf16.msra.mxu0 %v5504
    %5822 = vmatprep.subr.bf16.mxu0 0
    %5823 = vmatpush1.bf16.msra.mxu0 %v5503
    %5824 = vmatprep.subr.bf16.mxu0 0
    %5825 = vmatpush1.bf16.msra.mxu0 %v5502
    %5826 = vmatprep.subr.bf16.mxu0 0
    %5827 = vmatpush2.bf16.msra.mxu0 0
    %5828 = vmatprep.subr.bf16.mxu0 0
    %5829 = vmatpush2.bf16.msra.mxu0 0
    %5830 = vmatprep.subr.bf16.mxu0 0
    %5831 = vmatpush2.bf16.msra.mxu0 0
    %5832 = vmatprep.subr.bf16.mxu0 0
    %5833 = vmatpush2.bf16.msra.mxu0 0
    %5834 = vmatprep.subr.bf16.mxu0 0
    %5835 = vmatpush2.bf16.msra.mxu0 0
    %5836 = vmatprep.subr.bf16.mxu0 0
    %5837 = vmatpush2.bf16.msra.mxu0 0
    %5838 = vmatprep.subr.bf16.mxu0 0
    %5839 = vmatpush2.bf16.msra.mxu0 0
    %5840 = vmatprep.subr.bf16.mxu0 0
    %5841 = vmatpush2.bf16.msra.mxu0 0
    %5842 = vmatprep.mubr.bf16.mxu0 0
    %5843 = vmatmul.mubr.bf16.gmra.mxu0 %v5511
    %v5844 = vpop.f32.mrf.mxu0
    %v5845 = vadd.f32 %v5484, %v5844
    %v5846 = vpop.f32.mrf.mxu0
    %v5847 = vpop.f32.mrf.mxu0
    %v5848 = vadd.f32 %v5484, %v5847
    %v5849 = vpop.f32.mrf.mxu0
    %5850 = vmatprep.mubr.bf16.mxu0 0
    %5851 = vmatmul.mubr.bf16.gmra.mxu0 %v5514
    %v5852 = vpop.f32.mrf.mxu0
    %v5853 = vadd.f32 %v5484, %v5852
    %v5854 = vpop.f32.mrf.mxu0
    %v5855 = vpop.f32.mrf.mxu0
    %v5856 = vadd.f32 %v5484, %v5855
    %v5857 = vpop.f32.mrf.mxu0
    %5858 = vmatprep.mubr.bf16.mxu0 0
    %5859 = vmatmul.mubr.bf16.gmra.mxu0 %v5517
    %v5860 = vpop.f32.mrf.mxu0
    %v5861 = vadd.f32 %v5484, %v5860
    %v5862 = vpop.f32.mrf.mxu0
    %v5863 = vpop.f32.mrf.mxu0
    %v5864 = vadd.f32 %v5484, %v5863
    %v5865 = vpop.f32.mrf.mxu0
    %5866 = vmatprep.mubr.bf16.mxu0 0
    %5867 = vmatmul.mubr.bf16.gmra.mxu0 %v5520
    %v5868 = vpop.f32.mrf.mxu0
    %v5869 = vadd.f32 %v5484, %v5868
    %v5870 = vpop.f32.mrf.mxu0
    %v5871 = vpop.f32.mrf.mxu0
    %v5872 = vadd.f32 %v5484, %v5871
    %v5873 = vpop.f32.mrf.mxu0
    %5874 = vmatprep.mubr.bf16.mxu0 0
    %5875 = vmatmul.mubr.bf16.gmra.mxu0 %v5523
    %v5876 = vpop.f32.mrf.mxu0
    %v5877 = vadd.f32 %v5484, %v5876
    %v5878 = vpop.f32.mrf.mxu0
    %v5879 = vpop.f32.mrf.mxu0
    %v5880 = vadd.f32 %v5484, %v5879
    %v5881 = vpop.f32.mrf.mxu0
    %5882 = vmatprep.mubr.bf16.mxu0 0
    %5883 = vmatmul.mubr.bf16.gmra.mxu0 %v5526
    %v5884 = vpop.f32.mrf.mxu0
    %v5885 = vadd.f32 %v5484, %v5884
    %v5886 = vpop.f32.mrf.mxu0
    %v5887 = vpop.f32.mrf.mxu0
    %v5888 = vadd.f32 %v5484, %v5887
    %v5889 = vpop.f32.mrf.mxu0
    %5890 = vmatprep.mubr.bf16.mxu0 0
    %5891 = vmatmul.mubr.bf16.gmra.mxu0 %v5529
    %v5892 = vpop.f32.mrf.mxu0
    %v5893 = vadd.f32 %v5484, %v5892
    %v5894 = vpop.f32.mrf.mxu0
    %v5895 = vpop.f32.mrf.mxu0
    %v5896 = vadd.f32 %v5484, %v5895
    %v5897 = vpop.f32.mrf.mxu0
    %5898 = vmatprep.mubr.bf16.mxu0 0
    %5899 = vmatmul.mubr.bf16.gmra.mxu0 %v5532
    %v5900 = vpop.f32.mrf.mxu0
    %v5901 = vadd.f32 %v5484, %v5900
    %v5902 = vpop.f32.mrf.mxu0
    %v5903 = vpop.f32.mrf.mxu0
    %v5904 = vadd.f32 %v5484, %v5903
    %v5905 = vpop.f32.mrf.mxu0
    %5906 = vmatprep.mubr.bf16.mxu0 0
    %5907 = vmatmul.mubr.bf16.gmra.mxu0 %v5535
    %v5908 = vpop.f32.mrf.mxu0
    %v5909 = vadd.f32 %v5484, %v5908
    %v5910 = vpop.f32.mrf.mxu0
    %v5911 = vpop.f32.mrf.mxu0
    %v5912 = vadd.f32 %v5484, %v5911
    %v5913 = vpop.f32.mrf.mxu0
    %5914 = vmatprep.mubr.bf16.mxu0 0
    %5915 = vmatmul.mubr.bf16.gmra.mxu0 %v5538
    %v5916 = vpop.f32.mrf.mxu0
    %v5917 = vadd.f32 %v5484, %v5916
    %v5918 = vpop.f32.mrf.mxu0
    %v5919 = vpop.f32.mrf.mxu0
    %v5920 = vadd.f32 %v5484, %v5919
    %v5921 = vpop.f32.mrf.mxu0
    %5922 = vmatprep.mubr.bf16.mxu0 0
    %5923 = vmatmul.mubr.bf16.gmra.mxu0 %v5541
    %v5924 = vpop.f32.mrf.mxu0
    %v5925 = vadd.f32 %v5484, %v5924
    %v5926 = vpop.f32.mrf.mxu0
    %v5927 = vpop.f32.mrf.mxu0
    %v5928 = vadd.f32 %v5484, %v5927
    %v5929 = vpop.f32.mrf.mxu0
    %5930 = vmatprep.mubr.bf16.mxu0 0
    %5931 = vmatmul.mubr.bf16.gmra.mxu0 %v5544
    %v5932 = vpop.f32.mrf.mxu0
    %v5933 = vadd.f32 %v5484, %v5932
    %v5934 = vpop.f32.mrf.mxu0
    %v5935 = vpop.f32.mrf.mxu0
    %v5936 = vadd.f32 %v5484, %v5935
    %v5937 = vpop.f32.mrf.mxu0
    %5938 = vmatprep.mubr.bf16.mxu0 0
    %5939 = vmatmul.mubr.bf16.gmra.mxu0 %v5547
    %v5940 = vpop.f32.mrf.mxu0
    %v5941 = vadd.f32 %v5484, %v5940
    %v5942 = vpop.f32.mrf.mxu0
    %v5943 = vpop.f32.mrf.mxu0
    %v5944 = vadd.f32 %v5484, %v5943
    %v5945 = vpop.f32.mrf.mxu0
    %5946 = vmatprep.mubr.bf16.mxu0 0
    %5947 = vmatmul.mubr.bf16.gmra.mxu0 %v5550
    %v5948 = vpop.f32.mrf.mxu0
    %v5949 = vadd.f32 %v5484, %v5948
    %v5950 = vpop.f32.mrf.mxu0
    %v5951 = vpop.f32.mrf.mxu0
    %v5952 = vadd.f32 %v5484, %v5951
    %v5953 = vpop.f32.mrf.mxu0
    %5954 = vmatprep.mubr.bf16.mxu0 0
    %5955 = vmatmul.mubr.bf16.gmra.mxu0 %v5553
    %v5956 = vpop.f32.mrf.mxu0
    %v5957 = vadd.f32 %v5484, %v5956
    %v5958 = vpop.f32.mrf.mxu0
    %v5959 = vpop.f32.mrf.mxu0
    %v5960 = vadd.f32 %v5484, %v5959
    %v5961 = vpop.f32.mrf.mxu0
    %5962 = vmatprep.mubr.bf16.mxu0 0
    %5963 = vmatmul.mubr.bf16.gmra.mxu0 %v5556
    %v5964 = vpop.f32.mrf.mxu0
    %v5965 = vadd.f32 %v5484, %v5964
    %v5966 = vpop.f32.mrf.mxu0
    %v5967 = vpop.f32.mrf.mxu0
    %v5968 = vadd.f32 %v5484, %v5967
    %v5969 = vpop.f32.mrf.mxu0
    %5970 = vmatprep.mubr.bf16.mxu0 0
    %5971 = vmatmul.mubr.bf16.gmra.mxu0 %v5559
    %v5972 = vpop.f32.mrf.mxu0
    %v5973 = vadd.f32 %v5484, %v5972
    %v5974 = vpop.f32.mrf.mxu0
    %v5975 = vpop.f32.mrf.mxu0
    %v5976 = vadd.f32 %v5484, %v5975
    %v5977 = vpop.f32.mrf.mxu0
    %5978 = vmatprep.mubr.bf16.mxu0 0
    %5979 = vmatmul.mubr.bf16.gmra.mxu0 %v5562
    %v5980 = vpop.f32.mrf.mxu0
    %v5981 = vadd.f32 %v5484, %v5980
    %v5982 = vpop.f32.mrf.mxu0
    %v5983 = vpop.f32.mrf.mxu0
    %v5984 = vadd.f32 %v5484, %v5983
    %v5985 = vpop.f32.mrf.mxu0
    %5986 = vmatprep.mubr.bf16.mxu0 0
    %5987 = vmatmul.mubr.bf16.gmra.mxu0 %v5565
    %v5988 = vpop.f32.mrf.mxu0
    %v5989 = vadd.f32 %v5484, %v5988
    %v5990 = vpop.f32.mrf.mxu0
    %v5991 = vpop.f32.mrf.mxu0
    %v5992 = vadd.f32 %v5484, %v5991
    %v5993 = vpop.f32.mrf.mxu0
    %5994 = vmatprep.mubr.bf16.mxu0 0
    %5995 = vmatmul.mubr.bf16.gmra.mxu0 %v5568
    %v5996 = vpop.f32.mrf.mxu0
    %v5997 = vadd.f32 %v5484, %v5996
    %v5998 = vpop.f32.mrf.mxu0
    %v5999 = vpop.f32.mrf.mxu0
    %v6000 = vadd.f32 %v5484, %v5999
    %v6001 = vpop.f32.mrf.mxu0
    %6002 = vmatprep.mubr.bf16.mxu0 0
    %6003 = vmatmul.mubr.bf16.gmra.mxu0 %v5571
    %v6004 = vpop.f32.mrf.mxu0
    %v6005 = vadd.f32 %v5484, %v6004
    %v6006 = vpop.f32.mrf.mxu0
    %v6007 = vpop.f32.mrf.mxu0
    %v6008 = vadd.f32 %v5484, %v6007
    %v6009 = vpop.f32.mrf.mxu0
    %6010 = vmatprep.mubr.bf16.mxu0 0
    %6011 = vmatmul.mubr.bf16.gmra.mxu0 %v5574
    %v6012 = vpop.f32.mrf.mxu0
    %v6013 = vadd.f32 %v5484, %v6012
    %v6014 = vpop.f32.mrf.mxu0
    %v6015 = vpop.f32.mrf.mxu0
    %v6016 = vadd.f32 %v5484, %v6015
    %v6017 = vpop.f32.mrf.mxu0
    %6018 = vmatprep.mubr.bf16.mxu0 0
    %6019 = vmatmul.mubr.bf16.gmra.mxu0 %v5577
    %v6020 = vpop.f32.mrf.mxu0
    %v6021 = vadd.f32 %v5484, %v6020
    %v6022 = vpop.f32.mrf.mxu0
    %v6023 = vpop.f32.mrf.mxu0
    %v6024 = vadd.f32 %v5484, %v6023
    %v6025 = vpop.f32.mrf.mxu0
    %6026 = vmatprep.mubr.bf16.mxu0 0
    %6027 = vmatmul.mubr.bf16.gmra.mxu0 %v5580
    %v6028 = vpop.f32.mrf.mxu0
    %v6029 = vadd.f32 %v5484, %v6028
    %v6030 = vpop.f32.mrf.mxu0
    %v6031 = vpop.f32.mrf.mxu0
    %v6032 = vadd.f32 %v5484, %v6031
    %v6033 = vpop.f32.mrf.mxu0
    %6034 = vmatprep.mubr.bf16.mxu0 0
    %6035 = vmatmul.mubr.bf16.gmra.mxu0 %v5583
    %v6036 = vpop.f32.mrf.mxu0
    %v6037 = vadd.f32 %v5484, %v6036
    %v6038 = vpop.f32.mrf.mxu0
    %v6039 = vpop.f32.mrf.mxu0
    %v6040 = vadd.f32 %v5484, %v6039
    %v6041 = vpop.f32.mrf.mxu0
    %6042 = vmatprep.mubr.bf16.mxu0 0
    %6043 = vmatmul.mubr.bf16.gmra.mxu0 %v5586
    %v6044 = vpop.f32.mrf.mxu0
    %v6045 = vadd.f32 %v5484, %v6044
    %v6046 = vpop.f32.mrf.mxu0
    %v6047 = vpop.f32.mrf.mxu0
    %v6048 = vadd.f32 %v5484, %v6047
    %v6049 = vpop.f32.mrf.mxu0
    %6050 = vmatprep.mubr.bf16.mxu0 0
    %6051 = vmatmul.mubr.bf16.gmra.mxu0 %v5589
    %v6052 = vpop.f32.mrf.mxu0
    %v6053 = vadd.f32 %v5484, %v6052
    %v6054 = vpop.f32.mrf.mxu0
    %v6055 = vpop.f32.mrf.mxu0
    %v6056 = vadd.f32 %v5484, %v6055
    %v6057 = vpop.f32.mrf.mxu0
    %6058 = vmatprep.mubr.bf16.mxu0 0
    %6059 = vmatmul.mubr.bf16.gmra.mxu0 %v5592
    %v6060 = vpop.f32.mrf.mxu0
    %v6061 = vadd.f32 %v5484, %v6060
    %v6062 = vpop.f32.mrf.mxu0
    %v6063 = vpop.f32.mrf.mxu0
    %v6064 = vadd.f32 %v5484, %v6063
    %v6065 = vpop.f32.mrf.mxu0
    %6066 = vmatprep.mubr.bf16.mxu0 0
    %6067 = vmatmul.mubr.bf16.gmra.mxu0 %v5595
    %v6068 = vpop.f32.mrf.mxu0
    %v6069 = vadd.f32 %v5484, %v6068
    %v6070 = vpop.f32.mrf.mxu0
    %v6071 = vpop.f32.mrf.mxu0
    %v6072 = vadd.f32 %v5484, %v6071
    %v6073 = vpop.f32.mrf.mxu0
    %6074 = vmatprep.mubr.bf16.mxu0 0
    %6075 = vmatmul.mubr.bf16.gmra.mxu0 %v5598
    %v6076 = vpop.f32.mrf.mxu0
    %v6077 = vadd.f32 %v5484, %v6076
    %v6078 = vpop.f32.mrf.mxu0
    %v6079 = vpop.f32.mrf.mxu0
    %v6080 = vadd.f32 %v5484, %v6079
    %v6081 = vpop.f32.mrf.mxu0
    %6082 = vmatprep.mubr.bf16.mxu0 0
    %6083 = vmatmul.mubr.bf16.gmra.mxu0 %v5601
    %v6084 = vpop.f32.mrf.mxu0
    %v6085 = vadd.f32 %v5484, %v6084
    %v6086 = vpop.f32.mrf.mxu0
    %v6087 = vpop.f32.mrf.mxu0
    %v6088 = vadd.f32 %v5484, %v6087
    %v6089 = vpop.f32.mrf.mxu0
    %6090 = vmatprep.mubr.bf16.mxu0 0
    %6091 = vmatmul.mubr.bf16.gmra.mxu0 %v5604
    %v6092 = vpop.f32.mrf.mxu0
    %v6093 = vadd.f32 %v5484, %v6092
    %v6094 = vpop.f32.mrf.mxu0
    %v6095 = vpop.f32.mrf.mxu0
    %v6096 = vadd.f32 %v5484, %v6095
    %v6097 = vpop.f32.mrf.mxu0
    %6098 = vmatprep.mubr.bf16.mxu0 0
    %6099 = vmatmul.mubr.bf16.gmra.mxu0 %v5607
    %v6100 = vpop.f32.mrf.mxu0
    %v6101 = vadd.f32 %v5484, %v6100
    %v6102 = vpop.f32.mrf.mxu0
    %v6103 = vpop.f32.mrf.mxu0
    %v6104 = vadd.f32 %v5484, %v6103
    %v6105 = vpop.f32.mrf.mxu0
    %6106 = vmatprep.mubr.bf16.mxu0 0
    %6107 = vmatmul.mubr.bf16.gmra.mxu0 %v5610
    %v6108 = vpop.f32.mrf.mxu0
    %v6109 = vadd.f32 %v5484, %v6108
    %v6110 = vpop.f32.mrf.mxu0
    %v6111 = vpop.f32.mrf.mxu0
    %v6112 = vadd.f32 %v5484, %v6111
    %v6113 = vpop.f32.mrf.mxu0
    %6114 = vmatprep.mubr.bf16.mxu0 0
    %6115 = vmatmul.mubr.bf16.gmra.mxu0 %v5613
    %v6116 = vpop.f32.mrf.mxu0
    %v6117 = vadd.f32 %v5484, %v6116
    %v6118 = vpop.f32.mrf.mxu0
    %v6119 = vpop.f32.mrf.mxu0
    %v6120 = vadd.f32 %v5484, %v6119
    %v6121 = vpop.f32.mrf.mxu0
    %6122 = vmatprep.mubr.bf16.mxu0 0
    %6123 = vmatmul.mubr.bf16.gmra.mxu0 %v5616
    %v6124 = vpop.f32.mrf.mxu0
    %v6125 = vadd.f32 %v5484, %v6124
    %v6126 = vpop.f32.mrf.mxu0
    %v6127 = vpop.f32.mrf.mxu0
    %v6128 = vadd.f32 %v5484, %v6127
    %v6129 = vpop.f32.mrf.mxu0
    %6130 = vmatprep.mubr.bf16.mxu0 0
    %6131 = vmatmul.mubr.bf16.gmra.mxu0 %v5619
    %v6132 = vpop.f32.mrf.mxu0
    %v6133 = vadd.f32 %v5484, %v6132
    %v6134 = vpop.f32.mrf.mxu0
    %v6135 = vpop.f32.mrf.mxu0
    %v6136 = vadd.f32 %v5484, %v6135
    %v6137 = vpop.f32.mrf.mxu0
    %6138 = vmatprep.mubr.bf16.mxu0 0
    %6139 = vmatmul.mubr.bf16.gmra.mxu0 %v5622
    %v6140 = vpop.f32.mrf.mxu0
    %v6141 = vadd.f32 %v5484, %v6140
    %v6142 = vpop.f32.mrf.mxu0
    %v6143 = vpop.f32.mrf.mxu0
    %v6144 = vadd.f32 %v5484, %v6143
    %v6145 = vpop.f32.mrf.mxu0
    %6146 = vmatprep.mubr.bf16.mxu0 0
    %6147 = vmatmul.mubr.bf16.gmra.mxu0 %v5625
    %v6148 = vpop.f32.mrf.mxu0
    %v6149 = vadd.f32 %v5484, %v6148
    %v6150 = vpop.f32.mrf.mxu0
    %v6151 = vpop.f32.mrf.mxu0
    %v6152 = vadd.f32 %v5484, %v6151
    %v6153 = vpop.f32.mrf.mxu0
    %6154 = vmatprep.mubr.bf16.mxu0 0
    %6155 = vmatmul.mubr.bf16.gmra.mxu0 %v5628
    %v6156 = vpop.f32.mrf.mxu0
    %v6157 = vadd.f32 %v5484, %v6156
    %v6158 = vpop.f32.mrf.mxu0
    %v6159 = vpop.f32.mrf.mxu0
    %v6160 = vadd.f32 %v5484, %v6159
    %v6161 = vpop.f32.mrf.mxu0
    %6162 = vmatprep.mubr.bf16.mxu0 0
    %6163 = vmatmul.mubr.bf16.gmra.mxu0 %v5631
    %v6164 = vpop.f32.mrf.mxu0
    %v6165 = vadd.f32 %v5484, %v6164
    %v6166 = vpop.f32.mrf.mxu0
    %v6167 = vpop.f32.mrf.mxu0
    %v6168 = vadd.f32 %v5484, %v6167
    %v6169 = vpop.f32.mrf.mxu0
    %6170 = vmatprep.mubr.bf16.mxu0 0
    %6171 = vmatmul.mubr.bf16.gmra.mxu0 %v5634
    %v6172 = vpop.f32.mrf.mxu0
    %v6173 = vadd.f32 %v5484, %v6172
    %v6174 = vpop.f32.mrf.mxu0
    %v6175 = vpop.f32.mrf.mxu0
    %v6176 = vadd.f32 %v5484, %v6175
    %v6177 = vpop.f32.mrf.mxu0
    %6178 = vmatprep.mubr.bf16.mxu0 0
    %6179 = vmatmul.mubr.bf16.gmra.mxu0 %v5637
    %v6180 = vpop.f32.mrf.mxu0
    %v6181 = vadd.f32 %v5484, %v6180
    %v6182 = vpop.f32.mrf.mxu0
    %v6183 = vpop.f32.mrf.mxu0
    %v6184 = vadd.f32 %v5484, %v6183
    %v6185 = vpop.f32.mrf.mxu0
    %6186 = vmatprep.mubr.bf16.mxu0 0
    %6187 = vmatmul.mubr.bf16.gmra.mxu0 %v5640
    %v6188 = vpop.f32.mrf.mxu0
    %v6189 = vadd.f32 %v5484, %v6188
    %v6190 = vpop.f32.mrf.mxu0
    %v6191 = vpop.f32.mrf.mxu0
    %v6192 = vadd.f32 %v5484, %v6191
    %v6193 = vpop.f32.mrf.mxu0
    %6194 = vmatprep.mubr.bf16.mxu0 0
    %6195 = vmatmul.mubr.bf16.gmra.mxu0 %v5643
    %v6196 = vpop.f32.mrf.mxu0
    %v6197 = vadd.f32 %v5484, %v6196
    %v6198 = vpop.f32.mrf.mxu0
    %v6199 = vpop.f32.mrf.mxu0
    %v6200 = vadd.f32 %v5484, %v6199
    %v6201 = vpop.f32.mrf.mxu0
    %6202 = vmatprep.mubr.bf16.mxu0 0
    %6203 = vmatmul.mubr.bf16.gmra.mxu0 %v5646
    %v6204 = vpop.f32.mrf.mxu0
    %v6205 = vadd.f32 %v5484, %v6204
    %v6206 = vpop.f32.mrf.mxu0
    %v6207 = vpop.f32.mrf.mxu0
    %v6208 = vadd.f32 %v5484, %v6207
    %v6209 = vpop.f32.mrf.mxu0
    %6210 = vmatprep.mubr.bf16.mxu0 0
    %6211 = vmatmul.mubr.bf16.gmra.mxu0 %v5649
    %v6212 = vpop.f32.mrf.mxu0
    %v6213 = vadd.f32 %v5484, %v6212
    %v6214 = vpop.f32.mrf.mxu0
    %v6215 = vpop.f32.mrf.mxu0
    %v6216 = vadd.f32 %v5484, %v6215
    %v6217 = vpop.f32.mrf.mxu0
    %6218 = vmatprep.mubr.bf16.mxu0 0
    %6219 = vmatmul.mubr.bf16.gmra.mxu0 %v5652
    %v6220 = vpop.f32.mrf.mxu0
    %v6221 = vadd.f32 %v5484, %v6220
    %v6222 = vpop.f32.mrf.mxu0
    %v6223 = vpop.f32.mrf.mxu0
    %v6224 = vadd.f32 %v5484, %v6223
    %v6225 = vpop.f32.mrf.mxu0
    %6226 = vmatprep.mubr.bf16.mxu0 0
    %6227 = vmatmul.mubr.bf16.gmra.mxu0 %v5655
    %v6228 = vpop.f32.mrf.mxu0
    %v6229 = vadd.f32 %v5484, %v6228
    %v6230 = vpop.f32.mrf.mxu0
    %v6231 = vpop.f32.mrf.mxu0
    %v6232 = vadd.f32 %v5484, %v6231
    %v6233 = vpop.f32.mrf.mxu0
    %6234 = vmatprep.mubr.bf16.mxu0 0
    %6235 = vmatmul.mubr.bf16.gmra.mxu0 %v5658
    %v6236 = vpop.f32.mrf.mxu0
    %v6237 = vadd.f32 %v5484, %v6236
    %v6238 = vpop.f32.mrf.mxu0
    %v6239 = vpop.f32.mrf.mxu0
    %v6240 = vadd.f32 %v5484, %v6239
    %v6241 = vpop.f32.mrf.mxu0
    %6242 = vmatprep.mubr.bf16.mxu0 0
    %6243 = vmatmul.mubr.bf16.gmra.mxu0 %v5661
    %v6244 = vpop.f32.mrf.mxu0
    %v6245 = vadd.f32 %v5484, %v6244
    %v6246 = vpop.f32.mrf.mxu0
    %v6247 = vpop.f32.mrf.mxu0
    %v6248 = vadd.f32 %v5484, %v6247
    %v6249 = vpop.f32.mrf.mxu0
    %6250 = vmatprep.mubr.bf16.mxu0 0
    %6251 = vmatmul.mubr.bf16.gmra.mxu0 %v5664
    %v6252 = vpop.f32.mrf.mxu0
    %v6253 = vadd.f32 %v5484, %v6252
    %v6254 = vpop.f32.mrf.mxu0
    %v6255 = vpop.f32.mrf.mxu0
    %v6256 = vadd.f32 %v5484, %v6255
    %v6257 = vpop.f32.mrf.mxu0
    %6258 = vmatprep.mubr.bf16.mxu0 0
    %6259 = vmatmul.mubr.bf16.gmra.mxu0 %v5667
    %v6260 = vpop.f32.mrf.mxu0
    %v6261 = vadd.f32 %v5484, %v6260
    %v6262 = vpop.f32.mrf.mxu0
    %v6263 = vpop.f32.mrf.mxu0
    %v6264 = vadd.f32 %v5484, %v6263
    %v6265 = vpop.f32.mrf.mxu0
    %6266 = vmatprep.mubr.bf16.mxu0 0
    %6267 = vmatmul.mubr.bf16.gmra.mxu0 %v5670
    %v6268 = vpop.f32.mrf.mxu0
    %v6269 = vadd.f32 %v5484, %v6268
    %v6270 = vpop.f32.mrf.mxu0
    %v6271 = vpop.f32.mrf.mxu0
    %v6272 = vadd.f32 %v5484, %v6271
    %v6273 = vpop.f32.mrf.mxu0
    %6274 = vmatprep.mubr.bf16.mxu0 0
    %6275 = vmatmul.mubr.bf16.gmra.mxu0 %v5673
    %v6276 = vpop.f32.mrf.mxu0
    %v6277 = vadd.f32 %v5484, %v6276
    %v6278 = vpop.f32.mrf.mxu0
    %v6279 = vpop.f32.mrf.mxu0
    %v6280 = vadd.f32 %v5484, %v6279
    %v6281 = vpop.f32.mrf.mxu0
    %6282 = vmatprep.mubr.bf16.mxu0 0
    %6283 = vmatmul.mubr.bf16.gmra.mxu0 %v5676
    %v6284 = vpop.f32.mrf.mxu0
    %v6285 = vadd.f32 %v5484, %v6284
    %v6286 = vpop.f32.mrf.mxu0
    %v6287 = vpop.f32.mrf.mxu0
    %v6288 = vadd.f32 %v5484, %v6287
    %v6289 = vpop.f32.mrf.mxu0
    %6290 = vmatprep.mubr.bf16.mxu0 0
    %6291 = vmatmul.mubr.bf16.gmra.mxu0 %v5679
    %v6292 = vpop.f32.mrf.mxu0
    %v6293 = vadd.f32 %v5484, %v6292
    %v6294 = vpop.f32.mrf.mxu0
    %v6295 = vpop.f32.mrf.mxu0
    %v6296 = vadd.f32 %v5484, %v6295
    %v6297 = vpop.f32.mrf.mxu0
    %6298 = vmatprep.mubr.bf16.mxu0 0
    %6299 = vmatmul.mubr.bf16.gmra.mxu0 %v5682
    %v6300 = vpop.f32.mrf.mxu0
    %v6301 = vadd.f32 %v5484, %v6300
    %v6302 = vpop.f32.mrf.mxu0
    %v6303 = vpop.f32.mrf.mxu0
    %v6304 = vadd.f32 %v5484, %v6303
    %v6305 = vpop.f32.mrf.mxu0
    %6306 = vmatprep.mubr.bf16.mxu0 0
    %6307 = vmatmul.mubr.bf16.gmra.mxu0 %v5685
    %v6308 = vpop.f32.mrf.mxu0
    %v6309 = vadd.f32 %v5484, %v6308
    %v6310 = vpop.f32.mrf.mxu0
    %v6311 = vpop.f32.mrf.mxu0
    %v6312 = vadd.f32 %v5484, %v6311
    %v6313 = vpop.f32.mrf.mxu0
    %6314 = vmatprep.mubr.bf16.mxu0 0
    %6315 = vmatmul.mubr.bf16.gmra.mxu0 %v5688
    %v6316 = vpop.f32.mrf.mxu0
    %v6317 = vadd.f32 %v5484, %v6316
    %v6318 = vpop.f32.mrf.mxu0
    %v6319 = vpop.f32.mrf.mxu0
    %v6320 = vadd.f32 %v5484, %v6319
    %v6321 = vpop.f32.mrf.mxu0
    %6322 = vmatprep.mubr.bf16.mxu0 0
    %6323 = vmatmul.mubr.bf16.gmra.mxu0 %v5691
    %v6324 = vpop.f32.mrf.mxu0
    %v6325 = vadd.f32 %v5484, %v6324
    %v6326 = vpop.f32.mrf.mxu0
    %v6327 = vpop.f32.mrf.mxu0
    %v6328 = vadd.f32 %v5484, %v6327
    %v6329 = vpop.f32.mrf.mxu0
    %6330 = vmatprep.mubr.bf16.mxu0 0
    %6331 = vmatmul.mubr.bf16.gmra.mxu0 %v5694
    %v6332 = vpop.f32.mrf.mxu0
    %v6333 = vadd.f32 %v5484, %v6332
    %v6334 = vpop.f32.mrf.mxu0
    %v6335 = vpop.f32.mrf.mxu0
    %v6336 = vadd.f32 %v5484, %v6335
    %v6337 = vpop.f32.mrf.mxu0
    %6338 = vmatprep.mubr.bf16.mxu0 0
    %6339 = vmatmul.mubr.bf16.gmra.mxu0 %v5697
    %v6340 = vpop.f32.mrf.mxu0
    %v6341 = vadd.f32 %v5484, %v6340
    %v6342 = vpop.f32.mrf.mxu0
    %v6343 = vpop.f32.mrf.mxu0
    %v6344 = vadd.f32 %v5484, %v6343
    %v6345 = vpop.f32.mrf.mxu0
    %6346 = vmatprep.mubr.bf16.mxu0 0
    %6347 = vmatmul.mubr.bf16.gmra.mxu0 %v5700
    %v6348 = vpop.f32.mrf.mxu0
    %v6349 = vadd.f32 %v5484, %v6348
    %v6350 = vpop.f32.mrf.mxu0
    %v6351 = vpop.f32.mrf.mxu0
    %v6352 = vadd.f32 %v5484, %v6351
    %v6353 = vpop.f32.mrf.mxu0
    %6354 = vmatprep.mubr.bf16.mxu0 0
    %6355 = vmatmul.mubr.bf16.gmra.mxu0 %v5703
    %v6356 = vpop.f32.mrf.mxu0
    %v6357 = vadd.f32 %v5484, %v6356
    %v6358 = vpop.f32.mrf.mxu0
    %v6359 = vpop.f32.mrf.mxu0
    %v6360 = vadd.f32 %v5484, %v6359
    %v6361 = vpop.f32.mrf.mxu0
    %6362 = vmatprep.mubr.bf16.mxu0 0
    %6363 = vmatmul.mubr.bf16.gmra.mxu0 %v5706
    %v6364 = vpop.f32.mrf.mxu0
    %v6365 = vadd.f32 %v5484, %v6364
    %v6366 = vpop.f32.mrf.mxu0
    %v6367 = vpop.f32.mrf.mxu0
    %v6368 = vadd.f32 %v5484, %v6367
    %v6369 = vpop.f32.mrf.mxu0
    %6370 = vmatprep.mubr.bf16.mxu0 0
    %6371 = vmatmul.mubr.bf16.gmra.mxu0 %v5709
    %v6372 = vpop.f32.mrf.mxu0
    %v6373 = vadd.f32 %v5484, %v6372
    %v6374 = vpop.f32.mrf.mxu0
    %v6375 = vpop.f32.mrf.mxu0
    %v6376 = vadd.f32 %v5484, %v6375
    %v6377 = vpop.f32.mrf.mxu0
    %6378 = vmatprep.mubr.bf16.mxu0 0
    %6379 = vmatmul.mubr.bf16.gmra.mxu0 %v5712
    %v6380 = vpop.f32.mrf.mxu0
    %v6381 = vadd.f32 %v5484, %v6380
    %v6382 = vpop.f32.mrf.mxu0
    %v6383 = vpop.f32.mrf.mxu0
    %v6384 = vadd.f32 %v5484, %v6383
    %v6385 = vpop.f32.mrf.mxu0
    %6386 = vmatprep.mubr.bf16.mxu0 0
    %6387 = vmatmul.mubr.bf16.gmra.mxu0 %v5715
    %v6388 = vpop.f32.mrf.mxu0
    %v6389 = vadd.f32 %v5484, %v6388
    %v6390 = vpop.f32.mrf.mxu0
    %v6391 = vpop.f32.mrf.mxu0
    %v6392 = vadd.f32 %v5484, %v6391
    %v6393 = vpop.f32.mrf.mxu0
    %6394 = vmatprep.mubr.bf16.mxu0 0
    %6395 = vmatmul.mubr.bf16.gmra.mxu0 %v5718
    %v6396 = vpop.f32.mrf.mxu0
    %v6397 = vadd.f32 %v5484, %v6396
    %v6398 = vpop.f32.mrf.mxu0
    %v6399 = vpop.f32.mrf.mxu0
    %v6400 = vadd.f32 %v5484, %v6399
    %v6401 = vpop.f32.mrf.mxu0
    %6402 = vmatprep.mubr.bf16.mxu0 0
    %6403 = vmatmul.mubr.bf16.gmra.mxu0 %v5721
    %v6404 = vpop.f32.mrf.mxu0
    %v6405 = vadd.f32 %v5484, %v6404
    %v6406 = vpop.f32.mrf.mxu0
    %v6407 = vpop.f32.mrf.mxu0
    %v6408 = vadd.f32 %v5484, %v6407
    %v6409 = vpop.f32.mrf.mxu0
    %6410 = vmatprep.mubr.bf16.mxu0 0
    %6411 = vmatmul.mubr.bf16.gmra.mxu0 %v5724
    %v6412 = vpop.f32.mrf.mxu0
    %v6413 = vadd.f32 %v5484, %v6412
    %v6414 = vpop.f32.mrf.mxu0
    %v6415 = vpop.f32.mrf.mxu0
    %v6416 = vadd.f32 %v5484, %v6415
    %v6417 = vpop.f32.mrf.mxu0
    %6418 = vmatprep.mubr.bf16.mxu0 0
    %6419 = vmatmul.mubr.bf16.gmra.mxu0 %v5727
    %v6420 = vpop.f32.mrf.mxu0
    %v6421 = vadd.f32 %v5484, %v6420
    %v6422 = vpop.f32.mrf.mxu0
    %v6423 = vpop.f32.mrf.mxu0
    %v6424 = vadd.f32 %v5484, %v6423
    %v6425 = vpop.f32.mrf.mxu0
    %6426 = vmatprep.mubr.bf16.mxu0 0
    %6427 = vmatmul.mubr.bf16.gmra.mxu0 %v5730
    %v6428 = vpop.f32.mrf.mxu0
    %v6429 = vadd.f32 %v5484, %v6428
    %v6430 = vpop.f32.mrf.mxu0
    %v6431 = vpop.f32.mrf.mxu0
    %v6432 = vadd.f32 %v5484, %v6431
    %v6433 = vpop.f32.mrf.mxu0
    %6434 = vmatprep.mubr.bf16.mxu0 0
    %6435 = vmatmul.mubr.bf16.gmra.mxu0 %v5733
    %v6436 = vpop.f32.mrf.mxu0
    %v6437 = vadd.f32 %v5484, %v6436
    %v6438 = vpop.f32.mrf.mxu0
    %v6439 = vpop.f32.mrf.mxu0
    %v6440 = vadd.f32 %v5484, %v6439
    %v6441 = vpop.f32.mrf.mxu0
    %6442 = vmatprep.mubr.bf16.mxu0 0
    %6443 = vmatmul.mubr.bf16.gmra.mxu0 %v5736
    %v6444 = vpop.f32.mrf.mxu0
    %v6445 = vadd.f32 %v5484, %v6444
    %v6446 = vpop.f32.mrf.mxu0
    %v6447 = vpop.f32.mrf.mxu0
    %v6448 = vadd.f32 %v5484, %v6447
    %v6449 = vpop.f32.mrf.mxu0
    %6450 = vmatprep.mubr.bf16.mxu0 0
    %6451 = vmatmul.mubr.bf16.gmra.mxu0 %v5739
    %v6452 = vpop.f32.mrf.mxu0
    %v6453 = vadd.f32 %v5484, %v6452
    %v6454 = vpop.f32.mrf.mxu0
    %v6455 = vpop.f32.mrf.mxu0
    %v6456 = vadd.f32 %v5484, %v6455
    %v6457 = vpop.f32.mrf.mxu0
    %6458 = vmatprep.mubr.bf16.mxu0 0
    %6459 = vmatmul.mubr.bf16.gmra.mxu0 %v5742
    %v6460 = vpop.f32.mrf.mxu0
    %v6461 = vadd.f32 %v5484, %v6460
    %v6462 = vpop.f32.mrf.mxu0
    %v6463 = vpop.f32.mrf.mxu0
    %v6464 = vadd.f32 %v5484, %v6463
    %v6465 = vpop.f32.mrf.mxu0
    %6466 = vmatprep.mubr.bf16.mxu0 0
    %6467 = vmatmul.mubr.bf16.gmra.mxu0 %v5745
    %v6468 = vpop.f32.mrf.mxu0
    %v6469 = vadd.f32 %v5484, %v6468
    %v6470 = vpop.f32.mrf.mxu0
    %v6471 = vpop.f32.mrf.mxu0
    %v6472 = vadd.f32 %v5484, %v6471
    %v6473 = vpop.f32.mrf.mxu0
    %6474 = vmatprep.mubr.bf16.mxu0 0
    %6475 = vmatmul.mubr.bf16.gmra.mxu0 %v5748
    %v6476 = vpop.f32.mrf.mxu0
    %v6477 = vadd.f32 %v5484, %v6476
    %v6478 = vpop.f32.mrf.mxu0
    %v6479 = vpop.f32.mrf.mxu0
    %v6480 = vadd.f32 %v5484, %v6479
    %v6481 = vpop.f32.mrf.mxu0
    %6482 = vmatprep.mubr.bf16.mxu0 0
    %6483 = vmatmul.mubr.bf16.gmra.mxu0 %v5751
    %v6484 = vpop.f32.mrf.mxu0
    %v6485 = vadd.f32 %v5484, %v6484
    %v6486 = vpop.f32.mrf.mxu0
    %v6487 = vpop.f32.mrf.mxu0
    %v6488 = vadd.f32 %v5484, %v6487
    %v6489 = vpop.f32.mrf.mxu0
    %6490 = vmatprep.mubr.bf16.mxu0 0
    %6491 = vmatmul.mubr.bf16.gmra.mxu0 %v5754
    %v6492 = vpop.f32.mrf.mxu0
    %v6493 = vadd.f32 %v5484, %v6492
    %v6494 = vpop.f32.mrf.mxu0
    %v6495 = vpop.f32.mrf.mxu0
    %v6496 = vadd.f32 %v5484, %v6495
    %v6497 = vpop.f32.mrf.mxu0
    %6498 = vmatprep.mubr.bf16.mxu0 0
    %6499 = vmatmul.mubr.bf16.gmra.mxu0 %v5757
    %v6500 = vpop.f32.mrf.mxu0
    %v6501 = vadd.f32 %v5484, %v6500
    %v6502 = vpop.f32.mrf.mxu0
    %v6503 = vpop.f32.mrf.mxu0
    %v6504 = vadd.f32 %v5484, %v6503
    %v6505 = vpop.f32.mrf.mxu0
    %6506 = vmatprep.mubr.bf16.mxu0 0
    %6507 = vmatmul.mubr.bf16.gmra.mxu0 %v5760
    %v6508 = vpop.f32.mrf.mxu0
    %v6509 = vadd.f32 %v5484, %v6508
    %v6510 = vpop.f32.mrf.mxu0
    %v6511 = vpop.f32.mrf.mxu0
    %v6512 = vadd.f32 %v5484, %v6511
    %v6513 = vpop.f32.mrf.mxu0
    %6514 = vmatprep.mubr.bf16.mxu0 0
    %6515 = vmatmul.mubr.bf16.gmra.mxu0 %v5763
    %v6516 = vpop.f32.mrf.mxu0
    %v6517 = vadd.f32 %v5484, %v6516
    %v6518 = vpop.f32.mrf.mxu0
    %v6519 = vpop.f32.mrf.mxu0
    %v6520 = vadd.f32 %v5484, %v6519
    %v6521 = vpop.f32.mrf.mxu0
    %6522 = vmatprep.mubr.bf16.mxu0 0
    %6523 = vmatmul.mubr.bf16.gmra.mxu0 %v5766
    %v6524 = vpop.f32.mrf.mxu0
    %v6525 = vadd.f32 %v5484, %v6524
    %v6526 = vpop.f32.mrf.mxu0
    %v6527 = vpop.f32.mrf.mxu0
    %v6528 = vadd.f32 %v5484, %v6527
    %v6529 = vpop.f32.mrf.mxu0
    %6530 = vmatprep.mubr.bf16.mxu0 0
    %6531 = vmatmul.mubr.bf16.gmra.mxu0 %v5769
    %v6532 = vpop.f32.mrf.mxu0
    %v6533 = vadd.f32 %v5484, %v6532
    %v6534 = vpop.f32.mrf.mxu0
    %v6535 = vpop.f32.mrf.mxu0
    %v6536 = vadd.f32 %v5484, %v6535
    %v6537 = vpop.f32.mrf.mxu0
    %6538 = vmatprep.mubr.bf16.mxu0 0
    %6539 = vmatmul.mubr.bf16.gmra.mxu0 %v5772
    %v6540 = vpop.f32.mrf.mxu0
    %v6541 = vadd.f32 %v5484, %v6540
    %v6542 = vpop.f32.mrf.mxu0
    %v6543 = vpop.f32.mrf.mxu0
    %v6544 = vadd.f32 %v5484, %v6543
    %v6545 = vpop.f32.mrf.mxu0
    %6546 = vmatprep.mubr.bf16.mxu0 0
    %6547 = vmatmul.mubr.bf16.gmra.mxu0 %v5775
    %v6548 = vpop.f32.mrf.mxu0
    %v6549 = vadd.f32 %v5484, %v6548
    %v6550 = vpop.f32.mrf.mxu0
    %v6551 = vpop.f32.mrf.mxu0
    %v6552 = vadd.f32 %v5484, %v6551
    %v6553 = vpop.f32.mrf.mxu0
    %6554 = vmatprep.mubr.bf16.mxu0 0
    %6555 = vmatmul.mubr.bf16.gmra.mxu0 %v5778
    %v6556 = vpop.f32.mrf.mxu0
    %v6557 = vadd.f32 %v5484, %v6556
    %v6558 = vpop.f32.mrf.mxu0
    %v6559 = vpop.f32.mrf.mxu0
    %v6560 = vadd.f32 %v5484, %v6559
    %v6561 = vpop.f32.mrf.mxu0
    %6562 = vmatprep.mubr.bf16.mxu0 0
    %6563 = vmatmul.mubr.bf16.gmra.mxu0 %v5781
    %v6564 = vpop.f32.mrf.mxu0
    %v6565 = vadd.f32 %v5484, %v6564
    %v6566 = vpop.f32.mrf.mxu0
    %v6567 = vpop.f32.mrf.mxu0
    %v6568 = vadd.f32 %v5484, %v6567
    %v6569 = vpop.f32.mrf.mxu0
    %6570 = vmatprep.mubr.bf16.mxu0 0
    %6571 = vmatmul.mubr.bf16.gmra.mxu0 %v5784
    %v6572 = vpop.f32.mrf.mxu0
    %v6573 = vadd.f32 %v5484, %v6572
    %v6574 = vpop.f32.mrf.mxu0
    %v6575 = vpop.f32.mrf.mxu0
    %v6576 = vadd.f32 %v5484, %v6575
    %v6577 = vpop.f32.mrf.mxu0
    %6578 = vmatprep.mubr.bf16.mxu0 0
    %6579 = vmatmul.mubr.bf16.gmra.mxu0 %v5787
    %v6580 = vpop.f32.mrf.mxu0
    %v6581 = vadd.f32 %v5484, %v6580
    %v6582 = vpop.f32.mrf.mxu0
    %v6583 = vpop.f32.mrf.mxu0
    %v6584 = vadd.f32 %v5484, %v6583
    %v6585 = vpop.f32.mrf.mxu0
    %6586 = vmatprep.mubr.bf16.mxu0 0
    %6587 = vmatmul.mubr.bf16.gmra.mxu0 %v5790
    %v6588 = vpop.f32.mrf.mxu0
    %v6589 = vadd.f32 %v5484, %v6588
    %v6590 = vpop.f32.mrf.mxu0
    %v6591 = vpop.f32.mrf.mxu0
    %v6592 = vadd.f32 %v5484, %v6591
    %v6593 = vpop.f32.mrf.mxu0
    %6594 = vmatprep.mubr.bf16.mxu0 0
    %6595 = vmatmul.mubr.bf16.gmra.mxu0 %v5793
    %v6596 = vpop.f32.mrf.mxu0
    %v6597 = vadd.f32 %v5484, %v6596
    %v6598 = vpop.f32.mrf.mxu0
    %v6599 = vpop.f32.mrf.mxu0
    %v6600 = vadd.f32 %v5484, %v6599
    %v6601 = vpop.f32.mrf.mxu0
    %6602 = vmatprep.mubr.bf16.mxu0 0
    %6603 = vmatmul.mubr.bf16.gmra.mxu0 %v5796
    %v6604 = vpop.f32.mrf.mxu0
    %v6605 = vadd.f32 %v5484, %v6604
    %v6606 = vpop.f32.mrf.mxu0
    %v6607 = vpop.f32.mrf.mxu0
    %v6608 = vadd.f32 %v5484, %v6607
    %v6609 = vpop.f32.mrf.mxu0
    %6610 = vmatprep.mubr.bf16.mxu0 0
    %6611 = vmatmul.mubr.bf16.gmra.mxu0 %v5799
    %v6612 = vpop.f32.mrf.mxu0
    %v6613 = vadd.f32 %v5484, %v6612
    %v6614 = vpop.f32.mrf.mxu0
    %v6615 = vpop.f32.mrf.mxu0
    %v6616 = vadd.f32 %v5484, %v6615
    %v6617 = vpop.f32.mrf.mxu0
    %6618 = vmatprep.mubr.bf16.mxu0 0
    %6619 = vmatmul.mubr.bf16.gmra.mxu0 %v5802
    %v6620 = vpop.f32.mrf.mxu0
    %v6621 = vadd.f32 %v5484, %v6620
    %v6622 = vpop.f32.mrf.mxu0
    %v6623 = vpop.f32.mrf.mxu0
    %v6624 = vadd.f32 %v5484, %v6623
    %v6625 = vpop.f32.mrf.mxu0
    %6626 = vmatprep.mubr.bf16.mxu0 0
    %6627 = vmatmul.mubr.bf16.gmra.mxu0 %v5805
    %v6628 = vpop.f32.mrf.mxu0
    %v6629 = vadd.f32 %v5484, %v6628
    %v6630 = vpop.f32.mrf.mxu0
    %v6631 = vpop.f32.mrf.mxu0
    %v6632 = vadd.f32 %v5484, %v6631
    %v6633 = vpop.f32.mrf.mxu0
    %6634 = vmatprep.mubr.bf16.mxu0 0
    %6635 = vmatmul.mubr.bf16.gmra.mxu0 %v5808
    %v6636 = vpop.f32.mrf.mxu0
    %v6637 = vadd.f32 %v5484, %v6636
    %v6638 = vpop.f32.mrf.mxu0
    %v6639 = vpop.f32.mrf.mxu0
    %v6640 = vadd.f32 %v5484, %v6639
    %v6641 = vpop.f32.mrf.mxu0
    %6642 = vdwg.mxu0
    %v6643 = vmax.f32 %v5845, 0.0
    %v6644 = vmax.f32 %v5848, 0.0
    %v6645 = vmax.f32 %v5853, 0.0
    %v6646 = vmax.f32 %v5856, 0.0
    %v6647 = vmax.f32 %v5861, 0.0
    %v6648 = vmax.f32 %v5864, 0.0
    %v6649 = vmax.f32 %v5869, 0.0
    %v6650 = vmax.f32 %v5872, 0.0
    %v6651 = vmax.f32 %v5877, 0.0
    %v6652 = vmax.f32 %v5880, 0.0
    %v6653 = vmax.f32 %v5885, 0.0
    %v6654 = vmax.f32 %v5888, 0.0
    %v6655 = vmax.f32 %v5893, 0.0
    %v6656 = vmax.f32 %v5896, 0.0
    %v6657 = vmax.f32 %v5901, 0.0
    %v6658 = vmax.f32 %v5904, 0.0
    %v6659 = vmax.f32 %v5909, 0.0
    %v6660 = vmax.f32 %v5912, 0.0
    %v6661 = vmax.f32 %v5917, 0.0
    %v6662 = vmax.f32 %v5920, 0.0
    %v6663 = vmax.f32 %v5925, 0.0
    %v6664 = vmax.f32 %v5928, 0.0
    %v6665 = vmax.f32 %v5933, 0.0
    %v6666 = vmax.f32 %v5936, 0.0
    %v6667 = vmax.f32 %v5941, 0.0
    %v6668 = vmax.f32 %v5944, 0.0
    %v6669 = vmax.f32 %v5949, 0.0
    %v6670 = vmax.f32 %v5952, 0.0
    %v6671 = vmax.f32 %v5957, 0.0
    %v6672 = vmax.f32 %v5960, 0.0
    %v6673 = vmax.f32 %v5965, 0.0
    %v6674 = vmax.f32 %v5968, 0.0
    %v6675 = vmax.f32 %v5973, 0.0
    %v6676 = vmax.f32 %v5976, 0.0
    %v6677 = vmax.f32 %v5981, 0.0
    %v6678 = vmax.f32 %v5984, 0.0
    %v6679 = vmax.f32 %v5989, 0.0
    %v6680 = vmax.f32 %v5992, 0.0
    %v6681 = vmax.f32 %v5997, 0.0
    %v6682 = vmax.f32 %v6000, 0.0
    %v6683 = vmax.f32 %v6005, 0.0
    %v6684 = vmax.f32 %v6008, 0.0
    %v6685 = vmax.f32 %v6013, 0.0
    %v6686 = vmax.f32 %v6016, 0.0
    %v6687 = vmax.f32 %v6021, 0.0
    %v6688 = vmax.f32 %v6024, 0.0
    %v6689 = vmax.f32 %v6029, 0.0
    %v6690 = vmax.f32 %v6032, 0.0
    %v6691 = vmax.f32 %v6037, 0.0
    %v6692 = vmax.f32 %v6040, 0.0
    %v6693 = vmax.f32 %v6045, 0.0
    %v6694 = vmax.f32 %v6048, 0.0
    %v6695 = vmax.f32 %v6053, 0.0
    %v6696 = vmax.f32 %v6056, 0.0
    %v6697 = vmax.f32 %v6061, 0.0
    %v6698 = vmax.f32 %v6064, 0.0
    %v6699 = vmax.f32 %v6069, 0.0
    %v6700 = vmax.f32 %v6072, 0.0
    %v6701 = vmax.f32 %v6077, 0.0
    %v6702 = vmax.f32 %v6080, 0.0
    %v6703 = vmax.f32 %v6085, 0.0
    %v6704 = vmax.f32 %v6088, 0.0
    %v6705 = vmax.f32 %v6093, 0.0
    %v6706 = vmax.f32 %v6096, 0.0
    %v6707 = vmax.f32 %v6101, 0.0
    %v6708 = vmax.f32 %v6104, 0.0
    %v6709 = vmax.f32 %v6109, 0.0
    %v6710 = vmax.f32 %v6112, 0.0
    %v6711 = vmax.f32 %v6117, 0.0
    %v6712 = vmax.f32 %v6120, 0.0
    %v6713 = vmax.f32 %v6125, 0.0
    %v6714 = vmax.f32 %v6128, 0.0
    %v6715 = vmax.f32 %v6133, 0.0
    %v6716 = vmax.f32 %v6136, 0.0
    %v6717 = vmax.f32 %v6141, 0.0
    %v6718 = vmax.f32 %v6144, 0.0
    %v6719 = vmax.f32 %v6149, 0.0
    %v6720 = vmax.f32 %v6152, 0.0
    %v6721 = vmax.f32 %v6157, 0.0
    %v6722 = vmax.f32 %v6160, 0.0
    %v6723 = vmax.f32 %v6165, 0.0
    %v6724 = vmax.f32 %v6168, 0.0
    %v6725 = vmax.f32 %v6173, 0.0
    %v6726 = vmax.f32 %v6176, 0.0
    %v6727 = vmax.f32 %v6181, 0.0
    %v6728 = vmax.f32 %v6184, 0.0
    %v6729 = vmax.f32 %v6189, 0.0
    %v6730 = vmax.f32 %v6192, 0.0
    %v6731 = vmax.f32 %v6197, 0.0
    %v6732 = vmax.f32 %v6200, 0.0
    %v6733 = vmax.f32 %v6205, 0.0
    %v6734 = vmax.f32 %v6208, 0.0
    %v6735 = vmax.f32 %v6213, 0.0
    %v6736 = vmax.f32 %v6216, 0.0
    %v6737 = vmax.f32 %v6221, 0.0
    %v6738 = vmax.f32 %v6224, 0.0
    %v6739 = vmax.f32 %v6229, 0.0
    %v6740 = vmax.f32 %v6232, 0.0
    %v6741 = vmax.f32 %v6237, 0.0
    %v6742 = vmax.f32 %v6240, 0.0
    %v6743 = vmax.f32 %v6245, 0.0
    %v6744 = vmax.f32 %v6248, 0.0
    %v6745 = vmax.f32 %v6253, 0.0
    %v6746 = vmax.f32 %v6256, 0.0
    %v6747 = vmax.f32 %v6261, 0.0
    %v6748 = vmax.f32 %v6264, 0.0
    %v6749 = vmax.f32 %v6269, 0.0
    %v6750 = vmax.f32 %v6272, 0.0
    %v6751 = vmax.f32 %v6277, 0.0
    %v6752 = vmax.f32 %v6280, 0.0
    %v6753 = vmax.f32 %v6285, 0.0
    %v6754 = vmax.f32 %v6288, 0.0
    %v6755 = vmax.f32 %v6293, 0.0
    %v6756 = vmax.f32 %v6296, 0.0
    %v6757 = vmax.f32 %v6301, 0.0
    %v6758 = vmax.f32 %v6304, 0.0
    %v6759 = vmax.f32 %v6309, 0.0
    %v6760 = vmax.f32 %v6312, 0.0
    %v6761 = vmax.f32 %v6317, 0.0
    %v6762 = vmax.f32 %v6320, 0.0
    %v6763 = vmax.f32 %v6325, 0.0
    %v6764 = vmax.f32 %v6328, 0.0
    %v6765 = vmax.f32 %v6333, 0.0
    %v6766 = vmax.f32 %v6336, 0.0
    %v6767 = vmax.f32 %v6341, 0.0
    %v6768 = vmax.f32 %v6344, 0.0
    %v6769 = vmax.f32 %v6349, 0.0
    %v6770 = vmax.f32 %v6352, 0.0
    %v6771 = vmax.f32 %v6357, 0.0
    %v6772 = vmax.f32 %v6360, 0.0
    %v6773 = vmax.f32 %v6365, 0.0
    %v6774 = vmax.f32 %v6368, 0.0
    %v6775 = vmax.f32 %v6373, 0.0
    %v6776 = vmax.f32 %v6376, 0.0
    %v6777 = vmax.f32 %v6381, 0.0
    %v6778 = vmax.f32 %v6384, 0.0
    %v6779 = vmax.f32 %v6389, 0.0
    %v6780 = vmax.f32 %v6392, 0.0
    %v6781 = vmax.f32 %v6397, 0.0
    %v6782 = vmax.f32 %v6400, 0.0
    %v6783 = vmax.f32 %v6405, 0.0
    %v6784 = vmax.f32 %v6408, 0.0
    %v6785 = vmax.f32 %v6413, 0.0
    %v6786 = vmax.f32 %v6416, 0.0
    %v6787 = vmax.f32 %v6421, 0.0
    %v6788 = vmax.f32 %v6424, 0.0
    %v6789 = vmax.f32 %v6429, 0.0
    %v6790 = vmax.f32 %v6432, 0.0
    %v6791 = vmax.f32 %v6437, 0.0
    %v6792 = vmax.f32 %v6440, 0.0
    %v6793 = vmax.f32 %v6445, 0.0
    %v6794 = vmax.f32 %v6448, 0.0
    %v6795 = vmax.f32 %v6453, 0.0
    %v6796 = vmax.f32 %v6456, 0.0
    %v6797 = vmax.f32 %v6461, 0.0
    %v6798 = vmax.f32 %v6464, 0.0
    %v6799 = vmax.f32 %v6469, 0.0
    %v6800 = vmax.f32 %v6472, 0.0
    %v6801 = vmax.f32 %v6477, 0.0
    %v6802 = vmax.f32 %v6480, 0.0
    %v6803 = vmax.f32 %v6485, 0.0
    %v6804 = vmax.f32 %v6488, 0.0
    %v6805 = vmax.f32 %v6493, 0.0
    %v6806 = vmax.f32 %v6496, 0.0
    %v6807 = vmax.f32 %v6501, 0.0
    %v6808 = vmax.f32 %v6504, 0.0
    %v6809 = vmax.f32 %v6509, 0.0
    %v6810 = vmax.f32 %v6512, 0.0
    %v6811 = vmax.f32 %v6517, 0.0
    %v6812 = vmax.f32 %v6520, 0.0
    %v6813 = vmax.f32 %v6525, 0.0
    %v6814 = vmax.f32 %v6528, 0.0
    %v6815 = vmax.f32 %v6533, 0.0
    %v6816 = vmax.f32 %v6536, 0.0
    %v6817 = vmax.f32 %v6541, 0.0
    %v6818 = vmax.f32 %v6544, 0.0
    %v6819 = vmax.f32 %v6549, 0.0
    %v6820 = vmax.f32 %v6552, 0.0
    %v6821 = vmax.f32 %v6557, 0.0
    %v6822 = vmax.f32 %v6560, 0.0
    %v6823 = vmax.f32 %v6565, 0.0
    %v6824 = vmax.f32 %v6568, 0.0
    %v6825 = vmax.f32 %v6573, 0.0
    %v6826 = vmax.f32 %v6576, 0.0
    %v6827 = vmax.f32 %v6581, 0.0
    %v6828 = vmax.f32 %v6584, 0.0
    %v6829 = vmax.f32 %v6589, 0.0
    %v6830 = vmax.f32 %v6592, 0.0
    %v6831 = vmax.f32 %v6597, 0.0
    %v6832 = vmax.f32 %v6600, 0.0
    %v6833 = vmax.f32 %v6605, 0.0
    %v6834 = vmax.f32 %v6608, 0.0
    %v6835 = vmax.f32 %v6613, 0.0
    %v6836 = vmax.f32 %v6616, 0.0
    %v6837 = vmax.f32 %v6621, 0.0
    %v6838 = vmax.f32 %v6624, 0.0
    %v6839 = vmax.f32 %v6629, 0.0
    %v6840 = vmax.f32 %v6632, 0.0
    %v6841 = vmax.f32 %v6637, 0.0
    %v6842 = vmax.f32 %v6640, 0.0
    %v6843 = vpack.c.bf16 %v6644, %v6643
    %v6844 = vpack.c.bf16 %v6646, %v6645
    %v6845 = vpack.c.bf16 %v6648, %v6647
    %v6846 = vpack.c.bf16 %v6650, %v6649
    %v6847 = vpack.c.bf16 %v6652, %v6651
    %v6848 = vpack.c.bf16 %v6654, %v6653
    %v6849 = vpack.c.bf16 %v6656, %v6655
    %v6850 = vpack.c.bf16 %v6658, %v6657
    %v6851 = vpack.c.bf16 %v6660, %v6659
    %v6852 = vpack.c.bf16 %v6662, %v6661
    %v6853 = vpack.c.bf16 %v6664, %v6663
    %v6854 = vpack.c.bf16 %v6666, %v6665
    %v6855 = vpack.c.bf16 %v6668, %v6667
    %v6856 = vpack.c.bf16 %v6670, %v6669
    %v6857 = vpack.c.bf16 %v6672, %v6671
    %v6858 = vpack.c.bf16 %v6674, %v6673
    %v6859 = vpack.c.bf16 %v6676, %v6675
    %v6860 = vpack.c.bf16 %v6678, %v6677
    %v6861 = vpack.c.bf16 %v6680, %v6679
    %v6862 = vpack.c.bf16 %v6682, %v6681
    %v6863 = vpack.c.bf16 %v6684, %v6683
    %v6864 = vpack.c.bf16 %v6686, %v6685
    %v6865 = vpack.c.bf16 %v6688, %v6687
    %v6866 = vpack.c.bf16 %v6690, %v6689
    %v6867 = vpack.c.bf16 %v6692, %v6691
    %v6868 = vpack.c.bf16 %v6694, %v6693
    %v6869 = vpack.c.bf16 %v6696, %v6695
    %v6870 = vpack.c.bf16 %v6698, %v6697
    %v6871 = vpack.c.bf16 %v6700, %v6699
    %v6872 = vpack.c.bf16 %v6702, %v6701
    %v6873 = vpack.c.bf16 %v6704, %v6703
    %v6874 = vpack.c.bf16 %v6706, %v6705
    %v6875 = vpack.c.bf16 %v6708, %v6707
    %v6876 = vpack.c.bf16 %v6710, %v6709
    %v6877 = vpack.c.bf16 %v6712, %v6711
    %v6878 = vpack.c.bf16 %v6714, %v6713
    %v6879 = vpack.c.bf16 %v6716, %v6715
    %v6880 = vpack.c.bf16 %v6718, %v6717
    %v6881 = vpack.c.bf16 %v6720, %v6719
    %v6882 = vpack.c.bf16 %v6722, %v6721
    %v6883 = vpack.c.bf16 %v6724, %v6723
    %v6884 = vpack.c.bf16 %v6726, %v6725
    %v6885 = vpack.c.bf16 %v6728, %v6727
    %v6886 = vpack.c.bf16 %v6730, %v6729
    %v6887 = vpack.c.bf16 %v6732, %v6731
    %v6888 = vpack.c.bf16 %v6734, %v6733
    %v6889 = vpack.c.bf16 %v6736, %v6735
    %v6890 = vpack.c.bf16 %v6738, %v6737
    %v6891 = vpack.c.bf16 %v6740, %v6739
    %v6892 = vpack.c.bf16 %v6742, %v6741
    %v6893 = vpack.c.bf16 %v6744, %v6743
    %v6894 = vpack.c.bf16 %v6746, %v6745
    %v6895 = vpack.c.bf16 %v6748, %v6747
    %v6896 = vpack.c.bf16 %v6750, %v6749
    %v6897 = vpack.c.bf16 %v6752, %v6751
    %v6898 = vpack.c.bf16 %v6754, %v6753
    %v6899 = vpack.c.bf16 %v6756, %v6755
    %v6900 = vpack.c.bf16 %v6758, %v6757
    %v6901 = vpack.c.bf16 %v6760, %v6759
    %v6902 = vpack.c.bf16 %v6762, %v6761
    %v6903 = vpack.c.bf16 %v6764, %v6763
    %v6904 = vpack.c.bf16 %v6766, %v6765
    %v6905 = vpack.c.bf16 %v6768, %v6767
    %v6906 = vpack.c.bf16 %v6770, %v6769
    %v6907 = vpack.c.bf16 %v6772, %v6771
    %v6908 = vpack.c.bf16 %v6774, %v6773
    %v6909 = vpack.c.bf16 %v6776, %v6775
    %v6910 = vpack.c.bf16 %v6778, %v6777
    %v6911 = vpack.c.bf16 %v6780, %v6779
    %v6912 = vpack.c.bf16 %v6782, %v6781
    %v6913 = vpack.c.bf16 %v6784, %v6783
    %v6914 = vpack.c.bf16 %v6786, %v6785
    %v6915 = vpack.c.bf16 %v6788, %v6787
    %v6916 = vpack.c.bf16 %v6790, %v6789
    %v6917 = vpack.c.bf16 %v6792, %v6791
    %v6918 = vpack.c.bf16 %v6794, %v6793
    %v6919 = vpack.c.bf16 %v6796, %v6795
    %v6920 = vpack.c.bf16 %v6798, %v6797
    %v6921 = vpack.c.bf16 %v6800, %v6799
    %v6922 = vpack.c.bf16 %v6802, %v6801
    %v6923 = vpack.c.bf16 %v6804, %v6803
    %v6924 = vpack.c.bf16 %v6806, %v6805
    %v6925 = vpack.c.bf16 %v6808, %v6807
    %v6926 = vpack.c.bf16 %v6810, %v6809
    %v6927 = vpack.c.bf16 %v6812, %v6811
    %v6928 = vpack.c.bf16 %v6814, %v6813
    %v6929 = vpack.c.bf16 %v6816, %v6815
    %v6930 = vpack.c.bf16 %v6818, %v6817
    %v6931 = vpack.c.bf16 %v6820, %v6819
    %v6932 = vpack.c.bf16 %v6822, %v6821
    %v6933 = vpack.c.bf16 %v6824, %v6823
    %v6934 = vpack.c.bf16 %v6826, %v6825
    %v6935 = vpack.c.bf16 %v6828, %v6827
    %v6936 = vpack.c.bf16 %v6830, %v6829
    %v6937 = vpack.c.bf16 %v6832, %v6831
    %v6938 = vpack.c.bf16 %v6834, %v6833
    %v6939 = vpack.c.bf16 %v6836, %v6835
    %v6940 = vpack.c.bf16 %v6838, %v6837
    %v6941 = vpack.c.bf16 %v6840, %v6839
    %v6942 = vpack.c.bf16 %v6842, %v6841
    %v6943 = vld [vmem:[%s8] sm:$0xff]
    %v6944 = vld [vmem:[%s8 + $0x8] sm:$0xff]
    %v6945 = vld [vmem:[%s8 + $0x10] sm:$0xff]
    %v6946 = vld [vmem:[%s8 + $0x18] sm:$0xff]
    %v6947 = vld [vmem:[%s8 + $0x20] sm:$0xff]
    %v6948 = vld [vmem:[%s8 + $0x28] sm:$0xff]
    %v6949 = vld [vmem:[%s8 + $0x30] sm:$0xff]
    %v6950 = vld [vmem:[%s8 + $0x38] sm:$0xff]
    %v6951 = vld [vmem:[%s8 + $0x40] sm:$0xff]
    %v6952 = vld [vmem:[%s8 + $0x48] sm:$0xff]
    %v6953 = vld [vmem:[%s8 + $0x50] sm:$0xff]
    %v6954 = vld [vmem:[%s8 + $0x58] sm:$0xff]
    %v6955 = vld [vmem:[%s8 + $0x60] sm:$0xff]
    %v6956 = vld [vmem:[%s8 + $0x68] sm:$0xff]
    %v6957 = vld [vmem:[%s8 + $0x70] sm:$0xff]
    %v6958 = vld [vmem:[%s8 + $0x78] sm:$0xff]
    %v6959 = vld [vmem:[%s9] sm:$0x3]
    %v6961 = vlaneseq
    %v6962 = vshrl.u32 %v6961, 7
    %v6963 = vsub.s32 0, %v6962
    %v6964 = vrot.slane %v6959, %v6963
    %v6965 = vlaneseq
    %v6966 = vshrl.u32 %v6965, 7
    %v6967 = vsub.s32 1, %v6966
    %v6968 = vrot.slane %v6959, %v6967
    %v6987 = vunpack.c.l.b16 %v6943
    %v6988 = vunpack.c.h.b16 %v6943
    %v6989 = vunpack.c.l.b16 %v6944
    %v6990 = vunpack.c.h.b16 %v6944
    %v6991 = vunpack.c.l.b16 %v6945
    %v6992 = vunpack.c.h.b16 %v6945
    %v6993 = vunpack.c.l.b16 %v6946
    %v6994 = vunpack.c.h.b16 %v6946
    %v6995 = vunpack.c.l.b16 %v6947
    %v6996 = vunpack.c.h.b16 %v6947
    %v6997 = vunpack.c.l.b16 %v6948
    %v6998 = vunpack.c.h.b16 %v6948
    %v6999 = vunpack.c.l.b16 %v6949
    %v7000 = vunpack.c.h.b16 %v6949
    %v7001 = vunpack.c.l.b16 %v6950
    %v7002 = vunpack.c.h.b16 %v6950
    %v7003 = vunpack.c.l.b16 %v6951
    %v7004 = vunpack.c.h.b16 %v6951
    %v7005 = vunpack.c.l.b16 %v6952
    %v7006 = vunpack.c.h.b16 %v6952
    %v7007 = vunpack.c.l.b16 %v6953
    %v7008 = vunpack.c.h.b16 %v6953
    %v7009 = vunpack.c.l.b16 %v6954
    %v7010 = vunpack.c.h.b16 %v6954
    %v7011 = vunpack.c.l.b16 %v6955
    %v7012 = vunpack.c.h.b16 %v6955
    %v7013 = vunpack.c.l.b16 %v6956
    %v7014 = vunpack.c.h.b16 %v6956
    %v7015 = vunpack.c.l.b16 %v6957
    %v7016 = vunpack.c.h.b16 %v6957
    %v7017 = vunpack.c.l.b16 %v6958
    %v7018 = vunpack.c.h.b16 %v6958
    %v7019 = vpack.c.b16 %v6989, %v6987
    %v7020 = vpack.c.b16 %v6990, %v6988
    %v7021 = vpack.c.b16 %v6993, %v6991
    %v7022 = vpack.c.b16 %v6994, %v6992
    %v7023 = vpack.c.b16 %v6997, %v6995
    %v7024 = vpack.c.b16 %v6998, %v6996
    %v7025 = vpack.c.b16 %v7001, %v6999
    %v7026 = vpack.c.b16 %v7002, %v7000
    %v7027 = vpack.c.b16 %v7005, %v7003
    %v7028 = vpack.c.b16 %v7006, %v7004
    %v7029 = vpack.c.b16 %v7009, %v7007
    %v7030 = vpack.c.b16 %v7010, %v7008
    %v7031 = vpack.c.b16 %v7013, %v7011
    %v7032 = vpack.c.b16 %v7014, %v7012
    %v7033 = vpack.c.b16 %v7017, %v7015
    %v7034 = vpack.c.b16 %v7018, %v7016
    %7051 = vmatprep.subr.bf16.mxu0 %v7034
    %7052 = vmatpush1.bf16.msra.mxu0 %v7033
    %7053 = vmatprep.subr.bf16.mxu0 %v7032
    %7054 = vmatpush1.bf16.msra.mxu0 %v7031
    %7055 = vmatprep.subr.bf16.mxu0 %v7030
    %7056 = vmatpush1.bf16.msra.mxu0 %v7029
    %7057 = vmatprep.subr.bf16.mxu0 %v7028
    %7058 = vmatpush1.bf16.msra.mxu0 %v7027
    %7059 = vmatprep.subr.bf16.mxu0 %v7026
    %7060 = vmatpush1.bf16.msra.mxu0 %v7025
    %7061 = vmatprep.subr.bf16.mxu0 %v7024
    %7062 = vmatpush1.bf16.msra.mxu0 %v7023
    %7063 = vmatprep.subr.bf16.mxu0 %v7022
    %7064 = vmatpush1.bf16.msra.mxu0 %v7021
    %7065 = vmatprep.subr.bf16.mxu0 %v7020
    %7066 = vmatpush1.bf16.msra.mxu0 %v7019
    %7067 = vmatprep.subr.bf16.mxu0 0
    %7068 = vmatpush2.bf16.msra.mxu0 0
    %7069 = vmatprep.subr.bf16.mxu0 0
    %7070 = vmatpush2.bf16.msra.mxu0 0
    %7071 = vmatprep.subr.bf16.mxu0 0
    %7072 = vmatpush2.bf16.msra.mxu0 0
    %7073 = vmatprep.subr.bf16.mxu0 0
    %7074 = vmatpush2.bf16.msra.mxu0 0
    %7075 = vmatprep.subr.bf16.mxu0 0
    %7076 = vmatpush2.bf16.msra.mxu0 0
    %7077 = vmatprep.subr.bf16.mxu0 0
    %7078 = vmatpush2.bf16.msra.mxu0 0
    %7079 = vmatprep.subr.bf16.mxu0 0
    %7080 = vmatpush2.bf16.msra.mxu0 0
    %7081 = vmatprep.subr.bf16.mxu0 0
    %7082 = vmatpush2.bf16.msra.mxu0 0
    %7083 = vmatprep.mubr.bf16.mxu0 0
    %7084 = vmatmul.mubr.bf16.gmra.mxu0 %v6843
    %v7085 = vpop.f32.mrf.mxu0
    %v7086 = vadd.f32 %v6964, %v7085
    %v7087 = vpop.f32.mrf.mxu0
    %v7088 = vadd.f32 %v6968, %v7087
    %v7089 = vpop.f32.mrf.mxu0
    %v7090 = vadd.f32 %v6964, %v7089
    %v7091 = vpop.f32.mrf.mxu0
    %v7092 = vadd.f32 %v6968, %v7091
    %7093 = vmatprep.mubr.bf16.mxu0 0
    %7094 = vmatmul.mubr.bf16.gmra.mxu0 %v6844
    %v7095 = vpop.f32.mrf.mxu0
    %v7096 = vadd.f32 %v6964, %v7095
    %v7097 = vpop.f32.mrf.mxu0
    %v7098 = vadd.f32 %v6968, %v7097
    %v7099 = vpop.f32.mrf.mxu0
    %v7100 = vadd.f32 %v6964, %v7099
    %v7101 = vpop.f32.mrf.mxu0
    %v7102 = vadd.f32 %v6968, %v7101
    %7103 = vmatprep.mubr.bf16.mxu0 0
    %7104 = vmatmul.mubr.bf16.gmra.mxu0 %v6845
    %v7105 = vpop.f32.mrf.mxu0
    %v7106 = vadd.f32 %v6964, %v7105
    %v7107 = vpop.f32.mrf.mxu0
    %v7108 = vadd.f32 %v6968, %v7107
    %v7109 = vpop.f32.mrf.mxu0
    %v7110 = vadd.f32 %v6964, %v7109
    %v7111 = vpop.f32.mrf.mxu0
    %v7112 = vadd.f32 %v6968, %v7111
    %7113 = vmatprep.mubr.bf16.mxu0 0
    %7114 = vmatmul.mubr.bf16.gmra.mxu0 %v6846
    %v7115 = vpop.f32.mrf.mxu0
    %v7116 = vadd.f32 %v6964, %v7115
    %v7117 = vpop.f32.mrf.mxu0
    %v7118 = vadd.f32 %v6968, %v7117
    %v7119 = vpop.f32.mrf.mxu0
    %v7120 = vadd.f32 %v6964, %v7119
    %v7121 = vpop.f32.mrf.mxu0
    %v7122 = vadd.f32 %v6968, %v7121
    %7123 = vmatprep.mubr.bf16.mxu0 0
    %7124 = vmatmul.mubr.bf16.gmra.mxu0 %v6847
    %v7125 = vpop.f32.mrf.mxu0
    %v7126 = vadd.f32 %v6964, %v7125
    %v7127 = vpop.f32.mrf.mxu0
    %v7128 = vadd.f32 %v6968, %v7127
    %v7129 = vpop.f32.mrf.mxu0
    %v7130 = vadd.f32 %v6964, %v7129
    %v7131 = vpop.f32.mrf.mxu0
    %v7132 = vadd.f32 %v6968, %v7131
    %7133 = vmatprep.mubr.bf16.mxu0 0
    %7134 = vmatmul.mubr.bf16.gmra.mxu0 %v6848
    %v7135 = vpop.f32.mrf.mxu0
    %v7136 = vadd.f32 %v6964, %v7135
    %v7137 = vpop.f32.mrf.mxu0
    %v7138 = vadd.f32 %v6968, %v7137
    %v7139 = vpop.f32.mrf.mxu0
    %v7140 = vadd.f32 %v6964, %v7139
    %v7141 = vpop.f32.mrf.mxu0
    %v7142 = vadd.f32 %v6968, %v7141
    %7143 = vmatprep.mubr.bf16.mxu0 0
    %7144 = vmatmul.mubr.bf16.gmra.mxu0 %v6849
    %v7145 = vpop.f32.mrf.mxu0
    %v7146 = vadd.f32 %v6964, %v7145
    %v7147 = vpop.f32.mrf.mxu0
    %v7148 = vadd.f32 %v6968, %v7147
    %v7149 = vpop.f32.mrf.mxu0
    %v7150 = vadd.f32 %v6964, %v7149
    %v7151 = vpop.f32.mrf.mxu0
    %v7152 = vadd.f32 %v6968, %v7151
    %7153 = vmatprep.mubr.bf16.mxu0 0
    %7154 = vmatmul.mubr.bf16.gmra.mxu0 %v6850
    %v7155 = vpop.f32.mrf.mxu0
    %v7156 = vadd.f32 %v6964, %v7155
    %v7157 = vpop.f32.mrf.mxu0
    %v7158 = vadd.f32 %v6968, %v7157
    %v7159 = vpop.f32.mrf.mxu0
    %v7160 = vadd.f32 %v6964, %v7159
    %v7161 = vpop.f32.mrf.mxu0
    %v7162 = vadd.f32 %v6968, %v7161
    %7163 = vmatprep.mubr.bf16.mxu0 0
    %7164 = vmatmul.mubr.bf16.gmra.mxu0 %v6851
    %v7165 = vpop.f32.mrf.mxu0
    %v7166 = vadd.f32 %v6964, %v7165
    %v7167 = vpop.f32.mrf.mxu0
    %v7168 = vadd.f32 %v6968, %v7167
    %v7169 = vpop.f32.mrf.mxu0
    %v7170 = vadd.f32 %v6964, %v7169
    %v7171 = vpop.f32.mrf.mxu0
    %v7172 = vadd.f32 %v6968, %v7171
    %7173 = vmatprep.mubr.bf16.mxu0 0
    %7174 = vmatmul.mubr.bf16.gmra.mxu0 %v6852
    %v7175 = vpop.f32.mrf.mxu0
    %v7176 = vadd.f32 %v6964, %v7175
    %v7177 = vpop.f32.mrf.mxu0
    %v7178 = vadd.f32 %v6968, %v7177
    %v7179 = vpop.f32.mrf.mxu0
    %v7180 = vadd.f32 %v6964, %v7179
    %v7181 = vpop.f32.mrf.mxu0
    %v7182 = vadd.f32 %v6968, %v7181
    %7183 = vmatprep.mubr.bf16.mxu0 0
    %7184 = vmatmul.mubr.bf16.gmra.mxu0 %v6853
    %v7185 = vpop.f32.mrf.mxu0
    %v7186 = vadd.f32 %v6964, %v7185
    %v7187 = vpop.f32.mrf.mxu0
    %v7188 = vadd.f32 %v6968, %v7187
    %v7189 = vpop.f32.mrf.mxu0
    %v7190 = vadd.f32 %v6964, %v7189
    %v7191 = vpop.f32.mrf.mxu0
    %v7192 = vadd.f32 %v6968, %v7191
    %7193 = vmatprep.mubr.bf16.mxu0 0
    %7194 = vmatmul.mubr.bf16.gmra.mxu0 %v6854
    %v7195 = vpop.f32.mrf.mxu0
    %v7196 = vadd.f32 %v6964, %v7195
    %v7197 = vpop.f32.mrf.mxu0
    %v7198 = vadd.f32 %v6968, %v7197
    %v7199 = vpop.f32.mrf.mxu0
    %v7200 = vadd.f32 %v6964, %v7199
    %v7201 = vpop.f32.mrf.mxu0
    %v7202 = vadd.f32 %v6968, %v7201
    %7203 = vmatprep.mubr.bf16.mxu0 0
    %7204 = vmatmul.mubr.bf16.gmra.mxu0 %v6855
    %v7205 = vpop.f32.mrf.mxu0
    %v7206 = vadd.f32 %v6964, %v7205
    %v7207 = vpop.f32.mrf.mxu0
    %v7208 = vadd.f32 %v6968, %v7207
    %v7209 = vpop.f32.mrf.mxu0
    %v7210 = vadd.f32 %v6964, %v7209
    %v7211 = vpop.f32.mrf.mxu0
    %v7212 = vadd.f32 %v6968, %v7211
    %7213 = vmatprep.mubr.bf16.mxu0 0
    %7214 = vmatmul.mubr.bf16.gmra.mxu0 %v6856
    %v7215 = vpop.f32.mrf.mxu0
    %v7216 = vadd.f32 %v6964, %v7215
    %v7217 = vpop.f32.mrf.mxu0
    %v7218 = vadd.f32 %v6968, %v7217
    %v7219 = vpop.f32.mrf.mxu0
    %v7220 = vadd.f32 %v6964, %v7219
    %v7221 = vpop.f32.mrf.mxu0
    %v7222 = vadd.f32 %v6968, %v7221
    %7223 = vmatprep.mubr.bf16.mxu0 0
    %7224 = vmatmul.mubr.bf16.gmra.mxu0 %v6857
    %v7225 = vpop.f32.mrf.mxu0
    %v7226 = vadd.f32 %v6964, %v7225
    %v7227 = vpop.f32.mrf.mxu0
    %v7228 = vadd.f32 %v6968, %v7227
    %v7229 = vpop.f32.mrf.mxu0
    %v7230 = vadd.f32 %v6964, %v7229
    %v7231 = vpop.f32.mrf.mxu0
    %v7232 = vadd.f32 %v6968, %v7231
    %7233 = vmatprep.mubr.bf16.mxu0 0
    %7234 = vmatmul.mubr.bf16.gmra.mxu0 %v6858
    %v7235 = vpop.f32.mrf.mxu0
    %v7236 = vadd.f32 %v6964, %v7235
    %v7237 = vpop.f32.mrf.mxu0
    %v7238 = vadd.f32 %v6968, %v7237
    %v7239 = vpop.f32.mrf.mxu0
    %v7240 = vadd.f32 %v6964, %v7239
    %v7241 = vpop.f32.mrf.mxu0
    %v7242 = vadd.f32 %v6968, %v7241
    %7243 = vmatprep.mubr.bf16.mxu0 0
    %7244 = vmatmul.mubr.bf16.gmra.mxu0 %v6859
    %v7245 = vpop.f32.mrf.mxu0
    %v7246 = vadd.f32 %v6964, %v7245
    %v7247 = vpop.f32.mrf.mxu0
    %v7248 = vadd.f32 %v6968, %v7247
    %v7249 = vpop.f32.mrf.mxu0
    %v7250 = vadd.f32 %v6964, %v7249
    %v7251 = vpop.f32.mrf.mxu0
    %v7252 = vadd.f32 %v6968, %v7251
    %7253 = vmatprep.mubr.bf16.mxu0 0
    %7254 = vmatmul.mubr.bf16.gmra.mxu0 %v6860
    %v7255 = vpop.f32.mrf.mxu0
    %v7256 = vadd.f32 %v6964, %v7255
    %v7257 = vpop.f32.mrf.mxu0
    %v7258 = vadd.f32 %v6968, %v7257
    %v7259 = vpop.f32.mrf.mxu0
    %v7260 = vadd.f32 %v6964, %v7259
    %v7261 = vpop.f32.mrf.mxu0
    %v7262 = vadd.f32 %v6968, %v7261
    %7263 = vmatprep.mubr.bf16.mxu0 0
    %7264 = vmatmul.mubr.bf16.gmra.mxu0 %v6861
    %v7265 = vpop.f32.mrf.mxu0
    %v7266 = vadd.f32 %v6964, %v7265
    %v7267 = vpop.f32.mrf.mxu0
    %v7268 = vadd.f32 %v6968, %v7267
    %v7269 = vpop.f32.mrf.mxu0
    %v7270 = vadd.f32 %v6964, %v7269
    %v7271 = vpop.f32.mrf.mxu0
    %v7272 = vadd.f32 %v6968, %v7271
    %7273 = vmatprep.mubr.bf16.mxu0 0
    %7274 = vmatmul.mubr.bf16.gmra.mxu0 %v6862
    %v7275 = vpop.f32.mrf.mxu0
    %v7276 = vadd.f32 %v6964, %v7275
    %v7277 = vpop.f32.mrf.mxu0
    %v7278 = vadd.f32 %v6968, %v7277
    %v7279 = vpop.f32.mrf.mxu0
    %v7280 = vadd.f32 %v6964, %v7279
    %v7281 = vpop.f32.mrf.mxu0
    %v7282 = vadd.f32 %v6968, %v7281
    %7283 = vmatprep.mubr.bf16.mxu0 0
    %7284 = vmatmul.mubr.bf16.gmra.mxu0 %v6863
    %v7285 = vpop.f32.mrf.mxu0
    %v7286 = vadd.f32 %v6964, %v7285
    %v7287 = vpop.f32.mrf.mxu0
    %v7288 = vadd.f32 %v6968, %v7287
    %v7289 = vpop.f32.mrf.mxu0
    %v7290 = vadd.f32 %v6964, %v7289
    %v7291 = vpop.f32.mrf.mxu0
    %v7292 = vadd.f32 %v6968, %v7291
    %7293 = vmatprep.mubr.bf16.mxu0 0
    %7294 = vmatmul.mubr.bf16.gmra.mxu0 %v6864
    %v7295 = vpop.f32.mrf.mxu0
    %v7296 = vadd.f32 %v6964, %v7295
    %v7297 = vpop.f32.mrf.mxu0
    %v7298 = vadd.f32 %v6968, %v7297
    %v7299 = vpop.f32.mrf.mxu0
    %v7300 = vadd.f32 %v6964, %v7299
    %v7301 = vpop.f32.mrf.mxu0
    %v7302 = vadd.f32 %v6968, %v7301
    %7303 = vmatprep.mubr.bf16.mxu0 0
    %7304 = vmatmul.mubr.bf16.gmra.mxu0 %v6865
    %v7305 = vpop.f32.mrf.mxu0
    %v7306 = vadd.f32 %v6964, %v7305
    %v7307 = vpop.f32.mrf.mxu0
    %v7308 = vadd.f32 %v6968, %v7307
    %v7309 = vpop.f32.mrf.mxu0
    %v7310 = vadd.f32 %v6964, %v7309
    %v7311 = vpop.f32.mrf.mxu0
    %v7312 = vadd.f32 %v6968, %v7311
    %7313 = vmatprep.mubr.bf16.mxu0 0
    %7314 = vmatmul.mubr.bf16.gmra.mxu0 %v6866
    %v7315 = vpop.f32.mrf.mxu0
    %v7316 = vadd.f32 %v6964, %v7315
    %v7317 = vpop.f32.mrf.mxu0
    %v7318 = vadd.f32 %v6968, %v7317
    %v7319 = vpop.f32.mrf.mxu0
    %v7320 = vadd.f32 %v6964, %v7319
    %v7321 = vpop.f32.mrf.mxu0
    %v7322 = vadd.f32 %v6968, %v7321
    %7323 = vmatprep.mubr.bf16.mxu0 0
    %7324 = vmatmul.mubr.bf16.gmra.mxu0 %v6867
    %v7325 = vpop.f32.mrf.mxu0
    %v7326 = vadd.f32 %v6964, %v7325
    %v7327 = vpop.f32.mrf.mxu0
    %v7328 = vadd.f32 %v6968, %v7327
    %v7329 = vpop.f32.mrf.mxu0
    %v7330 = vadd.f32 %v6964, %v7329
    %v7331 = vpop.f32.mrf.mxu0
    %v7332 = vadd.f32 %v6968, %v7331
    %7333 = vmatprep.mubr.bf16.mxu0 0
    %7334 = vmatmul.mubr.bf16.gmra.mxu0 %v6868
    %v7335 = vpop.f32.mrf.mxu0
    %v7336 = vadd.f32 %v6964, %v7335
    %v7337 = vpop.f32.mrf.mxu0
    %v7338 = vadd.f32 %v6968, %v7337
    %v7339 = vpop.f32.mrf.mxu0
    %v7340 = vadd.f32 %v6964, %v7339
    %v7341 = vpop.f32.mrf.mxu0
    %v7342 = vadd.f32 %v6968, %v7341
    %7343 = vmatprep.mubr.bf16.mxu0 0
    %7344 = vmatmul.mubr.bf16.gmra.mxu0 %v6869
    %v7345 = vpop.f32.mrf.mxu0
    %v7346 = vadd.f32 %v6964, %v7345
    %v7347 = vpop.f32.mrf.mxu0
    %v7348 = vadd.f32 %v6968, %v7347
    %v7349 = vpop.f32.mrf.mxu0
    %v7350 = vadd.f32 %v6964, %v7349
    %v7351 = vpop.f32.mrf.mxu0
    %v7352 = vadd.f32 %v6968, %v7351
    %7353 = vmatprep.mubr.bf16.mxu0 0
    %7354 = vmatmul.mubr.bf16.gmra.mxu0 %v6870
    %v7355 = vpop.f32.mrf.mxu0
    %v7356 = vadd.f32 %v6964, %v7355
    %v7357 = vpop.f32.mrf.mxu0
    %v7358 = vadd.f32 %v6968, %v7357
    %v7359 = vpop.f32.mrf.mxu0
    %v7360 = vadd.f32 %v6964, %v7359
    %v7361 = vpop.f32.mrf.mxu0
    %v7362 = vadd.f32 %v6968, %v7361
    %7363 = vmatprep.mubr.bf16.mxu0 0
    %7364 = vmatmul.mubr.bf16.gmra.mxu0 %v6871
    %v7365 = vpop.f32.mrf.mxu0
    %v7366 = vadd.f32 %v6964, %v7365
    %v7367 = vpop.f32.mrf.mxu0
    %v7368 = vadd.f32 %v6968, %v7367
    %v7369 = vpop.f32.mrf.mxu0
    %v7370 = vadd.f32 %v6964, %v7369
    %v7371 = vpop.f32.mrf.mxu0
    %v7372 = vadd.f32 %v6968, %v7371
    %7373 = vmatprep.mubr.bf16.mxu0 0
    %7374 = vmatmul.mubr.bf16.gmra.mxu0 %v6872
    %v7375 = vpop.f32.mrf.mxu0
    %v7376 = vadd.f32 %v6964, %v7375
    %v7377 = vpop.f32.mrf.mxu0
    %v7378 = vadd.f32 %v6968, %v7377
    %v7379 = vpop.f32.mrf.mxu0
    %v7380 = vadd.f32 %v6964, %v7379
    %v7381 = vpop.f32.mrf.mxu0
    %v7382 = vadd.f32 %v6968, %v7381
    %7383 = vmatprep.mubr.bf16.mxu0 0
    %7384 = vmatmul.mubr.bf16.gmra.mxu0 %v6873
    %v7385 = vpop.f32.mrf.mxu0
    %v7386 = vadd.f32 %v6964, %v7385
    %v7387 = vpop.f32.mrf.mxu0
    %v7388 = vadd.f32 %v6968, %v7387
    %v7389 = vpop.f32.mrf.mxu0
    %v7390 = vadd.f32 %v6964, %v7389
    %v7391 = vpop.f32.mrf.mxu0
    %v7392 = vadd.f32 %v6968, %v7391
    %7393 = vmatprep.mubr.bf16.mxu0 0
    %7394 = vmatmul.mubr.bf16.gmra.mxu0 %v6874
    %v7395 = vpop.f32.mrf.mxu0
    %v7396 = vadd.f32 %v6964, %v7395
    %v7397 = vpop.f32.mrf.mxu0
    %v7398 = vadd.f32 %v6968, %v7397
    %v7399 = vpop.f32.mrf.mxu0
    %v7400 = vadd.f32 %v6964, %v7399
    %v7401 = vpop.f32.mrf.mxu0
    %v7402 = vadd.f32 %v6968, %v7401
    %7403 = vmatprep.mubr.bf16.mxu0 0
    %7404 = vmatmul.mubr.bf16.gmra.mxu0 %v6875
    %v7405 = vpop.f32.mrf.mxu0
    %v7406 = vadd.f32 %v6964, %v7405
    %v7407 = vpop.f32.mrf.mxu0
    %v7408 = vadd.f32 %v6968, %v7407
    %v7409 = vpop.f32.mrf.mxu0
    %v7410 = vadd.f32 %v6964, %v7409
    %v7411 = vpop.f32.mrf.mxu0
    %v7412 = vadd.f32 %v6968, %v7411
    %7413 = vmatprep.mubr.bf16.mxu0 0
    %7414 = vmatmul.mubr.bf16.gmra.mxu0 %v6876
    %v7415 = vpop.f32.mrf.mxu0
    %v7416 = vadd.f32 %v6964, %v7415
    %v7417 = vpop.f32.mrf.mxu0
    %v7418 = vadd.f32 %v6968, %v7417
    %v7419 = vpop.f32.mrf.mxu0
    %v7420 = vadd.f32 %v6964, %v7419
    %v7421 = vpop.f32.mrf.mxu0
    %v7422 = vadd.f32 %v6968, %v7421
    %7423 = vmatprep.mubr.bf16.mxu0 0
    %7424 = vmatmul.mubr.bf16.gmra.mxu0 %v6877
    %v7425 = vpop.f32.mrf.mxu0
    %v7426 = vadd.f32 %v6964, %v7425
    %v7427 = vpop.f32.mrf.mxu0
    %v7428 = vadd.f32 %v6968, %v7427
    %v7429 = vpop.f32.mrf.mxu0
    %v7430 = vadd.f32 %v6964, %v7429
    %v7431 = vpop.f32.mrf.mxu0
    %v7432 = vadd.f32 %v6968, %v7431
    %7433 = vmatprep.mubr.bf16.mxu0 0
    %7434 = vmatmul.mubr.bf16.gmra.mxu0 %v6878
    %v7435 = vpop.f32.mrf.mxu0
    %v7436 = vadd.f32 %v6964, %v7435
    %v7437 = vpop.f32.mrf.mxu0
    %v7438 = vadd.f32 %v6968, %v7437
    %v7439 = vpop.f32.mrf.mxu0
    %v7440 = vadd.f32 %v6964, %v7439
    %v7441 = vpop.f32.mrf.mxu0
    %v7442 = vadd.f32 %v6968, %v7441
    %7443 = vmatprep.mubr.bf16.mxu0 0
    %7444 = vmatmul.mubr.bf16.gmra.mxu0 %v6879
    %v7445 = vpop.f32.mrf.mxu0
    %v7446 = vadd.f32 %v6964, %v7445
    %v7447 = vpop.f32.mrf.mxu0
    %v7448 = vadd.f32 %v6968, %v7447
    %v7449 = vpop.f32.mrf.mxu0
    %v7450 = vadd.f32 %v6964, %v7449
    %v7451 = vpop.f32.mrf.mxu0
    %v7452 = vadd.f32 %v6968, %v7451
    %7453 = vmatprep.mubr.bf16.mxu0 0
    %7454 = vmatmul.mubr.bf16.gmra.mxu0 %v6880
    %v7455 = vpop.f32.mrf.mxu0
    %v7456 = vadd.f32 %v6964, %v7455
    %v7457 = vpop.f32.mrf.mxu0
    %v7458 = vadd.f32 %v6968, %v7457
    %v7459 = vpop.f32.mrf.mxu0
    %v7460 = vadd.f32 %v6964, %v7459
    %v7461 = vpop.f32.mrf.mxu0
    %v7462 = vadd.f32 %v6968, %v7461
    %7463 = vmatprep.mubr.bf16.mxu0 0
    %7464 = vmatmul.mubr.bf16.gmra.mxu0 %v6881
    %v7465 = vpop.f32.mrf.mxu0
    %v7466 = vadd.f32 %v6964, %v7465
    %v7467 = vpop.f32.mrf.mxu0
    %v7468 = vadd.f32 %v6968, %v7467
    %v7469 = vpop.f32.mrf.mxu0
    %v7470 = vadd.f32 %v6964, %v7469
    %v7471 = vpop.f32.mrf.mxu0
    %v7472 = vadd.f32 %v6968, %v7471
    %7473 = vmatprep.mubr.bf16.mxu0 0
    %7474 = vmatmul.mubr.bf16.gmra.mxu0 %v6882
    %v7475 = vpop.f32.mrf.mxu0
    %v7476 = vadd.f32 %v6964, %v7475
    %v7477 = vpop.f32.mrf.mxu0
    %v7478 = vadd.f32 %v6968, %v7477
    %v7479 = vpop.f32.mrf.mxu0
    %v7480 = vadd.f32 %v6964, %v7479
    %v7481 = vpop.f32.mrf.mxu0
    %v7482 = vadd.f32 %v6968, %v7481
    %7483 = vmatprep.mubr.bf16.mxu0 0
    %7484 = vmatmul.mubr.bf16.gmra.mxu0 %v6883
    %v7485 = vpop.f32.mrf.mxu0
    %v7486 = vadd.f32 %v6964, %v7485
    %v7487 = vpop.f32.mrf.mxu0
    %v7488 = vadd.f32 %v6968, %v7487
    %v7489 = vpop.f32.mrf.mxu0
    %v7490 = vadd.f32 %v6964, %v7489
    %v7491 = vpop.f32.mrf.mxu0
    %v7492 = vadd.f32 %v6968, %v7491
    %7493 = vmatprep.mubr.bf16.mxu0 0
    %7494 = vmatmul.mubr.bf16.gmra.mxu0 %v6884
    %v7495 = vpop.f32.mrf.mxu0
    %v7496 = vadd.f32 %v6964, %v7495
    %v7497 = vpop.f32.mrf.mxu0
    %v7498 = vadd.f32 %v6968, %v7497
    %v7499 = vpop.f32.mrf.mxu0
    %v7500 = vadd.f32 %v6964, %v7499
    %v7501 = vpop.f32.mrf.mxu0
    %v7502 = vadd.f32 %v6968, %v7501
    %7503 = vmatprep.mubr.bf16.mxu0 0
    %7504 = vmatmul.mubr.bf16.gmra.mxu0 %v6885
    %v7505 = vpop.f32.mrf.mxu0
    %v7506 = vadd.f32 %v6964, %v7505
    %v7507 = vpop.f32.mrf.mxu0
    %v7508 = vadd.f32 %v6968, %v7507
    %v7509 = vpop.f32.mrf.mxu0
    %v7510 = vadd.f32 %v6964, %v7509
    %v7511 = vpop.f32.mrf.mxu0
    %v7512 = vadd.f32 %v6968, %v7511
    %7513 = vmatprep.mubr.bf16.mxu0 0
    %7514 = vmatmul.mubr.bf16.gmra.mxu0 %v6886
    %v7515 = vpop.f32.mrf.mxu0
    %v7516 = vadd.f32 %v6964, %v7515
    %v7517 = vpop.f32.mrf.mxu0
    %v7518 = vadd.f32 %v6968, %v7517
    %v7519 = vpop.f32.mrf.mxu0
    %v7520 = vadd.f32 %v6964, %v7519
    %v7521 = vpop.f32.mrf.mxu0
    %v7522 = vadd.f32 %v6968, %v7521
    %7523 = vmatprep.mubr.bf16.mxu0 0
    %7524 = vmatmul.mubr.bf16.gmra.mxu0 %v6887
    %v7525 = vpop.f32.mrf.mxu0
    %v7526 = vadd.f32 %v6964, %v7525
    %v7527 = vpop.f32.mrf.mxu0
    %v7528 = vadd.f32 %v6968, %v7527
    %v7529 = vpop.f32.mrf.mxu0
    %v7530 = vadd.f32 %v6964, %v7529
    %v7531 = vpop.f32.mrf.mxu0
    %v7532 = vadd.f32 %v6968, %v7531
    %7533 = vmatprep.mubr.bf16.mxu0 0
    %7534 = vmatmul.mubr.bf16.gmra.mxu0 %v6888
    %v7535 = vpop.f32.mrf.mxu0
    %v7536 = vadd.f32 %v6964, %v7535
    %v7537 = vpop.f32.mrf.mxu0
    %v7538 = vadd.f32 %v6968, %v7537
    %v7539 = vpop.f32.mrf.mxu0
    %v7540 = vadd.f32 %v6964, %v7539
    %v7541 = vpop.f32.mrf.mxu0
    %v7542 = vadd.f32 %v6968, %v7541
    %7543 = vmatprep.mubr.bf16.mxu0 0
    %7544 = vmatmul.mubr.bf16.gmra.mxu0 %v6889
    %v7545 = vpop.f32.mrf.mxu0
    %v7546 = vadd.f32 %v6964, %v7545
    %v7547 = vpop.f32.mrf.mxu0
    %v7548 = vadd.f32 %v6968, %v7547
    %v7549 = vpop.f32.mrf.mxu0
    %v7550 = vadd.f32 %v6964, %v7549
    %v7551 = vpop.f32.mrf.mxu0
    %v7552 = vadd.f32 %v6968, %v7551
    %7553 = vmatprep.mubr.bf16.mxu0 0
    %7554 = vmatmul.mubr.bf16.gmra.mxu0 %v6890
    %v7555 = vpop.f32.mrf.mxu0
    %v7556 = vadd.f32 %v6964, %v7555
    %v7557 = vpop.f32.mrf.mxu0
    %v7558 = vadd.f32 %v6968, %v7557
    %v7559 = vpop.f32.mrf.mxu0
    %v7560 = vadd.f32 %v6964, %v7559
    %v7561 = vpop.f32.mrf.mxu0
    %v7562 = vadd.f32 %v6968, %v7561
    %7563 = vmatprep.mubr.bf16.mxu0 0
    %7564 = vmatmul.mubr.bf16.gmra.mxu0 %v6891
    %v7565 = vpop.f32.mrf.mxu0
    %v7566 = vadd.f32 %v6964, %v7565
    %v7567 = vpop.f32.mrf.mxu0
    %v7568 = vadd.f32 %v6968, %v7567
    %v7569 = vpop.f32.mrf.mxu0
    %v7570 = vadd.f32 %v6964, %v7569
    %v7571 = vpop.f32.mrf.mxu0
    %v7572 = vadd.f32 %v6968, %v7571
    %7573 = vmatprep.mubr.bf16.mxu0 0
    %7574 = vmatmul.mubr.bf16.gmra.mxu0 %v6892
    %v7575 = vpop.f32.mrf.mxu0
    %v7576 = vadd.f32 %v6964, %v7575
    %v7577 = vpop.f32.mrf.mxu0
    %v7578 = vadd.f32 %v6968, %v7577
    %v7579 = vpop.f32.mrf.mxu0
    %v7580 = vadd.f32 %v6964, %v7579
    %v7581 = vpop.f32.mrf.mxu0
    %v7582 = vadd.f32 %v6968, %v7581
    %7583 = vmatprep.mubr.bf16.mxu0 0
    %7584 = vmatmul.mubr.bf16.gmra.mxu0 %v6893
    %v7585 = vpop.f32.mrf.mxu0
    %v7586 = vadd.f32 %v6964, %v7585
    %v7587 = vpop.f32.mrf.mxu0
    %v7588 = vadd.f32 %v6968, %v7587
    %v7589 = vpop.f32.mrf.mxu0
    %v7590 = vadd.f32 %v6964, %v7589
    %v7591 = vpop.f32.mrf.mxu0
    %v7592 = vadd.f32 %v6968, %v7591
    %7593 = vmatprep.mubr.bf16.mxu0 0
    %7594 = vmatmul.mubr.bf16.gmra.mxu0 %v6894
    %v7595 = vpop.f32.mrf.mxu0
    %v7596 = vadd.f32 %v6964, %v7595
    %v7597 = vpop.f32.mrf.mxu0
    %v7598 = vadd.f32 %v6968, %v7597
    %v7599 = vpop.f32.mrf.mxu0
    %v7600 = vadd.f32 %v6964, %v7599
    %v7601 = vpop.f32.mrf.mxu0
    %v7602 = vadd.f32 %v6968, %v7601
    %7603 = vmatprep.mubr.bf16.mxu0 0
    %7604 = vmatmul.mubr.bf16.gmra.mxu0 %v6895
    %v7605 = vpop.f32.mrf.mxu0
    %v7606 = vadd.f32 %v6964, %v7605
    %v7607 = vpop.f32.mrf.mxu0
    %v7608 = vadd.f32 %v6968, %v7607
    %v7609 = vpop.f32.mrf.mxu0
    %v7610 = vadd.f32 %v6964, %v7609
    %v7611 = vpop.f32.mrf.mxu0
    %v7612 = vadd.f32 %v6968, %v7611
    %7613 = vmatprep.mubr.bf16.mxu0 0
    %7614 = vmatmul.mubr.bf16.gmra.mxu0 %v6896
    %v7615 = vpop.f32.mrf.mxu0
    %v7616 = vadd.f32 %v6964, %v7615
    %v7617 = vpop.f32.mrf.mxu0
    %v7618 = vadd.f32 %v6968, %v7617
    %v7619 = vpop.f32.mrf.mxu0
    %v7620 = vadd.f32 %v6964, %v7619
    %v7621 = vpop.f32.mrf.mxu0
    %v7622 = vadd.f32 %v6968, %v7621
    %7623 = vmatprep.mubr.bf16.mxu0 0
    %7624 = vmatmul.mubr.bf16.gmra.mxu0 %v6897
    %v7625 = vpop.f32.mrf.mxu0
    %v7626 = vadd.f32 %v6964, %v7625
    %v7627 = vpop.f32.mrf.mxu0
    %v7628 = vadd.f32 %v6968, %v7627
    %v7629 = vpop.f32.mrf.mxu0
    %v7630 = vadd.f32 %v6964, %v7629
    %v7631 = vpop.f32.mrf.mxu0
    %v7632 = vadd.f32 %v6968, %v7631
    %7633 = vmatprep.mubr.bf16.mxu0 0
    %7634 = vmatmul.mubr.bf16.gmra.mxu0 %v6898
    %v7635 = vpop.f32.mrf.mxu0
    %v7636 = vadd.f32 %v6964, %v7635
    %v7637 = vpop.f32.mrf.mxu0
    %v7638 = vadd.f32 %v6968, %v7637
    %v7639 = vpop.f32.mrf.mxu0
    %v7640 = vadd.f32 %v6964, %v7639
    %v7641 = vpop.f32.mrf.mxu0
    %v7642 = vadd.f32 %v6968, %v7641
    %7643 = vmatprep.mubr.bf16.mxu0 0
    %7644 = vmatmul.mubr.bf16.gmra.mxu0 %v6899
    %v7645 = vpop.f32.mrf.mxu0
    %v7646 = vadd.f32 %v6964, %v7645
    %v7647 = vpop.f32.mrf.mxu0
    %v7648 = vadd.f32 %v6968, %v7647
    %v7649 = vpop.f32.mrf.mxu0
    %v7650 = vadd.f32 %v6964, %v7649
    %v7651 = vpop.f32.mrf.mxu0
    %v7652 = vadd.f32 %v6968, %v7651
    %7653 = vmatprep.mubr.bf16.mxu0 0
    %7654 = vmatmul.mubr.bf16.gmra.mxu0 %v6900
    %v7655 = vpop.f32.mrf.mxu0
    %v7656 = vadd.f32 %v6964, %v7655
    %v7657 = vpop.f32.mrf.mxu0
    %v7658 = vadd.f32 %v6968, %v7657
    %v7659 = vpop.f32.mrf.mxu0
    %v7660 = vadd.f32 %v6964, %v7659
    %v7661 = vpop.f32.mrf.mxu0
    %v7662 = vadd.f32 %v6968, %v7661
    %7663 = vmatprep.mubr.bf16.mxu0 0
    %7664 = vmatmul.mubr.bf16.gmra.mxu0 %v6901
    %v7665 = vpop.f32.mrf.mxu0
    %v7666 = vadd.f32 %v6964, %v7665
    %v7667 = vpop.f32.mrf.mxu0
    %v7668 = vadd.f32 %v6968, %v7667
    %v7669 = vpop.f32.mrf.mxu0
    %v7670 = vadd.f32 %v6964, %v7669
    %v7671 = vpop.f32.mrf.mxu0
    %v7672 = vadd.f32 %v6968, %v7671
    %7673 = vmatprep.mubr.bf16.mxu0 0
    %7674 = vmatmul.mubr.bf16.gmra.mxu0 %v6902
    %v7675 = vpop.f32.mrf.mxu0
    %v7676 = vadd.f32 %v6964, %v7675
    %v7677 = vpop.f32.mrf.mxu0
    %v7678 = vadd.f32 %v6968, %v7677
    %v7679 = vpop.f32.mrf.mxu0
    %v7680 = vadd.f32 %v6964, %v7679
    %v7681 = vpop.f32.mrf.mxu0
    %v7682 = vadd.f32 %v6968, %v7681
    %7683 = vmatprep.mubr.bf16.mxu0 0
    %7684 = vmatmul.mubr.bf16.gmra.mxu0 %v6903
    %v7685 = vpop.f32.mrf.mxu0
    %v7686 = vadd.f32 %v6964, %v7685
    %v7687 = vpop.f32.mrf.mxu0
    %v7688 = vadd.f32 %v6968, %v7687
    %v7689 = vpop.f32.mrf.mxu0
    %v7690 = vadd.f32 %v6964, %v7689
    %v7691 = vpop.f32.mrf.mxu0
    %v7692 = vadd.f32 %v6968, %v7691
    %7693 = vmatprep.mubr.bf16.mxu0 0
    %7694 = vmatmul.mubr.bf16.gmra.mxu0 %v6904
    %v7695 = vpop.f32.mrf.mxu0
    %v7696 = vadd.f32 %v6964, %v7695
    %v7697 = vpop.f32.mrf.mxu0
    %v7698 = vadd.f32 %v6968, %v7697
    %v7699 = vpop.f32.mrf.mxu0
    %v7700 = vadd.f32 %v6964, %v7699
    %v7701 = vpop.f32.mrf.mxu0
    %v7702 = vadd.f32 %v6968, %v7701
    %7703 = vmatprep.mubr.bf16.mxu0 0
    %7704 = vmatmul.mubr.bf16.gmra.mxu0 %v6905
    %v7705 = vpop.f32.mrf.mxu0
    %v7706 = vadd.f32 %v6964, %v7705
    %v7707 = vpop.f32.mrf.mxu0
    %v7708 = vadd.f32 %v6968, %v7707
    %v7709 = vpop.f32.mrf.mxu0
    %v7710 = vadd.f32 %v6964, %v7709
    %v7711 = vpop.f32.mrf.mxu0
    %v7712 = vadd.f32 %v6968, %v7711
    %7713 = vmatprep.mubr.bf16.mxu0 0
    %7714 = vmatmul.mubr.bf16.gmra.mxu0 %v6906
    %v7715 = vpop.f32.mrf.mxu0
    %v7716 = vadd.f32 %v6964, %v7715
    %v7717 = vpop.f32.mrf.mxu0
    %v7718 = vadd.f32 %v6968, %v7717
    %v7719 = vpop.f32.mrf.mxu0
    %v7720 = vadd.f32 %v6964, %v7719
    %v7721 = vpop.f32.mrf.mxu0
    %v7722 = vadd.f32 %v6968, %v7721
    %7723 = vmatprep.mubr.bf16.mxu0 0
    %7724 = vmatmul.mubr.bf16.gmra.mxu0 %v6907
    %v7725 = vpop.f32.mrf.mxu0
    %v7726 = vadd.f32 %v6964, %v7725
    %v7727 = vpop.f32.mrf.mxu0
    %v7728 = vadd.f32 %v6968, %v7727
    %v7729 = vpop.f32.mrf.mxu0
    %v7730 = vadd.f32 %v6964, %v7729
    %v7731 = vpop.f32.mrf.mxu0
    %v7732 = vadd.f32 %v6968, %v7731
    %7733 = vmatprep.mubr.bf16.mxu0 0
    %7734 = vmatmul.mubr.bf16.gmra.mxu0 %v6908
    %v7735 = vpop.f32.mrf.mxu0
    %v7736 = vadd.f32 %v6964, %v7735
    %v7737 = vpop.f32.mrf.mxu0
    %v7738 = vadd.f32 %v6968, %v7737
    %v7739 = vpop.f32.mrf.mxu0
    %v7740 = vadd.f32 %v6964, %v7739
    %v7741 = vpop.f32.mrf.mxu0
    %v7742 = vadd.f32 %v6968, %v7741
    %7743 = vmatprep.mubr.bf16.mxu0 0
    %7744 = vmatmul.mubr.bf16.gmra.mxu0 %v6909
    %v7745 = vpop.f32.mrf.mxu0
    %v7746 = vadd.f32 %v6964, %v7745
    %v7747 = vpop.f32.mrf.mxu0
    %v7748 = vadd.f32 %v6968, %v7747
    %v7749 = vpop.f32.mrf.mxu0
    %v7750 = vadd.f32 %v6964, %v7749
    %v7751 = vpop.f32.mrf.mxu0
    %v7752 = vadd.f32 %v6968, %v7751
    %7753 = vmatprep.mubr.bf16.mxu0 0
    %7754 = vmatmul.mubr.bf16.gmra.mxu0 %v6910
    %v7755 = vpop.f32.mrf.mxu0
    %v7756 = vadd.f32 %v6964, %v7755
    %v7757 = vpop.f32.mrf.mxu0
    %v7758 = vadd.f32 %v6968, %v7757
    %v7759 = vpop.f32.mrf.mxu0
    %v7760 = vadd.f32 %v6964, %v7759
    %v7761 = vpop.f32.mrf.mxu0
    %v7762 = vadd.f32 %v6968, %v7761
    %7763 = vmatprep.mubr.bf16.mxu0 0
    %7764 = vmatmul.mubr.bf16.gmra.mxu0 %v6911
    %v7765 = vpop.f32.mrf.mxu0
    %v7766 = vadd.f32 %v6964, %v7765
    %v7767 = vpop.f32.mrf.mxu0
    %v7768 = vadd.f32 %v6968, %v7767
    %v7769 = vpop.f32.mrf.mxu0
    %v7770 = vadd.f32 %v6964, %v7769
    %v7771 = vpop.f32.mrf.mxu0
    %v7772 = vadd.f32 %v6968, %v7771
    %7773 = vmatprep.mubr.bf16.mxu0 0
    %7774 = vmatmul.mubr.bf16.gmra.mxu0 %v6912
    %v7775 = vpop.f32.mrf.mxu0
    %v7776 = vadd.f32 %v6964, %v7775
    %v7777 = vpop.f32.mrf.mxu0
    %v7778 = vadd.f32 %v6968, %v7777
    %v7779 = vpop.f32.mrf.mxu0
    %v7780 = vadd.f32 %v6964, %v7779
    %v7781 = vpop.f32.mrf.mxu0
    %v7782 = vadd.f32 %v6968, %v7781
    %7783 = vmatprep.mubr.bf16.mxu0 0
    %7784 = vmatmul.mubr.bf16.gmra.mxu0 %v6913
    %v7785 = vpop.f32.mrf.mxu0
    %v7786 = vadd.f32 %v6964, %v7785
    %v7787 = vpop.f32.mrf.mxu0
    %v7788 = vadd.f32 %v6968, %v7787
    %v7789 = vpop.f32.mrf.mxu0
    %v7790 = vadd.f32 %v6964, %v7789
    %v7791 = vpop.f32.mrf.mxu0
    %v7792 = vadd.f32 %v6968, %v7791
    %7793 = vmatprep.mubr.bf16.mxu0 0
    %7794 = vmatmul.mubr.bf16.gmra.mxu0 %v6914
    %v7795 = vpop.f32.mrf.mxu0
    %v7796 = vadd.f32 %v6964, %v7795
    %v7797 = vpop.f32.mrf.mxu0
    %v7798 = vadd.f32 %v6968, %v7797
    %v7799 = vpop.f32.mrf.mxu0
    %v7800 = vadd.f32 %v6964, %v7799
    %v7801 = vpop.f32.mrf.mxu0
    %v7802 = vadd.f32 %v6968, %v7801
    %7803 = vmatprep.mubr.bf16.mxu0 0
    %7804 = vmatmul.mubr.bf16.gmra.mxu0 %v6915
    %v7805 = vpop.f32.mrf.mxu0
    %v7806 = vadd.f32 %v6964, %v7805
    %v7807 = vpop.f32.mrf.mxu0
    %v7808 = vadd.f32 %v6968, %v7807
    %v7809 = vpop.f32.mrf.mxu0
    %v7810 = vadd.f32 %v6964, %v7809
    %v7811 = vpop.f32.mrf.mxu0
    %v7812 = vadd.f32 %v6968, %v7811
    %7813 = vmatprep.mubr.bf16.mxu0 0
    %7814 = vmatmul.mubr.bf16.gmra.mxu0 %v6916
    %v7815 = vpop.f32.mrf.mxu0
    %v7816 = vadd.f32 %v6964, %v7815
    %v7817 = vpop.f32.mrf.mxu0
    %v7818 = vadd.f32 %v6968, %v7817
    %v7819 = vpop.f32.mrf.mxu0
    %v7820 = vadd.f32 %v6964, %v7819
    %v7821 = vpop.f32.mrf.mxu0
    %v7822 = vadd.f32 %v6968, %v7821
    %7823 = vmatprep.mubr.bf16.mxu0 0
    %7824 = vmatmul.mubr.bf16.gmra.mxu0 %v6917
    %v7825 = vpop.f32.mrf.mxu0
    %v7826 = vadd.f32 %v6964, %v7825
    %v7827 = vpop.f32.mrf.mxu0
    %v7828 = vadd.f32 %v6968, %v7827
    %v7829 = vpop.f32.mrf.mxu0
    %v7830 = vadd.f32 %v6964, %v7829
    %v7831 = vpop.f32.mrf.mxu0
    %v7832 = vadd.f32 %v6968, %v7831
    %7833 = vmatprep.mubr.bf16.mxu0 0
    %7834 = vmatmul.mubr.bf16.gmra.mxu0 %v6918
    %v7835 = vpop.f32.mrf.mxu0
    %v7836 = vadd.f32 %v6964, %v7835
    %v7837 = vpop.f32.mrf.mxu0
    %v7838 = vadd.f32 %v6968, %v7837
    %v7839 = vpop.f32.mrf.mxu0
    %v7840 = vadd.f32 %v6964, %v7839
    %v7841 = vpop.f32.mrf.mxu0
    %v7842 = vadd.f32 %v6968, %v7841
    %7843 = vmatprep.mubr.bf16.mxu0 0
    %7844 = vmatmul.mubr.bf16.gmra.mxu0 %v6919
    %v7845 = vpop.f32.mrf.mxu0
    %v7846 = vadd.f32 %v6964, %v7845
    %v7847 = vpop.f32.mrf.mxu0
    %v7848 = vadd.f32 %v6968, %v7847
    %v7849 = vpop.f32.mrf.mxu0
    %v7850 = vadd.f32 %v6964, %v7849
    %v7851 = vpop.f32.mrf.mxu0
    %v7852 = vadd.f32 %v6968, %v7851
    %7853 = vmatprep.mubr.bf16.mxu0 0
    %7854 = vmatmul.mubr.bf16.gmra.mxu0 %v6920
    %v7855 = vpop.f32.mrf.mxu0
    %v7856 = vadd.f32 %v6964, %v7855
    %v7857 = vpop.f32.mrf.mxu0
    %v7858 = vadd.f32 %v6968, %v7857
    %v7859 = vpop.f32.mrf.mxu0
    %v7860 = vadd.f32 %v6964, %v7859
    %v7861 = vpop.f32.mrf.mxu0
    %v7862 = vadd.f32 %v6968, %v7861
    %7863 = vmatprep.mubr.bf16.mxu0 0
    %7864 = vmatmul.mubr.bf16.gmra.mxu0 %v6921
    %v7865 = vpop.f32.mrf.mxu0
    %v7866 = vadd.f32 %v6964, %v7865
    %v7867 = vpop.f32.mrf.mxu0
    %v7868 = vadd.f32 %v6968, %v7867
    %v7869 = vpop.f32.mrf.mxu0
    %v7870 = vadd.f32 %v6964, %v7869
    %v7871 = vpop.f32.mrf.mxu0
    %v7872 = vadd.f32 %v6968, %v7871
    %7873 = vmatprep.mubr.bf16.mxu0 0
    %7874 = vmatmul.mubr.bf16.gmra.mxu0 %v6922
    %v7875 = vpop.f32.mrf.mxu0
    %v7876 = vadd.f32 %v6964, %v7875
    %v7877 = vpop.f32.mrf.mxu0
    %v7878 = vadd.f32 %v6968, %v7877
    %v7879 = vpop.f32.mrf.mxu0
    %v7880 = vadd.f32 %v6964, %v7879
    %v7881 = vpop.f32.mrf.mxu0
    %v7882 = vadd.f32 %v6968, %v7881
    %7883 = vmatprep.mubr.bf16.mxu0 0
    %7884 = vmatmul.mubr.bf16.gmra.mxu0 %v6923
    %v7885 = vpop.f32.mrf.mxu0
    %v7886 = vadd.f32 %v6964, %v7885
    %v7887 = vpop.f32.mrf.mxu0
    %v7888 = vadd.f32 %v6968, %v7887
    %v7889 = vpop.f32.mrf.mxu0
    %v7890 = vadd.f32 %v6964, %v7889
    %v7891 = vpop.f32.mrf.mxu0
    %v7892 = vadd.f32 %v6968, %v7891
    %7893 = vmatprep.mubr.bf16.mxu0 0
    %7894 = vmatmul.mubr.bf16.gmra.mxu0 %v6924
    %v7895 = vpop.f32.mrf.mxu0
    %v7896 = vadd.f32 %v6964, %v7895
    %v7897 = vpop.f32.mrf.mxu0
    %v7898 = vadd.f32 %v6968, %v7897
    %v7899 = vpop.f32.mrf.mxu0
    %v7900 = vadd.f32 %v6964, %v7899
    %v7901 = vpop.f32.mrf.mxu0
    %v7902 = vadd.f32 %v6968, %v7901
    %7903 = vmatprep.mubr.bf16.mxu0 0
    %7904 = vmatmul.mubr.bf16.gmra.mxu0 %v6925
    %v7905 = vpop.f32.mrf.mxu0
    %v7906 = vadd.f32 %v6964, %v7905
    %v7907 = vpop.f32.mrf.mxu0
    %v7908 = vadd.f32 %v6968, %v7907
    %v7909 = vpop.f32.mrf.mxu0
    %v7910 = vadd.f32 %v6964, %v7909
    %v7911 = vpop.f32.mrf.mxu0
    %v7912 = vadd.f32 %v6968, %v7911
    %7913 = vmatprep.mubr.bf16.mxu0 0
    %7914 = vmatmul.mubr.bf16.gmra.mxu0 %v6926
    %v7915 = vpop.f32.mrf.mxu0
    %v7916 = vadd.f32 %v6964, %v7915
    %v7917 = vpop.f32.mrf.mxu0
    %v7918 = vadd.f32 %v6968, %v7917
    %v7919 = vpop.f32.mrf.mxu0
    %v7920 = vadd.f32 %v6964, %v7919
    %v7921 = vpop.f32.mrf.mxu0
    %v7922 = vadd.f32 %v6968, %v7921
    %7923 = vmatprep.mubr.bf16.mxu0 0
    %7924 = vmatmul.mubr.bf16.gmra.mxu0 %v6927
    %v7925 = vpop.f32.mrf.mxu0
    %v7926 = vadd.f32 %v6964, %v7925
    %v7927 = vpop.f32.mrf.mxu0
    %v7928 = vadd.f32 %v6968, %v7927
    %v7929 = vpop.f32.mrf.mxu0
    %v7930 = vadd.f32 %v6964, %v7929
    %v7931 = vpop.f32.mrf.mxu0
    %v7932 = vadd.f32 %v6968, %v7931
    %7933 = vmatprep.mubr.bf16.mxu0 0
    %7934 = vmatmul.mubr.bf16.gmra.mxu0 %v6928
    %v7935 = vpop.f32.mrf.mxu0
    %v7936 = vadd.f32 %v6964, %v7935
    %v7937 = vpop.f32.mrf.mxu0
    %v7938 = vadd.f32 %v6968, %v7937
    %v7939 = vpop.f32.mrf.mxu0
    %v7940 = vadd.f32 %v6964, %v7939
    %v7941 = vpop.f32.mrf.mxu0
    %v7942 = vadd.f32 %v6968, %v7941
    %7943 = vmatprep.mubr.bf16.mxu0 0
    %7944 = vmatmul.mubr.bf16.gmra.mxu0 %v6929
    %v7945 = vpop.f32.mrf.mxu0
    %v7946 = vadd.f32 %v6964, %v7945
    %v7947 = vpop.f32.mrf.mxu0
    %v7948 = vadd.f32 %v6968, %v7947
    %v7949 = vpop.f32.mrf.mxu0
    %v7950 = vadd.f32 %v6964, %v7949
    %v7951 = vpop.f32.mrf.mxu0
    %v7952 = vadd.f32 %v6968, %v7951
    %7953 = vmatprep.mubr.bf16.mxu0 0
    %7954 = vmatmul.mubr.bf16.gmra.mxu0 %v6930
    %v7955 = vpop.f32.mrf.mxu0
    %v7956 = vadd.f32 %v6964, %v7955
    %v7957 = vpop.f32.mrf.mxu0
    %v7958 = vadd.f32 %v6968, %v7957
    %v7959 = vpop.f32.mrf.mxu0
    %v7960 = vadd.f32 %v6964, %v7959
    %v7961 = vpop.f32.mrf.mxu0
    %v7962 = vadd.f32 %v6968, %v7961
    %7963 = vmatprep.mubr.bf16.mxu0 0
    %7964 = vmatmul.mubr.bf16.gmra.mxu0 %v6931
    %v7965 = vpop.f32.mrf.mxu0
    %v7966 = vadd.f32 %v6964, %v7965
    %v7967 = vpop.f32.mrf.mxu0
    %v7968 = vadd.f32 %v6968, %v7967
    %v7969 = vpop.f32.mrf.mxu0
    %v7970 = vadd.f32 %v6964, %v7969
    %v7971 = vpop.f32.mrf.mxu0
    %v7972 = vadd.f32 %v6968, %v7971
    %7973 = vmatprep.mubr.bf16.mxu0 0
    %7974 = vmatmul.mubr.bf16.gmra.mxu0 %v6932
    %v7975 = vpop.f32.mrf.mxu0
    %v7976 = vadd.f32 %v6964, %v7975
    %v7977 = vpop.f32.mrf.mxu0
    %v7978 = vadd.f32 %v6968, %v7977
    %v7979 = vpop.f32.mrf.mxu0
    %v7980 = vadd.f32 %v6964, %v7979
    %v7981 = vpop.f32.mrf.mxu0
    %v7982 = vadd.f32 %v6968, %v7981
    %7983 = vmatprep.mubr.bf16.mxu0 0
    %7984 = vmatmul.mubr.bf16.gmra.mxu0 %v6933
    %v7985 = vpop.f32.mrf.mxu0
    %v7986 = vadd.f32 %v6964, %v7985
    %v7987 = vpop.f32.mrf.mxu0
    %v7988 = vadd.f32 %v6968, %v7987
    %v7989 = vpop.f32.mrf.mxu0
    %v7990 = vadd.f32 %v6964, %v7989
    %v7991 = vpop.f32.mrf.mxu0
    %v7992 = vadd.f32 %v6968, %v7991
    %7993 = vmatprep.mubr.bf16.mxu0 0
    %7994 = vmatmul.mubr.bf16.gmra.mxu0 %v6934
    %v7995 = vpop.f32.mrf.mxu0
    %v7996 = vadd.f32 %v6964, %v7995
    %v7997 = vpop.f32.mrf.mxu0
    %v7998 = vadd.f32 %v6968, %v7997
    %v7999 = vpop.f32.mrf.mxu0
    %v8000 = vadd.f32 %v6964, %v7999
    %v8001 = vpop.f32.mrf.mxu0
    %v8002 = vadd.f32 %v6968, %v8001
    %8003 = vmatprep.mubr.bf16.mxu0 0
    %8004 = vmatmul.mubr.bf16.gmra.mxu0 %v6935
    %v8005 = vpop.f32.mrf.mxu0
    %v8006 = vadd.f32 %v6964, %v8005
    %v8007 = vpop.f32.mrf.mxu0
    %v8008 = vadd.f32 %v6968, %v8007
    %v8009 = vpop.f32.mrf.mxu0
    %v8010 = vadd.f32 %v6964, %v8009
    %v8011 = vpop.f32.mrf.mxu0
    %v8012 = vadd.f32 %v6968, %v8011
    %8013 = vmatprep.mubr.bf16.mxu0 0
    %8014 = vmatmul.mubr.bf16.gmra.mxu0 %v6936
    %v8015 = vpop.f32.mrf.mxu0
    %v8016 = vadd.f32 %v6964, %v8015
    %v8017 = vpop.f32.mrf.mxu0
    %v8018 = vadd.f32 %v6968, %v8017
    %v8019 = vpop.f32.mrf.mxu0
    %v8020 = vadd.f32 %v6964, %v8019
    %v8021 = vpop.f32.mrf.mxu0
    %v8022 = vadd.f32 %v6968, %v8021
    %8023 = vmatprep.mubr.bf16.mxu0 0
    %8024 = vmatmul.mubr.bf16.gmra.mxu0 %v6937
    %v8025 = vpop.f32.mrf.mxu0
    %v8026 = vadd.f32 %v6964, %v8025
    %v8027 = vpop.f32.mrf.mxu0
    %v8028 = vadd.f32 %v6968, %v8027
    %v8029 = vpop.f32.mrf.mxu0
    %v8030 = vadd.f32 %v6964, %v8029
    %v8031 = vpop.f32.mrf.mxu0
    %v8032 = vadd.f32 %v6968, %v8031
    %8033 = vmatprep.mubr.bf16.mxu0 0
    %8034 = vmatmul.mubr.bf16.gmra.mxu0 %v6938
    %v8035 = vpop.f32.mrf.mxu0
    %v8036 = vadd.f32 %v6964, %v8035
    %v8037 = vpop.f32.mrf.mxu0
    %v8038 = vadd.f32 %v6968, %v8037
    %v8039 = vpop.f32.mrf.mxu0
    %v8040 = vadd.f32 %v6964, %v8039
    %v8041 = vpop.f32.mrf.mxu0
    %v8042 = vadd.f32 %v6968, %v8041
    %8043 = vmatprep.mubr.bf16.mxu0 0
    %8044 = vmatmul.mubr.bf16.gmra.mxu0 %v6939
    %v8045 = vpop.f32.mrf.mxu0
    %v8046 = vadd.f32 %v6964, %v8045
    %v8047 = vpop.f32.mrf.mxu0
    %v8048 = vadd.f32 %v6968, %v8047
    %v8049 = vpop.f32.mrf.mxu0
    %v8050 = vadd.f32 %v6964, %v8049
    %v8051 = vpop.f32.mrf.mxu0
    %v8052 = vadd.f32 %v6968, %v8051
    %8053 = vmatprep.mubr.bf16.mxu0 0
    %8054 = vmatmul.mubr.bf16.gmra.mxu0 %v6940
    %v8055 = vpop.f32.mrf.mxu0
    %v8056 = vadd.f32 %v6964, %v8055
    %v8057 = vpop.f32.mrf.mxu0
    %v8058 = vadd.f32 %v6968, %v8057
    %v8059 = vpop.f32.mrf.mxu0
    %v8060 = vadd.f32 %v6964, %v8059
    %v8061 = vpop.f32.mrf.mxu0
    %v8062 = vadd.f32 %v6968, %v8061
    %8063 = vmatprep.mubr.bf16.mxu0 0
    %8064 = vmatmul.mubr.bf16.gmra.mxu0 %v6941
    %v8065 = vpop.f32.mrf.mxu0
    %v8066 = vadd.f32 %v6964, %v8065
    %v8067 = vpop.f32.mrf.mxu0
    %v8068 = vadd.f32 %v6968, %v8067
    %v8069 = vpop.f32.mrf.mxu0
    %v8070 = vadd.f32 %v6964, %v8069
    %v8071 = vpop.f32.mrf.mxu0
    %v8072 = vadd.f32 %v6968, %v8071
    %8073 = vmatprep.mubr.bf16.mxu0 0
    %8074 = vmatmul.mubr.bf16.gmra.mxu0 %v6942
    %v8075 = vpop.f32.mrf.mxu0
    %v8076 = vadd.f32 %v6964, %v8075
    %v8077 = vpop.f32.mrf.mxu0
    %v8078 = vadd.f32 %v6968, %v8077
    %v8079 = vpop.f32.mrf.mxu0
    %v8080 = vadd.f32 %v6964, %v8079
    %v8081 = vpop.f32.mrf.mxu0
    %v8082 = vadd.f32 %v6968, %v8081
    %8083 = vdwg.mxu0
    %v8084 = vmax.f32 %v7086, 0.0
    %v8085 = vmax.f32 %v7088, 0.0
    %v8086 = vmax.f32 %v7090, 0.0
    %v8087 = vmax.f32 %v7092, 0.0
    %v8088 = vmax.f32 %v7096, 0.0
    %v8089 = vmax.f32 %v7098, 0.0
    %v8090 = vmax.f32 %v7100, 0.0
    %v8091 = vmax.f32 %v7102, 0.0
    %v8092 = vmax.f32 %v7106, 0.0
    %v8093 = vmax.f32 %v7108, 0.0
    %v8094 = vmax.f32 %v7110, 0.0
    %v8095 = vmax.f32 %v7112, 0.0
    %v8096 = vmax.f32 %v7116, 0.0
    %v8097 = vmax.f32 %v7118, 0.0
    %v8098 = vmax.f32 %v7120, 0.0
    %v8099 = vmax.f32 %v7122, 0.0
    %v8100 = vmax.f32 %v7126, 0.0
    %v8101 = vmax.f32 %v7128, 0.0
    %v8102 = vmax.f32 %v7130, 0.0
    %v8103 = vmax.f32 %v7132, 0.0
    %v8104 = vmax.f32 %v7136, 0.0
    %v8105 = vmax.f32 %v7138, 0.0
    %v8106 = vmax.f32 %v7140, 0.0
    %v8107 = vmax.f32 %v7142, 0.0
    %v8108 = vmax.f32 %v7146, 0.0
    %v8109 = vmax.f32 %v7148, 0.0
    %v8110 = vmax.f32 %v7150, 0.0
    %v8111 = vmax.f32 %v7152, 0.0
    %v8112 = vmax.f32 %v7156, 0.0
    %v8113 = vmax.f32 %v7158, 0.0
    %v8114 = vmax.f32 %v7160, 0.0
    %v8115 = vmax.f32 %v7162, 0.0
    %v8116 = vmax.f32 %v7166, 0.0
    %v8117 = vmax.f32 %v7168, 0.0
    %v8118 = vmax.f32 %v7170, 0.0
    %v8119 = vmax.f32 %v7172, 0.0
    %v8120 = vmax.f32 %v7176, 0.0
    %v8121 = vmax.f32 %v7178, 0.0
    %v8122 = vmax.f32 %v7180, 0.0
    %v8123 = vmax.f32 %v7182, 0.0
    %v8124 = vmax.f32 %v7186, 0.0
    %v8125 = vmax.f32 %v7188, 0.0
    %v8126 = vmax.f32 %v7190, 0.0
    %v8127 = vmax.f32 %v7192, 0.0
    %v8128 = vmax.f32 %v7196, 0.0
    %v8129 = vmax.f32 %v7198, 0.0
    %v8130 = vmax.f32 %v7200, 0.0
    %v8131 = vmax.f32 %v7202, 0.0
    %v8132 = vmax.f32 %v7206, 0.0
    %v8133 = vmax.f32 %v7208, 0.0
    %v8134 = vmax.f32 %v7210, 0.0
    %v8135 = vmax.f32 %v7212, 0.0
    %v8136 = vmax.f32 %v7216, 0.0
    %v8137 = vmax.f32 %v7218, 0.0
    %v8138 = vmax.f32 %v7220, 0.0
    %v8139 = vmax.f32 %v7222, 0.0
    %v8140 = vmax.f32 %v7226, 0.0
    %v8141 = vmax.f32 %v7228, 0.0
    %v8142 = vmax.f32 %v7230, 0.0
    %v8143 = vmax.f32 %v7232, 0.0
    %v8144 = vmax.f32 %v7236, 0.0
    %v8145 = vmax.f32 %v7238, 0.0
    %v8146 = vmax.f32 %v7240, 0.0
    %v8147 = vmax.f32 %v7242, 0.0
    %v8148 = vmax.f32 %v7246, 0.0
    %v8149 = vmax.f32 %v7248, 0.0
    %v8150 = vmax.f32 %v7250, 0.0
    %v8151 = vmax.f32 %v7252, 0.0
    %v8152 = vmax.f32 %v7256, 0.0
    %v8153 = vmax.f32 %v7258, 0.0
    %v8154 = vmax.f32 %v7260, 0.0
    %v8155 = vmax.f32 %v7262, 0.0
    %v8156 = vmax.f32 %v7266, 0.0
    %v8157 = vmax.f32 %v7268, 0.0
    %v8158 = vmax.f32 %v7270, 0.0
    %v8159 = vmax.f32 %v7272, 0.0
    %v8160 = vmax.f32 %v7276, 0.0
    %v8161 = vmax.f32 %v7278, 0.0
    %v8162 = vmax.f32 %v7280, 0.0
    %v8163 = vmax.f32 %v7282, 0.0
    %v8164 = vmax.f32 %v7286, 0.0
    %v8165 = vmax.f32 %v7288, 0.0
    %v8166 = vmax.f32 %v7290, 0.0
    %v8167 = vmax.f32 %v7292, 0.0
    %v8168 = vmax.f32 %v7296, 0.0
    %v8169 = vmax.f32 %v7298, 0.0
    %v8170 = vmax.f32 %v7300, 0.0
    %v8171 = vmax.f32 %v7302, 0.0
    %v8172 = vmax.f32 %v7306, 0.0
    %v8173 = vmax.f32 %v7308, 0.0
    %v8174 = vmax.f32 %v7310, 0.0
    %v8175 = vmax.f32 %v7312, 0.0
    %v8176 = vmax.f32 %v7316, 0.0
    %v8177 = vmax.f32 %v7318, 0.0
    %v8178 = vmax.f32 %v7320, 0.0
    %v8179 = vmax.f32 %v7322, 0.0
    %v8180 = vmax.f32 %v7326, 0.0
    %v8181 = vmax.f32 %v7328, 0.0
    %v8182 = vmax.f32 %v7330, 0.0
    %v8183 = vmax.f32 %v7332, 0.0
    %v8184 = vmax.f32 %v7336, 0.0
    %v8185 = vmax.f32 %v7338, 0.0
    %v8186 = vmax.f32 %v7340, 0.0
    %v8187 = vmax.f32 %v7342, 0.0
    %v8188 = vmax.f32 %v7346, 0.0
    %v8189 = vmax.f32 %v7348, 0.0
    %v8190 = vmax.f32 %v7350, 0.0
    %v8191 = vmax.f32 %v7352, 0.0
    %v8192 = vmax.f32 %v7356, 0.0
    %v8193 = vmax.f32 %v7358, 0.0
    %v8194 = vmax.f32 %v7360, 0.0
    %v8195 = vmax.f32 %v7362, 0.0
    %v8196 = vmax.f32 %v7366, 0.0
    %v8197 = vmax.f32 %v7368, 0.0
    %v8198 = vmax.f32 %v7370, 0.0
    %v8199 = vmax.f32 %v7372, 0.0
    %v8200 = vmax.f32 %v7376, 0.0
    %v8201 = vmax.f32 %v7378, 0.0
    %v8202 = vmax.f32 %v7380, 0.0
    %v8203 = vmax.f32 %v7382, 0.0
    %v8204 = vmax.f32 %v7386, 0.0
    %v8205 = vmax.f32 %v7388, 0.0
    %v8206 = vmax.f32 %v7390, 0.0
    %v8207 = vmax.f32 %v7392, 0.0
    %v8208 = vmax.f32 %v7396, 0.0
    %v8209 = vmax.f32 %v7398, 0.0
    %v8210 = vmax.f32 %v7400, 0.0
    %v8211 = vmax.f32 %v7402, 0.0
    %v8212 = vmax.f32 %v7406, 0.0
    %v8213 = vmax.f32 %v7408, 0.0
    %v8214 = vmax.f32 %v7410, 0.0
    %v8215 = vmax.f32 %v7412, 0.0
    %v8216 = vmax.f32 %v7416, 0.0
    %v8217 = vmax.f32 %v7418, 0.0
    %v8218 = vmax.f32 %v7420, 0.0
    %v8219 = vmax.f32 %v7422, 0.0
    %v8220 = vmax.f32 %v7426, 0.0
    %v8221 = vmax.f32 %v7428, 0.0
    %v8222 = vmax.f32 %v7430, 0.0
    %v8223 = vmax.f32 %v7432, 0.0
    %v8224 = vmax.f32 %v7436, 0.0
    %v8225 = vmax.f32 %v7438, 0.0
    %v8226 = vmax.f32 %v7440, 0.0
    %v8227 = vmax.f32 %v7442, 0.0
    %v8228 = vmax.f32 %v7446, 0.0
    %v8229 = vmax.f32 %v7448, 0.0
    %v8230 = vmax.f32 %v7450, 0.0
    %v8231 = vmax.f32 %v7452, 0.0
    %v8232 = vmax.f32 %v7456, 0.0
    %v8233 = vmax.f32 %v7458, 0.0
    %v8234 = vmax.f32 %v7460, 0.0
    %v8235 = vmax.f32 %v7462, 0.0
    %v8236 = vmax.f32 %v7466, 0.0
    %v8237 = vmax.f32 %v7468, 0.0
    %v8238 = vmax.f32 %v7470, 0.0
    %v8239 = vmax.f32 %v7472, 0.0
    %v8240 = vmax.f32 %v7476, 0.0
    %v8241 = vmax.f32 %v7478, 0.0
    %v8242 = vmax.f32 %v7480, 0.0
    %v8243 = vmax.f32 %v7482, 0.0
    %v8244 = vmax.f32 %v7486, 0.0
    %v8245 = vmax.f32 %v7488, 0.0
    %v8246 = vmax.f32 %v7490, 0.0
    %v8247 = vmax.f32 %v7492, 0.0
    %v8248 = vmax.f32 %v7496, 0.0
    %v8249 = vmax.f32 %v7498, 0.0
    %v8250 = vmax.f32 %v7500, 0.0
    %v8251 = vmax.f32 %v7502, 0.0
    %v8252 = vmax.f32 %v7506, 0.0
    %v8253 = vmax.f32 %v7508, 0.0
    %v8254 = vmax.f32 %v7510, 0.0
    %v8255 = vmax.f32 %v7512, 0.0
    %v8256 = vmax.f32 %v7516, 0.0
    %v8257 = vmax.f32 %v7518, 0.0
    %v8258 = vmax.f32 %v7520, 0.0
    %v8259 = vmax.f32 %v7522, 0.0
    %v8260 = vmax.f32 %v7526, 0.0
    %v8261 = vmax.f32 %v7528, 0.0
    %v8262 = vmax.f32 %v7530, 0.0
    %v8263 = vmax.f32 %v7532, 0.0
    %v8264 = vmax.f32 %v7536, 0.0
    %v8265 = vmax.f32 %v7538, 0.0
    %v8266 = vmax.f32 %v7540, 0.0
    %v8267 = vmax.f32 %v7542, 0.0
    %v8268 = vmax.f32 %v7546, 0.0
    %v8269 = vmax.f32 %v7548, 0.0
    %v8270 = vmax.f32 %v7550, 0.0
    %v8271 = vmax.f32 %v7552, 0.0
    %v8272 = vmax.f32 %v7556, 0.0
    %v8273 = vmax.f32 %v7558, 0.0
    %v8274 = vmax.f32 %v7560, 0.0
    %v8275 = vmax.f32 %v7562, 0.0
    %v8276 = vmax.f32 %v7566, 0.0
    %v8277 = vmax.f32 %v7568, 0.0
    %v8278 = vmax.f32 %v7570, 0.0
    %v8279 = vmax.f32 %v7572, 0.0
    %v8280 = vmax.f32 %v7576, 0.0
    %v8281 = vmax.f32 %v7578, 0.0
    %v8282 = vmax.f32 %v7580, 0.0
    %v8283 = vmax.f32 %v7582, 0.0
    %v8284 = vmax.f32 %v7586, 0.0
    %v8285 = vmax.f32 %v7588, 0.0
    %v8286 = vmax.f32 %v7590, 0.0
    %v8287 = vmax.f32 %v7592, 0.0
    %v8288 = vmax.f32 %v7596, 0.0
    %v8289 = vmax.f32 %v7598, 0.0
    %v8290 = vmax.f32 %v7600, 0.0
    %v8291 = vmax.f32 %v7602, 0.0
    %v8292 = vmax.f32 %v7606, 0.0
    %v8293 = vmax.f32 %v7608, 0.0
    %v8294 = vmax.f32 %v7610, 0.0
    %v8295 = vmax.f32 %v7612, 0.0
    %v8296 = vmax.f32 %v7616, 0.0
    %v8297 = vmax.f32 %v7618, 0.0
    %v8298 = vmax.f32 %v7620, 0.0
    %v8299 = vmax.f32 %v7622, 0.0
    %v8300 = vmax.f32 %v7626, 0.0
    %v8301 = vmax.f32 %v7628, 0.0
    %v8302 = vmax.f32 %v7630, 0.0
    %v8303 = vmax.f32 %v7632, 0.0
    %v8304 = vmax.f32 %v7636, 0.0
    %v8305 = vmax.f32 %v7638, 0.0
    %v8306 = vmax.f32 %v7640, 0.0
    %v8307 = vmax.f32 %v7642, 0.0
    %v8308 = vmax.f32 %v7646, 0.0
    %v8309 = vmax.f32 %v7648, 0.0
    %v8310 = vmax.f32 %v7650, 0.0
    %v8311 = vmax.f32 %v7652, 0.0
    %v8312 = vmax.f32 %v7656, 0.0
    %v8313 = vmax.f32 %v7658, 0.0
    %v8314 = vmax.f32 %v7660, 0.0
    %v8315 = vmax.f32 %v7662, 0.0
    %v8316 = vmax.f32 %v7666, 0.0
    %v8317 = vmax.f32 %v7668, 0.0
    %v8318 = vmax.f32 %v7670, 0.0
    %v8319 = vmax.f32 %v7672, 0.0
    %v8320 = vmax.f32 %v7676, 0.0
    %v8321 = vmax.f32 %v7678, 0.0
    %v8322 = vmax.f32 %v7680, 0.0
    %v8323 = vmax.f32 %v7682, 0.0
    %v8324 = vmax.f32 %v7686, 0.0
    %v8325 = vmax.f32 %v7688, 0.0
    %v8326 = vmax.f32 %v7690, 0.0
    %v8327 = vmax.f32 %v7692, 0.0
    %v8328 = vmax.f32 %v7696, 0.0
    %v8329 = vmax.f32 %v7698, 0.0
    %v8330 = vmax.f32 %v7700, 0.0
    %v8331 = vmax.f32 %v7702, 0.0
    %v8332 = vmax.f32 %v7706, 0.0
    %v8333 = vmax.f32 %v7708, 0.0
    %v8334 = vmax.f32 %v7710, 0.0
    %v8335 = vmax.f32 %v7712, 0.0
    %v8336 = vmax.f32 %v7716, 0.0
    %v8337 = vmax.f32 %v7718, 0.0
    %v8338 = vmax.f32 %v7720, 0.0
    %v8339 = vmax.f32 %v7722, 0.0
    %v8340 = vmax.f32 %v7726, 0.0
    %v8341 = vmax.f32 %v7728, 0.0
    %v8342 = vmax.f32 %v7730, 0.0
    %v8343 = vmax.f32 %v7732, 0.0
    %v8344 = vmax.f32 %v7736, 0.0
    %v8345 = vmax.f32 %v7738, 0.0
    %v8346 = vmax.f32 %v7740, 0.0
    %v8347 = vmax.f32 %v7742, 0.0
    %v8348 = vmax.f32 %v7746, 0.0
    %v8349 = vmax.f32 %v7748, 0.0
    %v8350 = vmax.f32 %v7750, 0.0
    %v8351 = vmax.f32 %v7752, 0.0
    %v8352 = vmax.f32 %v7756, 0.0
    %v8353 = vmax.f32 %v7758, 0.0
    %v8354 = vmax.f32 %v7760, 0.0
    %v8355 = vmax.f32 %v7762, 0.0
    %v8356 = vmax.f32 %v7766, 0.0
    %v8357 = vmax.f32 %v7768, 0.0
    %v8358 = vmax.f32 %v7770, 0.0
    %v8359 = vmax.f32 %v7772, 0.0
    %v8360 = vmax.f32 %v7776, 0.0
    %v8361 = vmax.f32 %v7778, 0.0
    %v8362 = vmax.f32 %v7780, 0.0
    %v8363 = vmax.f32 %v7782, 0.0
    %v8364 = vmax.f32 %v7786, 0.0
    %v8365 = vmax.f32 %v7788, 0.0
    %v8366 = vmax.f32 %v7790, 0.0
    %v8367 = vmax.f32 %v7792, 0.0
    %v8368 = vmax.f32 %v7796, 0.0
    %v8369 = vmax.f32 %v7798, 0.0
    %v8370 = vmax.f32 %v7800, 0.0
    %v8371 = vmax.f32 %v7802, 0.0
    %v8372 = vmax.f32 %v7806, 0.0
    %v8373 = vmax.f32 %v7808, 0.0
    %v8374 = vmax.f32 %v7810, 0.0
    %v8375 = vmax.f32 %v7812, 0.0
    %v8376 = vmax.f32 %v7816, 0.0
    %v8377 = vmax.f32 %v7818, 0.0
    %v8378 = vmax.f32 %v7820, 0.0
    %v8379 = vmax.f32 %v7822, 0.0
    %v8380 = vmax.f32 %v7826, 0.0
    %v8381 = vmax.f32 %v7828, 0.0
    %v8382 = vmax.f32 %v7830, 0.0
    %v8383 = vmax.f32 %v7832, 0.0
    %v8384 = vmax.f32 %v7836, 0.0
    %v8385 = vmax.f32 %v7838, 0.0
    %v8386 = vmax.f32 %v7840, 0.0
    %v8387 = vmax.f32 %v7842, 0.0
    %v8388 = vmax.f32 %v7846, 0.0
    %v8389 = vmax.f32 %v7848, 0.0
    %v8390 = vmax.f32 %v7850, 0.0
    %v8391 = vmax.f32 %v7852, 0.0
    %v8392 = vmax.f32 %v7856, 0.0
    %v8393 = vmax.f32 %v7858, 0.0
    %v8394 = vmax.f32 %v7860, 0.0
    %v8395 = vmax.f32 %v7862, 0.0
    %v8396 = vmax.f32 %v7866, 0.0
    %v8397 = vmax.f32 %v7868, 0.0
    %v8398 = vmax.f32 %v7870, 0.0
    %v8399 = vmax.f32 %v7872, 0.0
    %v8400 = vmax.f32 %v7876, 0.0
    %v8401 = vmax.f32 %v7878, 0.0
    %v8402 = vmax.f32 %v7880, 0.0
    %v8403 = vmax.f32 %v7882, 0.0
    %v8404 = vmax.f32 %v7886, 0.0
    %v8405 = vmax.f32 %v7888, 0.0
    %v8406 = vmax.f32 %v7890, 0.0
    %v8407 = vmax.f32 %v7892, 0.0
    %v8408 = vmax.f32 %v7896, 0.0
    %v8409 = vmax.f32 %v7898, 0.0
    %v8410 = vmax.f32 %v7900, 0.0
    %v8411 = vmax.f32 %v7902, 0.0
    %v8412 = vmax.f32 %v7906, 0.0
    %v8413 = vmax.f32 %v7908, 0.0
    %v8414 = vmax.f32 %v7910, 0.0
    %v8415 = vmax.f32 %v7912, 0.0
    %v8416 = vmax.f32 %v7916, 0.0
    %v8417 = vmax.f32 %v7918, 0.0
    %v8418 = vmax.f32 %v7920, 0.0
    %v8419 = vmax.f32 %v7922, 0.0
    %v8420 = vmax.f32 %v7926, 0.0
    %v8421 = vmax.f32 %v7928, 0.0
    %v8422 = vmax.f32 %v7930, 0.0
    %v8423 = vmax.f32 %v7932, 0.0
    %v8424 = vmax.f32 %v7936, 0.0
    %v8425 = vmax.f32 %v7938, 0.0
    %v8426 = vmax.f32 %v7940, 0.0
    %v8427 = vmax.f32 %v7942, 0.0
    %v8428 = vmax.f32 %v7946, 0.0
    %v8429 = vmax.f32 %v7948, 0.0
    %v8430 = vmax.f32 %v7950, 0.0
    %v8431 = vmax.f32 %v7952, 0.0
    %v8432 = vmax.f32 %v7956, 0.0
    %v8433 = vmax.f32 %v7958, 0.0
    %v8434 = vmax.f32 %v7960, 0.0
    %v8435 = vmax.f32 %v7962, 0.0
    %v8436 = vmax.f32 %v7966, 0.0
    %v8437 = vmax.f32 %v7968, 0.0
    %v8438 = vmax.f32 %v7970, 0.0
    %v8439 = vmax.f32 %v7972, 0.0
    %v8440 = vmax.f32 %v7976, 0.0
    %v8441 = vmax.f32 %v7978, 0.0
    %v8442 = vmax.f32 %v7980, 0.0
    %v8443 = vmax.f32 %v7982, 0.0
    %v8444 = vmax.f32 %v7986, 0.0
    %v8445 = vmax.f32 %v7988, 0.0
    %v8446 = vmax.f32 %v7990, 0.0
    %v8447 = vmax.f32 %v7992, 0.0
    %v8448 = vmax.f32 %v7996, 0.0
    %v8449 = vmax.f32 %v7998, 0.0
    %v8450 = vmax.f32 %v8000, 0.0
    %v8451 = vmax.f32 %v8002, 0.0
    %v8452 = vmax.f32 %v8006, 0.0
    %v8453 = vmax.f32 %v8008, 0.0
    %v8454 = vmax.f32 %v8010, 0.0
    %v8455 = vmax.f32 %v8012, 0.0
    %v8456 = vmax.f32 %v8016, 0.0
    %v8457 = vmax.f32 %v8018, 0.0
    %v8458 = vmax.f32 %v8020, 0.0
    %v8459 = vmax.f32 %v8022, 0.0
    %v8460 = vmax.f32 %v8026, 0.0
    %v8461 = vmax.f32 %v8028, 0.0
    %v8462 = vmax.f32 %v8030, 0.0
    %v8463 = vmax.f32 %v8032, 0.0
    %v8464 = vmax.f32 %v8036, 0.0
    %v8465 = vmax.f32 %v8038, 0.0
    %v8466 = vmax.f32 %v8040, 0.0
    %v8467 = vmax.f32 %v8042, 0.0
    %v8468 = vmax.f32 %v8046, 0.0
    %v8469 = vmax.f32 %v8048, 0.0
    %v8470 = vmax.f32 %v8050, 0.0
    %v8471 = vmax.f32 %v8052, 0.0
    %v8472 = vmax.f32 %v8056, 0.0
    %v8473 = vmax.f32 %v8058, 0.0
    %v8474 = vmax.f32 %v8060, 0.0
    %v8475 = vmax.f32 %v8062, 0.0
    %v8476 = vmax.f32 %v8066, 0.0
    %v8477 = vmax.f32 %v8068, 0.0
    %v8478 = vmax.f32 %v8070, 0.0
    %v8479 = vmax.f32 %v8072, 0.0
    %v8480 = vmax.f32 %v8076, 0.0
    %v8481 = vmax.f32 %v8078, 0.0
    %v8482 = vmax.f32 %v8080, 0.0
    %v8483 = vmax.f32 %v8082, 0.0
    %v8484 = vpack.c.bf16 %v8086, %v8084
    %v8485 = vpack.c.bf16 %v8087, %v8085
    %v8486 = vpack.c.bf16 %v8090, %v8088
    %v8487 = vpack.c.bf16 %v8091, %v8089
    %v8488 = vpack.c.bf16 %v8094, %v8092
    %v8489 = vpack.c.bf16 %v8095, %v8093
    %v8490 = vpack.c.bf16 %v8098, %v8096
    %v8491 = vpack.c.bf16 %v8099, %v8097
    %v8492 = vpack.c.bf16 %v8102, %v8100
    %v8493 = vpack.c.bf16 %v8103, %v8101
    %v8494 = vpack.c.bf16 %v8106, %v8104
    %v8495 = vpack.c.bf16 %v8107, %v8105
    %v8496 = vpack.c.bf16 %v8110, %v8108
    %v8497 = vpack.c.bf16 %v8111, %v8109
    %v8498 = vpack.c.bf16 %v8114, %v8112
    %v8499 = vpack.c.bf16 %v8115, %v8113
    %v8500 = vpack.c.bf16 %v8118, %v8116
    %v8501 = vpack.c.bf16 %v8119, %v8117
    %v8502 = vpack.c.bf16 %v8122, %v8120
    %v8503 = vpack.c.bf16 %v8123, %v8121
    %v8504 = vpack.c.bf16 %v8126, %v8124
    %v8505 = vpack.c.bf16 %v8127, %v8125
    %v8506 = vpack.c.bf16 %v8130, %v8128
    %v8507 = vpack.c.bf16 %v8131, %v8129
    %v8508 = vpack.c.bf16 %v8134, %v8132
    %v8509 = vpack.c.bf16 %v8135, %v8133
    %v8510 = vpack.c.bf16 %v8138, %v8136
    %v8511 = vpack.c.bf16 %v8139, %v8137
    %v8512 = vpack.c.bf16 %v8142, %v8140
    %v8513 = vpack.c.bf16 %v8143, %v8141
    %v8514 = vpack.c.bf16 %v8146, %v8144
    %v8515 = vpack.c.bf16 %v8147, %v8145
    %v8516 = vpack.c.bf16 %v8150, %v8148
    %v8517 = vpack.c.bf16 %v8151, %v8149
    %v8518 = vpack.c.bf16 %v8154, %v8152
    %v8519 = vpack.c.bf16 %v8155, %v8153
    %v8520 = vpack.c.bf16 %v8158, %v8156
    %v8521 = vpack.c.bf16 %v8159, %v8157
    %v8522 = vpack.c.bf16 %v8162, %v8160
    %v8523 = vpack.c.bf16 %v8163, %v8161
    %v8524 = vpack.c.bf16 %v8166, %v8164
    %v8525 = vpack.c.bf16 %v8167, %v8165
    %v8526 = vpack.c.bf16 %v8170, %v8168
    %v8527 = vpack.c.bf16 %v8171, %v8169
    %v8528 = vpack.c.bf16 %v8174, %v8172
    %v8529 = vpack.c.bf16 %v8175, %v8173
    %v8530 = vpack.c.bf16 %v8178, %v8176
    %v8531 = vpack.c.bf16 %v8179, %v8177
    %v8532 = vpack.c.bf16 %v8182, %v8180
    %v8533 = vpack.c.bf16 %v8183, %v8181
    %v8534 = vpack.c.bf16 %v8186, %v8184
    %v8535 = vpack.c.bf16 %v8187, %v8185
    %v8536 = vpack.c.bf16 %v8190, %v8188
    %v8537 = vpack.c.bf16 %v8191, %v8189
    %v8538 = vpack.c.bf16 %v8194, %v8192
    %v8539 = vpack.c.bf16 %v8195, %v8193
    %v8540 = vpack.c.bf16 %v8198, %v8196
    %v8541 = vpack.c.bf16 %v8199, %v8197
    %v8542 = vpack.c.bf16 %v8202, %v8200
    %v8543 = vpack.c.bf16 %v8203, %v8201
    %v8544 = vpack.c.bf16 %v8206, %v8204
    %v8545 = vpack.c.bf16 %v8207, %v8205
    %v8546 = vpack.c.bf16 %v8210, %v8208
    %v8547 = vpack.c.bf16 %v8211, %v8209
    %v8548 = vpack.c.bf16 %v8214, %v8212
    %v8549 = vpack.c.bf16 %v8215, %v8213
    %v8550 = vpack.c.bf16 %v8218, %v8216
    %v8551 = vpack.c.bf16 %v8219, %v8217
    %v8552 = vpack.c.bf16 %v8222, %v8220
    %v8553 = vpack.c.bf16 %v8223, %v8221
    %v8554 = vpack.c.bf16 %v8226, %v8224
    %v8555 = vpack.c.bf16 %v8227, %v8225
    %v8556 = vpack.c.bf16 %v8230, %v8228
    %v8557 = vpack.c.bf16 %v8231, %v8229
    %v8558 = vpack.c.bf16 %v8234, %v8232
    %v8559 = vpack.c.bf16 %v8235, %v8233
    %v8560 = vpack.c.bf16 %v8238, %v8236
    %v8561 = vpack.c.bf16 %v8239, %v8237
    %v8562 = vpack.c.bf16 %v8242, %v8240
    %v8563 = vpack.c.bf16 %v8243, %v8241
    %v8564 = vpack.c.bf16 %v8246, %v8244
    %v8565 = vpack.c.bf16 %v8247, %v8245
    %v8566 = vpack.c.bf16 %v8250, %v8248
    %v8567 = vpack.c.bf16 %v8251, %v8249
    %v8568 = vpack.c.bf16 %v8254, %v8252
    %v8569 = vpack.c.bf16 %v8255, %v8253
    %v8570 = vpack.c.bf16 %v8258, %v8256
    %v8571 = vpack.c.bf16 %v8259, %v8257
    %v8572 = vpack.c.bf16 %v8262, %v8260
    %v8573 = vpack.c.bf16 %v8263, %v8261
    %v8574 = vpack.c.bf16 %v8266, %v8264
    %v8575 = vpack.c.bf16 %v8267, %v8265
    %v8576 = vpack.c.bf16 %v8270, %v8268
    %v8577 = vpack.c.bf16 %v8271, %v8269
    %v8578 = vpack.c.bf16 %v8274, %v8272
    %v8579 = vpack.c.bf16 %v8275, %v8273
    %v8580 = vpack.c.bf16 %v8278, %v8276
    %v8581 = vpack.c.bf16 %v8279, %v8277
    %v8582 = vpack.c.bf16 %v8282, %v8280
    %v8583 = vpack.c.bf16 %v8283, %v8281
    %v8584 = vpack.c.bf16 %v8286, %v8284
    %v8585 = vpack.c.bf16 %v8287, %v8285
    %v8586 = vpack.c.bf16 %v8290, %v8288
    %v8587 = vpack.c.bf16 %v8291, %v8289
    %v8588 = vpack.c.bf16 %v8294, %v8292
    %v8589 = vpack.c.bf16 %v8295, %v8293
    %v8590 = vpack.c.bf16 %v8298, %v8296
    %v8591 = vpack.c.bf16 %v8299, %v8297
    %v8592 = vpack.c.bf16 %v8302, %v8300
    %v8593 = vpack.c.bf16 %v8303, %v8301
    %v8594 = vpack.c.bf16 %v8306, %v8304
    %v8595 = vpack.c.bf16 %v8307, %v8305
    %v8596 = vpack.c.bf16 %v8310, %v8308
    %v8597 = vpack.c.bf16 %v8311, %v8309
    %v8598 = vpack.c.bf16 %v8314, %v8312
    %v8599 = vpack.c.bf16 %v8315, %v8313
    %v8600 = vpack.c.bf16 %v8318, %v8316
    %v8601 = vpack.c.bf16 %v8319, %v8317
    %v8602 = vpack.c.bf16 %v8322, %v8320
    %v8603 = vpack.c.bf16 %v8323, %v8321
    %v8604 = vpack.c.bf16 %v8326, %v8324
    %v8605 = vpack.c.bf16 %v8327, %v8325
    %v8606 = vpack.c.bf16 %v8330, %v8328
    %v8607 = vpack.c.bf16 %v8331, %v8329
    %v8608 = vpack.c.bf16 %v8334, %v8332
    %v8609 = vpack.c.bf16 %v8335, %v8333
    %v8610 = vpack.c.bf16 %v8338, %v8336
    %v8611 = vpack.c.bf16 %v8339, %v8337
    %v8612 = vpack.c.bf16 %v8342, %v8340
    %v8613 = vpack.c.bf16 %v8343, %v8341
    %v8614 = vpack.c.bf16 %v8346, %v8344
    %v8615 = vpack.c.bf16 %v8347, %v8345
    %v8616 = vpack.c.bf16 %v8350, %v8348
    %v8617 = vpack.c.bf16 %v8351, %v8349
    %v8618 = vpack.c.bf16 %v8354, %v8352
    %v8619 = vpack.c.bf16 %v8355, %v8353
    %v8620 = vpack.c.bf16 %v8358, %v8356
    %v8621 = vpack.c.bf16 %v8359, %v8357
    %v8622 = vpack.c.bf16 %v8362, %v8360
    %v8623 = vpack.c.bf16 %v8363, %v8361
    %v8624 = vpack.c.bf16 %v8366, %v8364
    %v8625 = vpack.c.bf16 %v8367, %v8365
    %v8626 = vpack.c.bf16 %v8370, %v8368
    %v8627 = vpack.c.bf16 %v8371, %v8369
    %v8628 = vpack.c.bf16 %v8374, %v8372
    %v8629 = vpack.c.bf16 %v8375, %v8373
    %v8630 = vpack.c.bf16 %v8378, %v8376
    %v8631 = vpack.c.bf16 %v8379, %v8377
    %v8632 = vpack.c.bf16 %v8382, %v8380
    %v8633 = vpack.c.bf16 %v8383, %v8381
    %v8634 = vpack.c.bf16 %v8386, %v8384
    %v8635 = vpack.c.bf16 %v8387, %v8385
    %v8636 = vpack.c.bf16 %v8390, %v8388
    %v8637 = vpack.c.bf16 %v8391, %v8389
    %v8638 = vpack.c.bf16 %v8394, %v8392
    %v8639 = vpack.c.bf16 %v8395, %v8393
    %v8640 = vpack.c.bf16 %v8398, %v8396
    %v8641 = vpack.c.bf16 %v8399, %v8397
    %v8642 = vpack.c.bf16 %v8402, %v8400
    %v8643 = vpack.c.bf16 %v8403, %v8401
    %v8644 = vpack.c.bf16 %v8406, %v8404
    %v8645 = vpack.c.bf16 %v8407, %v8405
    %v8646 = vpack.c.bf16 %v8410, %v8408
    %v8647 = vpack.c.bf16 %v8411, %v8409
    %v8648 = vpack.c.bf16 %v8414, %v8412
    %v8649 = vpack.c.bf16 %v8415, %v8413
    %v8650 = vpack.c.bf16 %v8418, %v8416
    %v8651 = vpack.c.bf16 %v8419, %v8417
    %v8652 = vpack.c.bf16 %v8422, %v8420
    %v8653 = vpack.c.bf16 %v8423, %v8421
    %v8654 = vpack.c.bf16 %v8426, %v8424
    %v8655 = vpack.c.bf16 %v8427, %v8425
    %v8656 = vpack.c.bf16 %v8430, %v8428
    %v8657 = vpack.c.bf16 %v8431, %v8429
    %v8658 = vpack.c.bf16 %v8434, %v8432
    %v8659 = vpack.c.bf16 %v8435, %v8433
    %v8660 = vpack.c.bf16 %v8438, %v8436
    %v8661 = vpack.c.bf16 %v8439, %v8437
    %v8662 = vpack.c.bf16 %v8442, %v8440
    %v8663 = vpack.c.bf16 %v8443, %v8441
    %v8664 = vpack.c.bf16 %v8446, %v8444
    %v8665 = vpack.c.bf16 %v8447, %v8445
    %v8666 = vpack.c.bf16 %v8450, %v8448
    %v8667 = vpack.c.bf16 %v8451, %v8449
    %v8668 = vpack.c.bf16 %v8454, %v8452
    %v8669 = vpack.c.bf16 %v8455, %v8453
    %v8670 = vpack.c.bf16 %v8458, %v8456
    %v8671 = vpack.c.bf16 %v8459, %v8457
    %v8672 = vpack.c.bf16 %v8462, %v8460
    %v8673 = vpack.c.bf16 %v8463, %v8461
    %v8674 = vpack.c.bf16 %v8466, %v8464
    %v8675 = vpack.c.bf16 %v8467, %v8465
    %v8676 = vpack.c.bf16 %v8470, %v8468
    %v8677 = vpack.c.bf16 %v8471, %v8469
    %v8678 = vpack.c.bf16 %v8474, %v8472
    %v8679 = vpack.c.bf16 %v8475, %v8473
    %v8680 = vpack.c.bf16 %v8478, %v8476
    %v8681 = vpack.c.bf16 %v8479, %v8477
    %v8682 = vpack.c.bf16 %v8482, %v8480
    %v8683 = vpack.c.bf16 %v8483, %v8481
    %v8684 = vld [vmem:[%s10] sm:$0xff]
    %v8685 = vld [vmem:[%s10 + $0x8] sm:$0xff]
    %v8686 = vld [vmem:[%s10 + $0x10] sm:$0xff]
    %v8687 = vld [vmem:[%s10 + $0x18] sm:$0xff]
    %v8688 = vld [vmem:[%s10 + $0x20] sm:$0xff]
    %v8689 = vld [vmem:[%s10 + $0x28] sm:$0xff]
    %v8690 = vld [vmem:[%s10 + $0x30] sm:$0xff]
    %v8691 = vld [vmem:[%s10 + $0x38] sm:$0xff]
    %v8692 = vld [vmem:[%s10 + $0x40] sm:$0xff]
    %v8693 = vld [vmem:[%s10 + $0x48] sm:$0xff]
    %v8694 = vld [vmem:[%s10 + $0x50] sm:$0xff]
    %v8695 = vld [vmem:[%s10 + $0x58] sm:$0xff]
    %v8696 = vld [vmem:[%s10 + $0x60] sm:$0xff]
    %v8697 = vld [vmem:[%s10 + $0x68] sm:$0xff]
    %v8698 = vld [vmem:[%s10 + $0x70] sm:$0xff]
    %v8699 = vld [vmem:[%s10 + $0x78] sm:$0xff]
    %v8700 = vld [vmem:[%s10 + $0x80] sm:$0xff]
    %v8701 = vld [vmem:[%s10 + $0x88] sm:$0xff]
    %v8702 = vld [vmem:[%s10 + $0x90] sm:$0xff]
    %v8703 = vld [vmem:[%s10 + $0x98] sm:$0xff]
    %v8704 = vld [vmem:[%s10 + $0xa0] sm:$0xff]
    %v8705 = vld [vmem:[%s10 + $0xa8] sm:$0xff]
    %v8706 = vld [vmem:[%s10 + $0xb0] sm:$0xff]
    %v8707 = vld [vmem:[%s10 + $0xb8] sm:$0xff]
    %v8708 = vld [vmem:[%s10 + $0xc0] sm:$0xff]
    %v8709 = vld [vmem:[%s10 + $0xc8] sm:$0xff]
    %v8710 = vld [vmem:[%s10 + $0xd0] sm:$0xff]
    %v8711 = vld [vmem:[%s10 + $0xd8] sm:$0xff]
    %v8712 = vld [vmem:[%s10 + $0xe0] sm:$0xff]
    %v8713 = vld [vmem:[%s10 + $0xe8] sm:$0xff]
    %v8714 = vld [vmem:[%s10 + $0xf0] sm:$0xff]
    %v8715 = vld [vmem:[%s10 + $0xf8] sm:$0xff]
    %v8716 = vld [vmem:[%s11] sm:$0x3]
    %v8718 = vlaneseq
    %v8719 = vshrl.u32 %v8718, 7
    %v8720 = vsub.s32 0, %v8719
    %v8721 = vrot.slane %v8716, %v8720
    %v8722 = vlaneseq
    %v8723 = vshrl.u32 %v8722, 7
    %v8724 = vsub.s32 1, %v8723
    %v8725 = vrot.slane %v8716, %v8724
    %v8760 = vunpack.c.l.b16 %v8684
    %v8761 = vunpack.c.h.b16 %v8684
    %v8762 = vunpack.c.l.b16 %v8685
    %v8763 = vunpack.c.h.b16 %v8685
    %v8764 = vunpack.c.l.b16 %v8686
    %v8765 = vunpack.c.h.b16 %v8686
    %v8766 = vunpack.c.l.b16 %v8687
    %v8767 = vunpack.c.h.b16 %v8687
    %v8768 = vunpack.c.l.b16 %v8688
    %v8769 = vunpack.c.h.b16 %v8688
    %v8770 = vunpack.c.l.b16 %v8689
    %v8771 = vunpack.c.h.b16 %v8689
    %v8772 = vunpack.c.l.b16 %v8690
    %v8773 = vunpack.c.h.b16 %v8690
    %v8774 = vunpack.c.l.b16 %v8691
    %v8775 = vunpack.c.h.b16 %v8691
    %v8776 = vunpack.c.l.b16 %v8692
    %v8777 = vunpack.c.h.b16 %v8692
    %v8778 = vunpack.c.l.b16 %v8693
    %v8779 = vunpack.c.h.b16 %v8693
    %v8780 = vunpack.c.l.b16 %v8694
    %v8781 = vunpack.c.h.b16 %v8694
    %v8782 = vunpack.c.l.b16 %v8695
    %v8783 = vunpack.c.h.b16 %v8695
    %v8784 = vunpack.c.l.b16 %v8696
    %v8785 = vunpack.c.h.b16 %v8696
    %v8786 = vunpack.c.l.b16 %v8697
    %v8787 = vunpack.c.h.b16 %v8697
    %v8788 = vunpack.c.l.b16 %v8698
    %v8789 = vunpack.c.h.b16 %v8698
    %v8790 = vunpack.c.l.b16 %v8699
    %v8791 = vunpack.c.h.b16 %v8699
    %v8792 = vunpack.c.l.b16 %v8700
    %v8793 = vunpack.c.h.b16 %v8700
    %v8794 = vunpack.c.l.b16 %v8701
    %v8795 = vunpack.c.h.b16 %v8701
    %v8796 = vunpack.c.l.b16 %v8702
    %v8797 = vunpack.c.h.b16 %v8702
    %v8798 = vunpack.c.l.b16 %v8703
    %v8799 = vunpack.c.h.b16 %v8703
    %v8800 = vunpack.c.l.b16 %v8704
    %v8801 = vunpack.c.h.b16 %v8704
    %v8802 = vunpack.c.l.b16 %v8705
    %v8803 = vunpack.c.h.b16 %v8705
    %v8804 = vunpack.c.l.b16 %v8706
    %v8805 = vunpack.c.h.b16 %v8706
    %v8806 = vunpack.c.l.b16 %v8707
    %v8807 = vunpack.c.h.b16 %v8707
    %v8808 = vunpack.c.l.b16 %v8708
    %v8809 = vunpack.c.h.b16 %v8708
    %v8810 = vunpack.c.l.b16 %v8709
    %v8811 = vunpack.c.h.b16 %v8709
    %v8812 = vunpack.c.l.b16 %v8710
    %v8813 = vunpack.c.h.b16 %v8710
    %v8814 = vunpack.c.l.b16 %v8711
    %v8815 = vunpack.c.h.b16 %v8711
    %v8816 = vunpack.c.l.b16 %v8712
    %v8817 = vunpack.c.h.b16 %v8712
    %v8818 = vunpack.c.l.b16 %v8713
    %v8819 = vunpack.c.h.b16 %v8713
    %v8820 = vunpack.c.l.b16 %v8714
    %v8821 = vunpack.c.h.b16 %v8714
    %v8822 = vunpack.c.l.b16 %v8715
    %v8823 = vunpack.c.h.b16 %v8715
    %v8824 = vpack.c.b16 %v8762, %v8760
    %v8825 = vpack.c.b16 %v8763, %v8761
    %v8826 = vpack.c.b16 %v8766, %v8764
    %v8827 = vpack.c.b16 %v8767, %v8765
    %v8828 = vpack.c.b16 %v8770, %v8768
    %v8829 = vpack.c.b16 %v8771, %v8769
    %v8830 = vpack.c.b16 %v8774, %v8772
    %v8831 = vpack.c.b16 %v8775, %v8773
    %v8832 = vpack.c.b16 %v8778, %v8776
    %v8833 = vpack.c.b16 %v8779, %v8777
    %v8834 = vpack.c.b16 %v8782, %v8780
    %v8835 = vpack.c.b16 %v8783, %v8781
    %v8836 = vpack.c.b16 %v8786, %v8784
    %v8837 = vpack.c.b16 %v8787, %v8785
    %v8838 = vpack.c.b16 %v8790, %v8788
    %v8839 = vpack.c.b16 %v8791, %v8789
    %v8840 = vpack.c.b16 %v8794, %v8792
    %v8841 = vpack.c.b16 %v8795, %v8793
    %v8842 = vpack.c.b16 %v8798, %v8796
    %v8843 = vpack.c.b16 %v8799, %v8797
    %v8844 = vpack.c.b16 %v8802, %v8800
    %v8845 = vpack.c.b16 %v8803, %v8801
    %v8846 = vpack.c.b16 %v8806, %v8804
    %v8847 = vpack.c.b16 %v8807, %v8805
    %v8848 = vpack.c.b16 %v8810, %v8808
    %v8849 = vpack.c.b16 %v8811, %v8809
    %v8850 = vpack.c.b16 %v8814, %v8812
    %v8851 = vpack.c.b16 %v8815, %v8813
    %v8852 = vpack.c.b16 %v8818, %v8816
    %v8853 = vpack.c.b16 %v8819, %v8817
    %v8854 = vpack.c.b16 %v8822, %v8820
    %v8855 = vpack.c.b16 %v8823, %v8821
    %8888 = vmatprep.subr.bf16.mxu0 %v8839
    %8889 = vmatpush1.bf16.msra.mxu0 %v8838
    %8890 = vmatprep.subr.bf16.mxu0 %v8837
    %8891 = vmatpush1.bf16.msra.mxu0 %v8836
    %8892 = vmatprep.subr.bf16.mxu0 %v8835
    %8893 = vmatpush1.bf16.msra.mxu0 %v8834
    %8894 = vmatprep.subr.bf16.mxu0 %v8833
    %8895 = vmatpush1.bf16.msra.mxu0 %v8832
    %8896 = vmatprep.subr.bf16.mxu0 %v8831
    %8897 = vmatpush1.bf16.msra.mxu0 %v8830
    %8898 = vmatprep.subr.bf16.mxu0 %v8829
    %8899 = vmatpush1.bf16.msra.mxu0 %v8828
    %8900 = vmatprep.subr.bf16.mxu0 %v8827
    %8901 = vmatpush1.bf16.msra.mxu0 %v8826
    %8902 = vmatprep.subr.bf16.mxu0 %v8825
    %8903 = vmatpush1.bf16.msra.mxu0 %v8824
    %8904 = vmatprep.subr.bf16.mxu0 %v8855
    %8905 = vmatpush2.bf16.msra.mxu0 %v8854
    %8906 = vmatprep.subr.bf16.mxu0 %v8853
    %8907 = vmatpush2.bf16.msra.mxu0 %v8852
    %8908 = vmatprep.subr.bf16.mxu0 %v8851
    %8909 = vmatpush2.bf16.msra.mxu0 %v8850
    %8910 = vmatprep.subr.bf16.mxu0 %v8849
    %8911 = vmatpush2.bf16.msra.mxu0 %v8848
    %8912 = vmatprep.subr.bf16.mxu0 %v8847
    %8913 = vmatpush2.bf16.msra.mxu0 %v8846
    %8914 = vmatprep.subr.bf16.mxu0 %v8845
    %8915 = vmatpush2.bf16.msra.mxu0 %v8844
    %8916 = vmatprep.subr.bf16.mxu0 %v8843
    %8917 = vmatpush2.bf16.msra.mxu0 %v8842
    %8918 = vmatprep.subr.bf16.mxu0 %v8841
    %8919 = vmatpush2.bf16.msra.mxu0 %v8840
    %8920 = vmatprep.mubr.bf16.mxu0 %v8485
    %8921 = vmatmul.mubr.bf16.gmra.mxu0 %v8484
    %v8922 = vpop.f32.mrf.mxu0
    %v8923 = vadd.f32 %v8721, %v8922
    %v8924 = vpop.f32.mrf.mxu0
    %v8925 = vadd.f32 %v8725, %v8924
    %v8926 = vpop.f32.mrf.mxu0
    %v8927 = vadd.f32 %v8721, %v8926
    %v8928 = vpop.f32.mrf.mxu0
    %v8929 = vadd.f32 %v8725, %v8928
    %8930 = vmatprep.mubr.bf16.mxu0 %v8487
    %8931 = vmatmul.mubr.bf16.gmra.mxu0 %v8486
    %v8932 = vpop.f32.mrf.mxu0
    %v8933 = vadd.f32 %v8721, %v8932
    %v8934 = vpop.f32.mrf.mxu0
    %v8935 = vadd.f32 %v8725, %v8934
    %v8936 = vpop.f32.mrf.mxu0
    %v8937 = vadd.f32 %v8721, %v8936
    %v8938 = vpop.f32.mrf.mxu0
    %v8939 = vadd.f32 %v8725, %v8938
    %8940 = vmatprep.mubr.bf16.mxu0 %v8489
    %8941 = vmatmul.mubr.bf16.gmra.mxu0 %v8488
    %v8942 = vpop.f32.mrf.mxu0
    %v8943 = vadd.f32 %v8721, %v8942
    %v8944 = vpop.f32.mrf.mxu0
    %v8945 = vadd.f32 %v8725, %v8944
    %v8946 = vpop.f32.mrf.mxu0
    %v8947 = vadd.f32 %v8721, %v8946
    %v8948 = vpop.f32.mrf.mxu0
    %v8949 = vadd.f32 %v8725, %v8948
    %8950 = vmatprep.mubr.bf16.mxu0 %v8491
    %8951 = vmatmul.mubr.bf16.gmra.mxu0 %v8490
    %v8952 = vpop.f32.mrf.mxu0
    %v8953 = vadd.f32 %v8721, %v8952
    %v8954 = vpop.f32.mrf.mxu0
    %v8955 = vadd.f32 %v8725, %v8954
    %v8956 = vpop.f32.mrf.mxu0
    %v8957 = vadd.f32 %v8721, %v8956
    %v8958 = vpop.f32.mrf.mxu0
    %v8959 = vadd.f32 %v8725, %v8958
    %8960 = vmatprep.mubr.bf16.mxu0 %v8493
    %8961 = vmatmul.mubr.bf16.gmra.mxu0 %v8492
    %v8962 = vpop.f32.mrf.mxu0
    %v8963 = vadd.f32 %v8721, %v8962
    %v8964 = vpop.f32.mrf.mxu0
    %v8965 = vadd.f32 %v8725, %v8964
    %v8966 = vpop.f32.mrf.mxu0
    %v8967 = vadd.f32 %v8721, %v8966
    %v8968 = vpop.f32.mrf.mxu0
    %v8969 = vadd.f32 %v8725, %v8968
    %8970 = vmatprep.mubr.bf16.mxu0 %v8495
    %8971 = vmatmul.mubr.bf16.gmra.mxu0 %v8494
    %v8972 = vpop.f32.mrf.mxu0
    %v8973 = vadd.f32 %v8721, %v8972
    %v8974 = vpop.f32.mrf.mxu0
    %v8975 = vadd.f32 %v8725, %v8974
    %v8976 = vpop.f32.mrf.mxu0
    %v8977 = vadd.f32 %v8721, %v8976
    %v8978 = vpop.f32.mrf.mxu0
    %v8979 = vadd.f32 %v8725, %v8978
    %8980 = vmatprep.mubr.bf16.mxu0 %v8497
    %8981 = vmatmul.mubr.bf16.gmra.mxu0 %v8496
    %v8982 = vpop.f32.mrf.mxu0
    %v8983 = vadd.f32 %v8721, %v8982
    %v8984 = vpop.f32.mrf.mxu0
    %v8985 = vadd.f32 %v8725, %v8984
    %v8986 = vpop.f32.mrf.mxu0
    %v8987 = vadd.f32 %v8721, %v8986
    %v8988 = vpop.f32.mrf.mxu0
    %v8989 = vadd.f32 %v8725, %v8988
    %8990 = vmatprep.mubr.bf16.mxu0 %v8499
    %8991 = vmatmul.mubr.bf16.gmra.mxu0 %v8498
    %v8992 = vpop.f32.mrf.mxu0
    %v8993 = vadd.f32 %v8721, %v8992
    %v8994 = vpop.f32.mrf.mxu0
    %v8995 = vadd.f32 %v8725, %v8994
    %v8996 = vpop.f32.mrf.mxu0
    %v8997 = vadd.f32 %v8721, %v8996
    %v8998 = vpop.f32.mrf.mxu0
    %v8999 = vadd.f32 %v8725, %v8998
    %9000 = vmatprep.mubr.bf16.mxu0 %v8501
    %9001 = vmatmul.mubr.bf16.gmra.mxu0 %v8500
    %v9002 = vpop.f32.mrf.mxu0
    %v9003 = vadd.f32 %v8721, %v9002
    %v9004 = vpop.f32.mrf.mxu0
    %v9005 = vadd.f32 %v8725, %v9004
    %v9006 = vpop.f32.mrf.mxu0
    %v9007 = vadd.f32 %v8721, %v9006
    %v9008 = vpop.f32.mrf.mxu0
    %v9009 = vadd.f32 %v8725, %v9008
    %9010 = vmatprep.mubr.bf16.mxu0 %v8503
    %9011 = vmatmul.mubr.bf16.gmra.mxu0 %v8502
    %v9012 = vpop.f32.mrf.mxu0
    %v9013 = vadd.f32 %v8721, %v9012
    %v9014 = vpop.f32.mrf.mxu0
    %v9015 = vadd.f32 %v8725, %v9014
    %v9016 = vpop.f32.mrf.mxu0
    %v9017 = vadd.f32 %v8721, %v9016
    %v9018 = vpop.f32.mrf.mxu0
    %v9019 = vadd.f32 %v8725, %v9018
    %9020 = vmatprep.mubr.bf16.mxu0 %v8505
    %9021 = vmatmul.mubr.bf16.gmra.mxu0 %v8504
    %v9022 = vpop.f32.mrf.mxu0
    %v9023 = vadd.f32 %v8721, %v9022
    %v9024 = vpop.f32.mrf.mxu0
    %v9025 = vadd.f32 %v8725, %v9024
    %v9026 = vpop.f32.mrf.mxu0
    %v9027 = vadd.f32 %v8721, %v9026
    %v9028 = vpop.f32.mrf.mxu0
    %v9029 = vadd.f32 %v8725, %v9028
    %9030 = vmatprep.mubr.bf16.mxu0 %v8507
    %9031 = vmatmul.mubr.bf16.gmra.mxu0 %v8506
    %v9032 = vpop.f32.mrf.mxu0
    %v9033 = vadd.f32 %v8721, %v9032
    %v9034 = vpop.f32.mrf.mxu0
    %v9035 = vadd.f32 %v8725, %v9034
    %v9036 = vpop.f32.mrf.mxu0
    %v9037 = vadd.f32 %v8721, %v9036
    %v9038 = vpop.f32.mrf.mxu0
    %v9039 = vadd.f32 %v8725, %v9038
    %9040 = vmatprep.mubr.bf16.mxu0 %v8509
    %9041 = vmatmul.mubr.bf16.gmra.mxu0 %v8508
    %v9042 = vpop.f32.mrf.mxu0
    %v9043 = vadd.f32 %v8721, %v9042
    %v9044 = vpop.f32.mrf.mxu0
    %v9045 = vadd.f32 %v8725, %v9044
    %v9046 = vpop.f32.mrf.mxu0
    %v9047 = vadd.f32 %v8721, %v9046
    %v9048 = vpop.f32.mrf.mxu0
    %v9049 = vadd.f32 %v8725, %v9048
    %9050 = vmatprep.mubr.bf16.mxu0 %v8511
    %9051 = vmatmul.mubr.bf16.gmra.mxu0 %v8510
    %v9052 = vpop.f32.mrf.mxu0
    %v9053 = vadd.f32 %v8721, %v9052
    %v9054 = vpop.f32.mrf.mxu0
    %v9055 = vadd.f32 %v8725, %v9054
    %v9056 = vpop.f32.mrf.mxu0
    %v9057 = vadd.f32 %v8721, %v9056
    %v9058 = vpop.f32.mrf.mxu0
    %v9059 = vadd.f32 %v8725, %v9058
    %9060 = vmatprep.mubr.bf16.mxu0 %v8513
    %9061 = vmatmul.mubr.bf16.gmra.mxu0 %v8512
    %v9062 = vpop.f32.mrf.mxu0
    %v9063 = vadd.f32 %v8721, %v9062
    %v9064 = vpop.f32.mrf.mxu0
    %v9065 = vadd.f32 %v8725, %v9064
    %v9066 = vpop.f32.mrf.mxu0
    %v9067 = vadd.f32 %v8721, %v9066
    %v9068 = vpop.f32.mrf.mxu0
    %v9069 = vadd.f32 %v8725, %v9068
    %9070 = vmatprep.mubr.bf16.mxu0 %v8515
    %9071 = vmatmul.mubr.bf16.gmra.mxu0 %v8514
    %v9072 = vpop.f32.mrf.mxu0
    %v9073 = vadd.f32 %v8721, %v9072
    %v9074 = vpop.f32.mrf.mxu0
    %v9075 = vadd.f32 %v8725, %v9074
    %v9076 = vpop.f32.mrf.mxu0
    %v9077 = vadd.f32 %v8721, %v9076
    %v9078 = vpop.f32.mrf.mxu0
    %v9079 = vadd.f32 %v8725, %v9078
    %9080 = vmatprep.mubr.bf16.mxu0 %v8517
    %9081 = vmatmul.mubr.bf16.gmra.mxu0 %v8516
    %v9082 = vpop.f32.mrf.mxu0
    %v9083 = vadd.f32 %v8721, %v9082
    %v9084 = vpop.f32.mrf.mxu0
    %v9085 = vadd.f32 %v8725, %v9084
    %v9086 = vpop.f32.mrf.mxu0
    %v9087 = vadd.f32 %v8721, %v9086
    %v9088 = vpop.f32.mrf.mxu0
    %v9089 = vadd.f32 %v8725, %v9088
    %9090 = vmatprep.mubr.bf16.mxu0 %v8519
    %9091 = vmatmul.mubr.bf16.gmra.mxu0 %v8518
    %v9092 = vpop.f32.mrf.mxu0
    %v9093 = vadd.f32 %v8721, %v9092
    %v9094 = vpop.f32.mrf.mxu0
    %v9095 = vadd.f32 %v8725, %v9094
    %v9096 = vpop.f32.mrf.mxu0
    %v9097 = vadd.f32 %v8721, %v9096
    %v9098 = vpop.f32.mrf.mxu0
    %v9099 = vadd.f32 %v8725, %v9098
    %9100 = vmatprep.mubr.bf16.mxu0 %v8521
    %9101 = vmatmul.mubr.bf16.gmra.mxu0 %v8520
    %v9102 = vpop.f32.mrf.mxu0
    %v9103 = vadd.f32 %v8721, %v9102
    %v9104 = vpop.f32.mrf.mxu0
    %v9105 = vadd.f32 %v8725, %v9104
    %v9106 = vpop.f32.mrf.mxu0
    %v9107 = vadd.f32 %v8721, %v9106
    %v9108 = vpop.f32.mrf.mxu0
    %v9109 = vadd.f32 %v8725, %v9108
    %9110 = vmatprep.mubr.bf16.mxu0 %v8523
    %9111 = vmatmul.mubr.bf16.gmra.mxu0 %v8522
    %v9112 = vpop.f32.mrf.mxu0
    %v9113 = vadd.f32 %v8721, %v9112
    %v9114 = vpop.f32.mrf.mxu0
    %v9115 = vadd.f32 %v8725, %v9114
    %v9116 = vpop.f32.mrf.mxu0
    %v9117 = vadd.f32 %v8721, %v9116
    %v9118 = vpop.f32.mrf.mxu0
    %v9119 = vadd.f32 %v8725, %v9118
    %9120 = vmatprep.mubr.bf16.mxu0 %v8525
    %9121 = vmatmul.mubr.bf16.gmra.mxu0 %v8524
    %v9122 = vpop.f32.mrf.mxu0
    %v9123 = vadd.f32 %v8721, %v9122
    %v9124 = vpop.f32.mrf.mxu0
    %v9125 = vadd.f32 %v8725, %v9124
    %v9126 = vpop.f32.mrf.mxu0
    %v9127 = vadd.f32 %v8721, %v9126
    %v9128 = vpop.f32.mrf.mxu0
    %v9129 = vadd.f32 %v8725, %v9128
    %9130 = vmatprep.mubr.bf16.mxu0 %v8527
    %9131 = vmatmul.mubr.bf16.gmra.mxu0 %v8526
    %v9132 = vpop.f32.mrf.mxu0
    %v9133 = vadd.f32 %v8721, %v9132
    %v9134 = vpop.f32.mrf.mxu0
    %v9135 = vadd.f32 %v8725, %v9134
    %v9136 = vpop.f32.mrf.mxu0
    %v9137 = vadd.f32 %v8721, %v9136
    %v9138 = vpop.f32.mrf.mxu0
    %v9139 = vadd.f32 %v8725, %v9138
    %9140 = vmatprep.mubr.bf16.mxu0 %v8529
    %9141 = vmatmul.mubr.bf16.gmra.mxu0 %v8528
    %v9142 = vpop.f32.mrf.mxu0
    %v9143 = vadd.f32 %v8721, %v9142
    %v9144 = vpop.f32.mrf.mxu0
    %v9145 = vadd.f32 %v8725, %v9144
    %v9146 = vpop.f32.mrf.mxu0
    %v9147 = vadd.f32 %v8721, %v9146
    %v9148 = vpop.f32.mrf.mxu0
    %v9149 = vadd.f32 %v8725, %v9148
    %9150 = vmatprep.mubr.bf16.mxu0 %v8531
    %9151 = vmatmul.mubr.bf16.gmra.mxu0 %v8530
    %v9152 = vpop.f32.mrf.mxu0
    %v9153 = vadd.f32 %v8721, %v9152
    %v9154 = vpop.f32.mrf.mxu0
    %v9155 = vadd.f32 %v8725, %v9154
    %v9156 = vpop.f32.mrf.mxu0
    %v9157 = vadd.f32 %v8721, %v9156
    %v9158 = vpop.f32.mrf.mxu0
    %v9159 = vadd.f32 %v8725, %v9158
    %9160 = vmatprep.mubr.bf16.mxu0 %v8533
    %9161 = vmatmul.mubr.bf16.gmra.mxu0 %v8532
    %v9162 = vpop.f32.mrf.mxu0
    %v9163 = vadd.f32 %v8721, %v9162
    %v9164 = vpop.f32.mrf.mxu0
    %v9165 = vadd.f32 %v8725, %v9164
    %v9166 = vpop.f32.mrf.mxu0
    %v9167 = vadd.f32 %v8721, %v9166
    %v9168 = vpop.f32.mrf.mxu0
    %v9169 = vadd.f32 %v8725, %v9168
    %9170 = vmatprep.mubr.bf16.mxu0 %v8535
    %9171 = vmatmul.mubr.bf16.gmra.mxu0 %v8534
    %v9172 = vpop.f32.mrf.mxu0
    %v9173 = vadd.f32 %v8721, %v9172
    %v9174 = vpop.f32.mrf.mxu0
    %v9175 = vadd.f32 %v8725, %v9174
    %v9176 = vpop.f32.mrf.mxu0
    %v9177 = vadd.f32 %v8721, %v9176
    %v9178 = vpop.f32.mrf.mxu0
    %v9179 = vadd.f32 %v8725, %v9178
    %9180 = vmatprep.mubr.bf16.mxu0 %v8537
    %9181 = vmatmul.mubr.bf16.gmra.mxu0 %v8536
    %v9182 = vpop.f32.mrf.mxu0
    %v9183 = vadd.f32 %v8721, %v9182
    %v9184 = vpop.f32.mrf.mxu0
    %v9185 = vadd.f32 %v8725, %v9184
    %v9186 = vpop.f32.mrf.mxu0
    %v9187 = vadd.f32 %v8721, %v9186
    %v9188 = vpop.f32.mrf.mxu0
    %v9189 = vadd.f32 %v8725, %v9188
    %9190 = vmatprep.mubr.bf16.mxu0 %v8539
    %9191 = vmatmul.mubr.bf16.gmra.mxu0 %v8538
    %v9192 = vpop.f32.mrf.mxu0
    %v9193 = vadd.f32 %v8721, %v9192
    %v9194 = vpop.f32.mrf.mxu0
    %v9195 = vadd.f32 %v8725, %v9194
    %v9196 = vpop.f32.mrf.mxu0
    %v9197 = vadd.f32 %v8721, %v9196
    %v9198 = vpop.f32.mrf.mxu0
    %v9199 = vadd.f32 %v8725, %v9198
    %9200 = vmatprep.mubr.bf16.mxu0 %v8541
    %9201 = vmatmul.mubr.bf16.gmra.mxu0 %v8540
    %v9202 = vpop.f32.mrf.mxu0
    %v9203 = vadd.f32 %v8721, %v9202
    %v9204 = vpop.f32.mrf.mxu0
    %v9205 = vadd.f32 %v8725, %v9204
    %v9206 = vpop.f32.mrf.mxu0
    %v9207 = vadd.f32 %v8721, %v9206
    %v9208 = vpop.f32.mrf.mxu0
    %v9209 = vadd.f32 %v8725, %v9208
    %9210 = vmatprep.mubr.bf16.mxu0 %v8543
    %9211 = vmatmul.mubr.bf16.gmra.mxu0 %v8542
    %v9212 = vpop.f32.mrf.mxu0
    %v9213 = vadd.f32 %v8721, %v9212
    %v9214 = vpop.f32.mrf.mxu0
    %v9215 = vadd.f32 %v8725, %v9214
    %v9216 = vpop.f32.mrf.mxu0
    %v9217 = vadd.f32 %v8721, %v9216
    %v9218 = vpop.f32.mrf.mxu0
    %v9219 = vadd.f32 %v8725, %v9218
    %9220 = vmatprep.mubr.bf16.mxu0 %v8545
    %9221 = vmatmul.mubr.bf16.gmra.mxu0 %v8544
    %v9222 = vpop.f32.mrf.mxu0
    %v9223 = vadd.f32 %v8721, %v9222
    %v9224 = vpop.f32.mrf.mxu0
    %v9225 = vadd.f32 %v8725, %v9224
    %v9226 = vpop.f32.mrf.mxu0
    %v9227 = vadd.f32 %v8721, %v9226
    %v9228 = vpop.f32.mrf.mxu0
    %v9229 = vadd.f32 %v8725, %v9228
    %9230 = vmatprep.mubr.bf16.mxu0 %v8547
    %9231 = vmatmul.mubr.bf16.gmra.mxu0 %v8546
    %v9232 = vpop.f32.mrf.mxu0
    %v9233 = vadd.f32 %v8721, %v9232
    %v9234 = vpop.f32.mrf.mxu0
    %v9235 = vadd.f32 %v8725, %v9234
    %v9236 = vpop.f32.mrf.mxu0
    %v9237 = vadd.f32 %v8721, %v9236
    %v9238 = vpop.f32.mrf.mxu0
    %v9239 = vadd.f32 %v8725, %v9238
    %9240 = vmatprep.mubr.bf16.mxu0 %v8549
    %9241 = vmatmul.mubr.bf16.gmra.mxu0 %v8548
    %v9242 = vpop.f32.mrf.mxu0
    %v9243 = vadd.f32 %v8721, %v9242
    %v9244 = vpop.f32.mrf.mxu0
    %v9245 = vadd.f32 %v8725, %v9244
    %v9246 = vpop.f32.mrf.mxu0
    %v9247 = vadd.f32 %v8721, %v9246
    %v9248 = vpop.f32.mrf.mxu0
    %v9249 = vadd.f32 %v8725, %v9248
    %9250 = vmatprep.mubr.bf16.mxu0 %v8551
    %9251 = vmatmul.mubr.bf16.gmra.mxu0 %v8550
    %v9252 = vpop.f32.mrf.mxu0
    %v9253 = vadd.f32 %v8721, %v9252
    %v9254 = vpop.f32.mrf.mxu0
    %v9255 = vadd.f32 %v8725, %v9254
    %v9256 = vpop.f32.mrf.mxu0
    %v9257 = vadd.f32 %v8721, %v9256
    %v9258 = vpop.f32.mrf.mxu0
    %v9259 = vadd.f32 %v8725, %v9258
    %9260 = vmatprep.mubr.bf16.mxu0 %v8553
    %9261 = vmatmul.mubr.bf16.gmra.mxu0 %v8552
    %v9262 = vpop.f32.mrf.mxu0
    %v9263 = vadd.f32 %v8721, %v9262
    %v9264 = vpop.f32.mrf.mxu0
    %v9265 = vadd.f32 %v8725, %v9264
    %v9266 = vpop.f32.mrf.mxu0
    %v9267 = vadd.f32 %v8721, %v9266
    %v9268 = vpop.f32.mrf.mxu0
    %v9269 = vadd.f32 %v8725, %v9268
    %9270 = vmatprep.mubr.bf16.mxu0 %v8555
    %9271 = vmatmul.mubr.bf16.gmra.mxu0 %v8554
    %v9272 = vpop.f32.mrf.mxu0
    %v9273 = vadd.f32 %v8721, %v9272
    %v9274 = vpop.f32.mrf.mxu0
    %v9275 = vadd.f32 %v8725, %v9274
    %v9276 = vpop.f32.mrf.mxu0
    %v9277 = vadd.f32 %v8721, %v9276
    %v9278 = vpop.f32.mrf.mxu0
    %v9279 = vadd.f32 %v8725, %v9278
    %9280 = vmatprep.mubr.bf16.mxu0 %v8557
    %9281 = vmatmul.mubr.bf16.gmra.mxu0 %v8556
    %v9282 = vpop.f32.mrf.mxu0
    %v9283 = vadd.f32 %v8721, %v9282
    %v9284 = vpop.f32.mrf.mxu0
    %v9285 = vadd.f32 %v8725, %v9284
    %v9286 = vpop.f32.mrf.mxu0
    %v9287 = vadd.f32 %v8721, %v9286
    %v9288 = vpop.f32.mrf.mxu0
    %v9289 = vadd.f32 %v8725, %v9288
    %9290 = vmatprep.mubr.bf16.mxu0 %v8559
    %9291 = vmatmul.mubr.bf16.gmra.mxu0 %v8558
    %v9292 = vpop.f32.mrf.mxu0
    %v9293 = vadd.f32 %v8721, %v9292
    %v9294 = vpop.f32.mrf.mxu0
    %v9295 = vadd.f32 %v8725, %v9294
    %v9296 = vpop.f32.mrf.mxu0
    %v9297 = vadd.f32 %v8721, %v9296
    %v9298 = vpop.f32.mrf.mxu0
    %v9299 = vadd.f32 %v8725, %v9298
    %9300 = vmatprep.mubr.bf16.mxu0 %v8561
    %9301 = vmatmul.mubr.bf16.gmra.mxu0 %v8560
    %v9302 = vpop.f32.mrf.mxu0
    %v9303 = vadd.f32 %v8721, %v9302
    %v9304 = vpop.f32.mrf.mxu0
    %v9305 = vadd.f32 %v8725, %v9304
    %v9306 = vpop.f32.mrf.mxu0
    %v9307 = vadd.f32 %v8721, %v9306
    %v9308 = vpop.f32.mrf.mxu0
    %v9309 = vadd.f32 %v8725, %v9308
    %9310 = vmatprep.mubr.bf16.mxu0 %v8563
    %9311 = vmatmul.mubr.bf16.gmra.mxu0 %v8562
    %v9312 = vpop.f32.mrf.mxu0
    %v9313 = vadd.f32 %v8721, %v9312
    %v9314 = vpop.f32.mrf.mxu0
    %v9315 = vadd.f32 %v8725, %v9314
    %v9316 = vpop.f32.mrf.mxu0
    %v9317 = vadd.f32 %v8721, %v9316
    %v9318 = vpop.f32.mrf.mxu0
    %v9319 = vadd.f32 %v8725, %v9318
    %9320 = vmatprep.mubr.bf16.mxu0 %v8565
    %9321 = vmatmul.mubr.bf16.gmra.mxu0 %v8564
    %v9322 = vpop.f32.mrf.mxu0
    %v9323 = vadd.f32 %v8721, %v9322
    %v9324 = vpop.f32.mrf.mxu0
    %v9325 = vadd.f32 %v8725, %v9324
    %v9326 = vpop.f32.mrf.mxu0
    %v9327 = vadd.f32 %v8721, %v9326
    %v9328 = vpop.f32.mrf.mxu0
    %v9329 = vadd.f32 %v8725, %v9328
    %9330 = vmatprep.mubr.bf16.mxu0 %v8567
    %9331 = vmatmul.mubr.bf16.gmra.mxu0 %v8566
    %v9332 = vpop.f32.mrf.mxu0
    %v9333 = vadd.f32 %v8721, %v9332
    %v9334 = vpop.f32.mrf.mxu0
    %v9335 = vadd.f32 %v8725, %v9334
    %v9336 = vpop.f32.mrf.mxu0
    %v9337 = vadd.f32 %v8721, %v9336
    %v9338 = vpop.f32.mrf.mxu0
    %v9339 = vadd.f32 %v8725, %v9338
    %9340 = vmatprep.mubr.bf16.mxu0 %v8569
    %9341 = vmatmul.mubr.bf16.gmra.mxu0 %v8568
    %v9342 = vpop.f32.mrf.mxu0
    %v9343 = vadd.f32 %v8721, %v9342
    %v9344 = vpop.f32.mrf.mxu0
    %v9345 = vadd.f32 %v8725, %v9344
    %v9346 = vpop.f32.mrf.mxu0
    %v9347 = vadd.f32 %v8721, %v9346
    %v9348 = vpop.f32.mrf.mxu0
    %v9349 = vadd.f32 %v8725, %v9348
    %9350 = vmatprep.mubr.bf16.mxu0 %v8571
    %9351 = vmatmul.mubr.bf16.gmra.mxu0 %v8570
    %v9352 = vpop.f32.mrf.mxu0
    %v9353 = vadd.f32 %v8721, %v9352
    %v9354 = vpop.f32.mrf.mxu0
    %v9355 = vadd.f32 %v8725, %v9354
    %v9356 = vpop.f32.mrf.mxu0
    %v9357 = vadd.f32 %v8721, %v9356
    %v9358 = vpop.f32.mrf.mxu0
    %v9359 = vadd.f32 %v8725, %v9358
    %9360 = vmatprep.mubr.bf16.mxu0 %v8573
    %9361 = vmatmul.mubr.bf16.gmra.mxu0 %v8572
    %v9362 = vpop.f32.mrf.mxu0
    %v9363 = vadd.f32 %v8721, %v9362
    %v9364 = vpop.f32.mrf.mxu0
    %v9365 = vadd.f32 %v8725, %v9364
    %v9366 = vpop.f32.mrf.mxu0
    %v9367 = vadd.f32 %v8721, %v9366
    %v9368 = vpop.f32.mrf.mxu0
    %v9369 = vadd.f32 %v8725, %v9368
    %9370 = vmatprep.mubr.bf16.mxu0 %v8575
    %9371 = vmatmul.mubr.bf16.gmra.mxu0 %v8574
    %v9372 = vpop.f32.mrf.mxu0
    %v9373 = vadd.f32 %v8721, %v9372
    %v9374 = vpop.f32.mrf.mxu0
    %v9375 = vadd.f32 %v8725, %v9374
    %v9376 = vpop.f32.mrf.mxu0
    %v9377 = vadd.f32 %v8721, %v9376
    %v9378 = vpop.f32.mrf.mxu0
    %v9379 = vadd.f32 %v8725, %v9378
    %9380 = vmatprep.mubr.bf16.mxu0 %v8577
    %9381 = vmatmul.mubr.bf16.gmra.mxu0 %v8576
    %v9382 = vpop.f32.mrf.mxu0
    %v9383 = vadd.f32 %v8721, %v9382
    %v9384 = vpop.f32.mrf.mxu0
    %v9385 = vadd.f32 %v8725, %v9384
    %v9386 = vpop.f32.mrf.mxu0
    %v9387 = vadd.f32 %v8721, %v9386
    %v9388 = vpop.f32.mrf.mxu0
    %v9389 = vadd.f32 %v8725, %v9388
    %9390 = vmatprep.mubr.bf16.mxu0 %v8579
    %9391 = vmatmul.mubr.bf16.gmra.mxu0 %v8578
    %v9392 = vpop.f32.mrf.mxu0
    %v9393 = vadd.f32 %v8721, %v9392
    %v9394 = vpop.f32.mrf.mxu0
    %v9395 = vadd.f32 %v8725, %v9394
    %v9396 = vpop.f32.mrf.mxu0
    %v9397 = vadd.f32 %v8721, %v9396
    %v9398 = vpop.f32.mrf.mxu0
    %v9399 = vadd.f32 %v8725, %v9398
    %9400 = vmatprep.mubr.bf16.mxu0 %v8581
    %9401 = vmatmul.mubr.bf16.gmra.mxu0 %v8580
    %v9402 = vpop.f32.mrf.mxu0
    %v9403 = vadd.f32 %v8721, %v9402
    %v9404 = vpop.f32.mrf.mxu0
    %v9405 = vadd.f32 %v8725, %v9404
    %v9406 = vpop.f32.mrf.mxu0
    %v9407 = vadd.f32 %v8721, %v9406
    %v9408 = vpop.f32.mrf.mxu0
    %v9409 = vadd.f32 %v8725, %v9408
    %9410 = vmatprep.mubr.bf16.mxu0 %v8583
    %9411 = vmatmul.mubr.bf16.gmra.mxu0 %v8582
    %v9412 = vpop.f32.mrf.mxu0
    %v9413 = vadd.f32 %v8721, %v9412
    %v9414 = vpop.f32.mrf.mxu0
    %v9415 = vadd.f32 %v8725, %v9414
    %v9416 = vpop.f32.mrf.mxu0
    %v9417 = vadd.f32 %v8721, %v9416
    %v9418 = vpop.f32.mrf.mxu0
    %v9419 = vadd.f32 %v8725, %v9418
    %9420 = vmatprep.mubr.bf16.mxu0 %v8585
    %9421 = vmatmul.mubr.bf16.gmra.mxu0 %v8584
    %v9422 = vpop.f32.mrf.mxu0
    %v9423 = vadd.f32 %v8721, %v9422
    %v9424 = vpop.f32.mrf.mxu0
    %v9425 = vadd.f32 %v8725, %v9424
    %v9426 = vpop.f32.mrf.mxu0
    %v9427 = vadd.f32 %v8721, %v9426
    %v9428 = vpop.f32.mrf.mxu0
    %v9429 = vadd.f32 %v8725, %v9428
    %9430 = vmatprep.mubr.bf16.mxu0 %v8587
    %9431 = vmatmul.mubr.bf16.gmra.mxu0 %v8586
    %v9432 = vpop.f32.mrf.mxu0
    %v9433 = vadd.f32 %v8721, %v9432
    %v9434 = vpop.f32.mrf.mxu0
    %v9435 = vadd.f32 %v8725, %v9434
    %v9436 = vpop.f32.mrf.mxu0
    %v9437 = vadd.f32 %v8721, %v9436
    %v9438 = vpop.f32.mrf.mxu0
    %v9439 = vadd.f32 %v8725, %v9438
    %9440 = vmatprep.mubr.bf16.mxu0 %v8589
    %9441 = vmatmul.mubr.bf16.gmra.mxu0 %v8588
    %v9442 = vpop.f32.mrf.mxu0
    %v9443 = vadd.f32 %v8721, %v9442
    %v9444 = vpop.f32.mrf.mxu0
    %v9445 = vadd.f32 %v8725, %v9444
    %v9446 = vpop.f32.mrf.mxu0
    %v9447 = vadd.f32 %v8721, %v9446
    %v9448 = vpop.f32.mrf.mxu0
    %v9449 = vadd.f32 %v8725, %v9448
    %9450 = vmatprep.mubr.bf16.mxu0 %v8591
    %9451 = vmatmul.mubr.bf16.gmra.mxu0 %v8590
    %v9452 = vpop.f32.mrf.mxu0
    %v9453 = vadd.f32 %v8721, %v9452
    %v9454 = vpop.f32.mrf.mxu0
    %v9455 = vadd.f32 %v8725, %v9454
    %v9456 = vpop.f32.mrf.mxu0
    %v9457 = vadd.f32 %v8721, %v9456
    %v9458 = vpop.f32.mrf.mxu0
    %v9459 = vadd.f32 %v8725, %v9458
    %9460 = vmatprep.mubr.bf16.mxu0 %v8593
    %9461 = vmatmul.mubr.bf16.gmra.mxu0 %v8592
    %v9462 = vpop.f32.mrf.mxu0
    %v9463 = vadd.f32 %v8721, %v9462
    %v9464 = vpop.f32.mrf.mxu0
    %v9465 = vadd.f32 %v8725, %v9464
    %v9466 = vpop.f32.mrf.mxu0
    %v9467 = vadd.f32 %v8721, %v9466
    %v9468 = vpop.f32.mrf.mxu0
    %v9469 = vadd.f32 %v8725, %v9468
    %9470 = vmatprep.mubr.bf16.mxu0 %v8595
    %9471 = vmatmul.mubr.bf16.gmra.mxu0 %v8594
    %v9472 = vpop.f32.mrf.mxu0
    %v9473 = vadd.f32 %v8721, %v9472
    %v9474 = vpop.f32.mrf.mxu0
    %v9475 = vadd.f32 %v8725, %v9474
    %v9476 = vpop.f32.mrf.mxu0
    %v9477 = vadd.f32 %v8721, %v9476
    %v9478 = vpop.f32.mrf.mxu0
    %v9479 = vadd.f32 %v8725, %v9478
    %9480 = vmatprep.mubr.bf16.mxu0 %v8597
    %9481 = vmatmul.mubr.bf16.gmra.mxu0 %v8596
    %v9482 = vpop.f32.mrf.mxu0
    %v9483 = vadd.f32 %v8721, %v9482
    %v9484 = vpop.f32.mrf.mxu0
    %v9485 = vadd.f32 %v8725, %v9484
    %v9486 = vpop.f32.mrf.mxu0
    %v9487 = vadd.f32 %v8721, %v9486
    %v9488 = vpop.f32.mrf.mxu0
    %v9489 = vadd.f32 %v8725, %v9488
    %9490 = vmatprep.mubr.bf16.mxu0 %v8599
    %9491 = vmatmul.mubr.bf16.gmra.mxu0 %v8598
    %v9492 = vpop.f32.mrf.mxu0
    %v9493 = vadd.f32 %v8721, %v9492
    %v9494 = vpop.f32.mrf.mxu0
    %v9495 = vadd.f32 %v8725, %v9494
    %v9496 = vpop.f32.mrf.mxu0
    %v9497 = vadd.f32 %v8721, %v9496
    %v9498 = vpop.f32.mrf.mxu0
    %v9499 = vadd.f32 %v8725, %v9498
    %9500 = vmatprep.mubr.bf16.mxu0 %v8601
    %9501 = vmatmul.mubr.bf16.gmra.mxu0 %v8600
    %v9502 = vpop.f32.mrf.mxu0
    %v9503 = vadd.f32 %v8721, %v9502
    %v9504 = vpop.f32.mrf.mxu0
    %v9505 = vadd.f32 %v8725, %v9504
    %v9506 = vpop.f32.mrf.mxu0
    %v9507 = vadd.f32 %v8721, %v9506
    %v9508 = vpop.f32.mrf.mxu0
    %v9509 = vadd.f32 %v8725, %v9508
    %9510 = vmatprep.mubr.bf16.mxu0 %v8603
    %9511 = vmatmul.mubr.bf16.gmra.mxu0 %v8602
    %v9512 = vpop.f32.mrf.mxu0
    %v9513 = vadd.f32 %v8721, %v9512
    %v9514 = vpop.f32.mrf.mxu0
    %v9515 = vadd.f32 %v8725, %v9514
    %v9516 = vpop.f32.mrf.mxu0
    %v9517 = vadd.f32 %v8721, %v9516
    %v9518 = vpop.f32.mrf.mxu0
    %v9519 = vadd.f32 %v8725, %v9518
    %9520 = vmatprep.mubr.bf16.mxu0 %v8605
    %9521 = vmatmul.mubr.bf16.gmra.mxu0 %v8604
    %v9522 = vpop.f32.mrf.mxu0
    %v9523 = vadd.f32 %v8721, %v9522
    %v9524 = vpop.f32.mrf.mxu0
    %v9525 = vadd.f32 %v8725, %v9524
    %v9526 = vpop.f32.mrf.mxu0
    %v9527 = vadd.f32 %v8721, %v9526
    %v9528 = vpop.f32.mrf.mxu0
    %v9529 = vadd.f32 %v8725, %v9528
    %9530 = vmatprep.mubr.bf16.mxu0 %v8607
    %9531 = vmatmul.mubr.bf16.gmra.mxu0 %v8606
    %v9532 = vpop.f32.mrf.mxu0
    %v9533 = vadd.f32 %v8721, %v9532
    %v9534 = vpop.f32.mrf.mxu0
    %v9535 = vadd.f32 %v8725, %v9534
    %v9536 = vpop.f32.mrf.mxu0
    %v9537 = vadd.f32 %v8721, %v9536
    %v9538 = vpop.f32.mrf.mxu0
    %v9539 = vadd.f32 %v8725, %v9538
    %9540 = vmatprep.mubr.bf16.mxu0 %v8609
    %9541 = vmatmul.mubr.bf16.gmra.mxu0 %v8608
    %v9542 = vpop.f32.mrf.mxu0
    %v9543 = vadd.f32 %v8721, %v9542
    %v9544 = vpop.f32.mrf.mxu0
    %v9545 = vadd.f32 %v8725, %v9544
    %v9546 = vpop.f32.mrf.mxu0
    %v9547 = vadd.f32 %v8721, %v9546
    %v9548 = vpop.f32.mrf.mxu0
    %v9549 = vadd.f32 %v8725, %v9548
    %9550 = vmatprep.mubr.bf16.mxu0 %v8611
    %9551 = vmatmul.mubr.bf16.gmra.mxu0 %v8610
    %v9552 = vpop.f32.mrf.mxu0
    %v9553 = vadd.f32 %v8721, %v9552
    %v9554 = vpop.f32.mrf.mxu0
    %v9555 = vadd.f32 %v8725, %v9554
    %v9556 = vpop.f32.mrf.mxu0
    %v9557 = vadd.f32 %v8721, %v9556
    %v9558 = vpop.f32.mrf.mxu0
    %v9559 = vadd.f32 %v8725, %v9558
    %9560 = vmatprep.mubr.bf16.mxu0 %v8613
    %9561 = vmatmul.mubr.bf16.gmra.mxu0 %v8612
    %v9562 = vpop.f32.mrf.mxu0
    %v9563 = vadd.f32 %v8721, %v9562
    %v9564 = vpop.f32.mrf.mxu0
    %v9565 = vadd.f32 %v8725, %v9564
    %v9566 = vpop.f32.mrf.mxu0
    %v9567 = vadd.f32 %v8721, %v9566
    %v9568 = vpop.f32.mrf.mxu0
    %v9569 = vadd.f32 %v8725, %v9568
    %9570 = vmatprep.mubr.bf16.mxu0 %v8615
    %9571 = vmatmul.mubr.bf16.gmra.mxu0 %v8614
    %v9572 = vpop.f32.mrf.mxu0
    %v9573 = vadd.f32 %v8721, %v9572
    %v9574 = vpop.f32.mrf.mxu0
    %v9575 = vadd.f32 %v8725, %v9574
    %v9576 = vpop.f32.mrf.mxu0
    %v9577 = vadd.f32 %v8721, %v9576
    %v9578 = vpop.f32.mrf.mxu0
    %v9579 = vadd.f32 %v8725, %v9578
    %9580 = vmatprep.mubr.bf16.mxu0 %v8617
    %9581 = vmatmul.mubr.bf16.gmra.mxu0 %v8616
    %v9582 = vpop.f32.mrf.mxu0
    %v9583 = vadd.f32 %v8721, %v9582
    %v9584 = vpop.f32.mrf.mxu0
    %v9585 = vadd.f32 %v8725, %v9584
    %v9586 = vpop.f32.mrf.mxu0
    %v9587 = vadd.f32 %v8721, %v9586
    %v9588 = vpop.f32.mrf.mxu0
    %v9589 = vadd.f32 %v8725, %v9588
    %9590 = vmatprep.mubr.bf16.mxu0 %v8619
    %9591 = vmatmul.mubr.bf16.gmra.mxu0 %v8618
    %v9592 = vpop.f32.mrf.mxu0
    %v9593 = vadd.f32 %v8721, %v9592
    %v9594 = vpop.f32.mrf.mxu0
    %v9595 = vadd.f32 %v8725, %v9594
    %v9596 = vpop.f32.mrf.mxu0
    %v9597 = vadd.f32 %v8721, %v9596
    %v9598 = vpop.f32.mrf.mxu0
    %v9599 = vadd.f32 %v8725, %v9598
    %9600 = vmatprep.mubr.bf16.mxu0 %v8621
    %9601 = vmatmul.mubr.bf16.gmra.mxu0 %v8620
    %v9602 = vpop.f32.mrf.mxu0
    %v9603 = vadd.f32 %v8721, %v9602
    %v9604 = vpop.f32.mrf.mxu0
    %v9605 = vadd.f32 %v8725, %v9604
    %v9606 = vpop.f32.mrf.mxu0
    %v9607 = vadd.f32 %v8721, %v9606
    %v9608 = vpop.f32.mrf.mxu0
    %v9609 = vadd.f32 %v8725, %v9608
    %9610 = vmatprep.mubr.bf16.mxu0 %v8623
    %9611 = vmatmul.mubr.bf16.gmra.mxu0 %v8622
    %v9612 = vpop.f32.mrf.mxu0
    %v9613 = vadd.f32 %v8721, %v9612
    %v9614 = vpop.f32.mrf.mxu0
    %v9615 = vadd.f32 %v8725, %v9614
    %v9616 = vpop.f32.mrf.mxu0
    %v9617 = vadd.f32 %v8721, %v9616
    %v9618 = vpop.f32.mrf.mxu0
    %v9619 = vadd.f32 %v8725, %v9618
    %9620 = vmatprep.mubr.bf16.mxu0 %v8625
    %9621 = vmatmul.mubr.bf16.gmra.mxu0 %v8624
    %v9622 = vpop.f32.mrf.mxu0
    %v9623 = vadd.f32 %v8721, %v9622
    %v9624 = vpop.f32.mrf.mxu0
    %v9625 = vadd.f32 %v8725, %v9624
    %v9626 = vpop.f32.mrf.mxu0
    %v9627 = vadd.f32 %v8721, %v9626
    %v9628 = vpop.f32.mrf.mxu0
    %v9629 = vadd.f32 %v8725, %v9628
    %9630 = vmatprep.mubr.bf16.mxu0 %v8627
    %9631 = vmatmul.mubr.bf16.gmra.mxu0 %v8626
    %v9632 = vpop.f32.mrf.mxu0
    %v9633 = vadd.f32 %v8721, %v9632
    %v9634 = vpop.f32.mrf.mxu0
    %v9635 = vadd.f32 %v8725, %v9634
    %v9636 = vpop.f32.mrf.mxu0
    %v9637 = vadd.f32 %v8721, %v9636
    %v9638 = vpop.f32.mrf.mxu0
    %v9639 = vadd.f32 %v8725, %v9638
    %9640 = vmatprep.mubr.bf16.mxu0 %v8629
    %9641 = vmatmul.mubr.bf16.gmra.mxu0 %v8628
    %v9642 = vpop.f32.mrf.mxu0
    %v9643 = vadd.f32 %v8721, %v9642
    %v9644 = vpop.f32.mrf.mxu0
    %v9645 = vadd.f32 %v8725, %v9644
    %v9646 = vpop.f32.mrf.mxu0
    %v9647 = vadd.f32 %v8721, %v9646
    %v9648 = vpop.f32.mrf.mxu0
    %v9649 = vadd.f32 %v8725, %v9648
    %9650 = vmatprep.mubr.bf16.mxu0 %v8631
    %9651 = vmatmul.mubr.bf16.gmra.mxu0 %v8630
    %v9652 = vpop.f32.mrf.mxu0
    %v9653 = vadd.f32 %v8721, %v9652
    %v9654 = vpop.f32.mrf.mxu0
    %v9655 = vadd.f32 %v8725, %v9654
    %v9656 = vpop.f32.mrf.mxu0
    %v9657 = vadd.f32 %v8721, %v9656
    %v9658 = vpop.f32.mrf.mxu0
    %v9659 = vadd.f32 %v8725, %v9658
    %9660 = vmatprep.mubr.bf16.mxu0 %v8633
    %9661 = vmatmul.mubr.bf16.gmra.mxu0 %v8632
    %v9662 = vpop.f32.mrf.mxu0
    %v9663 = vadd.f32 %v8721, %v9662
    %v9664 = vpop.f32.mrf.mxu0
    %v9665 = vadd.f32 %v8725, %v9664
    %v9666 = vpop.f32.mrf.mxu0
    %v9667 = vadd.f32 %v8721, %v9666
    %v9668 = vpop.f32.mrf.mxu0
    %v9669 = vadd.f32 %v8725, %v9668
    %9670 = vmatprep.mubr.bf16.mxu0 %v8635
    %9671 = vmatmul.mubr.bf16.gmra.mxu0 %v8634
    %v9672 = vpop.f32.mrf.mxu0
    %v9673 = vadd.f32 %v8721, %v9672
    %v9674 = vpop.f32.mrf.mxu0
    %v9675 = vadd.f32 %v8725, %v9674
    %v9676 = vpop.f32.mrf.mxu0
    %v9677 = vadd.f32 %v8721, %v9676
    %v9678 = vpop.f32.mrf.mxu0
    %v9679 = vadd.f32 %v8725, %v9678
    %9680 = vmatprep.mubr.bf16.mxu0 %v8637
    %9681 = vmatmul.mubr.bf16.gmra.mxu0 %v8636
    %v9682 = vpop.f32.mrf.mxu0
    %v9683 = vadd.f32 %v8721, %v9682
    %v9684 = vpop.f32.mrf.mxu0
    %v9685 = vadd.f32 %v8725, %v9684
    %v9686 = vpop.f32.mrf.mxu0
    %v9687 = vadd.f32 %v8721, %v9686
    %v9688 = vpop.f32.mrf.mxu0
    %v9689 = vadd.f32 %v8725, %v9688
    %9690 = vmatprep.mubr.bf16.mxu0 %v8639
    %9691 = vmatmul.mubr.bf16.gmra.mxu0 %v8638
    %v9692 = vpop.f32.mrf.mxu0
    %v9693 = vadd.f32 %v8721, %v9692
    %v9694 = vpop.f32.mrf.mxu0
    %v9695 = vadd.f32 %v8725, %v9694
    %v9696 = vpop.f32.mrf.mxu0
    %v9697 = vadd.f32 %v8721, %v9696
    %v9698 = vpop.f32.mrf.mxu0
    %v9699 = vadd.f32 %v8725, %v9698
    %9700 = vmatprep.mubr.bf16.mxu0 %v8641
    %9701 = vmatmul.mubr.bf16.gmra.mxu0 %v8640
    %v9702 = vpop.f32.mrf.mxu0
    %v9703 = vadd.f32 %v8721, %v9702
    %v9704 = vpop.f32.mrf.mxu0
    %v9705 = vadd.f32 %v8725, %v9704
    %v9706 = vpop.f32.mrf.mxu0
    %v9707 = vadd.f32 %v8721, %v9706
    %v9708 = vpop.f32.mrf.mxu0
    %v9709 = vadd.f32 %v8725, %v9708
    %9710 = vmatprep.mubr.bf16.mxu0 %v8643
    %9711 = vmatmul.mubr.bf16.gmra.mxu0 %v8642
    %v9712 = vpop.f32.mrf.mxu0
    %v9713 = vadd.f32 %v8721, %v9712
    %v9714 = vpop.f32.mrf.mxu0
    %v9715 = vadd.f32 %v8725, %v9714
    %v9716 = vpop.f32.mrf.mxu0
    %v9717 = vadd.f32 %v8721, %v9716
    %v9718 = vpop.f32.mrf.mxu0
    %v9719 = vadd.f32 %v8725, %v9718
    %9720 = vmatprep.mubr.bf16.mxu0 %v8645
    %9721 = vmatmul.mubr.bf16.gmra.mxu0 %v8644
    %v9722 = vpop.f32.mrf.mxu0
    %v9723 = vadd.f32 %v8721, %v9722
    %v9724 = vpop.f32.mrf.mxu0
    %v9725 = vadd.f32 %v8725, %v9724
    %v9726 = vpop.f32.mrf.mxu0
    %v9727 = vadd.f32 %v8721, %v9726
    %v9728 = vpop.f32.mrf.mxu0
    %v9729 = vadd.f32 %v8725, %v9728
    %9730 = vmatprep.mubr.bf16.mxu0 %v8647
    %9731 = vmatmul.mubr.bf16.gmra.mxu0 %v8646
    %v9732 = vpop.f32.mrf.mxu0
    %v9733 = vadd.f32 %v8721, %v9732
    %v9734 = vpop.f32.mrf.mxu0
    %v9735 = vadd.f32 %v8725, %v9734
    %v9736 = vpop.f32.mrf.mxu0
    %v9737 = vadd.f32 %v8721, %v9736
    %v9738 = vpop.f32.mrf.mxu0
    %v9739 = vadd.f32 %v8725, %v9738
    %9740 = vmatprep.mubr.bf16.mxu0 %v8649
    %9741 = vmatmul.mubr.bf16.gmra.mxu0 %v8648
    %v9742 = vpop.f32.mrf.mxu0
    %v9743 = vadd.f32 %v8721, %v9742
    %v9744 = vpop.f32.mrf.mxu0
    %v9745 = vadd.f32 %v8725, %v9744
    %v9746 = vpop.f32.mrf.mxu0
    %v9747 = vadd.f32 %v8721, %v9746
    %v9748 = vpop.f32.mrf.mxu0
    %v9749 = vadd.f32 %v8725, %v9748
    %9750 = vmatprep.mubr.bf16.mxu0 %v8651
    %9751 = vmatmul.mubr.bf16.gmra.mxu0 %v8650
    %v9752 = vpop.f32.mrf.mxu0
    %v9753 = vadd.f32 %v8721, %v9752
    %v9754 = vpop.f32.mrf.mxu0
    %v9755 = vadd.f32 %v8725, %v9754
    %v9756 = vpop.f32.mrf.mxu0
    %v9757 = vadd.f32 %v8721, %v9756
    %v9758 = vpop.f32.mrf.mxu0
    %v9759 = vadd.f32 %v8725, %v9758
    %9760 = vmatprep.mubr.bf16.mxu0 %v8653
    %9761 = vmatmul.mubr.bf16.gmra.mxu0 %v8652
    %v9762 = vpop.f32.mrf.mxu0
    %v9763 = vadd.f32 %v8721, %v9762
    %v9764 = vpop.f32.mrf.mxu0
    %v9765 = vadd.f32 %v8725, %v9764
    %v9766 = vpop.f32.mrf.mxu0
    %v9767 = vadd.f32 %v8721, %v9766
    %v9768 = vpop.f32.mrf.mxu0
    %v9769 = vadd.f32 %v8725, %v9768
    %9770 = vmatprep.mubr.bf16.mxu0 %v8655
    %9771 = vmatmul.mubr.bf16.gmra.mxu0 %v8654
    %v9772 = vpop.f32.mrf.mxu0
    %v9773 = vadd.f32 %v8721, %v9772
    %v9774 = vpop.f32.mrf.mxu0
    %v9775 = vadd.f32 %v8725, %v9774
    %v9776 = vpop.f32.mrf.mxu0
    %v9777 = vadd.f32 %v8721, %v9776
    %v9778 = vpop.f32.mrf.mxu0
    %v9779 = vadd.f32 %v8725, %v9778
    %9780 = vmatprep.mubr.bf16.mxu0 %v8657
    %9781 = vmatmul.mubr.bf16.gmra.mxu0 %v8656
    %v9782 = vpop.f32.mrf.mxu0
    %v9783 = vadd.f32 %v8721, %v9782
    %v9784 = vpop.f32.mrf.mxu0
    %v9785 = vadd.f32 %v8725, %v9784
    %v9786 = vpop.f32.mrf.mxu0
    %v9787 = vadd.f32 %v8721, %v9786
    %v9788 = vpop.f32.mrf.mxu0
    %v9789 = vadd.f32 %v8725, %v9788
    %9790 = vmatprep.mubr.bf16.mxu0 %v8659
    %9791 = vmatmul.mubr.bf16.gmra.mxu0 %v8658
    %v9792 = vpop.f32.mrf.mxu0
    %v9793 = vadd.f32 %v8721, %v9792
    %v9794 = vpop.f32.mrf.mxu0
    %v9795 = vadd.f32 %v8725, %v9794
    %v9796 = vpop.f32.mrf.mxu0
    %v9797 = vadd.f32 %v8721, %v9796
    %v9798 = vpop.f32.mrf.mxu0
    %v9799 = vadd.f32 %v8725, %v9798
    %9800 = vmatprep.mubr.bf16.mxu0 %v8661
    %9801 = vmatmul.mubr.bf16.gmra.mxu0 %v8660
    %v9802 = vpop.f32.mrf.mxu0
    %v9803 = vadd.f32 %v8721, %v9802
    %v9804 = vpop.f32.mrf.mxu0
    %v9805 = vadd.f32 %v8725, %v9804
    %v9806 = vpop.f32.mrf.mxu0
    %v9807 = vadd.f32 %v8721, %v9806
    %v9808 = vpop.f32.mrf.mxu0
    %v9809 = vadd.f32 %v8725, %v9808
    %9810 = vmatprep.mubr.bf16.mxu0 %v8663
    %9811 = vmatmul.mubr.bf16.gmra.mxu0 %v8662
    %v9812 = vpop.f32.mrf.mxu0
    %v9813 = vadd.f32 %v8721, %v9812
    %v9814 = vpop.f32.mrf.mxu0
    %v9815 = vadd.f32 %v8725, %v9814
    %v9816 = vpop.f32.mrf.mxu0
    %v9817 = vadd.f32 %v8721, %v9816
    %v9818 = vpop.f32.mrf.mxu0
    %v9819 = vadd.f32 %v8725, %v9818
    %9820 = vmatprep.mubr.bf16.mxu0 %v8665
    %9821 = vmatmul.mubr.bf16.gmra.mxu0 %v8664
    %v9822 = vpop.f32.mrf.mxu0
    %v9823 = vadd.f32 %v8721, %v9822
    %v9824 = vpop.f32.mrf.mxu0
    %v9825 = vadd.f32 %v8725, %v9824
    %v9826 = vpop.f32.mrf.mxu0
    %v9827 = vadd.f32 %v8721, %v9826
    %v9828 = vpop.f32.mrf.mxu0
    %v9829 = vadd.f32 %v8725, %v9828
    %9830 = vmatprep.mubr.bf16.mxu0 %v8667
    %9831 = vmatmul.mubr.bf16.gmra.mxu0 %v8666
    %v9832 = vpop.f32.mrf.mxu0
    %v9833 = vadd.f32 %v8721, %v9832
    %v9834 = vpop.f32.mrf.mxu0
    %v9835 = vadd.f32 %v8725, %v9834
    %v9836 = vpop.f32.mrf.mxu0
    %v9837 = vadd.f32 %v8721, %v9836
    %v9838 = vpop.f32.mrf.mxu0
    %v9839 = vadd.f32 %v8725, %v9838
    %9840 = vmatprep.mubr.bf16.mxu0 %v8669
    %9841 = vmatmul.mubr.bf16.gmra.mxu0 %v8668
    %v9842 = vpop.f32.mrf.mxu0
    %v9843 = vadd.f32 %v8721, %v9842
    %v9844 = vpop.f32.mrf.mxu0
    %v9845 = vadd.f32 %v8725, %v9844
    %v9846 = vpop.f32.mrf.mxu0
    %v9847 = vadd.f32 %v8721, %v9846
    %v9848 = vpop.f32.mrf.mxu0
    %v9849 = vadd.f32 %v8725, %v9848
    %9850 = vmatprep.mubr.bf16.mxu0 %v8671
    %9851 = vmatmul.mubr.bf16.gmra.mxu0 %v8670
    %v9852 = vpop.f32.mrf.mxu0
    %v9853 = vadd.f32 %v8721, %v9852
    %v9854 = vpop.f32.mrf.mxu0
    %v9855 = vadd.f32 %v8725, %v9854
    %v9856 = vpop.f32.mrf.mxu0
    %v9857 = vadd.f32 %v8721, %v9856
    %v9858 = vpop.f32.mrf.mxu0
    %v9859 = vadd.f32 %v8725, %v9858
    %9860 = vmatprep.mubr.bf16.mxu0 %v8673
    %9861 = vmatmul.mubr.bf16.gmra.mxu0 %v8672
    %v9862 = vpop.f32.mrf.mxu0
    %v9863 = vadd.f32 %v8721, %v9862
    %v9864 = vpop.f32.mrf.mxu0
    %v9865 = vadd.f32 %v8725, %v9864
    %v9866 = vpop.f32.mrf.mxu0
    %v9867 = vadd.f32 %v8721, %v9866
    %v9868 = vpop.f32.mrf.mxu0
    %v9869 = vadd.f32 %v8725, %v9868
    %9870 = vmatprep.mubr.bf16.mxu0 %v8675
    %9871 = vmatmul.mubr.bf16.gmra.mxu0 %v8674
    %v9872 = vpop.f32.mrf.mxu0
    %v9873 = vadd.f32 %v8721, %v9872
    %v9874 = vpop.f32.mrf.mxu0
    %v9875 = vadd.f32 %v8725, %v9874
    %v9876 = vpop.f32.mrf.mxu0
    %v9877 = vadd.f32 %v8721, %v9876
    %v9878 = vpop.f32.mrf.mxu0
    %v9879 = vadd.f32 %v8725, %v9878
    %9880 = vmatprep.mubr.bf16.mxu0 %v8677
    %9881 = vmatmul.mubr.bf16.gmra.mxu0 %v8676
    %v9882 = vpop.f32.mrf.mxu0
    %v9883 = vadd.f32 %v8721, %v9882
    %v9884 = vpop.f32.mrf.mxu0
    %v9885 = vadd.f32 %v8725, %v9884
    %v9886 = vpop.f32.mrf.mxu0
    %v9887 = vadd.f32 %v8721, %v9886
    %v9888 = vpop.f32.mrf.mxu0
    %v9889 = vadd.f32 %v8725, %v9888
    %9890 = vmatprep.mubr.bf16.mxu0 %v8679
    %9891 = vmatmul.mubr.bf16.gmra.mxu0 %v8678
    %v9892 = vpop.f32.mrf.mxu0
    %v9893 = vadd.f32 %v8721, %v9892
    %v9894 = vpop.f32.mrf.mxu0
    %v9895 = vadd.f32 %v8725, %v9894
    %v9896 = vpop.f32.mrf.mxu0
    %v9897 = vadd.f32 %v8721, %v9896
    %v9898 = vpop.f32.mrf.mxu0
    %v9899 = vadd.f32 %v8725, %v9898
    %9900 = vmatprep.mubr.bf16.mxu0 %v8681
    %9901 = vmatmul.mubr.bf16.gmra.mxu0 %v8680
    %v9902 = vpop.f32.mrf.mxu0
    %v9903 = vadd.f32 %v8721, %v9902
    %v9904 = vpop.f32.mrf.mxu0
    %v9905 = vadd.f32 %v8725, %v9904
    %v9906 = vpop.f32.mrf.mxu0
    %v9907 = vadd.f32 %v8721, %v9906
    %v9908 = vpop.f32.mrf.mxu0
    %v9909 = vadd.f32 %v8725, %v9908
    %9910 = vmatprep.mubr.bf16.mxu0 %v8683
    %9911 = vmatmul.mubr.bf16.gmra.mxu0 %v8682
    %v9912 = vpop.f32.mrf.mxu0
    %v9913 = vadd.f32 %v8721, %v9912
    %v9914 = vpop.f32.mrf.mxu0
    %v9915 = vadd.f32 %v8725, %v9914
    %v9916 = vpop.f32.mrf.mxu0
    %v9917 = vadd.f32 %v8721, %v9916
    %v9918 = vpop.f32.mrf.mxu0
    %v9919 = vadd.f32 %v8725, %v9918
    %9920 = vdwg.mxu0
    %v9921 = vmax.f32 %v8923, 0.0
    %v9922 = vmax.f32 %v8925, 0.0
    %v9923 = vmax.f32 %v8927, 0.0
    %v9924 = vmax.f32 %v8929, 0.0
    %v9925 = vmax.f32 %v8933, 0.0
    %v9926 = vmax.f32 %v8935, 0.0
    %v9927 = vmax.f32 %v8937, 0.0
    %v9928 = vmax.f32 %v8939, 0.0
    %v9929 = vmax.f32 %v8943, 0.0
    %v9930 = vmax.f32 %v8945, 0.0
    %v9931 = vmax.f32 %v8947, 0.0
    %v9932 = vmax.f32 %v8949, 0.0
    %v9933 = vmax.f32 %v8953, 0.0
    %v9934 = vmax.f32 %v8955, 0.0
    %v9935 = vmax.f32 %v8957, 0.0
    %v9936 = vmax.f32 %v8959, 0.0
    %v9937 = vmax.f32 %v8963, 0.0
    %v9938 = vmax.f32 %v8965, 0.0
    %v9939 = vmax.f32 %v8967, 0.0
    %v9940 = vmax.f32 %v8969, 0.0
    %v9941 = vmax.f32 %v8973, 0.0
    %v9942 = vmax.f32 %v8975, 0.0
    %v9943 = vmax.f32 %v8977, 0.0
    %v9944 = vmax.f32 %v8979, 0.0
    %v9945 = vmax.f32 %v8983, 0.0
    %v9946 = vmax.f32 %v8985, 0.0
    %v9947 = vmax.f32 %v8987, 0.0
    %v9948 = vmax.f32 %v8989, 0.0
    %v9949 = vmax.f32 %v8993, 0.0
    %v9950 = vmax.f32 %v8995, 0.0
    %v9951 = vmax.f32 %v8997, 0.0
    %v9952 = vmax.f32 %v8999, 0.0
    %v9953 = vmax.f32 %v9003, 0.0
    %v9954 = vmax.f32 %v9005, 0.0
    %v9955 = vmax.f32 %v9007, 0.0
    %v9956 = vmax.f32 %v9009, 0.0
    %v9957 = vmax.f32 %v9013, 0.0
    %v9958 = vmax.f32 %v9015, 0.0
    %v9959 = vmax.f32 %v9017, 0.0
    %v9960 = vmax.f32 %v9019, 0.0
    %v9961 = vmax.f32 %v9023, 0.0
    %v9962 = vmax.f32 %v9025, 0.0
    %v9963 = vmax.f32 %v9027, 0.0
    %v9964 = vmax.f32 %v9029, 0.0
    %v9965 = vmax.f32 %v9033, 0.0
    %v9966 = vmax.f32 %v9035, 0.0
    %v9967 = vmax.f32 %v9037, 0.0
    %v9968 = vmax.f32 %v9039, 0.0
    %v9969 = vmax.f32 %v9043, 0.0
    %v9970 = vmax.f32 %v9045, 0.0
    %v9971 = vmax.f32 %v9047, 0.0
    %v9972 = vmax.f32 %v9049, 0.0
    %v9973 = vmax.f32 %v9053, 0.0
    %v9974 = vmax.f32 %v9055, 0.0
    %v9975 = vmax.f32 %v9057, 0.0
    %v9976 = vmax.f32 %v9059, 0.0
    %v9977 = vmax.f32 %v9063, 0.0
    %v9978 = vmax.f32 %v9065, 0.0
    %v9979 = vmax.f32 %v9067, 0.0
    %v9980 = vmax.f32 %v9069, 0.0
    %v9981 = vmax.f32 %v9073, 0.0
    %v9982 = vmax.f32 %v9075, 0.0
    %v9983 = vmax.f32 %v9077, 0.0
    %v9984 = vmax.f32 %v9079, 0.0
    %v9985 = vmax.f32 %v9083, 0.0
    %v9986 = vmax.f32 %v9085, 0.0
    %v9987 = vmax.f32 %v9087, 0.0
    %v9988 = vmax.f32 %v9089, 0.0
    %v9989 = vmax.f32 %v9093, 0.0
    %v9990 = vmax.f32 %v9095, 0.0
    %v9991 = vmax.f32 %v9097, 0.0
    %v9992 = vmax.f32 %v9099, 0.0
    %v9993 = vmax.f32 %v9103, 0.0
    %v9994 = vmax.f32 %v9105, 0.0
    %v9995 = vmax.f32 %v9107, 0.0
    %v9996 = vmax.f32 %v9109, 0.0
    %v9997 = vmax.f32 %v9113, 0.0
    %v9998 = vmax.f32 %v9115, 0.0
    %v9999 = vmax.f32 %v9117, 0.0
    %v10000 = vmax.f32 %v9119, 0.0
    %v10001 = vmax.f32 %v9123, 0.0
    %v10002 = vmax.f32 %v9125, 0.0
    %v10003 = vmax.f32 %v9127, 0.0
    %v10004 = vmax.f32 %v9129, 0.0
    %v10005 = vmax.f32 %v9133, 0.0
    %v10006 = vmax.f32 %v9135, 0.0
    %v10007 = vmax.f32 %v9137, 0.0
    %v10008 = vmax.f32 %v9139, 0.0
    %v10009 = vmax.f32 %v9143, 0.0
    %v10010 = vmax.f32 %v9145, 0.0
    %v10011 = vmax.f32 %v9147, 0.0
    %v10012 = vmax.f32 %v9149, 0.0
    %v10013 = vmax.f32 %v9153, 0.0
    %v10014 = vmax.f32 %v9155, 0.0
    %v10015 = vmax.f32 %v9157, 0.0
    %v10016 = vmax.f32 %v9159, 0.0
    %v10017 = vmax.f32 %v9163, 0.0
    %v10018 = vmax.f32 %v9165, 0.0
    %v10019 = vmax.f32 %v9167, 0.0
    %v10020 = vmax.f32 %v9169, 0.0
    %v10021 = vmax.f32 %v9173, 0.0
    %v10022 = vmax.f32 %v9175, 0.0
    %v10023 = vmax.f32 %v9177, 0.0
    %v10024 = vmax.f32 %v9179, 0.0
    %v10025 = vmax.f32 %v9183, 0.0
    %v10026 = vmax.f32 %v9185, 0.0
    %v10027 = vmax.f32 %v9187, 0.0
    %v10028 = vmax.f32 %v9189, 0.0
    %v10029 = vmax.f32 %v9193, 0.0
    %v10030 = vmax.f32 %v9195, 0.0
    %v10031 = vmax.f32 %v9197, 0.0
    %v10032 = vmax.f32 %v9199, 0.0
    %v10033 = vmax.f32 %v9203, 0.0
    %v10034 = vmax.f32 %v9205, 0.0
    %v10035 = vmax.f32 %v9207, 0.0
    %v10036 = vmax.f32 %v9209, 0.0
    %v10037 = vmax.f32 %v9213, 0.0
    %v10038 = vmax.f32 %v9215, 0.0
    %v10039 = vmax.f32 %v9217, 0.0
    %v10040 = vmax.f32 %v9219, 0.0
    %v10041 = vmax.f32 %v9223, 0.0
    %v10042 = vmax.f32 %v9225, 0.0
    %v10043 = vmax.f32 %v9227, 0.0
    %v10044 = vmax.f32 %v9229, 0.0
    %v10045 = vmax.f32 %v9233, 0.0
    %v10046 = vmax.f32 %v9235, 0.0
    %v10047 = vmax.f32 %v9237, 0.0
    %v10048 = vmax.f32 %v9239, 0.0
    %v10049 = vmax.f32 %v9243, 0.0
    %v10050 = vmax.f32 %v9245, 0.0
    %v10051 = vmax.f32 %v9247, 0.0
    %v10052 = vmax.f32 %v9249, 0.0
    %v10053 = vmax.f32 %v9253, 0.0
    %v10054 = vmax.f32 %v9255, 0.0
    %v10055 = vmax.f32 %v9257, 0.0
    %v10056 = vmax.f32 %v9259, 0.0
    %v10057 = vmax.f32 %v9263, 0.0
    %v10058 = vmax.f32 %v9265, 0.0
    %v10059 = vmax.f32 %v9267, 0.0
    %v10060 = vmax.f32 %v9269, 0.0
    %v10061 = vmax.f32 %v9273, 0.0
    %v10062 = vmax.f32 %v9275, 0.0
    %v10063 = vmax.f32 %v9277, 0.0
    %v10064 = vmax.f32 %v9279, 0.0
    %v10065 = vmax.f32 %v9283, 0.0
    %v10066 = vmax.f32 %v9285, 0.0
    %v10067 = vmax.f32 %v9287, 0.0
    %v10068 = vmax.f32 %v9289, 0.0
    %v10069 = vmax.f32 %v9293, 0.0
    %v10070 = vmax.f32 %v9295, 0.0
    %v10071 = vmax.f32 %v9297, 0.0
    %v10072 = vmax.f32 %v9299, 0.0
    %v10073 = vmax.f32 %v9303, 0.0
    %v10074 = vmax.f32 %v9305, 0.0
    %v10075 = vmax.f32 %v9307, 0.0
    %v10076 = vmax.f32 %v9309, 0.0
    %v10077 = vmax.f32 %v9313, 0.0
    %v10078 = vmax.f32 %v9315, 0.0
    %v10079 = vmax.f32 %v9317, 0.0
    %v10080 = vmax.f32 %v9319, 0.0
    %v10081 = vmax.f32 %v9323, 0.0
    %v10082 = vmax.f32 %v9325, 0.0
    %v10083 = vmax.f32 %v9327, 0.0
    %v10084 = vmax.f32 %v9329, 0.0
    %v10085 = vmax.f32 %v9333, 0.0
    %v10086 = vmax.f32 %v9335, 0.0
    %v10087 = vmax.f32 %v9337, 0.0
    %v10088 = vmax.f32 %v9339, 0.0
    %v10089 = vmax.f32 %v9343, 0.0
    %v10090 = vmax.f32 %v9345, 0.0
    %v10091 = vmax.f32 %v9347, 0.0
    %v10092 = vmax.f32 %v9349, 0.0
    %v10093 = vmax.f32 %v9353, 0.0
    %v10094 = vmax.f32 %v9355, 0.0
    %v10095 = vmax.f32 %v9357, 0.0
    %v10096 = vmax.f32 %v9359, 0.0
    %v10097 = vmax.f32 %v9363, 0.0
    %v10098 = vmax.f32 %v9365, 0.0
    %v10099 = vmax.f32 %v9367, 0.0
    %v10100 = vmax.f32 %v9369, 0.0
    %v10101 = vmax.f32 %v9373, 0.0
    %v10102 = vmax.f32 %v9375, 0.0
    %v10103 = vmax.f32 %v9377, 0.0
    %v10104 = vmax.f32 %v9379, 0.0
    %v10105 = vmax.f32 %v9383, 0.0
    %v10106 = vmax.f32 %v9385, 0.0
    %v10107 = vmax.f32 %v9387, 0.0
    %v10108 = vmax.f32 %v9389, 0.0
    %v10109 = vmax.f32 %v9393, 0.0
    %v10110 = vmax.f32 %v9395, 0.0
    %v10111 = vmax.f32 %v9397, 0.0
    %v10112 = vmax.f32 %v9399, 0.0
    %v10113 = vmax.f32 %v9403, 0.0
    %v10114 = vmax.f32 %v9405, 0.0
    %v10115 = vmax.f32 %v9407, 0.0
    %v10116 = vmax.f32 %v9409, 0.0
    %v10117 = vmax.f32 %v9413, 0.0
    %v10118 = vmax.f32 %v9415, 0.0
    %v10119 = vmax.f32 %v9417, 0.0
    %v10120 = vmax.f32 %v9419, 0.0
    %v10121 = vmax.f32 %v9423, 0.0
    %v10122 = vmax.f32 %v9425, 0.0
    %v10123 = vmax.f32 %v9427, 0.0
    %v10124 = vmax.f32 %v9429, 0.0
    %v10125 = vmax.f32 %v9433, 0.0
    %v10126 = vmax.f32 %v9435, 0.0
    %v10127 = vmax.f32 %v9437, 0.0
    %v10128 = vmax.f32 %v9439, 0.0
    %v10129 = vmax.f32 %v9443, 0.0
    %v10130 = vmax.f32 %v9445, 0.0
    %v10131 = vmax.f32 %v9447, 0.0
    %v10132 = vmax.f32 %v9449, 0.0
    %v10133 = vmax.f32 %v9453, 0.0
    %v10134 = vmax.f32 %v9455, 0.0
    %v10135 = vmax.f32 %v9457, 0.0
    %v10136 = vmax.f32 %v9459, 0.0
    %v10137 = vmax.f32 %v9463, 0.0
    %v10138 = vmax.f32 %v9465, 0.0
    %v10139 = vmax.f32 %v9467, 0.0
    %v10140 = vmax.f32 %v9469, 0.0
    %v10141 = vmax.f32 %v9473, 0.0
    %v10142 = vmax.f32 %v9475, 0.0
    %v10143 = vmax.f32 %v9477, 0.0
    %v10144 = vmax.f32 %v9479, 0.0
    %v10145 = vmax.f32 %v9483, 0.0
    %v10146 = vmax.f32 %v9485, 0.0
    %v10147 = vmax.f32 %v9487, 0.0
    %v10148 = vmax.f32 %v9489, 0.0
    %v10149 = vmax.f32 %v9493, 0.0
    %v10150 = vmax.f32 %v9495, 0.0
    %v10151 = vmax.f32 %v9497, 0.0
    %v10152 = vmax.f32 %v9499, 0.0
    %v10153 = vmax.f32 %v9503, 0.0
    %v10154 = vmax.f32 %v9505, 0.0
    %v10155 = vmax.f32 %v9507, 0.0
    %v10156 = vmax.f32 %v9509, 0.0
    %v10157 = vmax.f32 %v9513, 0.0
    %v10158 = vmax.f32 %v9515, 0.0
    %v10159 = vmax.f32 %v9517, 0.0
    %v10160 = vmax.f32 %v9519, 0.0
    %v10161 = vmax.f32 %v9523, 0.0
    %v10162 = vmax.f32 %v9525, 0.0
    %v10163 = vmax.f32 %v9527, 0.0
    %v10164 = vmax.f32 %v9529, 0.0
    %v10165 = vmax.f32 %v9533, 0.0
    %v10166 = vmax.f32 %v9535, 0.0
    %v10167 = vmax.f32 %v9537, 0.0
    %v10168 = vmax.f32 %v9539, 0.0
    %v10169 = vmax.f32 %v9543, 0.0
    %v10170 = vmax.f32 %v9545, 0.0
    %v10171 = vmax.f32 %v9547, 0.0
    %v10172 = vmax.f32 %v9549, 0.0
    %v10173 = vmax.f32 %v9553, 0.0
    %v10174 = vmax.f32 %v9555, 0.0
    %v10175 = vmax.f32 %v9557, 0.0
    %v10176 = vmax.f32 %v9559, 0.0
    %v10177 = vmax.f32 %v9563, 0.0
    %v10178 = vmax.f32 %v9565, 0.0
    %v10179 = vmax.f32 %v9567, 0.0
    %v10180 = vmax.f32 %v9569, 0.0
    %v10181 = vmax.f32 %v9573, 0.0
    %v10182 = vmax.f32 %v9575, 0.0
    %v10183 = vmax.f32 %v9577, 0.0
    %v10184 = vmax.f32 %v9579, 0.0
    %v10185 = vmax.f32 %v9583, 0.0
    %v10186 = vmax.f32 %v9585, 0.0
    %v10187 = vmax.f32 %v9587, 0.0
    %v10188 = vmax.f32 %v9589, 0.0
    %v10189 = vmax.f32 %v9593, 0.0
    %v10190 = vmax.f32 %v9595, 0.0
    %v10191 = vmax.f32 %v9597, 0.0
    %v10192 = vmax.f32 %v9599, 0.0
    %v10193 = vmax.f32 %v9603, 0.0
    %v10194 = vmax.f32 %v9605, 0.0
    %v10195 = vmax.f32 %v9607, 0.0
    %v10196 = vmax.f32 %v9609, 0.0
    %v10197 = vmax.f32 %v9613, 0.0
    %v10198 = vmax.f32 %v9615, 0.0
    %v10199 = vmax.f32 %v9617, 0.0
    %v10200 = vmax.f32 %v9619, 0.0
    %v10201 = vmax.f32 %v9623, 0.0
    %v10202 = vmax.f32 %v9625, 0.0
    %v10203 = vmax.f32 %v9627, 0.0
    %v10204 = vmax.f32 %v9629, 0.0
    %v10205 = vmax.f32 %v9633, 0.0
    %v10206 = vmax.f32 %v9635, 0.0
    %v10207 = vmax.f32 %v9637, 0.0
    %v10208 = vmax.f32 %v9639, 0.0
    %v10209 = vmax.f32 %v9643, 0.0
    %v10210 = vmax.f32 %v9645, 0.0
    %v10211 = vmax.f32 %v9647, 0.0
    %v10212 = vmax.f32 %v9649, 0.0
    %v10213 = vmax.f32 %v9653, 0.0
    %v10214 = vmax.f32 %v9655, 0.0
    %v10215 = vmax.f32 %v9657, 0.0
    %v10216 = vmax.f32 %v9659, 0.0
    %v10217 = vmax.f32 %v9663, 0.0
    %v10218 = vmax.f32 %v9665, 0.0
    %v10219 = vmax.f32 %v9667, 0.0
    %v10220 = vmax.f32 %v9669, 0.0
    %v10221 = vmax.f32 %v9673, 0.0
    %v10222 = vmax.f32 %v9675, 0.0
    %v10223 = vmax.f32 %v9677, 0.0
    %v10224 = vmax.f32 %v9679, 0.0
    %v10225 = vmax.f32 %v9683, 0.0
    %v10226 = vmax.f32 %v9685, 0.0
    %v10227 = vmax.f32 %v9687, 0.0
    %v10228 = vmax.f32 %v9689, 0.0
    %v10229 = vmax.f32 %v9693, 0.0
    %v10230 = vmax.f32 %v9695, 0.0
    %v10231 = vmax.f32 %v9697, 0.0
    %v10232 = vmax.f32 %v9699, 0.0
    %v10233 = vmax.f32 %v9703, 0.0
    %v10234 = vmax.f32 %v9705, 0.0
    %v10235 = vmax.f32 %v9707, 0.0
    %v10236 = vmax.f32 %v9709, 0.0
    %v10237 = vmax.f32 %v9713, 0.0
    %v10238 = vmax.f32 %v9715, 0.0
    %v10239 = vmax.f32 %v9717, 0.0
    %v10240 = vmax.f32 %v9719, 0.0
    %v10241 = vmax.f32 %v9723, 0.0
    %v10242 = vmax.f32 %v9725, 0.0
    %v10243 = vmax.f32 %v9727, 0.0
    %v10244 = vmax.f32 %v9729, 0.0
    %v10245 = vmax.f32 %v9733, 0.0
    %v10246 = vmax.f32 %v9735, 0.0
    %v10247 = vmax.f32 %v9737, 0.0
    %v10248 = vmax.f32 %v9739, 0.0
    %v10249 = vmax.f32 %v9743, 0.0
    %v10250 = vmax.f32 %v9745, 0.0
    %v10251 = vmax.f32 %v9747, 0.0
    %v10252 = vmax.f32 %v9749, 0.0
    %v10253 = vmax.f32 %v9753, 0.0
    %v10254 = vmax.f32 %v9755, 0.0
    %v10255 = vmax.f32 %v9757, 0.0
    %v10256 = vmax.f32 %v9759, 0.0
    %v10257 = vmax.f32 %v9763, 0.0
    %v10258 = vmax.f32 %v9765, 0.0
    %v10259 = vmax.f32 %v9767, 0.0
    %v10260 = vmax.f32 %v9769, 0.0
    %v10261 = vmax.f32 %v9773, 0.0
    %v10262 = vmax.f32 %v9775, 0.0
    %v10263 = vmax.f32 %v9777, 0.0
    %v10264 = vmax.f32 %v9779, 0.0
    %v10265 = vmax.f32 %v9783, 0.0
    %v10266 = vmax.f32 %v9785, 0.0
    %v10267 = vmax.f32 %v9787, 0.0
    %v10268 = vmax.f32 %v9789, 0.0
    %v10269 = vmax.f32 %v9793, 0.0
    %v10270 = vmax.f32 %v9795, 0.0
    %v10271 = vmax.f32 %v9797, 0.0
    %v10272 = vmax.f32 %v9799, 0.0
    %v10273 = vmax.f32 %v9803, 0.0
    %v10274 = vmax.f32 %v9805, 0.0
    %v10275 = vmax.f32 %v9807, 0.0
    %v10276 = vmax.f32 %v9809, 0.0
    %v10277 = vmax.f32 %v9813, 0.0
    %v10278 = vmax.f32 %v9815, 0.0
    %v10279 = vmax.f32 %v9817, 0.0
    %v10280 = vmax.f32 %v9819, 0.0
    %v10281 = vmax.f32 %v9823, 0.0
    %v10282 = vmax.f32 %v9825, 0.0
    %v10283 = vmax.f32 %v9827, 0.0
    %v10284 = vmax.f32 %v9829, 0.0
    %v10285 = vmax.f32 %v9833, 0.0
    %v10286 = vmax.f32 %v9835, 0.0
    %v10287 = vmax.f32 %v9837, 0.0
    %v10288 = vmax.f32 %v9839, 0.0
    %v10289 = vmax.f32 %v9843, 0.0
    %v10290 = vmax.f32 %v9845, 0.0
    %v10291 = vmax.f32 %v9847, 0.0
    %v10292 = vmax.f32 %v9849, 0.0
    %v10293 = vmax.f32 %v9853, 0.0
    %v10294 = vmax.f32 %v9855, 0.0
    %v10295 = vmax.f32 %v9857, 0.0
    %v10296 = vmax.f32 %v9859, 0.0
    %v10297 = vmax.f32 %v9863, 0.0
    %v10298 = vmax.f32 %v9865, 0.0
    %v10299 = vmax.f32 %v9867, 0.0
    %v10300 = vmax.f32 %v9869, 0.0
    %v10301 = vmax.f32 %v9873, 0.0
    %v10302 = vmax.f32 %v9875, 0.0
    %v10303 = vmax.f32 %v9877, 0.0
    %v10304 = vmax.f32 %v9879, 0.0
    %v10305 = vmax.f32 %v9883, 0.0
    %v10306 = vmax.f32 %v9885, 0.0
    %v10307 = vmax.f32 %v9887, 0.0
    %v10308 = vmax.f32 %v9889, 0.0
    %v10309 = vmax.f32 %v9893, 0.0
    %v10310 = vmax.f32 %v9895, 0.0
    %v10311 = vmax.f32 %v9897, 0.0
    %v10312 = vmax.f32 %v9899, 0.0
    %v10313 = vmax.f32 %v9903, 0.0
    %v10314 = vmax.f32 %v9905, 0.0
    %v10315 = vmax.f32 %v9907, 0.0
    %v10316 = vmax.f32 %v9909, 0.0
    %v10317 = vmax.f32 %v9913, 0.0
    %v10318 = vmax.f32 %v9915, 0.0
    %v10319 = vmax.f32 %v9917, 0.0
    %v10320 = vmax.f32 %v9919, 0.0
    %v10321 = vld [vmem:[%s12] sm:$0xff]
    %v10322 = vld [vmem:[%s12 + $0x8] sm:$0x1f]
    %v10323 = vpack.c.bf16 %v9923, %v9921
    %v10324 = vpack.c.bf16 %v9924, %v9922
    %v10325 = vpack.c.bf16 %v9927, %v9925
    %v10326 = vpack.c.bf16 %v9928, %v9926
    %v10327 = vpack.c.bf16 %v9931, %v9929
    %v10328 = vpack.c.bf16 %v9932, %v9930
    %v10329 = vpack.c.bf16 %v9935, %v9933
    %v10330 = vpack.c.bf16 %v9936, %v9934
    %v10331 = vpack.c.bf16 %v9939, %v9937
    %v10332 = vpack.c.bf16 %v9940, %v9938
    %v10333 = vpack.c.bf16 %v9943, %v9941
    %v10334 = vpack.c.bf16 %v9944, %v9942
    %v10335 = vpack.c.bf16 %v9947, %v9945
    %v10336 = vpack.c.bf16 %v9948, %v9946
    %v10337 = vpack.c.bf16 %v9951, %v9949
    %v10338 = vpack.c.bf16 %v9952, %v9950
    %v10339 = vpack.c.bf16 %v9955, %v9953
    %v10340 = vpack.c.bf16 %v9956, %v9954
    %v10341 = vpack.c.bf16 %v9959, %v9957
    %v10342 = vpack.c.bf16 %v9960, %v9958
    %v10343 = vpack.c.bf16 %v9963, %v9961
    %v10344 = vpack.c.bf16 %v9964, %v9962
    %v10345 = vpack.c.bf16 %v9967, %v9965
    %v10346 = vpack.c.bf16 %v9968, %v9966
    %v10347 = vpack.c.bf16 %v9971, %v9969
    %v10348 = vpack.c.bf16 %v9972, %v9970
    %v10349 = vpack.c.bf16 %v9975, %v9973
    %v10350 = vpack.c.bf16 %v9976, %v9974
    %v10351 = vpack.c.bf16 %v9979, %v9977
    %v10352 = vpack.c.bf16 %v9980, %v9978
    %v10353 = vpack.c.bf16 %v9983, %v9981
    %v10354 = vpack.c.bf16 %v9984, %v9982
    %v10355 = vpack.c.bf16 %v9987, %v9985
    %v10356 = vpack.c.bf16 %v9988, %v9986
    %v10357 = vpack.c.bf16 %v9991, %v9989
    %v10358 = vpack.c.bf16 %v9992, %v9990
    %v10359 = vpack.c.bf16 %v9995, %v9993
    %v10360 = vpack.c.bf16 %v9996, %v9994
    %v10361 = vpack.c.bf16 %v9999, %v9997
    %v10362 = vpack.c.bf16 %v10000, %v9998
    %v10363 = vpack.c.bf16 %v10003, %v10001
    %v10364 = vpack.c.bf16 %v10004, %v10002
    %v10365 = vpack.c.bf16 %v10007, %v10005
    %v10366 = vpack.c.bf16 %v10008, %v10006
    %v10367 = vpack.c.bf16 %v10011, %v10009
    %v10368 = vpack.c.bf16 %v10012, %v10010
    %v10369 = vpack.c.bf16 %v10015, %v10013
    %v10370 = vpack.c.bf16 %v10016, %v10014
    %v10371 = vpack.c.bf16 %v10019, %v10017
    %v10372 = vpack.c.bf16 %v10020, %v10018
    %v10373 = vpack.c.bf16 %v10023, %v10021
    %v10374 = vpack.c.bf16 %v10024, %v10022
    %v10375 = vpack.c.bf16 %v10027, %v10025
    %v10376 = vpack.c.bf16 %v10028, %v10026
    %v10377 = vpack.c.bf16 %v10031, %v10029
    %v10378 = vpack.c.bf16 %v10032, %v10030
    %v10379 = vpack.c.bf16 %v10035, %v10033
    %v10380 = vpack.c.bf16 %v10036, %v10034
    %v10381 = vpack.c.bf16 %v10039, %v10037
    %v10382 = vpack.c.bf16 %v10040, %v10038
    %v10383 = vpack.c.bf16 %v10043, %v10041
    %v10384 = vpack.c.bf16 %v10044, %v10042
    %v10385 = vpack.c.bf16 %v10047, %v10045
    %v10386 = vpack.c.bf16 %v10048, %v10046
    %v10387 = vpack.c.bf16 %v10051, %v10049
    %v10388 = vpack.c.bf16 %v10052, %v10050
    %v10389 = vpack.c.bf16 %v10055, %v10053
    %v10390 = vpack.c.bf16 %v10056, %v10054
    %v10391 = vpack.c.bf16 %v10059, %v10057
    %v10392 = vpack.c.bf16 %v10060, %v10058
    %v10393 = vpack.c.bf16 %v10063, %v10061
    %v10394 = vpack.c.bf16 %v10064, %v10062
    %v10395 = vpack.c.bf16 %v10067, %v10065
    %v10396 = vpack.c.bf16 %v10068, %v10066
    %v10397 = vpack.c.bf16 %v10071, %v10069
    %v10398 = vpack.c.bf16 %v10072, %v10070
    %v10399 = vpack.c.bf16 %v10075, %v10073
    %v10400 = vpack.c.bf16 %v10076, %v10074
    %v10401 = vpack.c.bf16 %v10079, %v10077
    %v10402 = vpack.c.bf16 %v10080, %v10078
    %v10403 = vpack.c.bf16 %v10083, %v10081
    %v10404 = vpack.c.bf16 %v10084, %v10082
    %v10405 = vpack.c.bf16 %v10087, %v10085
    %v10406 = vpack.c.bf16 %v10088, %v10086
    %v10407 = vpack.c.bf16 %v10091, %v10089
    %v10408 = vpack.c.bf16 %v10092, %v10090
    %v10409 = vpack.c.bf16 %v10095, %v10093
    %v10410 = vpack.c.bf16 %v10096, %v10094
    %v10411 = vpack.c.bf16 %v10099, %v10097
    %v10412 = vpack.c.bf16 %v10100, %v10098
    %v10413 = vpack.c.bf16 %v10103, %v10101
    %v10414 = vpack.c.bf16 %v10104, %v10102
    %v10415 = vpack.c.bf16 %v10107, %v10105
    %v10416 = vpack.c.bf16 %v10108, %v10106
    %v10417 = vpack.c.bf16 %v10111, %v10109
    %v10418 = vpack.c.bf16 %v10112, %v10110
    %v10419 = vpack.c.bf16 %v10115, %v10113
    %v10420 = vpack.c.bf16 %v10116, %v10114
    %v10421 = vpack.c.bf16 %v10119, %v10117
    %v10422 = vpack.c.bf16 %v10120, %v10118
    %v10423 = vpack.c.bf16 %v10123, %v10121
    %v10424 = vpack.c.bf16 %v10124, %v10122
    %v10425 = vpack.c.bf16 %v10127, %v10125
    %v10426 = vpack.c.bf16 %v10128, %v10126
    %v10427 = vpack.c.bf16 %v10131, %v10129
    %v10428 = vpack.c.bf16 %v10132, %v10130
    %v10429 = vpack.c.bf16 %v10135, %v10133
    %v10430 = vpack.c.bf16 %v10136, %v10134
    %v10431 = vpack.c.bf16 %v10139, %v10137
    %v10432 = vpack.c.bf16 %v10140, %v10138
    %v10433 = vpack.c.bf16 %v10143, %v10141
    %v10434 = vpack.c.bf16 %v10144, %v10142
    %v10435 = vpack.c.bf16 %v10147, %v10145
    %v10436 = vpack.c.bf16 %v10148, %v10146
    %v10437 = vpack.c.bf16 %v10151, %v10149
    %v10438 = vpack.c.bf16 %v10152, %v10150
    %v10439 = vpack.c.bf16 %v10155, %v10153
    %v10440 = vpack.c.bf16 %v10156, %v10154
    %v10441 = vpack.c.bf16 %v10159, %v10157
    %v10442 = vpack.c.bf16 %v10160, %v10158
    %v10443 = vpack.c.bf16 %v10163, %v10161
    %v10444 = vpack.c.bf16 %v10164, %v10162
    %v10445 = vpack.c.bf16 %v10167, %v10165
    %v10446 = vpack.c.bf16 %v10168, %v10166
    %v10447 = vpack.c.bf16 %v10171, %v10169
    %v10448 = vpack.c.bf16 %v10172, %v10170
    %v10449 = vpack.c.bf16 %v10175, %v10173
    %v10450 = vpack.c.bf16 %v10176, %v10174
    %v10451 = vpack.c.bf16 %v10179, %v10177
    %v10452 = vpack.c.bf16 %v10180, %v10178
    %v10453 = vpack.c.bf16 %v10183, %v10181
    %v10454 = vpack.c.bf16 %v10184, %v10182
    %v10455 = vpack.c.bf16 %v10187, %v10185
    %v10456 = vpack.c.bf16 %v10188, %v10186
    %v10457 = vpack.c.bf16 %v10191, %v10189
    %v10458 = vpack.c.bf16 %v10192, %v10190
    %v10459 = vpack.c.bf16 %v10195, %v10193
    %v10460 = vpack.c.bf16 %v10196, %v10194
    %v10461 = vpack.c.bf16 %v10199, %v10197
    %v10462 = vpack.c.bf16 %v10200, %v10198
    %v10463 = vpack.c.bf16 %v10203, %v10201
    %v10464 = vpack.c.bf16 %v10204, %v10202
    %v10465 = vpack.c.bf16 %v10207, %v10205
    %v10466 = vpack.c.bf16 %v10208, %v10206
    %v10467 = vpack.c.bf16 %v10211, %v10209
    %v10468 = vpack.c.bf16 %v10212, %v10210
    %v10469 = vpack.c.bf16 %v10215, %v10213
    %v10470 = vpack.c.bf16 %v10216, %v10214
    %v10471 = vpack.c.bf16 %v10219, %v10217
    %v10472 = vpack.c.bf16 %v10220, %v10218
    %v10473 = vpack.c.bf16 %v10223, %v10221
    %v10474 = vpack.c.bf16 %v10224, %v10222
    %v10475 = vpack.c.bf16 %v10227, %v10225
    %v10476 = vpack.c.bf16 %v10228, %v10226
    %v10477 = vpack.c.bf16 %v10231, %v10229
    %v10478 = vpack.c.bf16 %v10232, %v10230
    %v10479 = vpack.c.bf16 %v10235, %v10233
    %v10480 = vpack.c.bf16 %v10236, %v10234
    %v10481 = vpack.c.bf16 %v10239, %v10237
    %v10482 = vpack.c.bf16 %v10240, %v10238
    %v10483 = vpack.c.bf16 %v10243, %v10241
    %v10484 = vpack.c.bf16 %v10244, %v10242
    %v10485 = vpack.c.bf16 %v10247, %v10245
    %v10486 = vpack.c.bf16 %v10248, %v10246
    %v10487 = vpack.c.bf16 %v10251, %v10249
    %v10488 = vpack.c.bf16 %v10252, %v10250
    %v10489 = vpack.c.bf16 %v10255, %v10253
    %v10490 = vpack.c.bf16 %v10256, %v10254
    %v10491 = vpack.c.bf16 %v10259, %v10257
    %v10492 = vpack.c.bf16 %v10260, %v10258
    %v10493 = vpack.c.bf16 %v10263, %v10261
    %v10494 = vpack.c.bf16 %v10264, %v10262
    %v10495 = vpack.c.bf16 %v10267, %v10265
    %v10496 = vpack.c.bf16 %v10268, %v10266
    %v10497 = vpack.c.bf16 %v10271, %v10269
    %v10498 = vpack.c.bf16 %v10272, %v10270
    %v10499 = vpack.c.bf16 %v10275, %v10273
    %v10500 = vpack.c.bf16 %v10276, %v10274
    %v10501 = vpack.c.bf16 %v10279, %v10277
    %v10502 = vpack.c.bf16 %v10280, %v10278
    %v10503 = vpack.c.bf16 %v10283, %v10281
    %v10504 = vpack.c.bf16 %v10284, %v10282
    %v10505 = vpack.c.bf16 %v10287, %v10285
    %v10506 = vpack.c.bf16 %v10288, %v10286
    %v10507 = vpack.c.bf16 %v10291, %v10289
    %v10508 = vpack.c.bf16 %v10292, %v10290
    %v10509 = vpack.c.bf16 %v10295, %v10293
    %v10510 = vpack.c.bf16 %v10296, %v10294
    %v10511 = vpack.c.bf16 %v10299, %v10297
    %v10512 = vpack.c.bf16 %v10300, %v10298
    %v10513 = vpack.c.bf16 %v10303, %v10301
    %v10514 = vpack.c.bf16 %v10304, %v10302
    %v10515 = vpack.c.bf16 %v10307, %v10305
    %v10516 = vpack.c.bf16 %v10308, %v10306
    %v10517 = vpack.c.bf16 %v10311, %v10309
    %v10518 = vpack.c.bf16 %v10312, %v10310
    %v10519 = vpack.c.bf16 %v10315, %v10313
    %v10520 = vpack.c.bf16 %v10316, %v10314
    %v10521 = vpack.c.bf16 %v10319, %v10317
    %v10522 = vpack.c.bf16 %v10320, %v10318
    %v10525 = vcombine.high %v10321, %v10321
    %v10527 = vunpack.c.l.s4 1966171168
    %v10528 = vunpack.c.0.s8 %v10527
    %v10529 = vlaneseq
    %v10530 = vshrl.u32 %v10529, 7
    %v10531 = vsub.s32 %v10528, %v10530
    %v10532 = vrot.slane %v10321, %v10531
    %v10534 = vunpack.c.l.s4 1966171168
    %v10535 = vunpack.c.0.s8 %v10534
    %v10536 = vlaneseq
    %v10537 = vshrl.u32 %v10536, 7
    %v10538 = vsub.s32 %v10535, %v10537
    %v10539 = vrot.slane %v10525, %v10538
    %v10540 = vcombine.high %v10532, %v10532
    %v10541 = vcombine.high %v10539, %v10539
    %v10543 = vunpack.c.l.s4 1966171168
    %v10544 = vunpack.c.0.s8 %v10543
    %v10545 = vlaneseq
    %v10546 = vshrl.u32 %v10545, 7
    %v10547 = vsub.s32 %v10544, %v10546
    %v10548 = vrot.slane %v10532, %v10547
    %v10550 = vunpack.c.l.s4 1966171168
    %v10551 = vunpack.c.0.s8 %v10550
    %v10552 = vlaneseq
    %v10553 = vshrl.u32 %v10552, 7
    %v10554 = vsub.s32 %v10551, %v10553
    %v10555 = vrot.slane %v10539, %v10554
    %v10557 = vunpack.c.l.s4 1966171168
    %v10558 = vunpack.c.0.s8 %v10557
    %v10559 = vlaneseq
    %v10560 = vshrl.u32 %v10559, 7
    %v10561 = vsub.s32 %v10558, %v10560
    %v10562 = vrot.slane %v10540, %v10561
    %v10564 = vunpack.c.l.s4 1966171168
    %v10565 = vunpack.c.0.s8 %v10564
    %v10566 = vlaneseq
    %v10567 = vshrl.u32 %v10566, 7
    %v10568 = vsub.s32 %v10565, %v10567
    %v10569 = vrot.slane %v10541, %v10568
    %v10570 = vcombine.high %v10548, %v10548
    %v10571 = vcombine.high %v10555, %v10555
    %v10572 = vcombine.high %v10562, %v10562
    %v10573 = vcombine.high %v10569, %v10569
    %v10574 = vcombine.high %v10322, %v10322
    %v10576 = vunpack.c.l.s4 1966171168
    %v10577 = vunpack.c.0.s8 %v10576
    %v10578 = vlaneseq
    %v10579 = vshrl.u32 %v10578, 7
    %v10580 = vsub.s32 %v10577, %v10579
    %v10581 = vrot.slane %v10322, %v10580
    %v10583 = vunpack.c.l.s4 1966171168
    %v10584 = vunpack.c.0.s8 %v10583
    %v10585 = vlaneseq
    %v10586 = vshrl.u32 %v10585, 7
    %v10587 = vsub.s32 %v10584, %v10586
    %v10588 = vrot.slane %v10574, %v10587
    %v10589 = vcombine.high %v10581, %v10581
    %v10591 = vunpack.c.l.s4 1966171168
    %v10592 = vunpack.c.0.s8 %v10591
    %v10593 = vlaneseq
    %v10594 = vshrl.u32 %v10593, 7
    %v10595 = vsub.s32 %v10592, %v10594
    %v10596 = vrot.slane %v10581, %v10595
    %v10598 = vunpack.c.l.s4 1966171168
    %v10599 = vunpack.c.0.s8 %v10598
    %v10600 = vlaneseq
    %v10601 = vshrl.u32 %v10600, 7
    %v10602 = vsub.s32 %v10599, %v10601
    %v10603 = vrot.slane %v10588, %v10602
    %v10605 = vunpack.c.l.s4 1966171168
    %v10606 = vunpack.c.0.s8 %v10605
    %v10607 = vlaneseq
    %v10608 = vshrl.u32 %v10607, 7
    %v10609 = vsub.s32 %v10606, %v10608
    %v10610 = vrot.slane %v10589, %v10609
    %v10611 = vcombine.high %v10596, %v10596
    %v10612 = vcombine.high %v10610, %v10610
    %v10626 = vsel %vm2837, %v10603, 0
    %10628 = vmatprep.subr.bf16.mxu0 %v10338
    %10629 = vmatpush1.bf16.msra.mxu0 %v10337
    %10630 = vmatprep.subr.bf16.mxu0 %v10336
    %10631 = vmatpush1.bf16.msra.mxu0 %v10335
    %10632 = vmatprep.subr.bf16.mxu0 %v10334
    %10633 = vmatpush1.bf16.msra.mxu0 %v10333
    %10634 = vmatprep.subr.bf16.mxu0 %v10332
    %10635 = vmatpush1.bf16.msra.mxu0 %v10331
    %10636 = vmatprep.subr.bf16.mxu0 %v10330
    %10637 = vmatpush1.bf16.msra.mxu0 %v10329
    %10638 = vmatprep.subr.bf16.mxu0 %v10328
    %10639 = vmatpush1.bf16.msra.mxu0 %v10327
    %10640 = vmatprep.subr.bf16.mxu0 %v10326
    %10641 = vmatpush1.bf16.msra.mxu0 %v10325
    %10642 = vmatprep.subr.bf16.mxu0 %v10324
    %10643 = vmatpush1.bf16.msra.mxu0 %v10323
    %10644 = vmatprep.subr.bf16.mxu0 %v10354
    %10645 = vmatpush2.bf16.msra.mxu0 %v10353
    %10646 = vmatprep.subr.bf16.mxu0 %v10352
    %10647 = vmatpush2.bf16.msra.mxu0 %v10351
    %10648 = vmatprep.subr.bf16.mxu0 %v10350
    %10649 = vmatpush2.bf16.msra.mxu0 %v10349
    %10650 = vmatprep.subr.bf16.mxu0 %v10348
    %10651 = vmatpush2.bf16.msra.mxu0 %v10347
    %10652 = vmatprep.subr.bf16.mxu0 %v10346
    %10653 = vmatpush2.bf16.msra.mxu0 %v10345
    %10654 = vmatprep.subr.bf16.mxu0 %v10344
    %10655 = vmatpush2.bf16.msra.mxu0 %v10343
    %10656 = vmatprep.subr.bf16.mxu0 %v10342
    %10657 = vmatpush2.bf16.msra.mxu0 %v10341
    %10658 = vmatprep.subr.bf16.mxu0 %v10340
    %10659 = vmatpush2.bf16.msra.mxu0 %v10339
    %10660 = vmatprep.mubr.bf16.mxu0 %v10562
    %10661 = vmatmul.mubr.bf16.gmra.mxu0 %v10548
    %v10662 = vpop.f32.mrf.mxu0
    %v10663 = vadd.f32 0.0, %v10662
    %v10664 = vpop.f32.mrf.mxu0
    %v10665 = vadd.f32 0.0, %v10664
    %v10666 = vpop.f32.mrf.mxu0
    %v10667 = vpop.f32.mrf.mxu0
    %10668 = vdwg.mxu0
    %10669 = vmatprep.subr.bf16.mxu0 %v10370
    %10670 = vmatpush1.bf16.msra.mxu0 %v10369
    %10671 = vmatprep.subr.bf16.mxu0 %v10368
    %10672 = vmatpush1.bf16.msra.mxu0 %v10367
    %10673 = vmatprep.subr.bf16.mxu0 %v10366
    %10674 = vmatpush1.bf16.msra.mxu0 %v10365
    %10675 = vmatprep.subr.bf16.mxu0 %v10364
    %10676 = vmatpush1.bf16.msra.mxu0 %v10363
    %10677 = vmatprep.subr.bf16.mxu0 %v10362
    %10678 = vmatpush1.bf16.msra.mxu0 %v10361
    %10679 = vmatprep.subr.bf16.mxu0 %v10360
    %10680 = vmatpush1.bf16.msra.mxu0 %v10359
    %10681 = vmatprep.subr.bf16.mxu0 %v10358
    %10682 = vmatpush1.bf16.msra.mxu0 %v10357
    %10683 = vmatprep.subr.bf16.mxu0 %v10356
    %10684 = vmatpush1.bf16.msra.mxu0 %v10355
    %10685 = vmatprep.subr.bf16.mxu0 %v10386
    %10686 = vmatpush2.bf16.msra.mxu0 %v10385
    %10687 = vmatprep.subr.bf16.mxu0 %v10384
    %10688 = vmatpush2.bf16.msra.mxu0 %v10383
    %10689 = vmatprep.subr.bf16.mxu0 %v10382
    %10690 = vmatpush2.bf16.msra.mxu0 %v10381
    %10691 = vmatprep.subr.bf16.mxu0 %v10380
    %10692 = vmatpush2.bf16.msra.mxu0 %v10379
    %10693 = vmatprep.subr.bf16.mxu0 %v10378
    %10694 = vmatpush2.bf16.msra.mxu0 %v10377
    %10695 = vmatprep.subr.bf16.mxu0 %v10376
    %10696 = vmatpush2.bf16.msra.mxu0 %v10375
    %10697 = vmatprep.subr.bf16.mxu0 %v10374
    %10698 = vmatpush2.bf16.msra.mxu0 %v10373
    %10699 = vmatprep.subr.bf16.mxu0 %v10372
    %10700 = vmatpush2.bf16.msra.mxu0 %v10371
    %10701 = vmatprep.mubr.bf16.mxu0 %v10572
    %10702 = vmatmul.mubr.bf16.gmra.mxu0 %v10570
    %v10703 = vpop.f32.mrf.mxu0
    %v10704 = vadd.f32 %v10663, %v10703
    %v10705 = vpop.f32.mrf.mxu0
    %v10706 = vadd.f32 %v10665, %v10705
    %v10707 = vpop.f32.mrf.mxu0
    %v10708 = vpop.f32.mrf.mxu0
    %10709 = vdwg.mxu0
    %10710 = vmatprep.subr.bf16.mxu0 %v10402
    %10711 = vmatpush1.bf16.msra.mxu0 %v10401
    %10712 = vmatprep.subr.bf16.mxu0 %v10400
    %10713 = vmatpush1.bf16.msra.mxu0 %v10399
    %10714 = vmatprep.subr.bf16.mxu0 %v10398
    %10715 = vmatpush1.bf16.msra.mxu0 %v10397
    %10716 = vmatprep.subr.bf16.mxu0 %v10396
    %10717 = vmatpush1.bf16.msra.mxu0 %v10395
    %10718 = vmatprep.subr.bf16.mxu0 %v10394
    %10719 = vmatpush1.bf16.msra.mxu0 %v10393
    %10720 = vmatprep.subr.bf16.mxu0 %v10392
    %10721 = vmatpush1.bf16.msra.mxu0 %v10391
    %10722 = vmatprep.subr.bf16.mxu0 %v10390
    %10723 = vmatpush1.bf16.msra.mxu0 %v10389
    %10724 = vmatprep.subr.bf16.mxu0 %v10388
    %10725 = vmatpush1.bf16.msra.mxu0 %v10387
    %10726 = vmatprep.subr.bf16.mxu0 %v10418
    %10727 = vmatpush2.bf16.msra.mxu0 %v10417
    %10728 = vmatprep.subr.bf16.mxu0 %v10416
    %10729 = vmatpush2.bf16.msra.mxu0 %v10415
    %10730 = vmatprep.subr.bf16.mxu0 %v10414
    %10731 = vmatpush2.bf16.msra.mxu0 %v10413
    %10732 = vmatprep.subr.bf16.mxu0 %v10412
    %10733 = vmatpush2.bf16.msra.mxu0 %v10411
    %10734 = vmatprep.subr.bf16.mxu0 %v10410
    %10735 = vmatpush2.bf16.msra.mxu0 %v10409
    %10736 = vmatprep.subr.bf16.mxu0 %v10408
    %10737 = vmatpush2.bf16.msra.mxu0 %v10407
    %10738 = vmatprep.subr.bf16.mxu0 %v10406
    %10739 = vmatpush2.bf16.msra.mxu0 %v10405
    %10740 = vmatprep.subr.bf16.mxu0 %v10404
    %10741 = vmatpush2.bf16.msra.mxu0 %v10403
    %10742 = vmatprep.mubr.bf16.mxu0 %v10569
    %10743 = vmatmul.mubr.bf16.gmra.mxu0 %v10555
    %v10744 = vpop.f32.mrf.mxu0
    %v10745 = vadd.f32 %v10704, %v10744
    %v10746 = vpop.f32.mrf.mxu0
    %v10747 = vadd.f32 %v10706, %v10746
    %v10748 = vpop.f32.mrf.mxu0
    %v10749 = vpop.f32.mrf.mxu0
    %10750 = vdwg.mxu0
    %10751 = vmatprep.subr.bf16.mxu0 %v10434
    %10752 = vmatpush1.bf16.msra.mxu0 %v10433
    %10753 = vmatprep.subr.bf16.mxu0 %v10432
    %10754 = vmatpush1.bf16.msra.mxu0 %v10431
    %10755 = vmatprep.subr.bf16.mxu0 %v10430
    %10756 = vmatpush1.bf16.msra.mxu0 %v10429
    %10757 = vmatprep.subr.bf16.mxu0 %v10428
    %10758 = vmatpush1.bf16.msra.mxu0 %v10427
    %10759 = vmatprep.subr.bf16.mxu0 %v10426
    %10760 = vmatpush1.bf16.msra.mxu0 %v10425
    %10761 = vmatprep.subr.bf16.mxu0 %v10424
    %10762 = vmatpush1.bf16.msra.mxu0 %v10423
    %10763 = vmatprep.subr.bf16.mxu0 %v10422
    %10764 = vmatpush1.bf16.msra.mxu0 %v10421
    %10765 = vmatprep.subr.bf16.mxu0 %v10420
    %10766 = vmatpush1.bf16.msra.mxu0 %v10419
    %10767 = vmatprep.subr.bf16.mxu0 %v10450
    %10768 = vmatpush2.bf16.msra.mxu0 %v10449
    %10769 = vmatprep.subr.bf16.mxu0 %v10448
    %10770 = vmatpush2.bf16.msra.mxu0 %v10447
    %10771 = vmatprep.subr.bf16.mxu0 %v10446
    %10772 = vmatpush2.bf16.msra.mxu0 %v10445
    %10773 = vmatprep.subr.bf16.mxu0 %v10444
    %10774 = vmatpush2.bf16.msra.mxu0 %v10443
    %10775 = vmatprep.subr.bf16.mxu0 %v10442
    %10776 = vmatpush2.bf16.msra.mxu0 %v10441
    %10777 = vmatprep.subr.bf16.mxu0 %v10440
    %10778 = vmatpush2.bf16.msra.mxu0 %v10439
    %10779 = vmatprep.subr.bf16.mxu0 %v10438
    %10780 = vmatpush2.bf16.msra.mxu0 %v10437
    %10781 = vmatprep.subr.bf16.mxu0 %v10436
    %10782 = vmatpush2.bf16.msra.mxu0 %v10435
    %10783 = vmatprep.mubr.bf16.mxu0 %v10573
    %10784 = vmatmul.mubr.bf16.gmra.mxu0 %v10571
    %v10785 = vpop.f32.mrf.mxu0
    %v10786 = vadd.f32 %v10745, %v10785
    %v10787 = vpop.f32.mrf.mxu0
    %v10788 = vadd.f32 %v10747, %v10787
    %v10789 = vpop.f32.mrf.mxu0
    %v10790 = vpop.f32.mrf.mxu0
    %10791 = vdwg.mxu0
    %10792 = vmatprep.subr.bf16.mxu0 %v10466
    %10793 = vmatpush1.bf16.msra.mxu0 %v10465
    %10794 = vmatprep.subr.bf16.mxu0 %v10464
    %10795 = vmatpush1.bf16.msra.mxu0 %v10463
    %10796 = vmatprep.subr.bf16.mxu0 %v10462
    %10797 = vmatpush1.bf16.msra.mxu0 %v10461
    %10798 = vmatprep.subr.bf16.mxu0 %v10460
    %10799 = vmatpush1.bf16.msra.mxu0 %v10459
    %10800 = vmatprep.subr.bf16.mxu0 %v10458
    %10801 = vmatpush1.bf16.msra.mxu0 %v10457
    %10802 = vmatprep.subr.bf16.mxu0 %v10456
    %10803 = vmatpush1.bf16.msra.mxu0 %v10455
    %10804 = vmatprep.subr.bf16.mxu0 %v10454
    %10805 = vmatpush1.bf16.msra.mxu0 %v10453
    %10806 = vmatprep.subr.bf16.mxu0 %v10452
    %10807 = vmatpush1.bf16.msra.mxu0 %v10451
    %10808 = vmatprep.subr.bf16.mxu0 %v10482
    %10809 = vmatpush2.bf16.msra.mxu0 %v10481
    %10810 = vmatprep.subr.bf16.mxu0 %v10480
    %10811 = vmatpush2.bf16.msra.mxu0 %v10479
    %10812 = vmatprep.subr.bf16.mxu0 %v10478
    %10813 = vmatpush2.bf16.msra.mxu0 %v10477
    %10814 = vmatprep.subr.bf16.mxu0 %v10476
    %10815 = vmatpush2.bf16.msra.mxu0 %v10475
    %10816 = vmatprep.subr.bf16.mxu0 %v10474
    %10817 = vmatpush2.bf16.msra.mxu0 %v10473
    %10818 = vmatprep.subr.bf16.mxu0 %v10472
    %10819 = vmatpush2.bf16.msra.mxu0 %v10471
    %10820 = vmatprep.subr.bf16.mxu0 %v10470
    %10821 = vmatpush2.bf16.msra.mxu0 %v10469
    %10822 = vmatprep.subr.bf16.mxu0 %v10468
    %10823 = vmatpush2.bf16.msra.mxu0 %v10467
    %10824 = vmatprep.mubr.bf16.mxu0 %v10610
    %10825 = vmatmul.mubr.bf16.gmra.mxu0 %v10596
    %v10826 = vpop.f32.mrf.mxu0
    %v10827 = vadd.f32 %v10786, %v10826
    %v10828 = vpop.f32.mrf.mxu0
    %v10829 = vadd.f32 %v10788, %v10828
    %v10830 = vpop.f32.mrf.mxu0
    %v10831 = vpop.f32.mrf.mxu0
    %10832 = vdwg.mxu0
    %10833 = vmatprep.subr.bf16.mxu0 %v10498
    %10834 = vmatpush1.bf16.msra.mxu0 %v10497
    %10835 = vmatprep.subr.bf16.mxu0 %v10496
    %10836 = vmatpush1.bf16.msra.mxu0 %v10495
    %10837 = vmatprep.subr.bf16.mxu0 %v10494
    %10838 = vmatpush1.bf16.msra.mxu0 %v10493
    %10839 = vmatprep.subr.bf16.mxu0 %v10492
    %10840 = vmatpush1.bf16.msra.mxu0 %v10491
    %10841 = vmatprep.subr.bf16.mxu0 %v10490
    %10842 = vmatpush1.bf16.msra.mxu0 %v10489
    %10843 = vmatprep.subr.bf16.mxu0 %v10488
    %10844 = vmatpush1.bf16.msra.mxu0 %v10487
    %10845 = vmatprep.subr.bf16.mxu0 %v10486
    %10846 = vmatpush1.bf16.msra.mxu0 %v10485
    %10847 = vmatprep.subr.bf16.mxu0 %v10484
    %10848 = vmatpush1.bf16.msra.mxu0 %v10483
    %10849 = vmatprep.subr.bf16.mxu0 %v10514
    %10850 = vmatpush2.bf16.msra.mxu0 %v10513
    %10851 = vmatprep.subr.bf16.mxu0 %v10512
    %10852 = vmatpush2.bf16.msra.mxu0 %v10511
    %10853 = vmatprep.subr.bf16.mxu0 %v10510
    %10854 = vmatpush2.bf16.msra.mxu0 %v10509
    %10855 = vmatprep.subr.bf16.mxu0 %v10508
    %10856 = vmatpush2.bf16.msra.mxu0 %v10507
    %10857 = vmatprep.subr.bf16.mxu0 %v10506
    %10858 = vmatpush2.bf16.msra.mxu0 %v10505
    %10859 = vmatprep.subr.bf16.mxu0 %v10504
    %10860 = vmatpush2.bf16.msra.mxu0 %v10503
    %10861 = vmatprep.subr.bf16.mxu0 %v10502
    %10862 = vmatpush2.bf16.msra.mxu0 %v10501
    %10863 = vmatprep.subr.bf16.mxu0 %v10500
    %10864 = vmatpush2.bf16.msra.mxu0 %v10499
    %10865 = vmatprep.mubr.bf16.mxu0 %v10612
    %10866 = vmatmul.mubr.bf16.gmra.mxu0 %v10611
    %v10867 = vpop.f32.mrf.mxu0
    %v10868 = vadd.f32 %v10827, %v10867
    %v10869 = vpop.f32.mrf.mxu0
    %v10870 = vadd.f32 %v10829, %v10869
    %v10871 = vpop.f32.mrf.mxu0
    %v10872 = vpop.f32.mrf.mxu0
    %10873 = vdwg.mxu0
    %10874 = vmatprep.subr.bf16.mxu0 0
    %10875 = vmatpush1.bf16.msra.mxu0 0
    %10876 = vmatprep.subr.bf16.mxu0 0
    %10877 = vmatpush1.bf16.msra.mxu0 0
    %10878 = vmatprep.subr.bf16.mxu0 0
    %10879 = vmatpush1.bf16.msra.mxu0 0
    %10880 = vmatprep.subr.bf16.mxu0 0
    %10881 = vmatpush1.bf16.msra.mxu0 0
    %10882 = vmatprep.subr.bf16.mxu0 %v10522
    %10883 = vmatpush1.bf16.msra.mxu0 %v10521
    %10884 = vmatprep.subr.bf16.mxu0 %v10520
    %10885 = vmatpush1.bf16.msra.mxu0 %v10519
    %10886 = vmatprep.subr.bf16.mxu0 %v10518
    %10887 = vmatpush1.bf16.msra.mxu0 %v10517
    %10888 = vmatprep.subr.bf16.mxu0 %v10516
    %10889 = vmatpush1.bf16.msra.mxu0 %v10515
    %10890 = vmatprep.subr.bf16.mxu0 0
    %10891 = vmatpush2.bf16.msra.mxu0 0
    %10892 = vmatprep.subr.bf16.mxu0 0
    %10893 = vmatpush2.bf16.msra.mxu0 0
    %10894 = vmatprep.subr.bf16.mxu0 0
    %10895 = vmatpush2.bf16.msra.mxu0 0
    %10896 = vmatprep.subr.bf16.mxu0 0
    %10897 = vmatpush2.bf16.msra.mxu0 0
    %10898 = vmatprep.subr.bf16.mxu0 0
    %10899 = vmatpush2.bf16.msra.mxu0 0
    %10900 = vmatprep.subr.bf16.mxu0 0
    %10901 = vmatpush2.bf16.msra.mxu0 0
    %10902 = vmatprep.subr.bf16.mxu0 0
    %10903 = vmatpush2.bf16.msra.mxu0 0
    %10904 = vmatprep.subr.bf16.mxu0 0
    %10905 = vmatpush2.bf16.msra.mxu0 0
    %10906 = vmatprep.mubr.bf16.mxu0 0
    %10907 = vmatmul.mubr.bf16.gmra.mxu0 %v10626
    %v10908 = vpop.f32.mrf.mxu0
    %v10909 = vadd.f32 %v10868, %v10908
    %v10910 = vpop.f32.mrf.mxu0
    %v10911 = vadd.f32 %v10870, %v10910
    %v10912 = vpop.f32.mrf.mxu0
    %v10913 = vpop.f32.mrf.mxu0
    %10914 = vdwg.mxu0
    %v10915 = vmul.f32 %v10909, 0.00125
    %v10916 = vmul.f32 %v10911, 0.00125
    %v10917 = vpack.c.bf16 %v10915, %v10915
    %v10918 = vpack.c.bf16 %v10916, %v10916
    %v10919 = vld [vmem:[%s13] sm:$0xf]
    %v10920 = vld [vmem:[%s13 + $0x4] sm:$0xf]
    %v10921 = vld [vmem:[%s13 + $0x8] sm:$0xf]
    %v10922 = vld [vmem:[%s13 + $0xc] sm:$0xf]
    %v10923 = vld [vmem:[%s13 + $0x10] sm:$0xf]
    %v10924 = vld [vmem:[%s13 + $0x14] sm:$0xf]
    %v10925 = vld [vmem:[%s13 + $0x18] sm:$0xf]
    %v10926 = vld [vmem:[%s13 + $0x1c] sm:$0xf]
    %v10927 = vld [vmem:[%s13 + $0x20] sm:$0xf]
    %v10928 = vld [vmem:[%s13 + $0x24] sm:$0xf]
    %v10929 = vld [vmem:[%s13 + $0x28] sm:$0xf]
    %v10930 = vld [vmem:[%s13 + $0x2c] sm:$0xf]
    %v10931 = vld [vmem:[%s13 + $0x30] sm:$0xf]
    %v10932 = vld [vmem:[%s13 + $0x34] sm:$0xf]
    %v10933 = vld [vmem:[%s13 + $0x38] sm:$0xf]
    %v10934 = vld [vmem:[%s13 + $0x3c] sm:$0xf]
    %v10935 = vld [vmem:[%s13 + $0x40] sm:$0xf]
    %v10936 = vld [vmem:[%s13 + $0x44] sm:$0xf]
    %v10937 = vld [vmem:[%s13 + $0x48] sm:$0xf]
    %v10938 = vld [vmem:[%s13 + $0x4c] sm:$0xf]
    %v10939 = vld [vmem:[%s13 + $0x50] sm:$0xf]
    %v10940 = vld [vmem:[%s13 + $0x54] sm:$0xf]
    %v10941 = vld [vmem:[%s13 + $0x58] sm:$0xf]
    %v10942 = vld [vmem:[%s13 + $0x5c] sm:$0xf]
    %v10943 = vld [vmem:[%s13 + $0x60] sm:$0xf]
    %v10944 = vld [vmem:[%s13 + $0x64] sm:$0xf]
    %v10945 = vld [vmem:[%s13 + $0x68] sm:$0xf]
    %v10946 = vld [vmem:[%s13 + $0x6c] sm:$0xf]
    %v10947 = vld [vmem:[%s13 + $0x70] sm:$0xf]
    %v10948 = vld [vmem:[%s13 + $0x74] sm:$0xf]
    %v10949 = vld [vmem:[%s13 + $0x78] sm:$0xf]
    %v10950 = vld [vmem:[%s13 + $0x7c] sm:$0xf]
    %v10951 = vld [vmem:[%s14] sm:$0x1]
    %v10953 = vlaneseq
    %v10954 = vshrl.u32 %v10953, 7
    %v10955 = vsub.s32 0, %v10954
    %v10956 = vrot.slane %v10951, %v10955
    %v10990 = vunpack.c.l.b16 %v10919
    %v10991 = vunpack.c.l.b16 %v10920
    %v10992 = vunpack.c.l.b16 %v10921
    %v10993 = vunpack.c.l.b16 %v10922
    %v10994 = vunpack.c.l.b16 %v10923
    %v10995 = vunpack.c.l.b16 %v10924
    %v10996 = vunpack.c.l.b16 %v10925
    %v10997 = vunpack.c.l.b16 %v10926
    %v10998 = vunpack.c.l.b16 %v10927
    %v10999 = vunpack.c.l.b16 %v10928
    %v11000 = vunpack.c.l.b16 %v10929
    %v11001 = vunpack.c.l.b16 %v10930
    %v11002 = vunpack.c.l.b16 %v10931
    %v11003 = vunpack.c.l.b16 %v10932
    %v11004 = vunpack.c.l.b16 %v10933
    %v11005 = vunpack.c.l.b16 %v10934
    %v11006 = vunpack.c.l.b16 %v10935
    %v11007 = vunpack.c.l.b16 %v10936
    %v11008 = vunpack.c.l.b16 %v10937
    %v11009 = vunpack.c.l.b16 %v10938
    %v11010 = vunpack.c.l.b16 %v10939
    %v11011 = vunpack.c.l.b16 %v10940
    %v11012 = vunpack.c.l.b16 %v10941
    %v11013 = vunpack.c.l.b16 %v10942
    %v11014 = vunpack.c.l.b16 %v10943
    %v11015 = vunpack.c.l.b16 %v10944
    %v11016 = vunpack.c.l.b16 %v10945
    %v11017 = vunpack.c.l.b16 %v10946
    %v11018 = vunpack.c.l.b16 %v10947
    %v11019 = vunpack.c.l.b16 %v10948
    %v11020 = vunpack.c.l.b16 %v10949
    %v11021 = vunpack.c.l.b16 %v10950
    %v11022 = vpack.c.b16 %v10991, %v10990
    %v11023 = vpack.c.b16 %v10993, %v10992
    %v11024 = vpack.c.b16 %v10995, %v10994
    %v11025 = vpack.c.b16 %v10997, %v10996
    %v11026 = vpack.c.b16 %v10999, %v10998
    %v11027 = vpack.c.b16 %v11001, %v11000
    %v11028 = vpack.c.b16 %v11003, %v11002
    %v11029 = vpack.c.b16 %v11005, %v11004
    %v11030 = vpack.c.b16 %v11007, %v11006
    %v11031 = vpack.c.b16 %v11009, %v11008
    %v11032 = vpack.c.b16 %v11011, %v11010
    %v11033 = vpack.c.b16 %v11013, %v11012
    %v11034 = vpack.c.b16 %v11015, %v11014
    %v11035 = vpack.c.b16 %v11017, %v11016
    %v11036 = vpack.c.b16 %v11019, %v11018
    %v11037 = vpack.c.b16 %v11021, %v11020
    %11054 = vmatprep.subr.bf16.mxu0 0
    %11055 = vmatpush1.bf16.msra.mxu0 %v11029
    %11056 = vmatprep.subr.bf16.mxu0 0
    %11057 = vmatpush1.bf16.msra.mxu0 %v11028
    %11058 = vmatprep.subr.bf16.mxu0 0
    %11059 = vmatpush1.bf16.msra.mxu0 %v11027
    %11060 = vmatprep.subr.bf16.mxu0 0
    %11061 = vmatpush1.bf16.msra.mxu0 %v11026
    %11062 = vmatprep.subr.bf16.mxu0 0
    %11063 = vmatpush1.bf16.msra.mxu0 %v11025
    %11064 = vmatprep.subr.bf16.mxu0 0
    %11065 = vmatpush1.bf16.msra.mxu0 %v11024
    %11066 = vmatprep.subr.bf16.mxu0 0
    %11067 = vmatpush1.bf16.msra.mxu0 %v11023
    %11068 = vmatprep.subr.bf16.mxu0 0
    %11069 = vmatpush1.bf16.msra.mxu0 %v11022
    %11070 = vmatprep.subr.bf16.mxu0 0
    %11071 = vmatpush2.bf16.msra.mxu0 %v11037
    %11072 = vmatprep.subr.bf16.mxu0 0
    %11073 = vmatpush2.bf16.msra.mxu0 %v11036
    %11074 = vmatprep.subr.bf16.mxu0 0
    %11075 = vmatpush2.bf16.msra.mxu0 %v11035
    %11076 = vmatprep.subr.bf16.mxu0 0
    %11077 = vmatpush2.bf16.msra.mxu0 %v11034
    %11078 = vmatprep.subr.bf16.mxu0 0
    %11079 = vmatpush2.bf16.msra.mxu0 %v11033
    %11080 = vmatprep.subr.bf16.mxu0 0
    %11081 = vmatpush2.bf16.msra.mxu0 %v11032
    %11082 = vmatprep.subr.bf16.mxu0 0
    %11083 = vmatpush2.bf16.msra.mxu0 %v11031
    %11084 = vmatprep.subr.bf16.mxu0 0
    %11085 = vmatpush2.bf16.msra.mxu0 %v11030
    %11086 = vmatprep.mubr.bf16.mxu0 %v10918
    %11087 = vmatmul.mubr.bf16.gmra.mxu0 %v10917
    %v11088 = vpop.f32.mrf.mxu0
    %v11089 = vadd.f32 %v10956, %v11088
    %v11090 = vpop.f32.mrf.mxu0
    %v11091 = vpop.f32.mrf.mxu0
    %v11092 = vpop.f32.mrf.mxu0
    %11093 = vdwg.mxu0
    %11094 = vst [vmem:[#allocation2] sm:$0x3] %v11089
    // Predicated region
    $region62: #{_lambda_.1} parent=1 // pred_check
      _
    $region63: #{_lambda_.1} parent=1 // pred_check_branch
      %11096 = sbr.rel (0) target = $region65
    $region64: #{_lambda_.1} parent=1 // pred_region
      %s11098 = ssub.s32 32, 32
      %11099 = vsyncadd [#allocation3], %s11098
      %s11101 = sshll.u32 [#allocation2], 4
      %s11102 = int_to_ptr.vmem [resolvable:$true] %s11101
      %11104 = dma.vmem_to_hbm [thread:$0]  %s11102, 32, %s15, [#allocation3]
    $region65: #{_lambda_.1} parent=1 // pred_fallthru
      _
    // Predicated region
    $region66: #{_lambda_.1} parent=1 // pred_check
      _
    $region67: #{_lambda_.1} parent=1 // pred_check_branch
      %11106 = sbr.rel (0) target = $region69
    $region68: #{_lambda_.1} parent=1 // pred_region
      %11107 = dma.done [#allocation3], 32
    $region69: #{_lambda_.1} parent=1 // pred_fallthru
      _
    %11108 = vsyncpa [#allocation3], 1

</llo_original>
